<compile_context>
chip_gen: v6e
topology: v6e:2x2x1
jax: 0.10.0
libtpu: 0.0.40
codegen_flags: <defaults>
</compile_context>

<pallas_src>
import jax
import jax.numpy as jnp
from jax.experimental import pallas as pl
from jax.experimental.pallas import tpu as pltpu


def encoder_kernel(x_ref, w1_ref, b1_ref, w2_ref, b2_ref, w3_ref, b3_ref,
                   wf_ref, bf_ref, o_ref, s1_ref, s2_ref, s3_ref):
    f32 = jnp.float32
    bf16 = jnp.bfloat16

    def zero_halo(s_ref):
        # s_ref: [tb, H+2, W, 3*Cin] pre-stacked padded operand scratch.
        # Zero only the 1-pixel halo (4 thin slabs); interior is rewritten
        # every step.  Unconditional so each TensorCore's scratch is valid.
        tb, Hp, W, K = s_ref.shape
        Cin = K // 3
        zrow = jnp.zeros((tb, 1, W, K), s_ref.dtype)
        s_ref[:, 0:1, :, :] = zrow                      # padded top row
        s_ref[:, Hp - 1:Hp, :, :] = zrow                # padded bottom row
        zcol = jnp.zeros((tb, Hp, 1, Cin), s_ref.dtype)
        s_ref[:, :, 0:1, 0:Cin] = zcol                  # left pad of dj=0 tap
        s_ref[:, :, W - 1:W, 2 * Cin:3 * Cin] = zcol    # right pad of dj=2 tap

    def write_taps(s_ref, a, h0):
        # Store activation rows a = act[:, h0:h0+hc, :, :] ([tb, hc, W, Cin])
        # into the pre-stacked operand scratch so that
        #   s[b, 1+h, w, dj*Cin + c] == padded_act[b, 1+h, w+dj, c]
        tb, hc, W, Cin = a.shape
        r = slice(h0 + 1, h0 + 1 + hc)
        s_ref[:, r, :, Cin:2 * Cin] = a                             # dj = 1
        s_ref[:, r, 1:W, 0:Cin] = a[:, :, 0:W - 1, :]               # dj = 0
        s_ref[:, r, 0:W - 1, 2 * Cin:3 * Cin] = a[:, :, 1:W, :]     # dj = 2

    def conv_relu_pool(s_in, w_ref, b_ref, emit_chunk):
        # s_in: [tb, H+2, W, 3*Cin] bf16.  w_ref: [3, 3*Cin, Cout] bf16 (row =
        # kernel row di).  b_ref: [1, Cout] f32.  Runs conv3x3 -> bias -> ReLU
        # -> 2x2 maxpool over chunks of output rows and hands each pooled chunk
        # [tb, hc//2, W//2, Cout] (f32) to emit_chunk(pooled_row_offset, chunk).
        tb, Hp, W, K = s_in.shape
        H = Hp - 2
        Cout = w_ref.shape[-1]
        # Row-chunking keeps the f32 accumulator in vregs (no VMEM spills).
        hc = H
        while hc % 4 == 0 and tb * hc * W > 512:
            hc //= 2
        for h0 in range(0, H, hc):
            acc = jnp.zeros((tb * hc * W, Cout), f32)
            for di in range(3):                        # 3 matmuls, K = 3*Cin
                taps = s_in[:, h0 + di:h0 + di + hc, :, :]
                taps = taps.reshape(tb * hc * W, K)
                acc = acc + jnp.dot(taps, w_ref[di], preferred_element_type=f32)
            acc = jnp.maximum(acc + b_ref[...], 0.0)   # bias + ReLU
            # 2x2 max-pool, stride 2 (rows of `acc` are ordered (b, h, w)).
            acc = acc.reshape(tb * hc * (W // 2), 2, Cout).max(axis=1)
            pooled = acc.reshape(tb, hc // 2, 2, W // 2, Cout).max(axis=2)
            emit_chunk(h0 // 2, pooled)

    # ---- halos once per step, then stage 1: input -> s1 -> conv1 -> s2 -------
    zero_halo(s1_ref)
    zero_halo(s2_ref)
    zero_halo(s3_ref)

    x = x_ref[...]                                     # [tb, H, W, Cin] bf16
    tb = x.shape[0]
    write_taps(s1_ref, x, 0)

    def to_s2(h0, chunk):
        write_taps(s2_ref, chunk.astype(bf16), h0)

    conv_relu_pool(s1_ref, w1_ref, b1_ref, to_s2)

    # ---- stage 2: s2 -> conv2 -> s3 -------------------------------------------
    def to_s3(h0, chunk):
        write_taps(s3_ref, chunk.astype(bf16), h0)

    conv_relu_pool(s2_ref, w2_ref, b2_ref, to_s3)

    # ---- stage 3 + fc: fold the flattened Linear into the per-chunk emission --
    Hf, Wf, _, E = wf_ref.shape
    fc_acc = [jnp.zeros((tb, E), f32)]

    def to_fc(h0, chunk):                              # chunk: [tb, ch, Wf, 128]
        cb = chunk.astype(bf16)
        o = fc_acc[0]
        for i in range(chunk.shape[1]):
            for j in range(Wf):
                o = o + jnp.dot(cb[:, i, j, :], wf_ref[h0 + i, j],
                                preferred_element_type=f32)
        fc_acc[0] = o

    conv_relu_pool(s3_ref, w3_ref, b3_ref, to_fc)

    o_ref[...] = (fc_acc[0] + bf_ref[...]).reshape(1, tb, E).astype(o_ref.dtype)


def encoder_maxpool(x_nchw, w1, b1, w2, b2, w3, b3, wf, bf):
    B, Cin, H, W = x_nchw.shape
    assert H % 8 == 0 and W % 8 == 0, "image_size must be divisible by 8"
    Hf, Wf, Cf, E = wf.shape
    assert (Hf, Wf, Cf) == (H // 8, W // 8, 128)
    assert w1.shape == (3, 3 * Cin, 32)

    # NCHW -> NHWC with the bf16 cast fused in (layout plumbing, half the bytes).
    x = jnp.transpose(x_nchw, (0, 2, 3, 1)).astype(jnp.bfloat16)

    # Batch tile: prefer a grid of >= 2 steps (feeds both v7x TensorCores and
    # pipelines input DMA with compute).  tb always divides B.
    tb = next((c for c in (8, 4, 2, 1) if B % c == 0 and B // c >= 2), B)
    grid = B // tb

    def whole(a):
        return pl.BlockSpec(a.shape, lambda b: (0,) * a.ndim)

    grid_spec = pltpu.PrefetchScalarGridSpec(
        num_scalar_prefetch=0,
        grid=(grid,),
        in_specs=[
            pl.BlockSpec((tb, H, W, Cin), lambda b: (b, 0, 0, 0)),
            whole(w1), whole(b1),
            whole(w2), whole(b2),
            whole(w3), whole(b3),
            whole(wf), whole(bf),
        ],
        # 3-D output (grid, tb, E): the block always equals the full trailing
        # (tb, E) dims, so any tb is legal; wrapper reshapes back to (B, E).
        out_specs=pl.BlockSpec((1, tb, E), lambda b: (b, 0, 0)),
        scratch_shapes=[
            pltpu.VMEM((tb, H + 2, W, 3 * Cin), jnp.bfloat16),
            pltpu.VMEM((tb, H // 2 + 2, W // 2, 3 * 32), jnp.bfloat16),
            pltpu.VMEM((tb, H // 4 + 2, W // 4, 3 * 64), jnp.bfloat16),
        ],
    )
    out = pl.pallas_call(
        encoder_kernel,
        out_shape=jax.ShapeDtypeStruct((grid, tb, E), jnp.float32),
        grid_spec=grid_spec,
        compiler_params=pltpu.CompilerParams(
            dimension_semantics=("parallel",),
        ),
    )(x, w1, b1, w2, b2, w3, b3, wf, bf)
    return out.reshape(B, E)


def init_params(key, channels, image_size, embedding_dim):
    # Matches PyTorch default init bounds: U(-1/sqrt(fan_in), +1/sqrt(fan_in)).
    # Conv weights are stored as [3, 3*Cin, Cout] where row di holds the 3 dj
    # taps stacked along the contraction dim (== torch weight [Cout, Cin, 3, 3]
    # permuted to [kh, kw, ci, co] and reshaped).  The fc weight is
    # [Hf, Wf, 128, E] (NHWC flatten order); a real torch [E, 128*Hf*Wf]
    # checkpoint must be reshaped to [E, 128, Hf, Wf] and permuted (2, 3, 1, 0).
    ks = jax.random.split(key, 8)

    def conv_init(kw, kb, cin, cout):
        bound = (cin * 9) ** -0.5
        w = jax.random.uniform(kw, (3, 3 * cin, cout), jnp.float32, -bound, bound)
        b = jax.random.uniform(kb, (1, cout), jnp.float32, -bound, bound)
        return w.astype(jnp.bfloat16), b            # bf16 weights, f32 biases

    w1, b1 = conv_init(ks[0], ks[1], channels, 32)
    w2, b2 = conv_init(ks[2], ks[3], 32, 64)
    w3, b3 = conv_init(ks[4], ks[5], 64, 128)
    hf = image_size // 8
    bound = (hf * hf * 128) ** -0.5
    wf = jax.random.uniform(ks[6], (hf, hf, 128, embedding_dim), jnp.float32,
                            -bound, bound).astype(jnp.bfloat16)
    bf = jax.random.uniform(ks[7], (1, embedding_dim), jnp.float32, -bound, bound)
    return w1, b1, w2, b2, w3, b3, wf, bf


def encoder_ref(x_nchw, params):
    # Pure-JAX reference (f32 math, same bf16-quantized weights).
    w1, b1, w2, b2, w3, b3, wf, bf = params
    h = jnp.transpose(x_nchw, (0, 2, 3, 1))
    for w, b in ((w1, b1), (w2, b2), (w3, b3)):
        cin, cout = w.shape[1] // 3, w.shape[2]
        k = w.astype(jnp.float32).reshape(3, 3, cin, cout)       # HWIO
        h = jax.lax.conv_general_dilated(
            h, k, window_strides=(1, 1), padding=((1, 1), (1, 1)),
            dimension_numbers=("NHWC", "HWIO", "NHWC"))
        h = jnp.maximum(h + b.reshape(1, 1, 1, -1), 0.0)
        B, H, W, C = h.shape
        h = h.reshape(B, H // 2, 2, W // 2, 2, C).max(axis=(2, 4))
    return jnp.einsum("bhwc,hwce->be", h, wf.astype(jnp.float32)) + bf


if __name__ == "__main__":
    key = jax.random.PRNGKey(0)
    k_x, k_p = jax.random.split(key)

    batch, channels, image_size, embedding_dim = 2, 4, 16, 32

    x = jax.random.normal(k_x, (batch, channels, image_size, image_size),
                          jnp.float32)
    params = init_params(k_p, channels, image_size, embedding_dim)

    out = encoder_maxpool(x, *params)
    out = jax.block_until_ready(out)

    ref = encoder_ref(x, params)
    assert out.shape == (batch, embedding_dim)
    max_err = float(jnp.max(jnp.abs(out - ref)))
    # bf16 weights / bf16 inter-stage activations with f32 accumulation.
    assert jnp.allclose(out, ref, rtol=2e-2, atol=2e-2), max_err

    print("KERNEL_OK")
</pallas_src>

<mosaic_0001>
module attributes {stable_mosaic.version = 11 : i64} {
  func.func @encoder_kernel(%arg0: i32, %arg1: memref<1x16x16x4xbf16, #tpu.memory_space<vmem>>, %arg2: memref<3x12x32xbf16, #tpu.memory_space<vmem>>, %arg3: memref<1x32xf32, #tpu.memory_space<vmem>>, %arg4: memref<3x96x64xbf16, #tpu.memory_space<vmem>>, %arg5: memref<1x64xf32, #tpu.memory_space<vmem>>, %arg6: memref<3x192x128xbf16, #tpu.memory_space<vmem>>, %arg7: memref<1x128xf32, #tpu.memory_space<vmem>>, %arg8: memref<2x2x128x32xbf16, #tpu.memory_space<vmem>>, %arg9: memref<1x32xf32, #tpu.memory_space<vmem>>, %arg10: memref<1x1x32xf32, #tpu.memory_space<vmem>>, %arg11: memref<1x18x16x12xbf16, #tpu.memory_space<vmem>>, %arg12: memref<1x10x8x96xbf16, #tpu.memory_space<vmem>>, %arg13: memref<1x6x4x192xbf16, #tpu.memory_space<vmem>>) attributes {dimension_semantics = [#tpu.dimension_semantics<parallel>], iteration_bounds = array<i64: 2>, scalar_prefetch = 0 : i64, scratch_operands = 3 : i64, tpu.core_type = #tpu.core_type<tc>, window_params = [{transform_indices = @transform_0, window_bounds = array<i64: 1, 16, 16, 4>}, {pipeline_mode = #tpu.pipeline_mode<synchronous>, transform_indices = @transform_1, window_bounds = array<i64: 3, 12, 32>}, {pipeline_mode = #tpu.pipeline_mode<synchronous>, transform_indices = @transform_2, window_bounds = array<i64: 1, 32>}, {pipeline_mode = #tpu.pipeline_mode<synchronous>, transform_indices = @transform_3, window_bounds = array<i64: 3, 96, 64>}, {pipeline_mode = #tpu.pipeline_mode<synchronous>, transform_indices = @transform_4, window_bounds = array<i64: 1, 64>}, {pipeline_mode = #tpu.pipeline_mode<synchronous>, transform_indices = @transform_5, window_bounds = array<i64: 3, 192, 128>}, {pipeline_mode = #tpu.pipeline_mode<synchronous>, transform_indices = @transform_6, window_bounds = array<i64: 1, 128>}, {pipeline_mode = #tpu.pipeline_mode<synchronous>, transform_indices = @transform_7, window_bounds = array<i64: 2, 2, 128, 32>}, {pipeline_mode = #tpu.pipeline_mode<synchronous>, transform_indices = @transform_8, window_bounds = array<i64: 1, 32>}, {transform_indices = @transform_9, window_bounds = array<i64: 1, 1, 32>}]} {
    %cst = arith.constant 0.000000e+00 : bf16
    %0 = vector.broadcast %cst : bf16 to vector<1x1x16x12xbf16>
    %c0 = arith.constant 0 : index
    %c0_0 = arith.constant 0 : index
    %c0_1 = arith.constant 0 : index
    %c0_2 = arith.constant 0 : index
    %1 = vector.load %arg11[%c0, %c0_0, %c0_1, %c0_2] : memref<1x18x16x12xbf16, #tpu.memory_space<vmem>>, vector<1x1x16x12xbf16>
    tpu.vector_store %arg11[%c0, %c0_0, %c0_1, %c0_2], %0 {strides = array<i32>} : memref<1x18x16x12xbf16, #tpu.memory_space<vmem>>, vector<1x1x16x12xbf16>,
    %c0_3 = arith.constant 0 : index
    %c17 = arith.constant 17 : index
    %c0_4 = arith.constant 0 : index
    %c0_5 = arith.constant 0 : index
    %2 = vector.load %arg11[%c0_3, %c17, %c0_4, %c0_5] : memref<1x18x16x12xbf16, #tpu.memory_space<vmem>>, vector<1x1x16x12xbf16>
    tpu.vector_store %arg11[%c0_3, %c17, %c0_4, %c0_5], %0 {strides = array<i32>} : memref<1x18x16x12xbf16, #tpu.memory_space<vmem>>, vector<1x1x16x12xbf16>,
    %cst_6 = arith.constant 0.000000e+00 : bf16
    %3 = vector.broadcast %cst_6 : bf16 to vector<1x18x1x4xbf16>
    %c0_7 = arith.constant 0 : index
    %c0_8 = arith.constant 0 : index
    %c0_9 = arith.constant 0 : index
    %c0_10 = arith.constant 0 : index
    %4 = vector.load %arg11[%c0_7, %c0_8, %c0_9, %c0_10] : memref<1x18x16x12xbf16, #tpu.memory_space<vmem>>, vector<1x18x1x4xbf16>
    tpu.vector_store %arg11[%c0_7, %c0_8, %c0_9, %c0_10], %3 {strides = array<i32>} : memref<1x18x16x12xbf16, #tpu.memory_space<vmem>>, vector<1x18x1x4xbf16>,
    %c0_11 = arith.constant 0 : index
    %c0_12 = arith.constant 0 : index
    %c15 = arith.constant 15 : index
    %c8 = arith.constant 8 : index
    %5 = vector.load %arg11[%c0_11, %c0_12, %c15, %c8] : memref<1x18x16x12xbf16, #tpu.memory_space<vmem>>, vector<1x18x1x4xbf16>
    tpu.vector_store %arg11[%c0_11, %c0_12, %c15, %c8], %3 {strides = array<i32>} : memref<1x18x16x12xbf16, #tpu.memory_space<vmem>>, vector<1x18x1x4xbf16>,
    %cst_13 = arith.constant 0.000000e+00 : bf16
    %6 = vector.broadcast %cst_13 : bf16 to vector<1x1x8x96xbf16>
    %c0_14 = arith.constant 0 : index
    %c0_15 = arith.constant 0 : index
    %c0_16 = arith.constant 0 : index
    %c0_17 = arith.constant 0 : index
    %7 = vector.load %arg12[%c0_14, %c0_15, %c0_16, %c0_17] : memref<1x10x8x96xbf16, #tpu.memory_space<vmem>>, vector<1x1x8x96xbf16>
    tpu.vector_store %arg12[%c0_14, %c0_15, %c0_16, %c0_17], %6 {strides = array<i32>} : memref<1x10x8x96xbf16, #tpu.memory_space<vmem>>, vector<1x1x8x96xbf16>,
    %c0_18 = arith.constant 0 : index
    %c9 = arith.constant 9 : index
    %c0_19 = arith.constant 0 : index
    %c0_20 = arith.constant 0 : index
    %8 = vector.load %arg12[%c0_18, %c9, %c0_19, %c0_20] : memref<1x10x8x96xbf16, #tpu.memory_space<vmem>>, vector<1x1x8x96xbf16>
    tpu.vector_store %arg12[%c0_18, %c9, %c0_19, %c0_20], %6 {strides = array<i32>} : memref<1x10x8x96xbf16, #tpu.memory_space<vmem>>, vector<1x1x8x96xbf16>,
    %cst_21 = arith.constant 0.000000e+00 : bf16
    %9 = vector.broadcast %cst_21 : bf16 to vector<1x10x1x32xbf16>
    %c0_22 = arith.constant 0 : index
    %c0_23 = arith.constant 0 : index
    %c0_24 = arith.constant 0 : index
    %c0_25 = arith.constant 0 : index
    %10 = vector.load %arg12[%c0_22, %c0_23, %c0_24, %c0_25] : memref<1x10x8x96xbf16, #tpu.memory_space<vmem>>, vector<1x10x1x32xbf16>
    tpu.vector_store %arg12[%c0_22, %c0_23, %c0_24, %c0_25], %9 {strides = array<i32>} : memref<1x10x8x96xbf16, #tpu.memory_space<vmem>>, vector<1x10x1x32xbf16>,
    %c0_26 = arith.constant 0 : index
    %c0_27 = arith.constant 0 : index
    %c7 = arith.constant 7 : index
    %c64 = arith.constant 64 : index
    %11 = vector.load %arg12[%c0_26, %c0_27, %c7, %c64] : memref<1x10x8x96xbf16, #tpu.memory_space<vmem>>, vector<1x10x1x32xbf16>
    tpu.vector_store %arg12[%c0_26, %c0_27, %c7, %c64], %9 {strides = array<i32>} : memref<1x10x8x96xbf16, #tpu.memory_space<vmem>>, vector<1x10x1x32xbf16>,
    %cst_28 = arith.constant 0.000000e+00 : bf16
    %12 = vector.broadcast %cst_28 : bf16 to vector<1x1x4x192xbf16>
    %c0_29 = arith.constant 0 : index
    %c0_30 = arith.constant 0 : index
    %c0_31 = arith.constant 0 : index
    %c0_32 = arith.constant 0 : index
    %13 = vector.load %arg13[%c0_29, %c0_30, %c0_31, %c0_32] : memref<1x6x4x192xbf16, #tpu.memory_space<vmem>>, vector<1x1x4x192xbf16>
    tpu.vector_store %arg13[%c0_29, %c0_30, %c0_31, %c0_32], %12 {strides = array<i32>} : memref<1x6x4x192xbf16, #tpu.memory_space<vmem>>, vector<1x1x4x192xbf16>,
    %c0_33 = arith.constant 0 : index
    %c5 = arith.constant 5 : index
    %c0_34 = arith.constant 0 : index
    %c0_35 = arith.constant 0 : index
    %14 = vector.load %arg13[%c0_33, %c5, %c0_34, %c0_35] : memref<1x6x4x192xbf16, #tpu.memory_space<vmem>>, vector<1x1x4x192xbf16>
    tpu.vector_store %arg13[%c0_33, %c5, %c0_34, %c0_35], %12 {strides = array<i32>} : memref<1x6x4x192xbf16, #tpu.memory_space<vmem>>, vector<1x1x4x192xbf16>,
    %cst_36 = arith.constant 0.000000e+00 : bf16
    %15 = vector.broadcast %cst_36 : bf16 to vector<1x6x1x64xbf16>
    %c0_37 = arith.constant 0 : index
    %c0_38 = arith.constant 0 : index
    %c0_39 = arith.constant 0 : index
    %c0_40 = arith.constant 0 : index
    %16 = vector.load %arg13[%c0_37, %c0_38, %c0_39, %c0_40] : memref<1x6x4x192xbf16, #tpu.memory_space<vmem>>, vector<1x6x1x64xbf16>
    tpu.vector_store %arg13[%c0_37, %c0_38, %c0_39, %c0_40], %15 {strides = array<i32>} : memref<1x6x4x192xbf16, #tpu.memory_space<vmem>>, vector<1x6x1x64xbf16>,
    %c0_41 = arith.constant 0 : index
    %c0_42 = arith.constant 0 : index
    %c3 = arith.constant 3 : index
    %c128 = arith.constant 128 : index
    %17 = vector.load %arg13[%c0_41, %c0_42, %c3, %c128] : memref<1x6x4x192xbf16, #tpu.memory_space<vmem>>, vector<1x6x1x64xbf16>
    tpu.vector_store %arg13[%c0_41, %c0_42, %c3, %c128], %15 {strides = array<i32>} : memref<1x6x4x192xbf16, #tpu.memory_space<vmem>>, vector<1x6x1x64xbf16>,
    %c0_43 = arith.constant 0 : index
    %c0_44 = arith.constant 0 : index
    %c0_45 = arith.constant 0 : index
    %c0_46 = arith.constant 0 : index
    %18 = vector.load %arg1[%c0_43, %c0_44, %c0_45, %c0_46] : memref<1x16x16x4xbf16, #tpu.memory_space<vmem>>, vector<1x16x16x4xbf16>
    %c0_47 = arith.constant 0 : index
    %c1 = arith.constant 1 : index
    %c0_48 = arith.constant 0 : index
    %c4 = arith.constant 4 : index
    %19 = vector.load %arg11[%c0_47, %c1, %c0_48, %c4] : memref<1x18x16x12xbf16, #tpu.memory_space<vmem>>, vector<1x16x16x4xbf16>
    tpu.vector_store %arg11[%c0_47, %c1, %c0_48, %c4], %18 {strides = array<i32>} : memref<1x18x16x12xbf16, #tpu.memory_space<vmem>>, vector<1x16x16x4xbf16>,
    %20 = vector.extract_strided_slice %18 {offsets = [0, 0, 0, 0], sizes = [1, 16, 15, 4], strides = [1, 1, 1, 1]} : vector<1x16x16x4xbf16> to vector<1x16x15x4xbf16>
    %c0_49 = arith.constant 0 : index
    %c1_50 = arith.constant 1 : index
    %c1_51 = arith.constant 1 : index
    %c0_52 = arith.constant 0 : index
    %21 = vector.load %arg11[%c0_49, %c1_50, %c1_51, %c0_52] : memref<1x18x16x12xbf16, #tpu.memory_space<vmem>>, vector<1x16x15x4xbf16>
    tpu.vector_store %arg11[%c0_49, %c1_50, %c1_51, %c0_52], %20 {strides = array<i32>} : memref<1x18x16x12xbf16, #tpu.memory_space<vmem>>, vector<1x16x15x4xbf16>,
    %22 = vector.extract_strided_slice %18 {offsets = [0, 0, 1, 0], sizes = [1, 16, 15, 4], strides = [1, 1, 1, 1]} : vector<1x16x16x4xbf16> to vector<1x16x15x4xbf16>
    %c0_53 = arith.constant 0 : index
    %c1_54 = arith.constant 1 : index
    %c0_55 = arith.constant 0 : index
    %c8_56 = arith.constant 8 : index
    %23 = vector.load %arg11[%c0_53, %c1_54, %c0_55, %c8_56] : memref<1x18x16x12xbf16, #tpu.memory_space<vmem>>, vector<1x16x15x4xbf16>
    tpu.vector_store %arg11[%c0_53, %c1_54, %c0_55, %c8_56], %22 {strides = array<i32>} : memref<1x18x16x12xbf16, #tpu.memory_space<vmem>>, vector<1x16x15x4xbf16>,
    %cst_57 = arith.constant 0.000000e+00 : f32
    %24 = vector.broadcast %cst_57 : f32 to vector<256x32xf32>
    %c0_58 = arith.constant 0 : index
    %c0_59 = arith.constant 0 : index
    %c0_60 = arith.constant 0 : index
    %c0_61 = arith.constant 0 : index
    %25 = vector.load %arg11[%c0_58, %c0_59, %c0_60, %c0_61] : memref<1x18x16x12xbf16, #tpu.memory_space<vmem>>, vector<1x16x16x12xbf16>
    %26 = vector.shape_cast %25 : vector<1x16x16x12xbf16> to vector<256x12xbf16>
    %c0_62 = arith.constant 0 : index
    %c0_63 = arith.constant 0 : index
    %c0_64 = arith.constant 0 : index
    %27 = vector.load %arg2[%c0_62, %c0_63, %c0_64] : memref<3x12x32xbf16, #tpu.memory_space<vmem>>, vector<1x12x32xbf16>
    %28 = vector.shape_cast %27 : vector<1x12x32xbf16> to vector<12x32xbf16>
    %cst_65 = arith.constant dense<0.000000e+00> : vector<256x32xf32>
    %29 = tpu.matmul %26, %28, %cst_65 {dimension_numbers = #tpu.dot_dimension_numbers<[1], [0], [0], [1], [0, 0, 1, 1], [], []>} : vector<256x12xbf16>, vector<12x32xbf16>, vector<256x32xf32> -> vector<256x32xf32>
    %30 = arith.addf %24, %29 : vector<256x32xf32>
    %c0_66 = arith.constant 0 : index
    %c1_67 = arith.constant 1 : index
    %c0_68 = arith.constant 0 : index
    %c0_69 = arith.constant 0 : index
    %31 = vector.load %arg11[%c0_66, %c1_67, %c0_68, %c0_69] : memref<1x18x16x12xbf16, #tpu.memory_space<vmem>>, vector<1x16x16x12xbf16>
    %32 = vector.shape_cast %31 : vector<1x16x16x12xbf16> to vector<256x12xbf16>
    %c1_70 = arith.constant 1 : index
    %c0_71 = arith.constant 0 : index
    %c0_72 = arith.constant 0 : index
    %33 = vector.load %arg2[%c1_70, %c0_71, %c0_72] : memref<3x12x32xbf16, #tpu.memory_space<vmem>>, vector<1x12x32xbf16>
    %34 = vector.shape_cast %33 : vector<1x12x32xbf16> to vector<12x32xbf16>
    %cst_73 = arith.constant dense<0.000000e+00> : vector<256x32xf32>
    %35 = tpu.matmul %32, %34, %cst_73 {dimension_numbers = #tpu.dot_dimension_numbers<[1], [0], [0], [1], [0, 0, 1, 1], [], []>} : vector<256x12xbf16>, vector<12x32xbf16>, vector<256x32xf32> -> vector<256x32xf32>
    %36 = arith.addf %30, %35 : vector<256x32xf32>
    %c0_74 = arith.constant 0 : index
    %c2 = arith.constant 2 : index
    %c0_75 = arith.constant 0 : index
    %c0_76 = arith.constant 0 : index
    %37 = vector.load %arg11[%c0_74, %c2, %c0_75, %c0_76] : memref<1x18x16x12xbf16, #tpu.memory_space<vmem>>, vector<1x16x16x12xbf16>
    %38 = vector.shape_cast %37 : vector<1x16x16x12xbf16> to vector<256x12xbf16>
    %c2_77 = arith.constant 2 : index
    %c0_78 = arith.constant 0 : index
    %c0_79 = arith.constant 0 : index
    %39 = vector.load %arg2[%c2_77, %c0_78, %c0_79] : memref<3x12x32xbf16, #tpu.memory_space<vmem>>, vector<1x12x32xbf16>
    %40 = vector.shape_cast %39 : vector<1x12x32xbf16> to vector<12x32xbf16>
    %cst_80 = arith.constant dense<0.000000e+00> : vector<256x32xf32>
    %41 = tpu.matmul %38, %40, %cst_80 {dimension_numbers = #tpu.dot_dimension_numbers<[1], [0], [0], [1], [0, 0, 1, 1], [], []>} : vector<256x12xbf16>, vector<12x32xbf16>, vector<256x32xf32> -> vector<256x32xf32>
    %42 = arith.addf %36, %41 : vector<256x32xf32>
    %c0_81 = arith.constant 0 : index
    %c0_82 = arith.constant 0 : index
    %43 = vector.load %arg3[%c0_81, %c0_82] : memref<1x32xf32, #tpu.memory_space<vmem>>, vector<1x32xf32>
    %44 = vector.broadcast %43 : vector<1x32xf32> to vector<256x32xf32>
    %45 = arith.addf %42, %44 : vector<256x32xf32>
    %cst_83 = arith.constant 0.000000e+00 : f32
    %46 = vector.broadcast %cst_83 : f32 to vector<256x32xf32>
    %47 = arith.maximumf %45, %46 : vector<256x32xf32>
    %48 = vector.shape_cast %47 : vector<256x32xf32> to vector<128x2x32xf32>
    %cst_84 = arith.constant dense<0xFF800000> : vector<128x32xf32>
    %49 = vector.multi_reduction <maximumf>, %48, %cst_84 [1] : vector<128x2x32xf32> to vector<128x32xf32>
    %50 = vector.shape_cast %49 : vector<128x32xf32> to vector<1x8x2x8x32xf32>
    %cst_85 = arith.constant dense<0xFF800000> : vector<1x8x8x32xf32>
    %51 = vector.multi_reduction <maximumf>, %50, %cst_85 [2] : vector<1x8x2x8x32xf32> to vector<1x8x8x32xf32>
    %52 = arith.truncf %51 : vector<1x8x8x32xf32> to vector<1x8x8x32xbf16>
    %c0_86 = arith.constant 0 : index
    %c1_87 = arith.constant 1 : index
    %c0_88 = arith.constant 0 : index
    %c32 = arith.constant 32 : index
    %53 = vector.load %arg12[%c0_86, %c1_87, %c0_88, %c32] : memref<1x10x8x96xbf16, #tpu.memory_space<vmem>>, vector<1x8x8x32xbf16>
    tpu.vector_store %arg12[%c0_86, %c1_87, %c0_88, %c32], %52 {strides = array<i32>} : memref<1x10x8x96xbf16, #tpu.memory_space<vmem>>, vector<1x8x8x32xbf16>,
    %54 = vector.extract_strided_slice %52 {offsets = [0, 0, 0, 0], sizes = [1, 8, 7, 32], strides = [1, 1, 1, 1]} : vector<1x8x8x32xbf16> to vector<1x8x7x32xbf16>
    %c0_89 = arith.constant 0 : index
    %c1_90 = arith.constant 1 : index
    %c1_91 = arith.constant 1 : index
    %c0_92 = arith.constant 0 : index
    %55 = vector.load %arg12[%c0_89, %c1_90, %c1_91, %c0_92] : memref<1x10x8x96xbf16, #tpu.memory_space<vmem>>, vector<1x8x7x32xbf16>
    tpu.vector_store %arg12[%c0_89, %c1_90, %c1_91, %c0_92], %54 {strides = array<i32>} : memref<1x10x8x96xbf16, #tpu.memory_space<vmem>>, vector<1x8x7x32xbf16>,
    %56 = vector.extract_strided_slice %52 {offsets = [0, 0, 1, 0], sizes = [1, 8, 7, 32], strides = [1, 1, 1, 1]} : vector<1x8x8x32xbf16> to vector<1x8x7x32xbf16>
    %c0_93 = arith.constant 0 : index
    %c1_94 = arith.constant 1 : index
    %c0_95 = arith.constant 0 : index
    %c64_96 = arith.constant 64 : index
    %57 = vector.load %arg12[%c0_93, %c1_94, %c0_95, %c64_96] : memref<1x10x8x96xbf16, #tpu.memory_space<vmem>>, vector<1x8x7x32xbf16>
    tpu.vector_store %arg12[%c0_93, %c1_94, %c0_95, %c64_96], %56 {strides = array<i32>} : memref<1x10x8x96xbf16, #tpu.memory_space<vmem>>, vector<1x8x7x32xbf16>,
    %cst_97 = arith.constant 0.000000e+00 : f32
    %58 = vector.broadcast %cst_97 : f32 to vector<64x64xf32>
    %c0_98 = arith.constant 0 : index
    %c0_99 = arith.constant 0 : index
    %c0_100 = arith.constant 0 : index
    %c0_101 = arith.constant 0 : index
    %59 = vector.load %arg12[%c0_98, %c0_99, %c0_100, %c0_101] : memref<1x10x8x96xbf16, #tpu.memory_space<vmem>>, vector<1x8x8x96xbf16>
    %60 = vector.shape_cast %59 : vector<1x8x8x96xbf16> to vector<64x96xbf16>
    %c0_102 = arith.constant 0 : index
    %c0_103 = arith.constant 0 : index
    %c0_104 = arith.constant 0 : index
    %61 = vector.load %arg4[%c0_102, %c0_103, %c0_104] : memref<3x96x64xbf16, #tpu.memory_space<vmem>>, vector<1x96x64xbf16>
    %62 = vector.shape_cast %61 : vector<1x96x64xbf16> to vector<96x64xbf16>
    %cst_105 = arith.constant dense<0.000000e+00> : vector<64x64xf32>
    %63 = tpu.matmul %60, %62, %cst_105 {dimension_numbers = #tpu.dot_dimension_numbers<[1], [0], [0], [1], [0, 0, 1, 1], [], []>} : vector<64x96xbf16>, vector<96x64xbf16>, vector<64x64xf32> -> vector<64x64xf32>
    %64 = arith.addf %58, %63 : vector<64x64xf32>
    %c0_106 = arith.constant 0 : index
    %c1_107 = arith.constant 1 : index
    %c0_108 = arith.constant 0 : index
    %c0_109 = arith.constant 0 : index
    %65 = vector.load %arg12[%c0_106, %c1_107, %c0_108, %c0_109] : memref<1x10x8x96xbf16, #tpu.memory_space<vmem>>, vector<1x8x8x96xbf16>
    %66 = vector.shape_cast %65 : vector<1x8x8x96xbf16> to vector<64x96xbf16>
    %c1_110 = arith.constant 1 : index
    %c0_111 = arith.constant 0 : index
    %c0_112 = arith.constant 0 : index
    %67 = vector.load %arg4[%c1_110, %c0_111, %c0_112] : memref<3x96x64xbf16, #tpu.memory_space<vmem>>, vector<1x96x64xbf16>
    %68 = vector.shape_cast %67 : vector<1x96x64xbf16> to vector<96x64xbf16>
    %cst_113 = arith.constant dense<0.000000e+00> : vector<64x64xf32>
    %69 = tpu.matmul %66, %68, %cst_113 {dimension_numbers = #tpu.dot_dimension_numbers<[1], [0], [0], [1], [0, 0, 1, 1], [], []>} : vector<64x96xbf16>, vector<96x64xbf16>, vector<64x64xf32> -> vector<64x64xf32>
    %70 = arith.addf %64, %69 : vector<64x64xf32>
    %c0_114 = arith.constant 0 : index
    %c2_115 = arith.constant 2 : index
    %c0_116 = arith.constant 0 : index
    %c0_117 = arith.constant 0 : index
    %71 = vector.load %arg12[%c0_114, %c2_115, %c0_116, %c0_117] : memref<1x10x8x96xbf16, #tpu.memory_space<vmem>>, vector<1x8x8x96xbf16>
    %72 = vector.shape_cast %71 : vector<1x8x8x96xbf16> to vector<64x96xbf16>
    %c2_118 = arith.constant 2 : index
    %c0_119 = arith.constant 0 : index
    %c0_120 = arith.constant 0 : index
    %73 = vector.load %arg4[%c2_118, %c0_119, %c0_120] : memref<3x96x64xbf16, #tpu.memory_space<vmem>>, vector<1x96x64xbf16>
    %74 = vector.shape_cast %73 : vector<1x96x64xbf16> to vector<96x64xbf16>
    %cst_121 = arith.constant dense<0.000000e+00> : vector<64x64xf32>
    %75 = tpu.matmul %72, %74, %cst_121 {dimension_numbers = #tpu.dot_dimension_numbers<[1], [0], [0], [1], [0, 0, 1, 1], [], []>} : vector<64x96xbf16>, vector<96x64xbf16>, vector<64x64xf32> -> vector<64x64xf32>
    %76 = arith.addf %70, %75 : vector<64x64xf32>
    %c0_122 = arith.constant 0 : index
    %c0_123 = arith.constant 0 : index
    %77 = vector.load %arg5[%c0_122, %c0_123] : memref<1x64xf32, #tpu.memory_space<vmem>>, vector<1x64xf32>
    %78 = vector.broadcast %77 : vector<1x64xf32> to vector<64x64xf32>
    %79 = arith.addf %76, %78 : vector<64x64xf32>
    %cst_124 = arith.constant 0.000000e+00 : f32
    %80 = vector.broadcast %cst_124 : f32 to vector<64x64xf32>
    %81 = arith.maximumf %79, %80 : vector<64x64xf32>
    %82 = vector.shape_cast %81 : vector<64x64xf32> to vector<32x2x64xf32>
    %cst_125 = arith.constant dense<0xFF800000> : vector<32x64xf32>
    %83 = vector.multi_reduction <maximumf>, %82, %cst_125 [1] : vector<32x2x64xf32> to vector<32x64xf32>
    %84 = vector.shape_cast %83 : vector<32x64xf32> to vector<1x4x2x4x64xf32>
    %cst_126 = arith.constant dense<0xFF800000> : vector<1x4x4x64xf32>
    %85 = vector.multi_reduction <maximumf>, %84, %cst_126 [2] : vector<1x4x2x4x64xf32> to vector<1x4x4x64xf32>
    %86 = arith.truncf %85 : vector<1x4x4x64xf32> to vector<1x4x4x64xbf16>
    %c0_127 = arith.constant 0 : index
    %c1_128 = arith.constant 1 : index
    %c0_129 = arith.constant 0 : index
    %c64_130 = arith.constant 64 : index
    %87 = vector.load %arg13[%c0_127, %c1_128, %c0_129, %c64_130] : memref<1x6x4x192xbf16, #tpu.memory_space<vmem>>, vector<1x4x4x64xbf16>
    tpu.vector_store %arg13[%c0_127, %c1_128, %c0_129, %c64_130], %86 {strides = array<i32>} : memref<1x6x4x192xbf16, #tpu.memory_space<vmem>>, vector<1x4x4x64xbf16>,
    %88 = vector.extract_strided_slice %86 {offsets = [0, 0, 0, 0], sizes = [1, 4, 3, 64], strides = [1, 1, 1, 1]} : vector<1x4x4x64xbf16> to vector<1x4x3x64xbf16>
    %c0_131 = arith.constant 0 : index
    %c1_132 = arith.constant 1 : index
    %c1_133 = arith.constant 1 : index
    %c0_134 = arith.constant 0 : index
    %89 = vector.load %arg13[%c0_131, %c1_132, %c1_133, %c0_134] : memref<1x6x4x192xbf16, #tpu.memory_space<vmem>>, vector<1x4x3x64xbf16>
    tpu.vector_store %arg13[%c0_131, %c1_132, %c1_133, %c0_134], %88 {strides = array<i32>} : memref<1x6x4x192xbf16, #tpu.memory_space<vmem>>, vector<1x4x3x64xbf16>,
    %90 = vector.extract_strided_slice %86 {offsets = [0, 0, 1, 0], sizes = [1, 4, 3, 64], strides = [1, 1, 1, 1]} : vector<1x4x4x64xbf16> to vector<1x4x3x64xbf16>
    %c0_135 = arith.constant 0 : index
    %c1_136 = arith.constant 1 : index
    %c0_137 = arith.constant 0 : index
    %c128_138 = arith.constant 128 : index
    %91 = vector.load %arg13[%c0_135, %c1_136, %c0_137, %c128_138] : memref<1x6x4x192xbf16, #tpu.memory_space<vmem>>, vector<1x4x3x64xbf16>
    tpu.vector_store %arg13[%c0_135, %c1_136, %c0_137, %c128_138], %90 {strides = array<i32>} : memref<1x6x4x192xbf16, #tpu.memory_space<vmem>>, vector<1x4x3x64xbf16>,
    %cst_139 = arith.constant 0.000000e+00 : f32
    %92 = vector.broadcast %cst_139 : f32 to vector<1x32xf32>
    %cst_140 = arith.constant 0.000000e+00 : f32
    %93 = vector.broadcast %cst_140 : f32 to vector<16x128xf32>
    %c0_141 = arith.constant 0 : index
    %c0_142 = arith.constant 0 : index
    %c0_143 = arith.constant 0 : index
    %c0_144 = arith.constant 0 : index
    %94 = vector.load %arg13[%c0_141, %c0_142, %c0_143, %c0_144] : memref<1x6x4x192xbf16, #tpu.memory_space<vmem>>, vector<1x4x4x192xbf16>
    %95 = vector.shape_cast %94 : vector<1x4x4x192xbf16> to vector<16x192xbf16>
    %c0_145 = arith.constant 0 : index
    %c0_146 = arith.constant 0 : index
    %c0_147 = arith.constant 0 : index
    %96 = vector.load %arg6[%c0_145, %c0_146, %c0_147] : memref<3x192x128xbf16, #tpu.memory_space<vmem>>, vector<1x192x128xbf16>
    %97 = vector.shape_cast %96 : vector<1x192x128xbf16> to vector<192x128xbf16>
    %cst_148 = arith.constant dense<0.000000e+00> : vector<16x128xf32>
    %98 = tpu.matmul %95, %97, %cst_148 {dimension_numbers = #tpu.dot_dimension_numbers<[1], [0], [0], [1], [0, 0, 1, 1], [], []>} : vector<16x192xbf16>, vector<192x128xbf16>, vector<16x128xf32> -> vector<16x128xf32>
    %99 = arith.addf %93, %98 : vector<16x128xf32>
    %c0_149 = arith.constant 0 : index
    %c1_150 = arith.constant 1 : index
    %c0_151 = arith.constant 0 : index
    %c0_152 = arith.constant 0 : index
    %100 = vector.load %arg13[%c0_149, %c1_150, %c0_151, %c0_152] : memref<1x6x4x192xbf16, #tpu.memory_space<vmem>>, vector<1x4x4x192xbf16>
    %101 = vector.shape_cast %100 : vector<1x4x4x192xbf16> to vector<16x192xbf16>
    %c1_153 = arith.constant 1 : index
    %c0_154 = arith.constant 0 : index
    %c0_155 = arith.constant 0 : index
    %102 = vector.load %arg6[%c1_153, %c0_154, %c0_155] : memref<3x192x128xbf16, #tpu.memory_space<vmem>>, vector<1x192x128xbf16>
    %103 = vector.shape_cast %102 : vector<1x192x128xbf16> to vector<192x128xbf16>
    %cst_156 = arith.constant dense<0.000000e+00> : vector<16x128xf32>
    %104 = tpu.matmul %101, %103, %cst_156 {dimension_numbers = #tpu.dot_dimension_numbers<[1], [0], [0], [1], [0, 0, 1, 1], [], []>} : vector<16x192xbf16>, vector<192x128xbf16>, vector<16x128xf32> -> vector<16x128xf32>
    %105 = arith.addf %99, %104 : vector<16x128xf32>
    %c0_157 = arith.constant 0 : index
    %c2_158 = arith.constant 2 : index
    %c0_159 = arith.constant 0 : index
    %c0_160 = arith.constant 0 : index
    %106 = vector.load %arg13[%c0_157, %c2_158, %c0_159, %c0_160] : memref<1x6x4x192xbf16, #tpu.memory_space<vmem>>, vector<1x4x4x192xbf16>
    %107 = vector.shape_cast %106 : vector<1x4x4x192xbf16> to vector<16x192xbf16>
    %c2_161 = arith.constant 2 : index
    %c0_162 = arith.constant 0 : index
    %c0_163 = arith.constant 0 : index
    %108 = vector.load %arg6[%c2_161, %c0_162, %c0_163] : memref<3x192x128xbf16, #tpu.memory_space<vmem>>, vector<1x192x128xbf16>
    %109 = vector.shape_cast %108 : vector<1x192x128xbf16> to vector<192x128xbf16>
    %cst_164 = arith.constant dense<0.000000e+00> : vector<16x128xf32>
    %110 = tpu.matmul %107, %109, %cst_164 {dimension_numbers = #tpu.dot_dimension_numbers<[1], [0], [0], [1], [0, 0, 1, 1], [], []>} : vector<16x192xbf16>, vector<192x128xbf16>, vector<16x128xf32> -> vector<16x128xf32>
    %111 = arith.addf %105, %110 : vector<16x128xf32>
    %c0_165 = arith.constant 0 : index
    %c0_166 = arith.constant 0 : index
    %112 = vector.load %arg7[%c0_165, %c0_166] : memref<1x128xf32, #tpu.memory_space<vmem>>, vector<1x128xf32>
    %113 = vector.broadcast %112 : vector<1x128xf32> to vector<16x128xf32>
    %114 = arith.addf %111, %113 : vector<16x128xf32>
    %cst_167 = arith.constant 0.000000e+00 : f32
    %115 = vector.broadcast %cst_167 : f32 to vector<16x128xf32>
    %116 = arith.maximumf %114, %115 : vector<16x128xf32>
    %117 = vector.shape_cast %116 : vector<16x128xf32> to vector<8x2x128xf32>
    %cst_168 = arith.constant dense<0xFF800000> : vector<8x128xf32>
    %118 = vector.multi_reduction <maximumf>, %117, %cst_168 [1] : vector<8x2x128xf32> to vector<8x128xf32>
    %119 = vector.shape_cast %118 : vector<8x128xf32> to vector<1x2x2x2x128xf32>
    %cst_169 = arith.constant dense<0xFF800000> : vector<1x2x2x128xf32>
    %120 = vector.multi_reduction <maximumf>, %119, %cst_169 [2] : vector<1x2x2x2x128xf32> to vector<1x2x2x128xf32>
    %121 = arith.truncf %120 : vector<1x2x2x128xf32> to vector<1x2x2x128xbf16>
    %122 = vector.extract_strided_slice %121 {offsets = [0, 0, 0, 0], sizes = [1, 1, 1, 128], strides = [1, 1, 1, 1]} : vector<1x2x2x128xbf16> to vector<1x1x1x128xbf16>
    %123 = vector.shape_cast %122 : vector<1x1x1x128xbf16> to vector<1x128xbf16>
    %c0_170 = arith.constant 0 : index
    %c0_171 = arith.constant 0 : index
    %c0_172 = arith.constant 0 : index
    %c0_173 = arith.constant 0 : index
    %124 = vector.load %arg8[%c0_170, %c0_171, %c0_172, %c0_173] : memref<2x2x128x32xbf16, #tpu.memory_space<vmem>>, vector<1x1x128x32xbf16>
    %125 = vector.shape_cast %124 : vector<1x1x128x32xbf16> to vector<128x32xbf16>
    %cst_174 = arith.constant dense<0.000000e+00> : vector<1x32xf32>
    %126 = tpu.matmul %123, %125, %cst_174 {dimension_numbers = #tpu.dot_dimension_numbers<[1], [0], [0], [1], [0, 0, 1, 1], [], []>} : vector<1x128xbf16>, vector<128x32xbf16>, vector<1x32xf32> -> vector<1x32xf32>
    %127 = arith.addf %92, %126 : vector<1x32xf32>
    %128 = vector.extract_strided_slice %121 {offsets = [0, 0, 1, 0], sizes = [1, 1, 1, 128], strides = [1, 1, 1, 1]} : vector<1x2x2x128xbf16> to vector<1x1x1x128xbf16>
    %129 = vector.shape_cast %128 : vector<1x1x1x128xbf16> to vector<1x128xbf16>
    %c0_175 = arith.constant 0 : index
    %c1_176 = arith.constant 1 : index
    %c0_177 = arith.constant 0 : index
    %c0_178 = arith.constant 0 : index
    %130 = vector.load %arg8[%c0_175, %c1_176, %c0_177, %c0_178] : memref<2x2x128x32xbf16, #tpu.memory_space<vmem>>, vector<1x1x128x32xbf16>
    %131 = vector.shape_cast %130 : vector<1x1x128x32xbf16> to vector<128x32xbf16>
    %cst_179 = arith.constant dense<0.000000e+00> : vector<1x32xf32>
    %132 = tpu.matmul %129, %131, %cst_179 {dimension_numbers = #tpu.dot_dimension_numbers<[1], [0], [0], [1], [0, 0, 1, 1], [], []>} : vector<1x128xbf16>, vector<128x32xbf16>, vector<1x32xf32> -> vector<1x32xf32>
    %133 = arith.addf %127, %132 : vector<1x32xf32>
    %134 = vector.extract_strided_slice %121 {offsets = [0, 1, 0, 0], sizes = [1, 1, 1, 128], strides = [1, 1, 1, 1]} : vector<1x2x2x128xbf16> to vector<1x1x1x128xbf16>
    %135 = vector.shape_cast %134 : vector<1x1x1x128xbf16> to vector<1x128xbf16>
    %c1_180 = arith.constant 1 : index
    %c0_181 = arith.constant 0 : index
    %c0_182 = arith.constant 0 : index
    %c0_183 = arith.constant 0 : index
    %136 = vector.load %arg8[%c1_180, %c0_181, %c0_182, %c0_183] : memref<2x2x128x32xbf16, #tpu.memory_space<vmem>>, vector<1x1x128x32xbf16>
    %137 = vector.shape_cast %136 : vector<1x1x128x32xbf16> to vector<128x32xbf16>
    %cst_184 = arith.constant dense<0.000000e+00> : vector<1x32xf32>
    %138 = tpu.matmul %135, %137, %cst_184 {dimension_numbers = #tpu.dot_dimension_numbers<[1], [0], [0], [1], [0, 0, 1, 1], [], []>} : vector<1x128xbf16>, vector<128x32xbf16>, vector<1x32xf32> -> vector<1x32xf32>
    %139 = arith.addf %133, %138 : vector<1x32xf32>
    %140 = vector.extract_strided_slice %121 {offsets = [0, 1, 1, 0], sizes = [1, 1, 1, 128], strides = [1, 1, 1, 1]} : vector<1x2x2x128xbf16> to vector<1x1x1x128xbf16>
    %141 = vector.shape_cast %140 : vector<1x1x1x128xbf16> to vector<1x128xbf16>
    %c1_185 = arith.constant 1 : index
    %c1_186 = arith.constant 1 : index
    %c0_187 = arith.constant 0 : index
    %c0_188 = arith.constant 0 : index
    %142 = vector.load %arg8[%c1_185, %c1_186, %c0_187, %c0_188] : memref<2x2x128x32xbf16, #tpu.memory_space<vmem>>, vector<1x1x128x32xbf16>
    %143 = vector.shape_cast %142 : vector<1x1x128x32xbf16> to vector<128x32xbf16>
    %cst_189 = arith.constant dense<0.000000e+00> : vector<1x32xf32>
    %144 = tpu.matmul %141, %143, %cst_189 {dimension_numbers = #tpu.dot_dimension_numbers<[1], [0], [0], [1], [0, 0, 1, 1], [], []>} : vector<1x128xbf16>, vector<128x32xbf16>, vector<1x32xf32> -> vector<1x32xf32>
    %145 = arith.addf %139, %144 : vector<1x32xf32>
    %c0_190 = arith.constant 0 : index
    %c0_191 = arith.constant 0 : index
    %146 = vector.load %arg9[%c0_190, %c0_191] : memref<1x32xf32, #tpu.memory_space<vmem>>, vector<1x32xf32>
    %147 = arith.addf %145, %146 : vector<1x32xf32>
    %148 = vector.shape_cast %147 : vector<1x32xf32> to vector<1x1x32xf32>
    %c0_192 = arith.constant 0 : index
    %c0_193 = arith.constant 0 : index
    %c0_194 = arith.constant 0 : index
    %149 = vector.load %arg10[%c0_192, %c0_193, %c0_194] : memref<1x1x32xf32, #tpu.memory_space<vmem>>, vector<1x1x32xf32>
    tpu.vector_store %arg10[%c0_192, %c0_193, %c0_194], %148 {strides = array<i32>} : memref<1x1x32xf32, #tpu.memory_space<vmem>>, vector<1x1x32xf32>,
    return
  }
  func.func @transform_0(%arg0: i32) -> (i32, i32, i32, i32) {
    %c0_i32 = arith.constant 0 : i32
    %c0_i32_0 = arith.constant 0 : i32
    %c0_i32_1 = arith.constant 0 : i32
    %c0_i32_2 = arith.constant 0 : i32
    return %arg0, %c0_i32, %c0_i32_0, %c0_i32_1 : i32, i32, i32, i32
  }
  func.func @transform_1(%arg0: i32) -> (i32, i32, i32) {
    %c0_i32 = arith.constant 0 : i32
    %c0_i32_0 = arith.constant 0 : i32
    %c0_i32_1 = arith.constant 0 : i32
    %c0_i32_2 = arith.constant 0 : i32
    return %c0_i32, %c0_i32_0, %c0_i32_1 : i32, i32, i32
  }
  func.func @transform_2(%arg0: i32) -> (i32, i32) {
    %c0_i32 = arith.constant 0 : i32
    %c0_i32_0 = arith.constant 0 : i32
    %c0_i32_1 = arith.constant 0 : i32
    return %c0_i32, %c0_i32_0 : i32, i32
  }
  func.func @transform_3(%arg0: i32) -> (i32, i32, i32) {
    %c0_i32 = arith.constant 0 : i32
    %c0_i32_0 = arith.constant 0 : i32
    %c0_i32_1 = arith.constant 0 : i32
    %c0_i32_2 = arith.constant 0 : i32
    return %c0_i32, %c0_i32_0, %c0_i32_1 : i32, i32, i32
  }
  func.func @transform_4(%arg0: i32) -> (i32, i32) {
    %c0_i32 = arith.constant 0 : i32
    %c0_i32_0 = arith.constant 0 : i32
    %c0_i32_1 = arith.constant 0 : i32
    return %c0_i32, %c0_i32_0 : i32, i32
  }
  func.func @transform_5(%arg0: i32) -> (i32, i32, i32) {
    %c0_i32 = arith.constant 0 : i32
    %c0_i32_0 = arith.constant 0 : i32
    %c0_i32_1 = arith.constant 0 : i32
    %c0_i32_2 = arith.constant 0 : i32
    return %c0_i32, %c0_i32_0, %c0_i32_1 : i32, i32, i32
  }
  func.func @transform_6(%arg0: i32) -> (i32, i32) {
    %c0_i32 = arith.constant 0 : i32
    %c0_i32_0 = arith.constant 0 : i32
    %c0_i32_1 = arith.constant 0 : i32
    return %c0_i32, %c0_i32_0 : i32, i32
  }
  func.func @transform_7(%arg0: i32) -> (i32, i32, i32, i32) {
    %c0_i32 = arith.constant 0 : i32
    %c0_i32_0 = arith.constant 0 : i32
    %c0_i32_1 = arith.constant 0 : i32
    %c0_i32_2 = arith.constant 0 : i32
    %c0_i32_3 = arith.constant 0 : i32
    return %c0_i32, %c0_i32_0, %c0_i32_1, %c0_i32_2 : i32, i32, i32, i32
  }
  func.func @transform_8(%arg0: i32) -> (i32, i32) {
    %c0_i32 = arith.constant 0 : i32
    %c0_i32_0 = arith.constant 0 : i32
    %c0_i32_1 = arith.constant 0 : i32
    return %c0_i32, %c0_i32_0 : i32, i32
  }
  func.func @transform_9(%arg0: i32) -> (i32, i32, i32) {
    %c0_i32 = arith.constant 0 : i32
    %c0_i32_0 = arith.constant 0 : i32
    %c0_i32_1 = arith.constant 0 : i32
    return %arg0, %c0_i32, %c0_i32_0 : i32, i32, i32
  }
}

</mosaic_0001>

<llo_original>
// kernel: tpu_custom_call.1
$region0: #{tpu_custom_call.1}
  #allocation0 [shape = 'u32[]', space=smem, size = 0x4, offset = 0x4, fixed_abs, tag = 'smem constant byte address 0x4 - core index']
  #allocation1 [shape = 'u32[144,128]{1,0:T(1,128)}', space=vmem, size = 0x12000, scoped, tag = 'internal scratch']
  #allocation2 [shape = 'bf16[1,18,16,12]{3,2,1,0:T(8,128)(2,1)}', space=vmem, size = 0x12000, scoped, tag = 'scratch operand']
  #allocation3 [shape = 'bf16[1,10,8,96]{3,2,1,0:T(8,128)(2,1)}', space=vmem, size = 0x5000, scoped, tag = 'scratch operand']
  #allocation4 [shape = 'bf16[1,6,4,192]{3,2,1,0:T(4,128)(2,1)}', space=vmem, size = 0x3000, scoped, tag = 'scratch operand']
  %s0 = inlined_call_operand.vmem [shape: bf16[2,16,16,4], index: 0, kind: input, shape index: {}]
  %s1 = inlined_call_operand.vmem [shape: bf16[3,12,32], index: 1, kind: input, shape index: {}]
  %s2 = inlined_call_operand.vmem [shape: f32[1,32], index: 2, kind: input, shape index: {}]
  %s3 = inlined_call_operand.vmem [shape: bf16[3,96,64], index: 3, kind: input, shape index: {}]
  %s4 = inlined_call_operand.vmem [shape: f32[1,64], index: 4, kind: input, shape index: {}]
  %s5 = inlined_call_operand.vmem [shape: bf16[3,192,128], index: 5, kind: input, shape index: {}]
  %s6 = inlined_call_operand.vmem [shape: f32[1,128], index: 6, kind: input, shape index: {}]
  %s7 = inlined_call_operand.vmem [shape: bf16[2,2,128,32], index: 7, kind: input, shape index: {}]
  %s8 = inlined_call_operand.vmem [shape: f32[1,32], index: 8, kind: input, shape index: {}]
  %s9 = inlined_call_operand.hbm [shape: f32[2,1,32], index: 9, kind: output, shape index: {}]
  %s10 = sld [smem:[#allocation0]]
  $region69: #{tpu_custom_call.1} parent=0
    _
  %s12 = ssub.s32 1, %s10
  %s13 = scalar_select 0, %s12, %s10
  $region1: #{tpu_custom_call.1} parent=0
    #allocation5 [shape = 'u8[1024]{0}', space=vmem, size = 0x400, scoped, tag = 'output window, operand 0']
    #allocation6 [shape = 's32[2]{0}', space=sflag, size = 0x8, scoped, tag = 'scoped memory for tpu_custom_call.1']
    %14 = vsyncpa [#allocation6], 0
    %s15 = scalar_lea.sflag [#allocation6], 1
    %16 = vsyncpa %s15, 0
    loop: start=0, step=1, limit=4
    $region2: #{tpu_custom_call.1} parent=1 // loop_pre_header
      _
    $region3: #{tpu_custom_call.1} parent=1 // loop_header
      %s18 = sphi 0, %s22
      %p19 = scmp.ge.s32.totalorder %s18, 4
      %s28 = sphi 0, %s30
      %s31 = sphi 0, %s28
      %s32 = sphi 0, %s31
      %s48 = sphi 0, %s32
      %s52 = sphi 0, %s52
      %s54 = sphi 0, %s52
      %s55 = sphi 0, %s54
      %s69 = sphi 0, %s55
      %s73 = sphi 0, %s73
      %s75 = sphi 0, %s73
      %s76 = sphi 0, %s75
      %s90 = sphi 0, %s76
      %s94 = sphi 0, %s94
      %s96 = sphi 0, %s94
      %s97 = sphi 0, %s96
      %s111 = sphi 0, %s97
      %s115 = sphi 0, %s115
      %s117 = sphi 0, %s115
      %s118 = sphi 0, %s117
      %s132 = sphi 0, %s118
      %s136 = sphi 0, %s136
      %s138 = sphi 0, %s136
      %s139 = sphi 0, %s138
      %s153 = sphi 0, %s139
      %s157 = sphi 0, %s157
      %s159 = sphi 0, %s157
      %s160 = sphi 0, %s159
      %s174 = sphi 0, %s160
      %s178 = sphi 0, %s178
      %s180 = sphi 0, %s178
      %s181 = sphi 0, %s180
      %s195 = sphi 0, %s181
      %s199 = sphi 0, %s199
      %s201 = sphi 0, %s199
      %s202 = sphi 0, %s201
      %s216 = sphi 0, %s202
      %s222 = sphi 0, %s224
      %s225 = sphi 0, %s222
      %s226 = sphi 0, %s225
      %s242 = sphi 0, %s226
    $region4: #{tpu_custom_call.1} parent=1 // loop_header_branch
      %21 = sbr.rel (%p19) target = $region8
    $region5: #{tpu_custom_call.1} parent=1 // loop_body
      %s23 = ssub.s32 %s18, 1
      %s24 = ssub.s32 %s18, 2
      %s25 = sadd.s32 %s18, 1
      %s26 = ssub.s32 %s18, %s25
      %p27 = scmp.eq.s32.totalorder %s26, 0
      %s29 = sadd.s32 %s28, 1
      %s30 = scalar_select %p27, %s28, %s29
      %p33 = pneg %p27
      %p34 = scmp.eq.s32.totalorder %s18, 1
      %p35 = por %p33, %p34
      %p36 = scmp.ne.s32.totalorder %s28, %s31
      %p37 = scmp.eq.s32.totalorder %s18, 0
      %p38 = por %p36, %p37
      %p39 = scmp.ne.s32.totalorder %s28, %s31
      %p40 = scmp.eq.s32.totalorder %s23, 1
      %p41 = por %p39, %p40
      %p42 = scmp.ne.s32.totalorder %s31, %s32
      %p43 = scmp.eq.s32.totalorder %s23, 0
      %p44 = por %p42, %p43
      %p45 = scmp.ne.s32.totalorder %s31, %s32
      %p46 = scmp.eq.s32.totalorder %s24, 1
      %p47 = por %p45, %p46
      %p49 = scmp.ne.s32.totalorder %s32, %s48
      %p50 = scmp.eq.s32.totalorder %s24, 0
      %p51 = por %p49, %p50
      %s53 = sadd.s32 %s52, 1
      %p56 = scmp.eq.s32.totalorder %s18, 1
      %p57 = scmp.ne.s32.totalorder %s52, %s54
      %p58 = scmp.eq.s32.totalorder %s18, 0
      %p59 = por %p57, %p58
      %p60 = scmp.ne.s32.totalorder %s52, %s54
      %p61 = scmp.eq.s32.totalorder %s23, 1
      %p62 = por %p60, %p61
      %p63 = scmp.ne.s32.totalorder %s54, %s55
      %p64 = scmp.eq.s32.totalorder %s23, 0
      %p65 = por %p63, %p64
      %p66 = scmp.ne.s32.totalorder %s54, %s55
      %p67 = scmp.eq.s32.totalorder %s24, 1
      %p68 = por %p66, %p67
      %p70 = scmp.ne.s32.totalorder %s55, %s69
      %p71 = scmp.eq.s32.totalorder %s24, 0
      %p72 = por %p70, %p71
      %s74 = sadd.s32 %s73, 1
      %p77 = scmp.eq.s32.totalorder %s18, 1
      %p78 = scmp.ne.s32.totalorder %s73, %s75
      %p79 = scmp.eq.s32.totalorder %s18, 0
      %p80 = por %p78, %p79
      %p81 = scmp.ne.s32.totalorder %s73, %s75
      %p82 = scmp.eq.s32.totalorder %s23, 1
      %p83 = por %p81, %p82
      %p84 = scmp.ne.s32.totalorder %s75, %s76
      %p85 = scmp.eq.s32.totalorder %s23, 0
      %p86 = por %p84, %p85
      %p87 = scmp.ne.s32.totalorder %s75, %s76
      %p88 = scmp.eq.s32.totalorder %s24, 1
      %p89 = por %p87, %p88
      %p91 = scmp.ne.s32.totalorder %s76, %s90
      %p92 = scmp.eq.s32.totalorder %s24, 0
      %p93 = por %p91, %p92
      %s95 = sadd.s32 %s94, 1
      %p98 = scmp.eq.s32.totalorder %s18, 1
      %p99 = scmp.ne.s32.totalorder %s94, %s96
      %p100 = scmp.eq.s32.totalorder %s18, 0
      %p101 = por %p99, %p100
      %p102 = scmp.ne.s32.totalorder %s94, %s96
      %p103 = scmp.eq.s32.totalorder %s23, 1
      %p104 = por %p102, %p103
      %p105 = scmp.ne.s32.totalorder %s96, %s97
      %p106 = scmp.eq.s32.totalorder %s23, 0
      %p107 = por %p105, %p106
      %p108 = scmp.ne.s32.totalorder %s96, %s97
      %p109 = scmp.eq.s32.totalorder %s24, 1
      %p110 = por %p108, %p109
      %p112 = scmp.ne.s32.totalorder %s97, %s111
      %p113 = scmp.eq.s32.totalorder %s24, 0
      %p114 = por %p112, %p113
      %s116 = sadd.s32 %s115, 1
      %p119 = scmp.eq.s32.totalorder %s18, 1
      %p120 = scmp.ne.s32.totalorder %s115, %s117
      %p121 = scmp.eq.s32.totalorder %s18, 0
      %p122 = por %p120, %p121
      %p123 = scmp.ne.s32.totalorder %s115, %s117
      %p124 = scmp.eq.s32.totalorder %s23, 1
      %p125 = por %p123, %p124
      %p126 = scmp.ne.s32.totalorder %s117, %s118
      %p127 = scmp.eq.s32.totalorder %s23, 0
      %p128 = por %p126, %p127
      %p129 = scmp.ne.s32.totalorder %s117, %s118
      %p130 = scmp.eq.s32.totalorder %s24, 1
      %p131 = por %p129, %p130
      %p133 = scmp.ne.s32.totalorder %s118, %s132
      %p134 = scmp.eq.s32.totalorder %s24, 0
      %p135 = por %p133, %p134
      %s137 = sadd.s32 %s136, 1
      %p140 = scmp.eq.s32.totalorder %s18, 1
      %p141 = scmp.ne.s32.totalorder %s136, %s138
      %p142 = scmp.eq.s32.totalorder %s18, 0
      %p143 = por %p141, %p142
      %p144 = scmp.ne.s32.totalorder %s136, %s138
      %p145 = scmp.eq.s32.totalorder %s23, 1
      %p146 = por %p144, %p145
      %p147 = scmp.ne.s32.totalorder %s138, %s139
      %p148 = scmp.eq.s32.totalorder %s23, 0
      %p149 = por %p147, %p148
      %p150 = scmp.ne.s32.totalorder %s138, %s139
      %p151 = scmp.eq.s32.totalorder %s24, 1
      %p152 = por %p150, %p151
      %p154 = scmp.ne.s32.totalorder %s139, %s153
      %p155 = scmp.eq.s32.totalorder %s24, 0
      %p156 = por %p154, %p155
      %s158 = sadd.s32 %s157, 1
      %p161 = scmp.eq.s32.totalorder %s18, 1
      %p162 = scmp.ne.s32.totalorder %s157, %s159
      %p163 = scmp.eq.s32.totalorder %s18, 0
      %p164 = por %p162, %p163
      %p165 = scmp.ne.s32.totalorder %s157, %s159
      %p166 = scmp.eq.s32.totalorder %s23, 1
      %p167 = por %p165, %p166
      %p168 = scmp.ne.s32.totalorder %s159, %s160
      %p169 = scmp.eq.s32.totalorder %s23, 0
      %p170 = por %p168, %p169
      %p171 = scmp.ne.s32.totalorder %s159, %s160
      %p172 = scmp.eq.s32.totalorder %s24, 1
      %p173 = por %p171, %p172
      %p175 = scmp.ne.s32.totalorder %s160, %s174
      %p176 = scmp.eq.s32.totalorder %s24, 0
      %p177 = por %p175, %p176
      %s179 = sadd.s32 %s178, 1
      %p182 = scmp.eq.s32.totalorder %s18, 1
      %p183 = scmp.ne.s32.totalorder %s178, %s180
      %p184 = scmp.eq.s32.totalorder %s18, 0
      %p185 = por %p183, %p184
      %p186 = scmp.ne.s32.totalorder %s178, %s180
      %p187 = scmp.eq.s32.totalorder %s23, 1
      %p188 = por %p186, %p187
      %p189 = scmp.ne.s32.totalorder %s180, %s181
      %p190 = scmp.eq.s32.totalorder %s23, 0
      %p191 = por %p189, %p190
      %p192 = scmp.ne.s32.totalorder %s180, %s181
      %p193 = scmp.eq.s32.totalorder %s24, 1
      %p194 = por %p192, %p193
      %p196 = scmp.ne.s32.totalorder %s181, %s195
      %p197 = scmp.eq.s32.totalorder %s24, 0
      %p198 = por %p196, %p197
      %s200 = sadd.s32 %s199, 1
      %p203 = scmp.eq.s32.totalorder %s18, 1
      %p204 = scmp.ne.s32.totalorder %s199, %s201
      %p205 = scmp.eq.s32.totalorder %s18, 0
      %p206 = por %p204, %p205
      %p207 = scmp.ne.s32.totalorder %s199, %s201
      %p208 = scmp.eq.s32.totalorder %s23, 1
      %p209 = por %p207, %p208
      %p210 = scmp.ne.s32.totalorder %s201, %s202
      %p211 = scmp.eq.s32.totalorder %s23, 0
      %p212 = por %p210, %p211
      %p213 = scmp.ne.s32.totalorder %s201, %s202
      %p214 = scmp.eq.s32.totalorder %s24, 1
      %p215 = por %p213, %p214
      %p217 = scmp.ne.s32.totalorder %s202, %s216
      %p218 = scmp.eq.s32.totalorder %s24, 0
      %p219 = por %p217, %p218
      %s220 = ssub.s32 %s18, %s25
      %p221 = scmp.eq.s32.totalorder %s220, 0
      %s223 = sadd.s32 %s222, 1
      %s224 = scalar_select %p221, %s222, %s223
      %p227 = pneg %p221
      %p228 = scmp.eq.s32.totalorder %s18, 1
      %p229 = por %p227, %p228
      %p230 = scmp.ne.s32.totalorder %s222, %s225
      %p231 = scmp.eq.s32.totalorder %s18, 0
      %p232 = por %p230, %p231
      %p233 = scmp.ne.s32.totalorder %s222, %s225
      %p234 = scmp.eq.s32.totalorder %s23, 1
      %p235 = por %p233, %p234
      %p236 = scmp.ne.s32.totalorder %s225, %s226
      %p237 = scmp.eq.s32.totalorder %s23, 0
      %p238 = por %p236, %p237
      %p239 = scmp.ne.s32.totalorder %s225, %s226
      %p240 = scmp.eq.s32.totalorder %s24, 1
      %p241 = por %p239, %p240
      %p243 = scmp.ne.s32.totalorder %s226, %s242
      %p244 = scmp.eq.s32.totalorder %s24, 0
      %p245 = por %p243, %p244
      %p246 = scmp.le.s32.totalorder 1, %s18
      %p247 = scmp.lt.s32.totalorder %s18, 3
      %p248 = pnand %p246, %p247
      %p249 = pneg %p248
      // Predicated region
      $region9: #{tpu_custom_call.1} parent=5 // pred_check
        _
      $region10: #{tpu_custom_call.1} parent=5 // pred_check_branch
        %251 = sbr.rel (%p248) target = $region12
      $region11: #{tpu_custom_call.1} parent=5 // pred_region
        %s252 = ssub.s32 %s18, 1
        // Predicated region
        $region13: #{tpu_custom_call.1} parent=11 // pred_check
          %p253 = pneg %p65
        $region14: #{tpu_custom_call.1} parent=11 // pred_check_branch
          %255 = sbr.rel (%p253) target = $region16
        $region15: #{tpu_custom_call.1} parent=11 // pred_region
          _
        $region16: #{tpu_custom_call.1} parent=11 // pred_fallthru
          _
        // Predicated region
        $region17: #{tpu_custom_call.1} parent=11 // pred_check
          %p256 = pneg %p86
        $region18: #{tpu_custom_call.1} parent=11 // pred_check_branch
          %258 = sbr.rel (%p256) target = $region20
        $region19: #{tpu_custom_call.1} parent=11 // pred_region
          _
        $region20: #{tpu_custom_call.1} parent=11 // pred_fallthru
          _
        // Predicated region
        $region21: #{tpu_custom_call.1} parent=11 // pred_check
          %p259 = pneg %p107
        $region22: #{tpu_custom_call.1} parent=11 // pred_check_branch
          %261 = sbr.rel (%p259) target = $region24
        $region23: #{tpu_custom_call.1} parent=11 // pred_region
          _
        $region24: #{tpu_custom_call.1} parent=11 // pred_fallthru
          _
        // Predicated region
        $region25: #{tpu_custom_call.1} parent=11 // pred_check
          %p262 = pneg %p128
        $region26: #{tpu_custom_call.1} parent=11 // pred_check_branch
          %264 = sbr.rel (%p262) target = $region28
        $region27: #{tpu_custom_call.1} parent=11 // pred_region
          _
        $region28: #{tpu_custom_call.1} parent=11 // pred_fallthru
          _
        // Predicated region
        $region29: #{tpu_custom_call.1} parent=11 // pred_check
          %p265 = pneg %p149
        $region30: #{tpu_custom_call.1} parent=11 // pred_check_branch
          %267 = sbr.rel (%p265) target = $region32
        $region31: #{tpu_custom_call.1} parent=11 // pred_region
          _
        $region32: #{tpu_custom_call.1} parent=11 // pred_fallthru
          _
        // Predicated region
        $region33: #{tpu_custom_call.1} parent=11 // pred_check
          %p268 = pneg %p170
        $region34: #{tpu_custom_call.1} parent=11 // pred_check_branch
          %270 = sbr.rel (%p268) target = $region36
        $region35: #{tpu_custom_call.1} parent=11 // pred_region
          _
        $region36: #{tpu_custom_call.1} parent=11 // pred_fallthru
          _
        // Predicated region
        $region37: #{tpu_custom_call.1} parent=11 // pred_check
          %p271 = pneg %p191
        $region38: #{tpu_custom_call.1} parent=11 // pred_check_branch
          %273 = sbr.rel (%p271) target = $region40
        $region39: #{tpu_custom_call.1} parent=11 // pred_region
          _
        $region40: #{tpu_custom_call.1} parent=11 // pred_fallthru
          _
        // Predicated region
        $region41: #{tpu_custom_call.1} parent=11 // pred_check
          %p274 = pneg %p212
        $region42: #{tpu_custom_call.1} parent=11 // pred_check_branch
          %276 = sbr.rel (%p274) target = $region44
        $region43: #{tpu_custom_call.1} parent=11 // pred_region
          _
        $region44: #{tpu_custom_call.1} parent=11 // pred_fallthru
          _
      $region12: #{tpu_custom_call.1} parent=5 // pred_fallthru
        _
      %p277 = scmp.lt.s32.totalorder %s18, 2
      // Predicated region
      $region45: #{tpu_custom_call.1} parent=5 // pred_check
        %p278 = pneg %p277
      $region46: #{tpu_custom_call.1} parent=5 // pred_check_branch
        %280 = sbr.rel (%p278) target = $region48
      $region47: #{tpu_custom_call.1} parent=5 // pred_region
        // Predicated region
        $region49: #{tpu_custom_call.1} parent=47 // pred_check
          %p281 = pneg %p38
        $region50: #{tpu_custom_call.1} parent=47 // pred_check_branch
          %283 = sbr.rel (%p281) target = $region52
        $region51: #{tpu_custom_call.1} parent=47 // pred_region
          %p284 = scmp.lt.s32.totalorder %s18, 1
          %s285 = scalar_select %p284, %s18, 1
          %s286 = smul.addr %s285, 32
          %s287 = smul.addr %s286, 4
          %s288 = scalar_lea.vmem %s0, %s287
        $region52: #{tpu_custom_call.1} parent=47 // pred_fallthru
          _
      $region48: #{tpu_custom_call.1} parent=5 // pred_fallthru
        _
      %p289 = scmp.le.s32.totalorder 1, %s18
      %p290 = scmp.lt.s32.totalorder %s18, 3
      %p291 = pnand %p289, %p290
      %p292 = pneg %p291
      // Predicated region
      $region53: #{tpu_custom_call.1} parent=5 // pred_check
        _
      $region54: #{tpu_custom_call.1} parent=5 // pred_check_branch
        %294 = sbr.rel (%p291) target = $region56
      $region55: #{tpu_custom_call.1} parent=5 // pred_region
        %s295 = ssub.s32 %s18, 1
        %p296 = scmp.lt.s32.totalorder %s23, 1
        %s297 = scalar_select %p296, %s23, 1
        %s298 = smul.addr %s297, 32
        %s299 = smul.addr %s298, 4
        %s300 = scalar_lea.vmem %s0, %s299
        %p301 = pneg %p44
        %p302 = pneg %p41
        %p303 = pneg %p65
        %p304 = pneg %p62
        %p305 = pneg %p86
        %p306 = pneg %p83
        %p307 = pneg %p107
        %p308 = pneg %p104
        %p309 = pneg %p128
        %p310 = pneg %p125
        %p311 = pneg %p149
        %p312 = pneg %p146
        %p313 = pneg %p170
        %p314 = pneg %p167
        %p315 = pneg %p191
        %p316 = pneg %p188
        %p317 = pneg %p212
        %p318 = pneg %p209
        %p319 = pneg %p238
        %p320 = pneg %p235
        %s321 = sand.u32 %s225, 1
        %s322 = scalar_lea.sflag [#allocation6], %s321
        %s323 = sand.u32 %s225, 1
        %s324 = scalar_lea.vmem [#allocation5], %s323
        %p325 = scmp.lt.s32.totalorder %s23, 1
        %s326 = scalar_select %p325, %s23, 1
        %s327 = smul.addr %s326, 32
        %s328 = smul.addr %s327, 4
        %s329 = scalar_lea.vmem %s0, %s328
        %vm331 = vcmask 93184
        %332 = vst.msk [vmem:[#allocation2] sm:$0xf] %vm331, 0
        %333 = vst.msk [vmem:[#allocation2 + $0x4] sm:$0xf] %vm331, 0
        %s334 = scalar_lea.vmem [#allocation2], 136
        %335 = vst.msk [vmem:[%s334] sm:$0xf] %vm331, 0
        %336 = vst.msk [vmem:[%s334 + $0x4] sm:$0xf] %vm331, 0
        %vm337 = vcmask 24576
        %vm338 = vsmask.f32 256
        %vm339 = vmand %vm337, %vm338
        %v340 = vld [vmem:[#allocation2] sm:$0x1]
        %v341 = vsel %vm339, 0, %v340
        %342 = vst [vmem:[#allocation2] sm:$0x1] %v341
        %v343 = vld [vmem:[#allocation2 + $0x8] sm:$0x1]
        %v344 = vsel %vm339, 0, %v343
        %345 = vst [vmem:[#allocation2 + $0x8] sm:$0x1] %v344
        %v346 = vld [vmem:[#allocation2 + $0x10] sm:$0x1]
        %v347 = vsel %vm339, 0, %v346
        %348 = vst [vmem:[#allocation2 + $0x10] sm:$0x1] %v347
        %v349 = vld [vmem:[#allocation2 + $0x18] sm:$0x1]
        %v350 = vsel %vm339, 0, %v349
        %351 = vst [vmem:[#allocation2 + $0x18] sm:$0x1] %v350
        %v352 = vld [vmem:[#allocation2 + $0x20] sm:$0x1]
        %v353 = vsel %vm339, 0, %v352
        %354 = vst [vmem:[#allocation2 + $0x20] sm:$0x1] %v353
        %v355 = vld [vmem:[#allocation2 + $0x28] sm:$0x1]
        %v356 = vsel %vm339, 0, %v355
        %357 = vst [vmem:[#allocation2 + $0x28] sm:$0x1] %v356
        %v358 = vld [vmem:[#allocation2 + $0x30] sm:$0x1]
        %v359 = vsel %vm339, 0, %v358
        %360 = vst [vmem:[#allocation2 + $0x30] sm:$0x1] %v359
        %v361 = vld [vmem:[#allocation2 + $0x38] sm:$0x1]
        %v362 = vsel %vm339, 0, %v361
        %363 = vst [vmem:[#allocation2 + $0x38] sm:$0x1] %v362
        %v364 = vld [vmem:[#allocation2 + $0x40] sm:$0x1]
        %v365 = vsel %vm339, 0, %v364
        %366 = vst [vmem:[#allocation2 + $0x40] sm:$0x1] %v365
        %v367 = vld [vmem:[#allocation2 + $0x48] sm:$0x1]
        %v368 = vsel %vm339, 0, %v367
        %369 = vst [vmem:[#allocation2 + $0x48] sm:$0x1] %v368
        %v370 = vld [vmem:[#allocation2 + $0x50] sm:$0x1]
        %v371 = vsel %vm339, 0, %v370
        %372 = vst [vmem:[#allocation2 + $0x50] sm:$0x1] %v371
        %v373 = vld [vmem:[#allocation2 + $0x58] sm:$0x1]
        %v374 = vsel %vm339, 0, %v373
        %375 = vst [vmem:[#allocation2 + $0x58] sm:$0x1] %v374
        %v376 = vld [vmem:[#allocation2 + $0x60] sm:$0x1]
        %v377 = vsel %vm339, 0, %v376
        %378 = vst [vmem:[#allocation2 + $0x60] sm:$0x1] %v377
        %v379 = vld [vmem:[#allocation2 + $0x68] sm:$0x1]
        %v380 = vsel %vm339, 0, %v379
        %381 = vst [vmem:[#allocation2 + $0x68] sm:$0x1] %v380
        %v382 = vld [vmem:[#allocation2 + $0x70] sm:$0x1]
        %v383 = vsel %vm339, 0, %v382
        %384 = vst [vmem:[#allocation2 + $0x70] sm:$0x1] %v383
        %v385 = vld [vmem:[#allocation2 + $0x78] sm:$0x1]
        %v386 = vsel %vm339, 0, %v385
        %387 = vst [vmem:[#allocation2 + $0x78] sm:$0x1] %v386
        %v388 = vld [vmem:[#allocation2 + $0x80] sm:$0x1]
        %v389 = vsel %vm339, 0, %v388
        %390 = vst [vmem:[#allocation2 + $0x80] sm:$0x1] %v389
        %v391 = vld [vmem:[#allocation2 + $0x88] sm:$0x1]
        %v392 = vsel %vm339, 0, %v391
        %393 = vst [vmem:[#allocation2 + $0x88] sm:$0x1] %v392
        %vm394 = vcmask 93251
        %vm395 = vsmask.f32 7950
        %vm396 = vmand %vm394, %vm395
        %v397 = vld [vmem:[#allocation2 + $0x4] sm:$0x8]
        %v398 = vsel %vm396, 0, %v397
        %399 = vst [vmem:[#allocation2 + $0x4] sm:$0x8] %v398
        %v400 = vld [vmem:[#allocation2 + $0xc] sm:$0x8]
        %v401 = vsel %vm396, 0, %v400
        %402 = vst [vmem:[#allocation2 + $0xc] sm:$0x8] %v401
        %v403 = vld [vmem:[#allocation2 + $0x14] sm:$0x8]
        %v404 = vsel %vm396, 0, %v403
        %405 = vst [vmem:[#allocation2 + $0x14] sm:$0x8] %v404
        %v406 = vld [vmem:[#allocation2 + $0x1c] sm:$0x8]
        %v407 = vsel %vm396, 0, %v406
        %408 = vst [vmem:[#allocation2 + $0x1c] sm:$0x8] %v407
        %v409 = vld [vmem:[#allocation2 + $0x24] sm:$0x8]
        %v410 = vsel %vm396, 0, %v409
        %411 = vst [vmem:[#allocation2 + $0x24] sm:$0x8] %v410
        %v412 = vld [vmem:[#allocation2 + $0x2c] sm:$0x8]
        %v413 = vsel %vm396, 0, %v412
        %414 = vst [vmem:[#allocation2 + $0x2c] sm:$0x8] %v413
        %v415 = vld [vmem:[#allocation2 + $0x34] sm:$0x8]
        %v416 = vsel %vm396, 0, %v415
        %417 = vst [vmem:[#allocation2 + $0x34] sm:$0x8] %v416
        %v418 = vld [vmem:[#allocation2 + $0x3c] sm:$0x8]
        %v419 = vsel %vm396, 0, %v418
        %420 = vst [vmem:[#allocation2 + $0x3c] sm:$0x8] %v419
        %v421 = vld [vmem:[#allocation2 + $0x44] sm:$0x8]
        %v422 = vsel %vm396, 0, %v421
        %423 = vst [vmem:[#allocation2 + $0x44] sm:$0x8] %v422
        %v424 = vld [vmem:[#allocation2 + $0x4c] sm:$0x8]
        %v425 = vsel %vm396, 0, %v424
        %426 = vst [vmem:[#allocation2 + $0x4c] sm:$0x8] %v425
        %v427 = vld [vmem:[#allocation2 + $0x54] sm:$0x8]
        %v428 = vsel %vm396, 0, %v427
        %429 = vst [vmem:[#allocation2 + $0x54] sm:$0x8] %v428
        %v430 = vld [vmem:[#allocation2 + $0x5c] sm:$0x8]
        %v431 = vsel %vm396, 0, %v430
        %432 = vst [vmem:[#allocation2 + $0x5c] sm:$0x8] %v431
        %v433 = vld [vmem:[#allocation2 + $0x64] sm:$0x8]
        %v434 = vsel %vm396, 0, %v433
        %435 = vst [vmem:[#allocation2 + $0x64] sm:$0x8] %v434
        %v436 = vld [vmem:[#allocation2 + $0x6c] sm:$0x8]
        %v437 = vsel %vm396, 0, %v436
        %438 = vst [vmem:[#allocation2 + $0x6c] sm:$0x8] %v437
        %v439 = vld [vmem:[#allocation2 + $0x74] sm:$0x8]
        %v440 = vsel %vm396, 0, %v439
        %441 = vst [vmem:[#allocation2 + $0x74] sm:$0x8] %v440
        %v442 = vld [vmem:[#allocation2 + $0x7c] sm:$0x8]
        %v443 = vsel %vm396, 0, %v442
        %444 = vst [vmem:[#allocation2 + $0x7c] sm:$0x8] %v443
        %v445 = vld [vmem:[#allocation2 + $0x84] sm:$0x8]
        %v446 = vsel %vm396, 0, %v445
        %447 = vst [vmem:[#allocation2 + $0x84] sm:$0x8] %v446
        %v448 = vld [vmem:[#allocation2 + $0x8c] sm:$0x8]
        %v449 = vsel %vm396, 0, %v448
        %450 = vst [vmem:[#allocation2 + $0x8c] sm:$0x8] %v449
        %vm451 = vcmask 781312
        %452 = vst.msk [vmem:[#allocation3] sm:$0xf] %vm451, 0
        %s453 = scalar_lea.vmem [#allocation3], 36
        %454 = vst.msk [vmem:[%s453] sm:$0xf] %vm451, 0
        %vm455 = vcmask 253952
        %vm456 = vmand %vm455, %vm338
        %v457 = vld [vmem:[#allocation3] sm:$0x1]
        %v458 = vsel %vm456, 0, %v457
        %459 = vst [vmem:[#allocation3] sm:$0x1] %v458
        %v460 = vld [vmem:[#allocation3 + $0x4] sm:$0x1]
        %v461 = vsel %vm456, 0, %v460
        %462 = vst [vmem:[#allocation3 + $0x4] sm:$0x1] %v461
        %v463 = vld [vmem:[#allocation3 + $0x8] sm:$0x1]
        %v464 = vsel %vm456, 0, %v463
        %465 = vst [vmem:[#allocation3 + $0x8] sm:$0x1] %v464
        %v466 = vld [vmem:[#allocation3 + $0xc] sm:$0x1]
        %v467 = vsel %vm456, 0, %v466
        %468 = vst [vmem:[#allocation3 + $0xc] sm:$0x1] %v467
        %v469 = vld [vmem:[#allocation3 + $0x10] sm:$0x1]
        %v470 = vsel %vm456, 0, %v469
        %471 = vst [vmem:[#allocation3 + $0x10] sm:$0x1] %v470
        %v472 = vld [vmem:[#allocation3 + $0x14] sm:$0x1]
        %v473 = vsel %vm456, 0, %v472
        %474 = vst [vmem:[#allocation3 + $0x14] sm:$0x1] %v473
        %v475 = vld [vmem:[#allocation3 + $0x18] sm:$0x1]
        %v476 = vsel %vm456, 0, %v475
        %477 = vst [vmem:[#allocation3 + $0x18] sm:$0x1] %v476
        %v478 = vld [vmem:[#allocation3 + $0x1c] sm:$0x1]
        %v479 = vsel %vm456, 0, %v478
        %480 = vst [vmem:[#allocation3 + $0x1c] sm:$0x1] %v479
        %v481 = vld [vmem:[#allocation3 + $0x20] sm:$0x1]
        %v482 = vsel %vm456, 0, %v481
        %483 = vst [vmem:[#allocation3 + $0x20] sm:$0x1] %v482
        %v484 = vld [vmem:[#allocation3 + $0x24] sm:$0x1]
        %v485 = vsel %vm456, 0, %v484
        %486 = vst [vmem:[#allocation3 + $0x24] sm:$0x1] %v485
        %vm487 = vcmask 781827
        %vm488 = vmand %vm487, %vm395
        %v489 = vld [vmem:[#allocation3] sm:$0x8]
        %v490 = vsel %vm488, 0, %v489
        %491 = vst [vmem:[#allocation3] sm:$0x8] %v490
        %v492 = vld [vmem:[#allocation3 + $0x4] sm:$0x8]
        %v493 = vsel %vm488, 0, %v492
        %494 = vst [vmem:[#allocation3 + $0x4] sm:$0x8] %v493
        %v495 = vld [vmem:[#allocation3 + $0x8] sm:$0x8]
        %v496 = vsel %vm488, 0, %v495
        %497 = vst [vmem:[#allocation3 + $0x8] sm:$0x8] %v496
        %v498 = vld [vmem:[#allocation3 + $0xc] sm:$0x8]
        %v499 = vsel %vm488, 0, %v498
        %500 = vst [vmem:[#allocation3 + $0xc] sm:$0x8] %v499
        %v501 = vld [vmem:[#allocation3 + $0x10] sm:$0x8]
        %v502 = vsel %vm488, 0, %v501
        %503 = vst [vmem:[#allocation3 + $0x10] sm:$0x8] %v502
        %v504 = vld [vmem:[#allocation3 + $0x14] sm:$0x8]
        %v505 = vsel %vm488, 0, %v504
        %506 = vst [vmem:[#allocation3 + $0x14] sm:$0x8] %v505
        %v507 = vld [vmem:[#allocation3 + $0x18] sm:$0x8]
        %v508 = vsel %vm488, 0, %v507
        %509 = vst [vmem:[#allocation3 + $0x18] sm:$0x8] %v508
        %v510 = vld [vmem:[#allocation3 + $0x1c] sm:$0x8]
        %v511 = vsel %vm488, 0, %v510
        %512 = vst [vmem:[#allocation3 + $0x1c] sm:$0x8] %v511
        %v513 = vld [vmem:[#allocation3 + $0x20] sm:$0x8]
        %v514 = vsel %vm488, 0, %v513
        %515 = vst [vmem:[#allocation3 + $0x20] sm:$0x8] %v514
        %v516 = vld [vmem:[#allocation3 + $0x24] sm:$0x8]
        %v517 = vsel %vm488, 0, %v516
        %518 = vst [vmem:[#allocation3 + $0x24] sm:$0x8] %v517
        %vm519 = vcmask 1041408
        %vm520 = vcmask 519170
        %vm521 = vmor %vm520, %vm519
        %522 = vst.msk [vmem:[#allocation4] sm:$0xf] %vm521, 0
        %s523 = scalar_lea.vmem [#allocation4], 20
        %524 = vst.msk [vmem:[%s523] sm:$0xf] %vm521, 0
        %vm525 = vcmask 516096
        %vm526 = vmand %vm525, %vm338
        %v527 = vld [vmem:[#allocation4] sm:$0x1]
        %v528 = vsel %vm526, 0, %v527
        %529 = vst [vmem:[#allocation4] sm:$0x1] %v528
        %v530 = vld [vmem:[#allocation4 + $0x4] sm:$0x1]
        %v531 = vsel %vm526, 0, %v530
        %532 = vst [vmem:[#allocation4 + $0x4] sm:$0x1] %v531
        %v533 = vld [vmem:[#allocation4 + $0x8] sm:$0x1]
        %v534 = vsel %vm526, 0, %v533
        %535 = vst [vmem:[#allocation4 + $0x8] sm:$0x1] %v534
        %v536 = vld [vmem:[#allocation4 + $0xc] sm:$0x1]
        %v537 = vsel %vm526, 0, %v536
        %538 = vst [vmem:[#allocation4 + $0xc] sm:$0x1] %v537
        %v539 = vld [vmem:[#allocation4 + $0x10] sm:$0x1]
        %v540 = vsel %vm526, 0, %v539
        %541 = vst [vmem:[#allocation4 + $0x10] sm:$0x1] %v540
        %v542 = vld [vmem:[#allocation4 + $0x14] sm:$0x1]
        %v543 = vsel %vm526, 0, %v542
        %544 = vst [vmem:[#allocation4 + $0x14] sm:$0x1] %v543
        %vm545 = vcmask 517121
        %vm546 = vsmask.f32 7942
        %vm547 = vmand %vm545, %vm546
        %v548 = vld [vmem:[#allocation4 + $0x2] sm:$0x2]
        %v549 = vsel %vm547, 0, %v548
        %550 = vst [vmem:[#allocation4 + $0x2] sm:$0x2] %v549
        %v551 = vld [vmem:[#allocation4 + $0x6] sm:$0x2]
        %v552 = vsel %vm547, 0, %v551
        %553 = vst [vmem:[#allocation4 + $0x6] sm:$0x2] %v552
        %v554 = vld [vmem:[#allocation4 + $0xa] sm:$0x2]
        %v555 = vsel %vm547, 0, %v554
        %556 = vst [vmem:[#allocation4 + $0xa] sm:$0x2] %v555
        %v557 = vld [vmem:[#allocation4 + $0xe] sm:$0x2]
        %v558 = vsel %vm547, 0, %v557
        %559 = vst [vmem:[#allocation4 + $0xe] sm:$0x2] %v558
        %v560 = vld [vmem:[#allocation4 + $0x12] sm:$0x2]
        %v561 = vsel %vm547, 0, %v560
        %562 = vst [vmem:[#allocation4 + $0x12] sm:$0x2] %v561
        %v563 = vld [vmem:[#allocation4 + $0x16] sm:$0x2]
        %v564 = vsel %vm547, 0, %v563
        %565 = vst [vmem:[#allocation4 + $0x16] sm:$0x2] %v564
        %v566 = vld [vmem:[%s329] sm:$0xf]
        %v567 = vld [vmem:[%s329 + $0x4] sm:$0xf]
        %v568 = vld [vmem:[%s329 + $0x8] sm:$0xf]
        %v569 = vld [vmem:[%s329 + $0xc] sm:$0xf]
        %v570 = vld [vmem:[%s329 + $0x10] sm:$0xf]
        %v571 = vld [vmem:[%s329 + $0x14] sm:$0xf]
        %v572 = vld [vmem:[%s329 + $0x18] sm:$0xf]
        %v573 = vld [vmem:[%s329 + $0x1c] sm:$0xf]
        %v574 = vld [vmem:[%s329 + $0x20] sm:$0xf]
        %v575 = vld [vmem:[%s329 + $0x24] sm:$0xf]
        %v576 = vld [vmem:[%s329 + $0x28] sm:$0xf]
        %v577 = vld [vmem:[%s329 + $0x2c] sm:$0xf]
        %v578 = vld [vmem:[%s329 + $0x30] sm:$0xf]
        %v579 = vld [vmem:[%s329 + $0x34] sm:$0xf]
        %v580 = vld [vmem:[%s329 + $0x38] sm:$0xf]
        %v581 = vld [vmem:[%s329 + $0x3c] sm:$0xf]
        %v582 = vld [vmem:[%s329 + $0x40] sm:$0xf]
        %v583 = vld [vmem:[%s329 + $0x44] sm:$0xf]
        %v584 = vld [vmem:[%s329 + $0x48] sm:$0xf]
        %v585 = vld [vmem:[%s329 + $0x4c] sm:$0xf]
        %v586 = vld [vmem:[%s329 + $0x50] sm:$0xf]
        %v587 = vld [vmem:[%s329 + $0x54] sm:$0xf]
        %v588 = vld [vmem:[%s329 + $0x58] sm:$0xf]
        %v589 = vld [vmem:[%s329 + $0x5c] sm:$0xf]
        %v590 = vld [vmem:[%s329 + $0x60] sm:$0xf]
        %v591 = vld [vmem:[%s329 + $0x64] sm:$0xf]
        %v592 = vld [vmem:[%s329 + $0x68] sm:$0xf]
        %v593 = vld [vmem:[%s329 + $0x6c] sm:$0xf]
        %v594 = vld [vmem:[%s329 + $0x70] sm:$0xf]
        %v595 = vld [vmem:[%s329 + $0x74] sm:$0xf]
        %v596 = vld [vmem:[%s329 + $0x78] sm:$0xf]
        %v597 = vld [vmem:[%s329 + $0x7c] sm:$0xf]
        %630 = vrot.lane.b32.xlu0 %v566, 4
        %v631 = vpop.permute.xlu0 %630
        %632 = vrot.lane.b32.xlu0 %v567, 4
        %v633 = vpop.permute.xlu0 %632
        %634 = vrot.lane.b32.xlu0 %v568, 4
        %v635 = vpop.permute.xlu0 %634
        %636 = vrot.lane.b32.xlu0 %v569, 4
        %v637 = vpop.permute.xlu0 %636
        %638 = vrot.lane.b32.xlu0 %v570, 4
        %v639 = vpop.permute.xlu0 %638
        %640 = vrot.lane.b32.xlu0 %v571, 4
        %v641 = vpop.permute.xlu0 %640
        %642 = vrot.lane.b32.xlu0 %v572, 4
        %v643 = vpop.permute.xlu0 %642
        %644 = vrot.lane.b32.xlu0 %v573, 4
        %v645 = vpop.permute.xlu0 %644
        %646 = vrot.lane.b32.xlu0 %v574, 4
        %v647 = vpop.permute.xlu0 %646
        %648 = vrot.lane.b32.xlu0 %v575, 4
        %v649 = vpop.permute.xlu0 %648
        %650 = vrot.lane.b32.xlu0 %v576, 4
        %v651 = vpop.permute.xlu0 %650
        %652 = vrot.lane.b32.xlu0 %v577, 4
        %v653 = vpop.permute.xlu0 %652
        %654 = vrot.lane.b32.xlu0 %v578, 4
        %v655 = vpop.permute.xlu0 %654
        %656 = vrot.lane.b32.xlu0 %v579, 4
        %v657 = vpop.permute.xlu0 %656
        %658 = vrot.lane.b32.xlu0 %v580, 4
        %v659 = vpop.permute.xlu0 %658
        %660 = vrot.lane.b32.xlu0 %v581, 4
        %v661 = vpop.permute.xlu0 %660
        %662 = vrot.lane.b32.xlu0 %v582, 4
        %v663 = vpop.permute.xlu0 %662
        %664 = vrot.lane.b32.xlu0 %v583, 4
        %v665 = vpop.permute.xlu0 %664
        %666 = vrot.lane.b32.xlu0 %v584, 4
        %v667 = vpop.permute.xlu0 %666
        %668 = vrot.lane.b32.xlu0 %v585, 4
        %v669 = vpop.permute.xlu0 %668
        %670 = vrot.lane.b32.xlu0 %v586, 4
        %v671 = vpop.permute.xlu0 %670
        %672 = vrot.lane.b32.xlu0 %v587, 4
        %v673 = vpop.permute.xlu0 %672
        %674 = vrot.lane.b32.xlu0 %v588, 4
        %v675 = vpop.permute.xlu0 %674
        %676 = vrot.lane.b32.xlu0 %v589, 4
        %v677 = vpop.permute.xlu0 %676
        %678 = vrot.lane.b32.xlu0 %v590, 4
        %v679 = vpop.permute.xlu0 %678
        %680 = vrot.lane.b32.xlu0 %v591, 4
        %v681 = vpop.permute.xlu0 %680
        %682 = vrot.lane.b32.xlu0 %v592, 4
        %v683 = vpop.permute.xlu0 %682
        %684 = vrot.lane.b32.xlu0 %v593, 4
        %v685 = vpop.permute.xlu0 %684
        %686 = vrot.lane.b32.xlu0 %v594, 4
        %v687 = vpop.permute.xlu0 %686
        %688 = vrot.lane.b32.xlu0 %v595, 4
        %v689 = vpop.permute.xlu0 %688
        %690 = vrot.lane.b32.xlu0 %v596, 4
        %v691 = vpop.permute.xlu0 %690
        %692 = vrot.lane.b32.xlu0 %v597, 4
        %v693 = vpop.permute.xlu0 %692
        %s726 = scalar_lea.vmem [#allocation2], 8
        %vm727 = vcmask 60448
        %728 = vst.msk [vmem:[%s726] sm:$0xf] %vm727, %v631
        %729 = vst.msk [vmem:[%s726 + $0x4] sm:$0xf] %vm727, %v633
        %730 = vst.msk [vmem:[%s726 + $0x8] sm:$0xf] %vm727, %v635
        %731 = vst.msk [vmem:[%s726 + $0xc] sm:$0xf] %vm727, %v637
        %732 = vst.msk [vmem:[%s726 + $0x10] sm:$0xf] %vm727, %v639
        %733 = vst.msk [vmem:[%s726 + $0x14] sm:$0xf] %vm727, %v641
        %734 = vst.msk [vmem:[%s726 + $0x18] sm:$0xf] %vm727, %v643
        %735 = vst.msk [vmem:[%s726 + $0x1c] sm:$0xf] %vm727, %v645
        %736 = vst.msk [vmem:[%s726 + $0x20] sm:$0xf] %vm727, %v647
        %737 = vst.msk [vmem:[%s726 + $0x24] sm:$0xf] %vm727, %v649
        %738 = vst.msk [vmem:[%s726 + $0x28] sm:$0xf] %vm727, %v651
        %739 = vst.msk [vmem:[%s726 + $0x2c] sm:$0xf] %vm727, %v653
        %740 = vst.msk [vmem:[%s726 + $0x30] sm:$0xf] %vm727, %v655
        %741 = vst.msk [vmem:[%s726 + $0x34] sm:$0xf] %vm727, %v657
        %742 = vst.msk [vmem:[%s726 + $0x38] sm:$0xf] %vm727, %v659
        %743 = vst.msk [vmem:[%s726 + $0x3c] sm:$0xf] %vm727, %v661
        %744 = vst.msk [vmem:[%s726 + $0x40] sm:$0xf] %vm727, %v663
        %745 = vst.msk [vmem:[%s726 + $0x44] sm:$0xf] %vm727, %v665
        %746 = vst.msk [vmem:[%s726 + $0x48] sm:$0xf] %vm727, %v667
        %747 = vst.msk [vmem:[%s726 + $0x4c] sm:$0xf] %vm727, %v669
        %748 = vst.msk [vmem:[%s726 + $0x50] sm:$0xf] %vm727, %v671
        %749 = vst.msk [vmem:[%s726 + $0x54] sm:$0xf] %vm727, %v673
        %750 = vst.msk [vmem:[%s726 + $0x58] sm:$0xf] %vm727, %v675
        %751 = vst.msk [vmem:[%s726 + $0x5c] sm:$0xf] %vm727, %v677
        %752 = vst.msk [vmem:[%s726 + $0x60] sm:$0xf] %vm727, %v679
        %753 = vst.msk [vmem:[%s726 + $0x64] sm:$0xf] %vm727, %v681
        %754 = vst.msk [vmem:[%s726 + $0x68] sm:$0xf] %vm727, %v683
        %755 = vst.msk [vmem:[%s726 + $0x6c] sm:$0xf] %vm727, %v685
        %756 = vst.msk [vmem:[%s726 + $0x70] sm:$0xf] %vm727, %v687
        %757 = vst.msk [vmem:[%s726 + $0x74] sm:$0xf] %vm727, %v689
        %758 = vst.msk [vmem:[%s726 + $0x78] sm:$0xf] %vm727, %v691
        %759 = vst.msk [vmem:[%s726 + $0x7c] sm:$0xf] %vm727, %v693
        %vm760 = vsmask.f32 4368
        %vm761 = vmor %vm338, %vm760
        %v763 = vshrl.u32 %v566, 16
        %v765 = vrot.slane %v763, 7
        %v766 = vshll.u32 %v566, 16
        %v768 = vor.u32 %v765, %v766
        %v769 = vrot.slane %v765, 4
        %v771 = vshrl.u32 %v567, 16
        %v773 = vrot.slane %v771, 7
        %v774 = vshll.u32 %v567, 16
        %v776 = vor.u32 %v773, %v774
        %v777 = vsel %vm761, %v769, %v776
        %v779 = vshrl.u32 %v568, 16
        %v781 = vrot.slane %v779, 7
        %v782 = vshll.u32 %v568, 16
        %v784 = vor.u32 %v781, %v782
        %v785 = vrot.slane %v781, 4
        %v787 = vshrl.u32 %v569, 16
        %v789 = vrot.slane %v787, 7
        %v790 = vshll.u32 %v569, 16
        %v792 = vor.u32 %v789, %v790
        %v793 = vsel %vm761, %v785, %v792
        %v795 = vshrl.u32 %v570, 16
        %v797 = vrot.slane %v795, 7
        %v798 = vshll.u32 %v570, 16
        %v800 = vor.u32 %v797, %v798
        %v801 = vrot.slane %v797, 4
        %v803 = vshrl.u32 %v571, 16
        %v805 = vrot.slane %v803, 7
        %v806 = vshll.u32 %v571, 16
        %v808 = vor.u32 %v805, %v806
        %v809 = vsel %vm761, %v801, %v808
        %v811 = vshrl.u32 %v572, 16
        %v813 = vrot.slane %v811, 7
        %v814 = vshll.u32 %v572, 16
        %v816 = vor.u32 %v813, %v814
        %v817 = vrot.slane %v813, 4
        %v819 = vshrl.u32 %v573, 16
        %v821 = vrot.slane %v819, 7
        %v822 = vshll.u32 %v573, 16
        %v824 = vor.u32 %v821, %v822
        %v825 = vsel %vm761, %v817, %v824
        %v827 = vshrl.u32 %v574, 16
        %v829 = vrot.slane %v827, 7
        %v830 = vshll.u32 %v574, 16
        %v832 = vor.u32 %v829, %v830
        %v833 = vrot.slane %v829, 4
        %v835 = vshrl.u32 %v575, 16
        %v837 = vrot.slane %v835, 7
        %v838 = vshll.u32 %v575, 16
        %v840 = vor.u32 %v837, %v838
        %v841 = vsel %vm761, %v833, %v840
        %v843 = vshrl.u32 %v576, 16
        %v845 = vrot.slane %v843, 7
        %v846 = vshll.u32 %v576, 16
        %v848 = vor.u32 %v845, %v846
        %v849 = vrot.slane %v845, 4
        %v851 = vshrl.u32 %v577, 16
        %v853 = vrot.slane %v851, 7
        %v854 = vshll.u32 %v577, 16
        %v856 = vor.u32 %v853, %v854
        %v857 = vsel %vm761, %v849, %v856
        %v859 = vshrl.u32 %v578, 16
        %v861 = vrot.slane %v859, 7
        %v862 = vshll.u32 %v578, 16
        %v864 = vor.u32 %v861, %v862
        %v865 = vrot.slane %v861, 4
        %v867 = vshrl.u32 %v579, 16
        %v869 = vrot.slane %v867, 7
        %v870 = vshll.u32 %v579, 16
        %v872 = vor.u32 %v869, %v870
        %v873 = vsel %vm761, %v865, %v872
        %v875 = vshrl.u32 %v580, 16
        %v877 = vrot.slane %v875, 7
        %v878 = vshll.u32 %v580, 16
        %v880 = vor.u32 %v877, %v878
        %v881 = vrot.slane %v877, 4
        %v883 = vshrl.u32 %v581, 16
        %v885 = vrot.slane %v883, 7
        %v886 = vshll.u32 %v581, 16
        %v888 = vor.u32 %v885, %v886
        %v889 = vsel %vm761, %v881, %v888
        %v891 = vshrl.u32 %v582, 16
        %v893 = vrot.slane %v891, 7
        %v894 = vshll.u32 %v582, 16
        %v896 = vor.u32 %v893, %v894
        %v897 = vrot.slane %v893, 4
        %v899 = vshrl.u32 %v583, 16
        %v901 = vrot.slane %v899, 7
        %v902 = vshll.u32 %v583, 16
        %v904 = vor.u32 %v901, %v902
        %v905 = vsel %vm761, %v897, %v904
        %v907 = vshrl.u32 %v584, 16
        %v909 = vrot.slane %v907, 7
        %v910 = vshll.u32 %v584, 16
        %v912 = vor.u32 %v909, %v910
        %v913 = vrot.slane %v909, 4
        %v915 = vshrl.u32 %v585, 16
        %v917 = vrot.slane %v915, 7
        %v918 = vshll.u32 %v585, 16
        %v920 = vor.u32 %v917, %v918
        %v921 = vsel %vm761, %v913, %v920
        %v923 = vshrl.u32 %v586, 16
        %v925 = vrot.slane %v923, 7
        %v926 = vshll.u32 %v586, 16
        %v928 = vor.u32 %v925, %v926
        %v929 = vrot.slane %v925, 4
        %v931 = vshrl.u32 %v587, 16
        %v933 = vrot.slane %v931, 7
        %v934 = vshll.u32 %v587, 16
        %v936 = vor.u32 %v933, %v934
        %v937 = vsel %vm761, %v929, %v936
        %v939 = vshrl.u32 %v588, 16
        %v941 = vrot.slane %v939, 7
        %v942 = vshll.u32 %v588, 16
        %v944 = vor.u32 %v941, %v942
        %v945 = vrot.slane %v941, 4
        %v947 = vshrl.u32 %v589, 16
        %v949 = vrot.slane %v947, 7
        %v950 = vshll.u32 %v589, 16
        %v952 = vor.u32 %v949, %v950
        %v953 = vsel %vm761, %v945, %v952
        %v955 = vshrl.u32 %v590, 16
        %v957 = vrot.slane %v955, 7
        %v958 = vshll.u32 %v590, 16
        %v960 = vor.u32 %v957, %v958
        %v961 = vrot.slane %v957, 4
        %v963 = vshrl.u32 %v591, 16
        %v965 = vrot.slane %v963, 7
        %v966 = vshll.u32 %v591, 16
        %v968 = vor.u32 %v965, %v966
        %v969 = vsel %vm761, %v961, %v968
        %v971 = vshrl.u32 %v592, 16
        %v973 = vrot.slane %v971, 7
        %v974 = vshll.u32 %v592, 16
        %v976 = vor.u32 %v973, %v974
        %v977 = vrot.slane %v973, 4
        %v979 = vshrl.u32 %v593, 16
        %v981 = vrot.slane %v979, 7
        %v982 = vshll.u32 %v593, 16
        %v984 = vor.u32 %v981, %v982
        %v985 = vsel %vm761, %v977, %v984
        %v987 = vshrl.u32 %v594, 16
        %v989 = vrot.slane %v987, 7
        %v990 = vshll.u32 %v594, 16
        %v992 = vor.u32 %v989, %v990
        %v993 = vrot.slane %v989, 4
        %v995 = vshrl.u32 %v595, 16
        %v997 = vrot.slane %v995, 7
        %v998 = vshll.u32 %v595, 16
        %v1000 = vor.u32 %v997, %v998
        %v1001 = vsel %vm761, %v993, %v1000
        %v1003 = vshrl.u32 %v596, 16
        %v1005 = vrot.slane %v1003, 7
        %v1006 = vshll.u32 %v596, 16
        %v1008 = vor.u32 %v1005, %v1006
        %v1009 = vrot.slane %v1005, 4
        %v1011 = vshrl.u32 %v597, 16
        %v1013 = vrot.slane %v1011, 7
        %v1014 = vshll.u32 %v597, 16
        %v1016 = vor.u32 %v1013, %v1014
        %v1017 = vsel %vm761, %v1009, %v1016
        %vm1050 = vcmask 27648
        %vm1051 = vsmask.f32 7938
        %vm1052 = vmand %vm1050, %vm1051
        %v1053 = vld [vmem:[%s726] sm:$0xf]
        %v1054 = vsel %vm1052, %v768, %v1053
        %1055 = vst [vmem:[%s726] sm:$0xf] %v1054
        %vm1056 = vcmask 27648
        %1057 = vst.msk [vmem:[%s726 + $0x4] sm:$0xf] %vm1056, %v777
        %v1058 = vld [vmem:[%s726 + $0x8] sm:$0xf]
        %v1059 = vsel %vm1052, %v784, %v1058
        %1060 = vst [vmem:[%s726 + $0x8] sm:$0xf] %v1059
        %1061 = vst.msk [vmem:[%s726 + $0xc] sm:$0xf] %vm1056, %v793
        %v1062 = vld [vmem:[%s726 + $0x10] sm:$0xf]
        %v1063 = vsel %vm1052, %v800, %v1062
        %1064 = vst [vmem:[%s726 + $0x10] sm:$0xf] %v1063
        %1065 = vst.msk [vmem:[%s726 + $0x14] sm:$0xf] %vm1056, %v809
        %v1066 = vld [vmem:[%s726 + $0x18] sm:$0xf]
        %v1067 = vsel %vm1052, %v816, %v1066
        %1068 = vst [vmem:[%s726 + $0x18] sm:$0xf] %v1067
        %1069 = vst.msk [vmem:[%s726 + $0x1c] sm:$0xf] %vm1056, %v825
        %v1070 = vld [vmem:[%s726 + $0x20] sm:$0xf]
        %v1071 = vsel %vm1052, %v832, %v1070
        %1072 = vst [vmem:[%s726 + $0x20] sm:$0xf] %v1071
        %1073 = vst.msk [vmem:[%s726 + $0x24] sm:$0xf] %vm1056, %v841
        %v1074 = vld [vmem:[%s726 + $0x28] sm:$0xf]
        %v1075 = vsel %vm1052, %v848, %v1074
        %1076 = vst [vmem:[%s726 + $0x28] sm:$0xf] %v1075
        %1077 = vst.msk [vmem:[%s726 + $0x2c] sm:$0xf] %vm1056, %v857
        %v1078 = vld [vmem:[%s726 + $0x30] sm:$0xf]
        %v1079 = vsel %vm1052, %v864, %v1078
        %1080 = vst [vmem:[%s726 + $0x30] sm:$0xf] %v1079
        %1081 = vst.msk [vmem:[%s726 + $0x34] sm:$0xf] %vm1056, %v873
        %v1082 = vld [vmem:[%s726 + $0x38] sm:$0xf]
        %v1083 = vsel %vm1052, %v880, %v1082
        %1084 = vst [vmem:[%s726 + $0x38] sm:$0xf] %v1083
        %1085 = vst.msk [vmem:[%s726 + $0x3c] sm:$0xf] %vm1056, %v889
        %v1086 = vld [vmem:[%s726 + $0x40] sm:$0xf]
        %v1087 = vsel %vm1052, %v896, %v1086
        %1088 = vst [vmem:[%s726 + $0x40] sm:$0xf] %v1087
        %1089 = vst.msk [vmem:[%s726 + $0x44] sm:$0xf] %vm1056, %v905
        %v1090 = vld [vmem:[%s726 + $0x48] sm:$0xf]
        %v1091 = vsel %vm1052, %v912, %v1090
        %1092 = vst [vmem:[%s726 + $0x48] sm:$0xf] %v1091
        %1093 = vst.msk [vmem:[%s726 + $0x4c] sm:$0xf] %vm1056, %v921
        %v1094 = vld [vmem:[%s726 + $0x50] sm:$0xf]
        %v1095 = vsel %vm1052, %v928, %v1094
        %1096 = vst [vmem:[%s726 + $0x50] sm:$0xf] %v1095
        %1097 = vst.msk [vmem:[%s726 + $0x54] sm:$0xf] %vm1056, %v937
        %v1098 = vld [vmem:[%s726 + $0x58] sm:$0xf]
        %v1099 = vsel %vm1052, %v944, %v1098
        %1100 = vst [vmem:[%s726 + $0x58] sm:$0xf] %v1099
        %1101 = vst.msk [vmem:[%s726 + $0x5c] sm:$0xf] %vm1056, %v953
        %v1102 = vld [vmem:[%s726 + $0x60] sm:$0xf]
        %v1103 = vsel %vm1052, %v960, %v1102
        %1104 = vst [vmem:[%s726 + $0x60] sm:$0xf] %v1103
        %1105 = vst.msk [vmem:[%s726 + $0x64] sm:$0xf] %vm1056, %v969
        %v1106 = vld [vmem:[%s726 + $0x68] sm:$0xf]
        %v1107 = vsel %vm1052, %v976, %v1106
        %1108 = vst [vmem:[%s726 + $0x68] sm:$0xf] %v1107
        %1109 = vst.msk [vmem:[%s726 + $0x6c] sm:$0xf] %vm1056, %v985
        %v1110 = vld [vmem:[%s726 + $0x70] sm:$0xf]
        %v1111 = vsel %vm1052, %v992, %v1110
        %1112 = vst [vmem:[%s726 + $0x70] sm:$0xf] %v1111
        %1113 = vst.msk [vmem:[%s726 + $0x74] sm:$0xf] %vm1056, %v1001
        %v1114 = vld [vmem:[%s726 + $0x78] sm:$0xf]
        %v1115 = vsel %vm1052, %v1008, %v1114
        %1116 = vst [vmem:[%s726 + $0x78] sm:$0xf] %v1115
        %1117 = vst.msk [vmem:[%s726 + $0x7c] sm:$0xf] %vm1056, %v1017
        %vm1118 = vsmask.f32 3328
        %vm1119 = vsmask.f32 7440
        %vm1120 = vmor %vm1118, %vm1119
        %v1121 = vrot.slane %v763, 4
        %v1122 = vrot.slane %v766, 5
        %v1123 = vor.u32 %v1121, %v1122
        %v1124 = vrot.slane %v1123, 4
        %v1125 = vrot.slane %v774, 5
        %v1126 = vsel %vm1120, %v1124, %v1125
        %v1127 = vrot.slane %v771, 4
        %v1128 = vor.u32 %v1127, %v1125
        %v1129 = vrot.slane %v1128, 4
        %v1130 = vrot.slane %v779, 4
        %v1131 = vrot.slane %v782, 5
        %v1132 = vor.u32 %v1130, %v1131
        %v1133 = vrot.slane %v1132, 4
        %v1134 = vrot.slane %v790, 5
        %v1135 = vsel %vm1120, %v1133, %v1134
        %v1136 = vrot.slane %v787, 4
        %v1137 = vor.u32 %v1136, %v1134
        %v1138 = vrot.slane %v1137, 4
        %v1139 = vrot.slane %v795, 4
        %v1140 = vrot.slane %v798, 5
        %v1141 = vor.u32 %v1139, %v1140
        %v1142 = vrot.slane %v1141, 4
        %v1143 = vrot.slane %v806, 5
        %v1144 = vsel %vm1120, %v1142, %v1143
        %v1145 = vrot.slane %v803, 4
        %v1146 = vor.u32 %v1145, %v1143
        %v1147 = vrot.slane %v1146, 4
        %v1148 = vrot.slane %v811, 4
        %v1149 = vrot.slane %v814, 5
        %v1150 = vor.u32 %v1148, %v1149
        %v1151 = vrot.slane %v1150, 4
        %v1152 = vrot.slane %v822, 5
        %v1153 = vsel %vm1120, %v1151, %v1152
        %v1154 = vrot.slane %v819, 4
        %v1155 = vor.u32 %v1154, %v1152
        %v1156 = vrot.slane %v1155, 4
        %v1157 = vrot.slane %v827, 4
        %v1158 = vrot.slane %v830, 5
        %v1159 = vor.u32 %v1157, %v1158
        %v1160 = vrot.slane %v1159, 4
        %v1161 = vrot.slane %v838, 5
        %v1162 = vsel %vm1120, %v1160, %v1161
        %v1163 = vrot.slane %v835, 4
        %v1164 = vor.u32 %v1163, %v1161
        %v1165 = vrot.slane %v1164, 4
        %v1166 = vrot.slane %v843, 4
        %v1167 = vrot.slane %v846, 5
        %v1168 = vor.u32 %v1166, %v1167
        %v1169 = vrot.slane %v1168, 4
        %v1170 = vrot.slane %v854, 5
        %v1171 = vsel %vm1120, %v1169, %v1170
        %v1172 = vrot.slane %v851, 4
        %v1173 = vor.u32 %v1172, %v1170
        %v1174 = vrot.slane %v1173, 4
        %v1175 = vrot.slane %v859, 4
        %v1176 = vrot.slane %v862, 5
        %v1177 = vor.u32 %v1175, %v1176
        %v1178 = vrot.slane %v1177, 4
        %v1179 = vrot.slane %v870, 5
        %v1180 = vsel %vm1120, %v1178, %v1179
        %v1181 = vrot.slane %v867, 4
        %v1182 = vor.u32 %v1181, %v1179
        %v1183 = vrot.slane %v1182, 4
        %v1184 = vrot.slane %v875, 4
        %v1185 = vrot.slane %v878, 5
        %v1186 = vor.u32 %v1184, %v1185
        %v1187 = vrot.slane %v1186, 4
        %v1188 = vrot.slane %v886, 5
        %v1189 = vsel %vm1120, %v1187, %v1188
        %v1190 = vrot.slane %v883, 4
        %v1191 = vor.u32 %v1190, %v1188
        %v1192 = vrot.slane %v1191, 4
        %v1193 = vrot.slane %v891, 4
        %v1194 = vrot.slane %v894, 5
        %v1195 = vor.u32 %v1193, %v1194
        %v1196 = vrot.slane %v1195, 4
        %v1197 = vrot.slane %v902, 5
        %v1198 = vsel %vm1120, %v1196, %v1197
        %v1199 = vrot.slane %v899, 4
        %v1200 = vor.u32 %v1199, %v1197
        %v1201 = vrot.slane %v1200, 4
        %v1202 = vrot.slane %v907, 4
        %v1203 = vrot.slane %v910, 5
        %v1204 = vor.u32 %v1202, %v1203
        %v1205 = vrot.slane %v1204, 4
        %v1206 = vrot.slane %v918, 5
        %v1207 = vsel %vm1120, %v1205, %v1206
        %v1208 = vrot.slane %v915, 4
        %v1209 = vor.u32 %v1208, %v1206
        %v1210 = vrot.slane %v1209, 4
        %v1211 = vrot.slane %v923, 4
        %v1212 = vrot.slane %v926, 5
        %v1213 = vor.u32 %v1211, %v1212
        %v1214 = vrot.slane %v1213, 4
        %v1215 = vrot.slane %v934, 5
        %v1216 = vsel %vm1120, %v1214, %v1215
        %v1217 = vrot.slane %v931, 4
        %v1218 = vor.u32 %v1217, %v1215
        %v1219 = vrot.slane %v1218, 4
        %v1220 = vrot.slane %v939, 4
        %v1221 = vrot.slane %v942, 5
        %v1222 = vor.u32 %v1220, %v1221
        %v1223 = vrot.slane %v1222, 4
        %v1224 = vrot.slane %v950, 5
        %v1225 = vsel %vm1120, %v1223, %v1224
        %v1226 = vrot.slane %v947, 4
        %v1227 = vor.u32 %v1226, %v1224
        %v1228 = vrot.slane %v1227, 4
        %v1229 = vrot.slane %v955, 4
        %v1230 = vrot.slane %v958, 5
        %v1231 = vor.u32 %v1229, %v1230
        %v1232 = vrot.slane %v1231, 4
        %v1233 = vrot.slane %v966, 5
        %v1234 = vsel %vm1120, %v1232, %v1233
        %v1235 = vrot.slane %v963, 4
        %v1236 = vor.u32 %v1235, %v1233
        %v1237 = vrot.slane %v1236, 4
        %v1238 = vrot.slane %v971, 4
        %v1239 = vrot.slane %v974, 5
        %v1240 = vor.u32 %v1238, %v1239
        %v1241 = vrot.slane %v1240, 4
        %v1242 = vrot.slane %v982, 5
        %v1243 = vsel %vm1120, %v1241, %v1242
        %v1244 = vrot.slane %v979, 4
        %v1245 = vor.u32 %v1244, %v1242
        %v1246 = vrot.slane %v1245, 4
        %v1247 = vrot.slane %v987, 4
        %v1248 = vrot.slane %v990, 5
        %v1249 = vor.u32 %v1247, %v1248
        %v1250 = vrot.slane %v1249, 4
        %v1251 = vrot.slane %v998, 5
        %v1252 = vsel %vm1120, %v1250, %v1251
        %v1253 = vrot.slane %v995, 4
        %v1254 = vor.u32 %v1253, %v1251
        %v1255 = vrot.slane %v1254, 4
        %v1256 = vrot.slane %v1003, 4
        %v1257 = vrot.slane %v1006, 5
        %v1258 = vor.u32 %v1256, %v1257
        %v1259 = vrot.slane %v1258, 4
        %v1260 = vrot.slane %v1014, 5
        %v1261 = vsel %vm1120, %v1259, %v1260
        %v1262 = vrot.slane %v1011, 4
        %v1263 = vor.u32 %v1262, %v1260
        %v1264 = vrot.slane %v1263, 4
        %1265 = vrot.lane.b32.xlu0 %v1126, 8
        %v1266 = vpop.permute.xlu0 %1265
        %1267 = vrot.lane.b32.xlu0 %v1129, 8
        %v1268 = vpop.permute.xlu0 %1267
        %1269 = vrot.lane.b32.xlu0 %v1135, 8
        %v1270 = vpop.permute.xlu0 %1269
        %1271 = vrot.lane.b32.xlu0 %v1138, 8
        %v1272 = vpop.permute.xlu0 %1271
        %1273 = vrot.lane.b32.xlu0 %v1144, 8
        %v1274 = vpop.permute.xlu0 %1273
        %1275 = vrot.lane.b32.xlu0 %v1147, 8
        %v1276 = vpop.permute.xlu0 %1275
        %1277 = vrot.lane.b32.xlu0 %v1153, 8
        %v1278 = vpop.permute.xlu0 %1277
        %1279 = vrot.lane.b32.xlu0 %v1156, 8
        %v1280 = vpop.permute.xlu0 %1279
        %1281 = vrot.lane.b32.xlu0 %v1162, 8
        %v1282 = vpop.permute.xlu0 %1281
        %1283 = vrot.lane.b32.xlu0 %v1165, 8
        %v1284 = vpop.permute.xlu0 %1283
        %1285 = vrot.lane.b32.xlu0 %v1171, 8
        %v1286 = vpop.permute.xlu0 %1285
        %1287 = vrot.lane.b32.xlu0 %v1174, 8
        %v1288 = vpop.permute.xlu0 %1287
        %1289 = vrot.lane.b32.xlu0 %v1180, 8
        %v1290 = vpop.permute.xlu0 %1289
        %1291 = vrot.lane.b32.xlu0 %v1183, 8
        %v1292 = vpop.permute.xlu0 %1291
        %1293 = vrot.lane.b32.xlu0 %v1189, 8
        %v1294 = vpop.permute.xlu0 %1293
        %1295 = vrot.lane.b32.xlu0 %v1192, 8
        %v1296 = vpop.permute.xlu0 %1295
        %1297 = vrot.lane.b32.xlu0 %v1198, 8
        %v1298 = vpop.permute.xlu0 %1297
        %1299 = vrot.lane.b32.xlu0 %v1201, 8
        %v1300 = vpop.permute.xlu0 %1299
        %1301 = vrot.lane.b32.xlu0 %v1207, 8
        %v1302 = vpop.permute.xlu0 %1301
        %1303 = vrot.lane.b32.xlu0 %v1210, 8
        %v1304 = vpop.permute.xlu0 %1303
        %1305 = vrot.lane.b32.xlu0 %v1216, 8
        %v1306 = vpop.permute.xlu0 %1305
        %1307 = vrot.lane.b32.xlu0 %v1219, 8
        %v1308 = vpop.permute.xlu0 %1307
        %1309 = vrot.lane.b32.xlu0 %v1225, 8
        %v1310 = vpop.permute.xlu0 %1309
        %1311 = vrot.lane.b32.xlu0 %v1228, 8
        %v1312 = vpop.permute.xlu0 %1311
        %1313 = vrot.lane.b32.xlu0 %v1234, 8
        %v1314 = vpop.permute.xlu0 %1313
        %1315 = vrot.lane.b32.xlu0 %v1237, 8
        %v1316 = vpop.permute.xlu0 %1315
        %1317 = vrot.lane.b32.xlu0 %v1243, 8
        %v1318 = vpop.permute.xlu0 %1317
        %1319 = vrot.lane.b32.xlu0 %v1246, 8
        %v1320 = vpop.permute.xlu0 %1319
        %1321 = vrot.lane.b32.xlu0 %v1252, 8
        %v1322 = vpop.permute.xlu0 %1321
        %1323 = vrot.lane.b32.xlu0 %v1255, 8
        %v1324 = vpop.permute.xlu0 %1323
        %1325 = vrot.lane.b32.xlu0 %v1261, 8
        %v1326 = vpop.permute.xlu0 %1325
        %1327 = vrot.lane.b32.xlu0 %v1264, 8
        %v1328 = vpop.permute.xlu0 %1327
        %vm1361 = vcmask 93248
        %1362 = vst.msk [vmem:[%s726] sm:$0xf] %vm1361, %v1266
        %vm1363 = vcmask 93248
        %vm1364 = vmand %vm1363, %vm1118
        %v1365 = vld [vmem:[%s726 + $0x4] sm:$0xf]
        %v1366 = vsel %vm1364, %v1268, %v1365
        %1367 = vst [vmem:[%s726 + $0x4] sm:$0xf] %v1366
        %1368 = vst.msk [vmem:[%s726 + $0x8] sm:$0xf] %vm1361, %v1270
        %v1369 = vld [vmem:[%s726 + $0xc] sm:$0xf]
        %v1370 = vsel %vm1364, %v1272, %v1369
        %1371 = vst [vmem:[%s726 + $0xc] sm:$0xf] %v1370
        %1372 = vst.msk [vmem:[%s726 + $0x10] sm:$0xf] %vm1361, %v1274
        %v1373 = vld [vmem:[%s726 + $0x14] sm:$0xf]
        %v1374 = vsel %vm1364, %v1276, %v1373
        %1375 = vst [vmem:[%s726 + $0x14] sm:$0xf] %v1374
        %1376 = vst.msk [vmem:[%s726 + $0x18] sm:$0xf] %vm1361, %v1278
        %v1377 = vld [vmem:[%s726 + $0x1c] sm:$0xf]
        %v1378 = vsel %vm1364, %v1280, %v1377
        %1379 = vst [vmem:[%s726 + $0x1c] sm:$0xf] %v1378
        %1380 = vst.msk [vmem:[%s726 + $0x20] sm:$0xf] %vm1361, %v1282
        %v1381 = vld [vmem:[%s726 + $0x24] sm:$0xf]
        %v1382 = vsel %vm1364, %v1284, %v1381
        %1383 = vst [vmem:[%s726 + $0x24] sm:$0xf] %v1382
        %1384 = vst.msk [vmem:[%s726 + $0x28] sm:$0xf] %vm1361, %v1286
        %v1385 = vld [vmem:[%s726 + $0x2c] sm:$0xf]
        %v1386 = vsel %vm1364, %v1288, %v1385
        %1387 = vst [vmem:[%s726 + $0x2c] sm:$0xf] %v1386
        %1388 = vst.msk [vmem:[%s726 + $0x30] sm:$0xf] %vm1361, %v1290
        %v1389 = vld [vmem:[%s726 + $0x34] sm:$0xf]
        %v1390 = vsel %vm1364, %v1292, %v1389
        %1391 = vst [vmem:[%s726 + $0x34] sm:$0xf] %v1390
        %1392 = vst.msk [vmem:[%s726 + $0x38] sm:$0xf] %vm1361, %v1294
        %v1393 = vld [vmem:[%s726 + $0x3c] sm:$0xf]
        %v1394 = vsel %vm1364, %v1296, %v1393
        %1395 = vst [vmem:[%s726 + $0x3c] sm:$0xf] %v1394
        %1396 = vst.msk [vmem:[%s726 + $0x40] sm:$0xf] %vm1361, %v1298
        %v1397 = vld [vmem:[%s726 + $0x44] sm:$0xf]
        %v1398 = vsel %vm1364, %v1300, %v1397
        %1399 = vst [vmem:[%s726 + $0x44] sm:$0xf] %v1398
        %1400 = vst.msk [vmem:[%s726 + $0x48] sm:$0xf] %vm1361, %v1302
        %v1401 = vld [vmem:[%s726 + $0x4c] sm:$0xf]
        %v1402 = vsel %vm1364, %v1304, %v1401
        %1403 = vst [vmem:[%s726 + $0x4c] sm:$0xf] %v1402
        %1404 = vst.msk [vmem:[%s726 + $0x50] sm:$0xf] %vm1361, %v1306
        %v1405 = vld [vmem:[%s726 + $0x54] sm:$0xf]
        %v1406 = vsel %vm1364, %v1308, %v1405
        %1407 = vst [vmem:[%s726 + $0x54] sm:$0xf] %v1406
        %1408 = vst.msk [vmem:[%s726 + $0x58] sm:$0xf] %vm1361, %v1310
        %v1409 = vld [vmem:[%s726 + $0x5c] sm:$0xf]
        %v1410 = vsel %vm1364, %v1312, %v1409
        %1411 = vst [vmem:[%s726 + $0x5c] sm:$0xf] %v1410
        %1412 = vst.msk [vmem:[%s726 + $0x60] sm:$0xf] %vm1361, %v1314
        %v1413 = vld [vmem:[%s726 + $0x64] sm:$0xf]
        %v1414 = vsel %vm1364, %v1316, %v1413
        %1415 = vst [vmem:[%s726 + $0x64] sm:$0xf] %v1414
        %1416 = vst.msk [vmem:[%s726 + $0x68] sm:$0xf] %vm1361, %v1318
        %v1417 = vld [vmem:[%s726 + $0x6c] sm:$0xf]
        %v1418 = vsel %vm1364, %v1320, %v1417
        %1419 = vst [vmem:[%s726 + $0x6c] sm:$0xf] %v1418
        %1420 = vst.msk [vmem:[%s726 + $0x70] sm:$0xf] %vm1361, %v1322
        %v1421 = vld [vmem:[%s726 + $0x74] sm:$0xf]
        %v1422 = vsel %vm1364, %v1324, %v1421
        %1423 = vst [vmem:[%s726 + $0x74] sm:$0xf] %v1422
        %1424 = vst.msk [vmem:[%s726 + $0x78] sm:$0xf] %vm1361, %v1326
        %v1425 = vld [vmem:[%s726 + $0x7c] sm:$0xf]
        %v1426 = vsel %vm1364, %v1328, %v1425
        %1427 = vst [vmem:[%s726 + $0x7c] sm:$0xf] %v1426
        %v1428 = vld [vmem:[#allocation2] sm:$0xf]
        %v1429 = vld [vmem:[#allocation2 + $0x4] sm:$0xf]
        %v1430 = vld [vmem:[#allocation2 + $0x8] sm:$0xf]
        %v1431 = vld [vmem:[#allocation2 + $0xc] sm:$0xf]
        %v1432 = vld [vmem:[#allocation2 + $0x10] sm:$0xf]
        %v1433 = vld [vmem:[#allocation2 + $0x14] sm:$0xf]
        %v1434 = vld [vmem:[#allocation2 + $0x18] sm:$0xf]
        %v1435 = vld [vmem:[#allocation2 + $0x1c] sm:$0xf]
        %v1436 = vld [vmem:[#allocation2 + $0x20] sm:$0xf]
        %v1437 = vld [vmem:[#allocation2 + $0x24] sm:$0xf]
        %v1438 = vld [vmem:[#allocation2 + $0x28] sm:$0xf]
        %v1439 = vld [vmem:[#allocation2 + $0x2c] sm:$0xf]
        %v1440 = vld [vmem:[#allocation2 + $0x30] sm:$0xf]
        %v1441 = vld [vmem:[#allocation2 + $0x34] sm:$0xf]
        %v1442 = vld [vmem:[#allocation2 + $0x38] sm:$0xf]
        %v1443 = vld [vmem:[#allocation2 + $0x3c] sm:$0xf]
        %v1444 = vld [vmem:[#allocation2 + $0x40] sm:$0xf]
        %v1445 = vld [vmem:[#allocation2 + $0x44] sm:$0xf]
        %v1446 = vld [vmem:[#allocation2 + $0x48] sm:$0xf]
        %v1447 = vld [vmem:[#allocation2 + $0x4c] sm:$0xf]
        %v1448 = vld [vmem:[#allocation2 + $0x50] sm:$0xf]
        %v1449 = vld [vmem:[#allocation2 + $0x54] sm:$0xf]
        %v1450 = vld [vmem:[#allocation2 + $0x58] sm:$0xf]
        %v1451 = vld [vmem:[#allocation2 + $0x5c] sm:$0xf]
        %v1452 = vld [vmem:[#allocation2 + $0x60] sm:$0xf]
        %v1453 = vld [vmem:[#allocation2 + $0x64] sm:$0xf]
        %v1454 = vld [vmem:[#allocation2 + $0x68] sm:$0xf]
        %v1455 = vld [vmem:[#allocation2 + $0x6c] sm:$0xf]
        %v1456 = vld [vmem:[#allocation2 + $0x70] sm:$0xf]
        %v1457 = vld [vmem:[#allocation2 + $0x74] sm:$0xf]
        %v1458 = vld [vmem:[#allocation2 + $0x78] sm:$0xf]
        %v1459 = vld [vmem:[#allocation2 + $0x7c] sm:$0xf]
        %v1460 = vld [vmem:[%s1] sm:$0xf]
        %v1461 = vld [vmem:[%s1 + $0x4] sm:$0x3]
        %v1462 = vld [vmem:[%s726] sm:$0xf]
        %v1463 = vld [vmem:[%s726 + $0x4] sm:$0xf]
        %v1464 = vld [vmem:[%s726 + $0x8] sm:$0xf]
        %v1465 = vld [vmem:[%s726 + $0xc] sm:$0xf]
        %v1466 = vld [vmem:[%s726 + $0x10] sm:$0xf]
        %v1467 = vld [vmem:[%s726 + $0x14] sm:$0xf]
        %v1468 = vld [vmem:[%s726 + $0x18] sm:$0xf]
        %v1469 = vld [vmem:[%s726 + $0x1c] sm:$0xf]
        %v1470 = vld [vmem:[%s726 + $0x20] sm:$0xf]
        %v1471 = vld [vmem:[%s726 + $0x24] sm:$0xf]
        %v1472 = vld [vmem:[%s726 + $0x28] sm:$0xf]
        %v1473 = vld [vmem:[%s726 + $0x2c] sm:$0xf]
        %v1474 = vld [vmem:[%s726 + $0x30] sm:$0xf]
        %v1475 = vld [vmem:[%s726 + $0x34] sm:$0xf]
        %v1476 = vld [vmem:[%s726 + $0x38] sm:$0xf]
        %v1477 = vld [vmem:[%s726 + $0x3c] sm:$0xf]
        %v1478 = vld [vmem:[%s726 + $0x40] sm:$0xf]
        %v1479 = vld [vmem:[%s726 + $0x44] sm:$0xf]
        %v1480 = vld [vmem:[%s726 + $0x48] sm:$0xf]
        %v1481 = vld [vmem:[%s726 + $0x4c] sm:$0xf]
        %v1482 = vld [vmem:[%s726 + $0x50] sm:$0xf]
        %v1483 = vld [vmem:[%s726 + $0x54] sm:$0xf]
        %v1484 = vld [vmem:[%s726 + $0x58] sm:$0xf]
        %v1485 = vld [vmem:[%s726 + $0x5c] sm:$0xf]
        %v1486 = vld [vmem:[%s726 + $0x60] sm:$0xf]
        %v1487 = vld [vmem:[%s726 + $0x64] sm:$0xf]
        %v1488 = vld [vmem:[%s726 + $0x68] sm:$0xf]
        %v1489 = vld [vmem:[%s726 + $0x6c] sm:$0xf]
        %v1490 = vld [vmem:[%s726 + $0x70] sm:$0xf]
        %v1491 = vld [vmem:[%s726 + $0x74] sm:$0xf]
        %v1492 = vld [vmem:[%s726 + $0x78] sm:$0xf]
        %v1493 = vld [vmem:[%s726 + $0x7c] sm:$0xf]
        %s1494 = scalar_lea.vmem %s1, 8
        %v1495 = vld [vmem:[%s1494] sm:$0xf]
        %v1496 = vld [vmem:[%s1494 + $0x4] sm:$0x3]
        %v1529 = vunpack.c.l.b16 %v1462
        %v1530 = vunpack.c.l.b16 %v1463
        %v1531 = vunpack.c.l.b16 %v1464
        %v1532 = vunpack.c.l.b16 %v1465
        %v1533 = vunpack.c.l.b16 %v1466
        %v1534 = vunpack.c.l.b16 %v1467
        %v1535 = vunpack.c.l.b16 %v1468
        %v1536 = vunpack.c.l.b16 %v1469
        %v1537 = vunpack.c.l.b16 %v1470
        %v1538 = vunpack.c.l.b16 %v1471
        %v1539 = vunpack.c.l.b16 %v1472
        %v1540 = vunpack.c.l.b16 %v1473
        %v1541 = vunpack.c.l.b16 %v1474
        %v1542 = vunpack.c.l.b16 %v1475
        %v1543 = vunpack.c.l.b16 %v1476
        %v1544 = vunpack.c.l.b16 %v1477
        %v1545 = vunpack.c.l.b16 %v1478
        %v1546 = vunpack.c.l.b16 %v1479
        %v1547 = vunpack.c.l.b16 %v1480
        %v1548 = vunpack.c.l.b16 %v1481
        %v1549 = vunpack.c.l.b16 %v1482
        %v1550 = vunpack.c.l.b16 %v1483
        %v1551 = vunpack.c.l.b16 %v1484
        %v1552 = vunpack.c.l.b16 %v1485
        %v1553 = vunpack.c.l.b16 %v1486
        %v1554 = vunpack.c.l.b16 %v1487
        %v1555 = vunpack.c.l.b16 %v1488
        %v1556 = vunpack.c.l.b16 %v1489
        %v1557 = vunpack.c.l.b16 %v1490
        %v1558 = vunpack.c.l.b16 %v1491
        %v1559 = vunpack.c.l.b16 %v1492
        %v1560 = vunpack.c.l.b16 %v1493
        %v1561 = vpack.c.b16 %v1530, %v1529
        %v1562 = vpack.c.b16 %v1532, %v1531
        %v1563 = vpack.c.b16 %v1534, %v1533
        %v1564 = vpack.c.b16 %v1536, %v1535
        %v1565 = vpack.c.b16 %v1538, %v1537
        %v1566 = vpack.c.b16 %v1540, %v1539
        %v1567 = vpack.c.b16 %v1542, %v1541
        %v1568 = vpack.c.b16 %v1544, %v1543
        %v1569 = vpack.c.b16 %v1546, %v1545
        %v1570 = vpack.c.b16 %v1548, %v1547
        %v1571 = vpack.c.b16 %v1550, %v1549
        %v1572 = vpack.c.b16 %v1552, %v1551
        %v1573 = vpack.c.b16 %v1554, %v1553
        %v1574 = vpack.c.b16 %v1556, %v1555
        %v1575 = vpack.c.b16 %v1558, %v1557
        %v1576 = vpack.c.b16 %v1560, %v1559
        %v1579 = vunpack.c.l.b16 %v1495
        %v1580 = vunpack.c.l.b16 %v1496
        %v1581 = vpack.c.b16 %v1580, %v1579
        %vm1582 = vcmask 97280
        %v1584 = vsel %vm1582, %v1561, 0
        %v1587 = vsel %vm1582, %v1562, 0
        %v1590 = vsel %vm1582, %v1563, 0
        %v1593 = vsel %vm1582, %v1564, 0
        %v1596 = vsel %vm1582, %v1565, 0
        %v1599 = vsel %vm1582, %v1566, 0
        %v1602 = vsel %vm1582, %v1567, 0
        %v1605 = vsel %vm1582, %v1568, 0
        %v1608 = vsel %vm1582, %v1569, 0
        %v1611 = vsel %vm1582, %v1570, 0
        %v1614 = vsel %vm1582, %v1571, 0
        %v1617 = vsel %vm1582, %v1572, 0
        %v1620 = vsel %vm1582, %v1573, 0
        %v1623 = vsel %vm1582, %v1574, 0
        %v1626 = vsel %vm1582, %v1575, 0
        %v1629 = vsel %vm1582, %v1576, 0
        %vm1631 = vcmask 1045504
        %v1633 = vsel %vm1631, %v1581, 0
        %1635 = vmatprep.subr.bf16.mxu0 0
        %1636 = vmatpush1.bf16.msra.mxu0 0
        %1637 = vmatprep.subr.bf16.mxu0 0
        %1638 = vmatpush1.bf16.msra.mxu0 0
        %1639 = vmatprep.subr.bf16.mxu0 0
        %1640 = vmatpush1.bf16.msra.mxu0 0
        %1641 = vmatprep.subr.bf16.mxu0 0
        %1642 = vmatpush1.bf16.msra.mxu0 0
        %1643 = vmatprep.subr.bf16.mxu0 0
        %1644 = vmatpush1.bf16.msra.mxu0 0
        %1645 = vmatprep.subr.bf16.mxu0 0
        %1646 = vmatpush1.bf16.msra.mxu0 0
        %1647 = vmatprep.subr.bf16.mxu0 0
        %1648 = vmatpush1.bf16.msra.mxu0 0
        %1649 = vmatprep.subr.bf16.mxu0 0
        %1650 = vmatpush1.bf16.msra.mxu0 %v1633
        %1651 = vmatprep.subr.bf16.mxu0 0
        %1652 = vmatpush2.bf16.msra.mxu0 0
        %1653 = vmatprep.subr.bf16.mxu0 0
        %1654 = vmatpush2.bf16.msra.mxu0 0
        %1655 = vmatprep.subr.bf16.mxu0 0
        %1656 = vmatpush2.bf16.msra.mxu0 0
        %1657 = vmatprep.subr.bf16.mxu0 0
        %1658 = vmatpush2.bf16.msra.mxu0 0
        %1659 = vmatprep.subr.bf16.mxu0 0
        %1660 = vmatpush2.bf16.msra.mxu0 0
        %1661 = vmatprep.subr.bf16.mxu0 0
        %1662 = vmatpush2.bf16.msra.mxu0 0
        %1663 = vmatprep.subr.bf16.mxu0 0
        %1664 = vmatpush2.bf16.msra.mxu0 0
        %1665 = vmatprep.subr.bf16.mxu0 0
        %1666 = vmatpush2.bf16.msra.mxu0 0
        %1667 = vmatprep.mubr.bf16.mxu0 0
        %1668 = vmatmul.mubr.bf16.gmra.mxu0 %v1584
        %v1669 = vpop.f32.mrf.mxu0
        %v1670 = vadd.f32 0.0, %v1669
        %v1671 = vpop.f32.mrf.mxu0
        %v1672 = vpop.f32.mrf.mxu0
        %v1673 = vadd.f32 0.0, %v1672
        %v1674 = vpop.f32.mrf.mxu0
        %1675 = vmatprep.mubr.bf16.mxu0 0
        %1676 = vmatmul.mubr.bf16.gmra.mxu0 %v1587
        %v1677 = vpop.f32.mrf.mxu0
        %v1678 = vadd.f32 0.0, %v1677
        %v1679 = vpop.f32.mrf.mxu0
        %v1680 = vpop.f32.mrf.mxu0
        %v1681 = vadd.f32 0.0, %v1680
        %v1682 = vpop.f32.mrf.mxu0
        %1683 = vmatprep.mubr.bf16.mxu0 0
        %1684 = vmatmul.mubr.bf16.gmra.mxu0 %v1590
        %v1685 = vpop.f32.mrf.mxu0
        %v1686 = vadd.f32 0.0, %v1685
        %v1687 = vpop.f32.mrf.mxu0
        %v1688 = vpop.f32.mrf.mxu0
        %v1689 = vadd.f32 0.0, %v1688
        %v1690 = vpop.f32.mrf.mxu0
        %1691 = vmatprep.mubr.bf16.mxu0 0
        %1692 = vmatmul.mubr.bf16.gmra.mxu0 %v1593
        %v1693 = vpop.f32.mrf.mxu0
        %v1694 = vadd.f32 0.0, %v1693
        %v1695 = vpop.f32.mrf.mxu0
        %v1696 = vpop.f32.mrf.mxu0
        %v1697 = vadd.f32 0.0, %v1696
        %v1698 = vpop.f32.mrf.mxu0
        %1699 = vmatprep.mubr.bf16.mxu0 0
        %1700 = vmatmul.mubr.bf16.gmra.mxu0 %v1596
        %v1701 = vpop.f32.mrf.mxu0
        %v1702 = vadd.f32 0.0, %v1701
        %v1703 = vpop.f32.mrf.mxu0
        %v1704 = vpop.f32.mrf.mxu0
        %v1705 = vadd.f32 0.0, %v1704
        %v1706 = vpop.f32.mrf.mxu0
        %1707 = vmatprep.mubr.bf16.mxu0 0
        %1708 = vmatmul.mubr.bf16.gmra.mxu0 %v1599
        %v1709 = vpop.f32.mrf.mxu0
        %v1710 = vadd.f32 0.0, %v1709
        %v1711 = vpop.f32.mrf.mxu0
        %v1712 = vpop.f32.mrf.mxu0
        %v1713 = vadd.f32 0.0, %v1712
        %v1714 = vpop.f32.mrf.mxu0
        %1715 = vmatprep.mubr.bf16.mxu0 0
        %1716 = vmatmul.mubr.bf16.gmra.mxu0 %v1602
        %v1717 = vpop.f32.mrf.mxu0
        %v1718 = vadd.f32 0.0, %v1717
        %v1719 = vpop.f32.mrf.mxu0
        %v1720 = vpop.f32.mrf.mxu0
        %v1721 = vadd.f32 0.0, %v1720
        %v1722 = vpop.f32.mrf.mxu0
        %1723 = vmatprep.mubr.bf16.mxu0 0
        %1724 = vmatmul.mubr.bf16.gmra.mxu0 %v1605
        %v1725 = vpop.f32.mrf.mxu0
        %v1726 = vadd.f32 0.0, %v1725
        %v1727 = vpop.f32.mrf.mxu0
        %v1728 = vpop.f32.mrf.mxu0
        %v1729 = vadd.f32 0.0, %v1728
        %v1730 = vpop.f32.mrf.mxu0
        %1731 = vmatprep.mubr.bf16.mxu0 0
        %1732 = vmatmul.mubr.bf16.gmra.mxu0 %v1608
        %v1733 = vpop.f32.mrf.mxu0
        %v1734 = vadd.f32 0.0, %v1733
        %v1735 = vpop.f32.mrf.mxu0
        %v1736 = vpop.f32.mrf.mxu0
        %v1737 = vadd.f32 0.0, %v1736
        %v1738 = vpop.f32.mrf.mxu0
        %1739 = vmatprep.mubr.bf16.mxu0 0
        %1740 = vmatmul.mubr.bf16.gmra.mxu0 %v1611
        %v1741 = vpop.f32.mrf.mxu0
        %v1742 = vadd.f32 0.0, %v1741
        %v1743 = vpop.f32.mrf.mxu0
        %v1744 = vpop.f32.mrf.mxu0
        %v1745 = vadd.f32 0.0, %v1744
        %v1746 = vpop.f32.mrf.mxu0
        %1747 = vmatprep.mubr.bf16.mxu0 0
        %1748 = vmatmul.mubr.bf16.gmra.mxu0 %v1614
        %v1749 = vpop.f32.mrf.mxu0
        %v1750 = vadd.f32 0.0, %v1749
        %v1751 = vpop.f32.mrf.mxu0
        %v1752 = vpop.f32.mrf.mxu0
        %v1753 = vadd.f32 0.0, %v1752
        %v1754 = vpop.f32.mrf.mxu0
        %1755 = vmatprep.mubr.bf16.mxu0 0
        %1756 = vmatmul.mubr.bf16.gmra.mxu0 %v1617
        %v1757 = vpop.f32.mrf.mxu0
        %v1758 = vadd.f32 0.0, %v1757
        %v1759 = vpop.f32.mrf.mxu0
        %v1760 = vpop.f32.mrf.mxu0
        %v1761 = vadd.f32 0.0, %v1760
        %v1762 = vpop.f32.mrf.mxu0
        %1763 = vmatprep.mubr.bf16.mxu0 0
        %1764 = vmatmul.mubr.bf16.gmra.mxu0 %v1620
        %v1765 = vpop.f32.mrf.mxu0
        %v1766 = vadd.f32 0.0, %v1765
        %v1767 = vpop.f32.mrf.mxu0
        %v1768 = vpop.f32.mrf.mxu0
        %v1769 = vadd.f32 0.0, %v1768
        %v1770 = vpop.f32.mrf.mxu0
        %1771 = vmatprep.mubr.bf16.mxu0 0
        %1772 = vmatmul.mubr.bf16.gmra.mxu0 %v1623
        %v1773 = vpop.f32.mrf.mxu0
        %v1774 = vadd.f32 0.0, %v1773
        %v1775 = vpop.f32.mrf.mxu0
        %v1776 = vpop.f32.mrf.mxu0
        %v1777 = vadd.f32 0.0, %v1776
        %v1778 = vpop.f32.mrf.mxu0
        %1779 = vmatprep.mubr.bf16.mxu0 0
        %1780 = vmatmul.mubr.bf16.gmra.mxu0 %v1626
        %v1781 = vpop.f32.mrf.mxu0
        %v1782 = vadd.f32 0.0, %v1781
        %v1783 = vpop.f32.mrf.mxu0
        %v1784 = vpop.f32.mrf.mxu0
        %v1785 = vadd.f32 0.0, %v1784
        %v1786 = vpop.f32.mrf.mxu0
        %1787 = vmatprep.mubr.bf16.mxu0 0
        %1788 = vmatmul.mubr.bf16.gmra.mxu0 %v1629
        %v1789 = vpop.f32.mrf.mxu0
        %v1790 = vadd.f32 0.0, %v1789
        %v1791 = vpop.f32.mrf.mxu0
        %v1792 = vpop.f32.mrf.mxu0
        %v1793 = vadd.f32 0.0, %v1792
        %v1794 = vpop.f32.mrf.mxu0
        %1795 = vdwg.mxu0
        %v1828 = vunpack.c.l.b16 %v1428
        %v1829 = vunpack.c.l.b16 %v1429
        %v1830 = vunpack.c.l.b16 %v1430
        %v1831 = vunpack.c.l.b16 %v1431
        %v1832 = vunpack.c.l.b16 %v1432
        %v1833 = vunpack.c.l.b16 %v1433
        %v1834 = vunpack.c.l.b16 %v1434
        %v1835 = vunpack.c.l.b16 %v1435
        %v1836 = vunpack.c.l.b16 %v1436
        %v1837 = vunpack.c.l.b16 %v1437
        %v1838 = vunpack.c.l.b16 %v1438
        %v1839 = vunpack.c.l.b16 %v1439
        %v1840 = vunpack.c.l.b16 %v1440
        %v1841 = vunpack.c.l.b16 %v1441
        %v1842 = vunpack.c.l.b16 %v1442
        %v1843 = vunpack.c.l.b16 %v1443
        %v1844 = vunpack.c.l.b16 %v1444
        %v1845 = vunpack.c.l.b16 %v1445
        %v1846 = vunpack.c.l.b16 %v1446
        %v1847 = vunpack.c.l.b16 %v1447
        %v1848 = vunpack.c.l.b16 %v1448
        %v1849 = vunpack.c.l.b16 %v1449
        %v1850 = vunpack.c.l.b16 %v1450
        %v1851 = vunpack.c.l.b16 %v1451
        %v1852 = vunpack.c.l.b16 %v1452
        %v1853 = vunpack.c.l.b16 %v1453
        %v1854 = vunpack.c.l.b16 %v1454
        %v1855 = vunpack.c.l.b16 %v1455
        %v1856 = vunpack.c.l.b16 %v1456
        %v1857 = vunpack.c.l.b16 %v1457
        %v1858 = vunpack.c.l.b16 %v1458
        %v1859 = vunpack.c.l.b16 %v1459
        %v1860 = vpack.c.b16 %v1829, %v1828
        %v1861 = vpack.c.b16 %v1831, %v1830
        %v1862 = vpack.c.b16 %v1833, %v1832
        %v1863 = vpack.c.b16 %v1835, %v1834
        %v1864 = vpack.c.b16 %v1837, %v1836
        %v1865 = vpack.c.b16 %v1839, %v1838
        %v1866 = vpack.c.b16 %v1841, %v1840
        %v1867 = vpack.c.b16 %v1843, %v1842
        %v1868 = vpack.c.b16 %v1845, %v1844
        %v1869 = vpack.c.b16 %v1847, %v1846
        %v1870 = vpack.c.b16 %v1849, %v1848
        %v1871 = vpack.c.b16 %v1851, %v1850
        %v1872 = vpack.c.b16 %v1853, %v1852
        %v1873 = vpack.c.b16 %v1855, %v1854
        %v1874 = vpack.c.b16 %v1857, %v1856
        %v1875 = vpack.c.b16 %v1859, %v1858
        %v1878 = vunpack.c.l.b16 %v1460
        %v1879 = vunpack.c.l.b16 %v1461
        %v1880 = vpack.c.b16 %v1879, %v1878
        %v1882 = vsel %vm1582, %v1860, 0
        %v1885 = vsel %vm1582, %v1861, 0
        %v1888 = vsel %vm1582, %v1862, 0
        %v1891 = vsel %vm1582, %v1863, 0
        %v1894 = vsel %vm1582, %v1864, 0
        %v1897 = vsel %vm1582, %v1865, 0
        %v1900 = vsel %vm1582, %v1866, 0
        %v1903 = vsel %vm1582, %v1867, 0
        %v1906 = vsel %vm1582, %v1868, 0
        %v1909 = vsel %vm1582, %v1869, 0
        %v1912 = vsel %vm1582, %v1870, 0
        %v1915 = vsel %vm1582, %v1871, 0
        %v1918 = vsel %vm1582, %v1872, 0
        %v1921 = vsel %vm1582, %v1873, 0
        %v1924 = vsel %vm1582, %v1874, 0
        %v1927 = vsel %vm1582, %v1875, 0
        %v1930 = vsel %vm1631, %v1880, 0
        %1932 = vmatprep.subr.bf16.mxu0 0
        %1933 = vmatpush1.bf16.msra.mxu0 0
        %1934 = vmatprep.subr.bf16.mxu0 0
        %1935 = vmatpush1.bf16.msra.mxu0 0
        %1936 = vmatprep.subr.bf16.mxu0 0
        %1937 = vmatpush1.bf16.msra.mxu0 0
        %1938 = vmatprep.subr.bf16.mxu0 0
        %1939 = vmatpush1.bf16.msra.mxu0 0
        %1940 = vmatprep.subr.bf16.mxu0 0
        %1941 = vmatpush1.bf16.msra.mxu0 0
        %1942 = vmatprep.subr.bf16.mxu0 0
        %1943 = vmatpush1.bf16.msra.mxu0 0
        %1944 = vmatprep.subr.bf16.mxu0 0
        %1945 = vmatpush1.bf16.msra.mxu0 0
        %1946 = vmatprep.subr.bf16.mxu0 0
        %1947 = vmatpush1.bf16.msra.mxu0 %v1930
        %1948 = vmatprep.subr.bf16.mxu0 0
        %1949 = vmatpush2.bf16.msra.mxu0 0
        %1950 = vmatprep.subr.bf16.mxu0 0
        %1951 = vmatpush2.bf16.msra.mxu0 0
        %1952 = vmatprep.subr.bf16.mxu0 0
        %1953 = vmatpush2.bf16.msra.mxu0 0
        %1954 = vmatprep.subr.bf16.mxu0 0
        %1955 = vmatpush2.bf16.msra.mxu0 0
        %1956 = vmatprep.subr.bf16.mxu0 0
        %1957 = vmatpush2.bf16.msra.mxu0 0
        %1958 = vmatprep.subr.bf16.mxu0 0
        %1959 = vmatpush2.bf16.msra.mxu0 0
        %1960 = vmatprep.subr.bf16.mxu0 0
        %1961 = vmatpush2.bf16.msra.mxu0 0
        %1962 = vmatprep.subr.bf16.mxu0 0
        %1963 = vmatpush2.bf16.msra.mxu0 0
        %1964 = vmatprep.mubr.bf16.mxu0 0
        %1965 = vmatmul.mubr.bf16.gmra.mxu0 %v1882
        %v1966 = vpop.f32.mrf.mxu0
        %v1967 = vadd.f32 %v1670, %v1966
        %v1968 = vpop.f32.mrf.mxu0
        %v1969 = vpop.f32.mrf.mxu0
        %v1970 = vadd.f32 %v1673, %v1969
        %v1971 = vpop.f32.mrf.mxu0
        %1972 = vmatprep.mubr.bf16.mxu0 0
        %1973 = vmatmul.mubr.bf16.gmra.mxu0 %v1885
        %v1974 = vpop.f32.mrf.mxu0
        %v1975 = vadd.f32 %v1678, %v1974
        %v1976 = vpop.f32.mrf.mxu0
        %v1977 = vpop.f32.mrf.mxu0
        %v1978 = vadd.f32 %v1681, %v1977
        %v1979 = vpop.f32.mrf.mxu0
        %1980 = vmatprep.mubr.bf16.mxu0 0
        %1981 = vmatmul.mubr.bf16.gmra.mxu0 %v1888
        %v1982 = vpop.f32.mrf.mxu0
        %v1983 = vadd.f32 %v1686, %v1982
        %v1984 = vpop.f32.mrf.mxu0
        %v1985 = vpop.f32.mrf.mxu0
        %v1986 = vadd.f32 %v1689, %v1985
        %v1987 = vpop.f32.mrf.mxu0
        %1988 = vmatprep.mubr.bf16.mxu0 0
        %1989 = vmatmul.mubr.bf16.gmra.mxu0 %v1891
        %v1990 = vpop.f32.mrf.mxu0
        %v1991 = vadd.f32 %v1694, %v1990
        %v1992 = vpop.f32.mrf.mxu0
        %v1993 = vpop.f32.mrf.mxu0
        %v1994 = vadd.f32 %v1697, %v1993
        %v1995 = vpop.f32.mrf.mxu0
        %1996 = vmatprep.mubr.bf16.mxu0 0
        %1997 = vmatmul.mubr.bf16.gmra.mxu0 %v1894
        %v1998 = vpop.f32.mrf.mxu0
        %v1999 = vadd.f32 %v1702, %v1998
        %v2000 = vpop.f32.mrf.mxu0
        %v2001 = vpop.f32.mrf.mxu0
        %v2002 = vadd.f32 %v1705, %v2001
        %v2003 = vpop.f32.mrf.mxu0
        %2004 = vmatprep.mubr.bf16.mxu0 0
        %2005 = vmatmul.mubr.bf16.gmra.mxu0 %v1897
        %v2006 = vpop.f32.mrf.mxu0
        %v2007 = vadd.f32 %v1710, %v2006
        %v2008 = vpop.f32.mrf.mxu0
        %v2009 = vpop.f32.mrf.mxu0
        %v2010 = vadd.f32 %v1713, %v2009
        %v2011 = vpop.f32.mrf.mxu0
        %2012 = vmatprep.mubr.bf16.mxu0 0
        %2013 = vmatmul.mubr.bf16.gmra.mxu0 %v1900
        %v2014 = vpop.f32.mrf.mxu0
        %v2015 = vadd.f32 %v1718, %v2014
        %v2016 = vpop.f32.mrf.mxu0
        %v2017 = vpop.f32.mrf.mxu0
        %v2018 = vadd.f32 %v1721, %v2017
        %v2019 = vpop.f32.mrf.mxu0
        %2020 = vmatprep.mubr.bf16.mxu0 0
        %2021 = vmatmul.mubr.bf16.gmra.mxu0 %v1903
        %v2022 = vpop.f32.mrf.mxu0
        %v2023 = vadd.f32 %v1726, %v2022
        %v2024 = vpop.f32.mrf.mxu0
        %v2025 = vpop.f32.mrf.mxu0
        %v2026 = vadd.f32 %v1729, %v2025
        %v2027 = vpop.f32.mrf.mxu0
        %2028 = vmatprep.mubr.bf16.mxu0 0
        %2029 = vmatmul.mubr.bf16.gmra.mxu0 %v1906
        %v2030 = vpop.f32.mrf.mxu0
        %v2031 = vadd.f32 %v1734, %v2030
        %v2032 = vpop.f32.mrf.mxu0
        %v2033 = vpop.f32.mrf.mxu0
        %v2034 = vadd.f32 %v1737, %v2033
        %v2035 = vpop.f32.mrf.mxu0
        %2036 = vmatprep.mubr.bf16.mxu0 0
        %2037 = vmatmul.mubr.bf16.gmra.mxu0 %v1909
        %v2038 = vpop.f32.mrf.mxu0
        %v2039 = vadd.f32 %v1742, %v2038
        %v2040 = vpop.f32.mrf.mxu0
        %v2041 = vpop.f32.mrf.mxu0
        %v2042 = vadd.f32 %v1745, %v2041
        %v2043 = vpop.f32.mrf.mxu0
        %2044 = vmatprep.mubr.bf16.mxu0 0
        %2045 = vmatmul.mubr.bf16.gmra.mxu0 %v1912
        %v2046 = vpop.f32.mrf.mxu0
        %v2047 = vadd.f32 %v1750, %v2046
        %v2048 = vpop.f32.mrf.mxu0
        %v2049 = vpop.f32.mrf.mxu0
        %v2050 = vadd.f32 %v1753, %v2049
        %v2051 = vpop.f32.mrf.mxu0
        %2052 = vmatprep.mubr.bf16.mxu0 0
        %2053 = vmatmul.mubr.bf16.gmra.mxu0 %v1915
        %v2054 = vpop.f32.mrf.mxu0
        %v2055 = vadd.f32 %v1758, %v2054
        %v2056 = vpop.f32.mrf.mxu0
        %v2057 = vpop.f32.mrf.mxu0
        %v2058 = vadd.f32 %v1761, %v2057
        %v2059 = vpop.f32.mrf.mxu0
        %2060 = vmatprep.mubr.bf16.mxu0 0
        %2061 = vmatmul.mubr.bf16.gmra.mxu0 %v1918
        %v2062 = vpop.f32.mrf.mxu0
        %v2063 = vadd.f32 %v1766, %v2062
        %v2064 = vpop.f32.mrf.mxu0
        %v2065 = vpop.f32.mrf.mxu0
        %v2066 = vadd.f32 %v1769, %v2065
        %v2067 = vpop.f32.mrf.mxu0
        %2068 = vmatprep.mubr.bf16.mxu0 0
        %2069 = vmatmul.mubr.bf16.gmra.mxu0 %v1921
        %v2070 = vpop.f32.mrf.mxu0
        %v2071 = vadd.f32 %v1774, %v2070
        %v2072 = vpop.f32.mrf.mxu0
        %v2073 = vpop.f32.mrf.mxu0
        %v2074 = vadd.f32 %v1777, %v2073
        %v2075 = vpop.f32.mrf.mxu0
        %2076 = vmatprep.mubr.bf16.mxu0 0
        %2077 = vmatmul.mubr.bf16.gmra.mxu0 %v1924
        %v2078 = vpop.f32.mrf.mxu0
        %v2079 = vadd.f32 %v1782, %v2078
        %v2080 = vpop.f32.mrf.mxu0
        %v2081 = vpop.f32.mrf.mxu0
        %v2082 = vadd.f32 %v1785, %v2081
        %v2083 = vpop.f32.mrf.mxu0
        %2084 = vmatprep.mubr.bf16.mxu0 0
        %2085 = vmatmul.mubr.bf16.gmra.mxu0 %v1927
        %v2086 = vpop.f32.mrf.mxu0
        %v2087 = vadd.f32 %v1790, %v2086
        %v2088 = vpop.f32.mrf.mxu0
        %v2089 = vpop.f32.mrf.mxu0
        %v2090 = vadd.f32 %v1793, %v2089
        %v2091 = vpop.f32.mrf.mxu0
        %2092 = vdwg.mxu0
        %s2093 = scalar_lea.vmem [#allocation2], 16
        %v2094 = vld [vmem:[%s2093] sm:$0xf]
        %v2095 = vld [vmem:[%s2093 + $0x4] sm:$0xf]
        %v2096 = vld [vmem:[%s2093 + $0x8] sm:$0xf]
        %v2097 = vld [vmem:[%s2093 + $0xc] sm:$0xf]
        %v2098 = vld [vmem:[%s2093 + $0x10] sm:$0xf]
        %v2099 = vld [vmem:[%s2093 + $0x14] sm:$0xf]
        %v2100 = vld [vmem:[%s2093 + $0x18] sm:$0xf]
        %v2101 = vld [vmem:[%s2093 + $0x1c] sm:$0xf]
        %v2102 = vld [vmem:[%s2093 + $0x20] sm:$0xf]
        %v2103 = vld [vmem:[%s2093 + $0x24] sm:$0xf]
        %v2104 = vld [vmem:[%s2093 + $0x28] sm:$0xf]
        %v2105 = vld [vmem:[%s2093 + $0x2c] sm:$0xf]
        %v2106 = vld [vmem:[%s2093 + $0x30] sm:$0xf]
        %v2107 = vld [vmem:[%s2093 + $0x34] sm:$0xf]
        %v2108 = vld [vmem:[%s2093 + $0x38] sm:$0xf]
        %v2109 = vld [vmem:[%s2093 + $0x3c] sm:$0xf]
        %v2110 = vld [vmem:[%s2093 + $0x40] sm:$0xf]
        %v2111 = vld [vmem:[%s2093 + $0x44] sm:$0xf]
        %v2112 = vld [vmem:[%s2093 + $0x48] sm:$0xf]
        %v2113 = vld [vmem:[%s2093 + $0x4c] sm:$0xf]
        %v2114 = vld [vmem:[%s2093 + $0x50] sm:$0xf]
        %v2115 = vld [vmem:[%s2093 + $0x54] sm:$0xf]
        %v2116 = vld [vmem:[%s2093 + $0x58] sm:$0xf]
        %v2117 = vld [vmem:[%s2093 + $0x5c] sm:$0xf]
        %v2118 = vld [vmem:[%s2093 + $0x60] sm:$0xf]
        %v2119 = vld [vmem:[%s2093 + $0x64] sm:$0xf]
        %v2120 = vld [vmem:[%s2093 + $0x68] sm:$0xf]
        %v2121 = vld [vmem:[%s2093 + $0x6c] sm:$0xf]
        %v2122 = vld [vmem:[%s2093 + $0x70] sm:$0xf]
        %v2123 = vld [vmem:[%s2093 + $0x74] sm:$0xf]
        %v2124 = vld [vmem:[%s2093 + $0x78] sm:$0xf]
        %v2125 = vld [vmem:[%s2093 + $0x7c] sm:$0xf]
        %s2126 = scalar_lea.vmem %s1, 16
        %v2127 = vld [vmem:[%s2126] sm:$0xf]
        %v2128 = vld [vmem:[%s2126 + $0x4] sm:$0x3]
        %v2161 = vunpack.c.l.b16 %v2094
        %v2162 = vunpack.c.l.b16 %v2095
        %v2163 = vunpack.c.l.b16 %v2096
        %v2164 = vunpack.c.l.b16 %v2097
        %v2165 = vunpack.c.l.b16 %v2098
        %v2166 = vunpack.c.l.b16 %v2099
        %v2167 = vunpack.c.l.b16 %v2100
        %v2168 = vunpack.c.l.b16 %v2101
        %v2169 = vunpack.c.l.b16 %v2102
        %v2170 = vunpack.c.l.b16 %v2103
        %v2171 = vunpack.c.l.b16 %v2104
        %v2172 = vunpack.c.l.b16 %v2105
        %v2173 = vunpack.c.l.b16 %v2106
        %v2174 = vunpack.c.l.b16 %v2107
        %v2175 = vunpack.c.l.b16 %v2108
        %v2176 = vunpack.c.l.b16 %v2109
        %v2177 = vunpack.c.l.b16 %v2110
        %v2178 = vunpack.c.l.b16 %v2111
        %v2179 = vunpack.c.l.b16 %v2112
        %v2180 = vunpack.c.l.b16 %v2113
        %v2181 = vunpack.c.l.b16 %v2114
        %v2182 = vunpack.c.l.b16 %v2115
        %v2183 = vunpack.c.l.b16 %v2116
        %v2184 = vunpack.c.l.b16 %v2117
        %v2185 = vunpack.c.l.b16 %v2118
        %v2186 = vunpack.c.l.b16 %v2119
        %v2187 = vunpack.c.l.b16 %v2120
        %v2188 = vunpack.c.l.b16 %v2121
        %v2189 = vunpack.c.l.b16 %v2122
        %v2190 = vunpack.c.l.b16 %v2123
        %v2191 = vunpack.c.l.b16 %v2124
        %v2192 = vunpack.c.l.b16 %v2125
        %v2193 = vpack.c.b16 %v2162, %v2161
        %v2194 = vpack.c.b16 %v2164, %v2163
        %v2195 = vpack.c.b16 %v2166, %v2165
        %v2196 = vpack.c.b16 %v2168, %v2167
        %v2197 = vpack.c.b16 %v2170, %v2169
        %v2198 = vpack.c.b16 %v2172, %v2171
        %v2199 = vpack.c.b16 %v2174, %v2173
        %v2200 = vpack.c.b16 %v2176, %v2175
        %v2201 = vpack.c.b16 %v2178, %v2177
        %v2202 = vpack.c.b16 %v2180, %v2179
        %v2203 = vpack.c.b16 %v2182, %v2181
        %v2204 = vpack.c.b16 %v2184, %v2183
        %v2205 = vpack.c.b16 %v2186, %v2185
        %v2206 = vpack.c.b16 %v2188, %v2187
        %v2207 = vpack.c.b16 %v2190, %v2189
        %v2208 = vpack.c.b16 %v2192, %v2191
        %v2211 = vunpack.c.l.b16 %v2127
        %v2212 = vunpack.c.l.b16 %v2128
        %v2213 = vpack.c.b16 %v2212, %v2211
        %v2215 = vsel %vm1582, %v2193, 0
        %v2218 = vsel %vm1582, %v2194, 0
        %v2221 = vsel %vm1582, %v2195, 0
        %v2224 = vsel %vm1582, %v2196, 0
        %v2227 = vsel %vm1582, %v2197, 0
        %v2230 = vsel %vm1582, %v2198, 0
        %v2233 = vsel %vm1582, %v2199, 0
        %v2236 = vsel %vm1582, %v2200, 0
        %v2239 = vsel %vm1582, %v2201, 0
        %v2242 = vsel %vm1582, %v2202, 0
        %v2245 = vsel %vm1582, %v2203, 0
        %v2248 = vsel %vm1582, %v2204, 0
        %v2251 = vsel %vm1582, %v2205, 0
        %v2254 = vsel %vm1582, %v2206, 0
        %v2257 = vsel %vm1582, %v2207, 0
        %v2260 = vsel %vm1582, %v2208, 0
        %v2263 = vsel %vm1631, %v2213, 0
        %2265 = vmatprep.subr.bf16.mxu0 0
        %2266 = vmatpush1.bf16.msra.mxu0 0
        %2267 = vmatprep.subr.bf16.mxu0 0
        %2268 = vmatpush1.bf16.msra.mxu0 0
        %2269 = vmatprep.subr.bf16.mxu0 0
        %2270 = vmatpush1.bf16.msra.mxu0 0
        %2271 = vmatprep.subr.bf16.mxu0 0
        %2272 = vmatpush1.bf16.msra.mxu0 0
        %2273 = vmatprep.subr.bf16.mxu0 0
        %2274 = vmatpush1.bf16.msra.mxu0 0
        %2275 = vmatprep.subr.bf16.mxu0 0
        %2276 = vmatpush1.bf16.msra.mxu0 0
        %2277 = vmatprep.subr.bf16.mxu0 0
        %2278 = vmatpush1.bf16.msra.mxu0 0
        %2279 = vmatprep.subr.bf16.mxu0 0
        %2280 = vmatpush1.bf16.msra.mxu0 %v2263
        %2281 = vmatprep.subr.bf16.mxu0 0
        %2282 = vmatpush2.bf16.msra.mxu0 0
        %2283 = vmatprep.subr.bf16.mxu0 0
        %2284 = vmatpush2.bf16.msra.mxu0 0
        %2285 = vmatprep.subr.bf16.mxu0 0
        %2286 = vmatpush2.bf16.msra.mxu0 0
        %2287 = vmatprep.subr.bf16.mxu0 0
        %2288 = vmatpush2.bf16.msra.mxu0 0
        %2289 = vmatprep.subr.bf16.mxu0 0
        %2290 = vmatpush2.bf16.msra.mxu0 0
        %2291 = vmatprep.subr.bf16.mxu0 0
        %2292 = vmatpush2.bf16.msra.mxu0 0
        %2293 = vmatprep.subr.bf16.mxu0 0
        %2294 = vmatpush2.bf16.msra.mxu0 0
        %2295 = vmatprep.subr.bf16.mxu0 0
        %2296 = vmatpush2.bf16.msra.mxu0 0
        %2297 = vmatprep.mubr.bf16.mxu0 0
        %2298 = vmatmul.mubr.bf16.gmra.mxu0 %v2215
        %v2299 = vpop.f32.mrf.mxu0
        %v2300 = vadd.f32 0.0, %v2299
        %v2301 = vpop.f32.mrf.mxu0
        %v2302 = vpop.f32.mrf.mxu0
        %v2303 = vadd.f32 0.0, %v2302
        %v2304 = vpop.f32.mrf.mxu0
        %2305 = vmatprep.mubr.bf16.mxu0 0
        %2306 = vmatmul.mubr.bf16.gmra.mxu0 %v2218
        %v2307 = vpop.f32.mrf.mxu0
        %v2308 = vadd.f32 0.0, %v2307
        %v2309 = vpop.f32.mrf.mxu0
        %v2310 = vpop.f32.mrf.mxu0
        %v2311 = vadd.f32 0.0, %v2310
        %v2312 = vpop.f32.mrf.mxu0
        %2313 = vmatprep.mubr.bf16.mxu0 0
        %2314 = vmatmul.mubr.bf16.gmra.mxu0 %v2221
        %v2315 = vpop.f32.mrf.mxu0
        %v2316 = vadd.f32 0.0, %v2315
        %v2317 = vpop.f32.mrf.mxu0
        %v2318 = vpop.f32.mrf.mxu0
        %v2319 = vadd.f32 0.0, %v2318
        %v2320 = vpop.f32.mrf.mxu0
        %2321 = vmatprep.mubr.bf16.mxu0 0
        %2322 = vmatmul.mubr.bf16.gmra.mxu0 %v2224
        %v2323 = vpop.f32.mrf.mxu0
        %v2324 = vadd.f32 0.0, %v2323
        %v2325 = vpop.f32.mrf.mxu0
        %v2326 = vpop.f32.mrf.mxu0
        %v2327 = vadd.f32 0.0, %v2326
        %v2328 = vpop.f32.mrf.mxu0
        %2329 = vmatprep.mubr.bf16.mxu0 0
        %2330 = vmatmul.mubr.bf16.gmra.mxu0 %v2227
        %v2331 = vpop.f32.mrf.mxu0
        %v2332 = vadd.f32 0.0, %v2331
        %v2333 = vpop.f32.mrf.mxu0
        %v2334 = vpop.f32.mrf.mxu0
        %v2335 = vadd.f32 0.0, %v2334
        %v2336 = vpop.f32.mrf.mxu0
        %2337 = vmatprep.mubr.bf16.mxu0 0
        %2338 = vmatmul.mubr.bf16.gmra.mxu0 %v2230
        %v2339 = vpop.f32.mrf.mxu0
        %v2340 = vadd.f32 0.0, %v2339
        %v2341 = vpop.f32.mrf.mxu0
        %v2342 = vpop.f32.mrf.mxu0
        %v2343 = vadd.f32 0.0, %v2342
        %v2344 = vpop.f32.mrf.mxu0
        %2345 = vmatprep.mubr.bf16.mxu0 0
        %2346 = vmatmul.mubr.bf16.gmra.mxu0 %v2233
        %v2347 = vpop.f32.mrf.mxu0
        %v2348 = vadd.f32 0.0, %v2347
        %v2349 = vpop.f32.mrf.mxu0
        %v2350 = vpop.f32.mrf.mxu0
        %v2351 = vadd.f32 0.0, %v2350
        %v2352 = vpop.f32.mrf.mxu0
        %2353 = vmatprep.mubr.bf16.mxu0 0
        %2354 = vmatmul.mubr.bf16.gmra.mxu0 %v2236
        %v2355 = vpop.f32.mrf.mxu0
        %v2356 = vadd.f32 0.0, %v2355
        %v2357 = vpop.f32.mrf.mxu0
        %v2358 = vpop.f32.mrf.mxu0
        %v2359 = vadd.f32 0.0, %v2358
        %v2360 = vpop.f32.mrf.mxu0
        %2361 = vmatprep.mubr.bf16.mxu0 0
        %2362 = vmatmul.mubr.bf16.gmra.mxu0 %v2239
        %v2363 = vpop.f32.mrf.mxu0
        %v2364 = vadd.f32 0.0, %v2363
        %v2365 = vpop.f32.mrf.mxu0
        %v2366 = vpop.f32.mrf.mxu0
        %v2367 = vadd.f32 0.0, %v2366
        %v2368 = vpop.f32.mrf.mxu0
        %2369 = vmatprep.mubr.bf16.mxu0 0
        %2370 = vmatmul.mubr.bf16.gmra.mxu0 %v2242
        %v2371 = vpop.f32.mrf.mxu0
        %v2372 = vadd.f32 0.0, %v2371
        %v2373 = vpop.f32.mrf.mxu0
        %v2374 = vpop.f32.mrf.mxu0
        %v2375 = vadd.f32 0.0, %v2374
        %v2376 = vpop.f32.mrf.mxu0
        %2377 = vmatprep.mubr.bf16.mxu0 0
        %2378 = vmatmul.mubr.bf16.gmra.mxu0 %v2245
        %v2379 = vpop.f32.mrf.mxu0
        %v2380 = vadd.f32 0.0, %v2379
        %v2381 = vpop.f32.mrf.mxu0
        %v2382 = vpop.f32.mrf.mxu0
        %v2383 = vadd.f32 0.0, %v2382
        %v2384 = vpop.f32.mrf.mxu0
        %2385 = vmatprep.mubr.bf16.mxu0 0
        %2386 = vmatmul.mubr.bf16.gmra.mxu0 %v2248
        %v2387 = vpop.f32.mrf.mxu0
        %v2388 = vadd.f32 0.0, %v2387
        %v2389 = vpop.f32.mrf.mxu0
        %v2390 = vpop.f32.mrf.mxu0
        %v2391 = vadd.f32 0.0, %v2390
        %v2392 = vpop.f32.mrf.mxu0
        %2393 = vmatprep.mubr.bf16.mxu0 0
        %2394 = vmatmul.mubr.bf16.gmra.mxu0 %v2251
        %v2395 = vpop.f32.mrf.mxu0
        %v2396 = vadd.f32 0.0, %v2395
        %v2397 = vpop.f32.mrf.mxu0
        %v2398 = vpop.f32.mrf.mxu0
        %v2399 = vadd.f32 0.0, %v2398
        %v2400 = vpop.f32.mrf.mxu0
        %2401 = vmatprep.mubr.bf16.mxu0 0
        %2402 = vmatmul.mubr.bf16.gmra.mxu0 %v2254
        %v2403 = vpop.f32.mrf.mxu0
        %v2404 = vadd.f32 0.0, %v2403
        %v2405 = vpop.f32.mrf.mxu0
        %v2406 = vpop.f32.mrf.mxu0
        %v2407 = vadd.f32 0.0, %v2406
        %v2408 = vpop.f32.mrf.mxu0
        %2409 = vmatprep.mubr.bf16.mxu0 0
        %2410 = vmatmul.mubr.bf16.gmra.mxu0 %v2257
        %v2411 = vpop.f32.mrf.mxu0
        %v2412 = vadd.f32 0.0, %v2411
        %v2413 = vpop.f32.mrf.mxu0
        %v2414 = vpop.f32.mrf.mxu0
        %v2415 = vadd.f32 0.0, %v2414
        %v2416 = vpop.f32.mrf.mxu0
        %2417 = vmatprep.mubr.bf16.mxu0 0
        %2418 = vmatmul.mubr.bf16.gmra.mxu0 %v2260
        %v2419 = vpop.f32.mrf.mxu0
        %v2420 = vadd.f32 0.0, %v2419
        %v2421 = vpop.f32.mrf.mxu0
        %v2422 = vpop.f32.mrf.mxu0
        %v2423 = vadd.f32 0.0, %v2422
        %v2424 = vpop.f32.mrf.mxu0
        %2425 = vdwg.mxu0
        %v2426 = vadd.f32 %v1967, %v2300
        %v2427 = vadd.f32 %v1970, %v2303
        %v2428 = vadd.f32 %v1975, %v2308
        %v2429 = vadd.f32 %v1978, %v2311
        %v2430 = vadd.f32 %v1983, %v2316
        %v2431 = vadd.f32 %v1986, %v2319
        %v2432 = vadd.f32 %v1991, %v2324
        %v2433 = vadd.f32 %v1994, %v2327
        %v2434 = vadd.f32 %v1999, %v2332
        %v2435 = vadd.f32 %v2002, %v2335
        %v2436 = vadd.f32 %v2007, %v2340
        %v2437 = vadd.f32 %v2010, %v2343
        %v2438 = vadd.f32 %v2015, %v2348
        %v2439 = vadd.f32 %v2018, %v2351
        %v2440 = vadd.f32 %v2023, %v2356
        %v2441 = vadd.f32 %v2026, %v2359
        %v2442 = vadd.f32 %v2031, %v2364
        %v2443 = vadd.f32 %v2034, %v2367
        %v2444 = vadd.f32 %v2039, %v2372
        %v2445 = vadd.f32 %v2042, %v2375
        %v2446 = vadd.f32 %v2047, %v2380
        %v2447 = vadd.f32 %v2050, %v2383
        %v2448 = vadd.f32 %v2055, %v2388
        %v2449 = vadd.f32 %v2058, %v2391
        %v2450 = vadd.f32 %v2063, %v2396
        %v2451 = vadd.f32 %v2066, %v2399
        %v2452 = vadd.f32 %v2071, %v2404
        %v2453 = vadd.f32 %v2074, %v2407
        %v2454 = vadd.f32 %v2079, %v2412
        %v2455 = vadd.f32 %v2082, %v2415
        %v2456 = vadd.f32 %v2087, %v2420
        %v2457 = vadd.f32 %v2090, %v2423
        %v2458 = vld [vmem:[%s2] sm:$0x1]
        %v2460 = vlaneseq
        %v2461 = vshrl.u32 %v2460, 7
        %v2462 = vsub.s32 0, %v2461
        %v2463 = vrot.slane %v2458, %v2462
        %v2465 = vadd.f32 %v2426, %v2463
        %v2466 = vadd.f32 %v2427, %v2463
        %v2467 = vadd.f32 %v2428, %v2463
        %v2468 = vadd.f32 %v2429, %v2463
        %v2469 = vadd.f32 %v2430, %v2463
        %v2470 = vadd.f32 %v2431, %v2463
        %v2471 = vadd.f32 %v2432, %v2463
        %v2472 = vadd.f32 %v2433, %v2463
        %v2473 = vadd.f32 %v2434, %v2463
        %v2474 = vadd.f32 %v2435, %v2463
        %v2475 = vadd.f32 %v2436, %v2463
        %v2476 = vadd.f32 %v2437, %v2463
        %v2477 = vadd.f32 %v2438, %v2463
        %v2478 = vadd.f32 %v2439, %v2463
        %v2479 = vadd.f32 %v2440, %v2463
        %v2480 = vadd.f32 %v2441, %v2463
        %v2481 = vadd.f32 %v2442, %v2463
        %v2482 = vadd.f32 %v2443, %v2463
        %v2483 = vadd.f32 %v2444, %v2463
        %v2484 = vadd.f32 %v2445, %v2463
        %v2485 = vadd.f32 %v2446, %v2463
        %v2486 = vadd.f32 %v2447, %v2463
        %v2487 = vadd.f32 %v2448, %v2463
        %v2488 = vadd.f32 %v2449, %v2463
        %v2489 = vadd.f32 %v2450, %v2463
        %v2490 = vadd.f32 %v2451, %v2463
        %v2491 = vadd.f32 %v2452, %v2463
        %v2492 = vadd.f32 %v2453, %v2463
        %v2493 = vadd.f32 %v2454, %v2463
        %v2494 = vadd.f32 %v2455, %v2463
        %v2495 = vadd.f32 %v2456, %v2463
        %v2496 = vadd.f32 %v2457, %v2463
        %v2497 = vmax.f32 %v2465, 0.0
        %v2498 = vmax.f32 %v2466, 0.0
        %v2499 = vmax.f32 %v2467, 0.0
        %v2500 = vmax.f32 %v2468, 0.0
        %v2501 = vmax.f32 %v2469, 0.0
        %v2502 = vmax.f32 %v2470, 0.0
        %v2503 = vmax.f32 %v2471, 0.0
        %v2504 = vmax.f32 %v2472, 0.0
        %v2505 = vmax.f32 %v2473, 0.0
        %v2506 = vmax.f32 %v2474, 0.0
        %v2507 = vmax.f32 %v2475, 0.0
        %v2508 = vmax.f32 %v2476, 0.0
        %v2509 = vmax.f32 %v2477, 0.0
        %v2510 = vmax.f32 %v2478, 0.0
        %v2511 = vmax.f32 %v2479, 0.0
        %v2512 = vmax.f32 %v2480, 0.0
        %v2513 = vmax.f32 %v2481, 0.0
        %v2514 = vmax.f32 %v2482, 0.0
        %v2515 = vmax.f32 %v2483, 0.0
        %v2516 = vmax.f32 %v2484, 0.0
        %v2517 = vmax.f32 %v2485, 0.0
        %v2518 = vmax.f32 %v2486, 0.0
        %v2519 = vmax.f32 %v2487, 0.0
        %v2520 = vmax.f32 %v2488, 0.0
        %v2521 = vmax.f32 %v2489, 0.0
        %v2522 = vmax.f32 %v2490, 0.0
        %v2523 = vmax.f32 %v2491, 0.0
        %v2524 = vmax.f32 %v2492, 0.0
        %v2525 = vmax.f32 %v2493, 0.0
        %v2526 = vmax.f32 %v2494, 0.0
        %v2527 = vmax.f32 %v2495, 0.0
        %v2528 = vmax.f32 %v2496, 0.0
        %v2561 = vcombine.high %v2497, %v2497
        %v2563 = vunpack.c.l.s4 1983009808
        %v2564 = vunpack.c.0.s8 %v2563
        %v2565 = vlaneseq
        %v2566 = vshrl.u32 %v2565, 7
        %v2567 = vsub.s32 %v2564, %v2566
        %v2568 = vrot.slane %v2497, %v2567
        %v2570 = vunpack.c.l.s4 1983009808
        %v2571 = vunpack.c.0.s8 %v2570
        %v2572 = vlaneseq
        %v2573 = vshrl.u32 %v2572, 7
        %v2574 = vsub.s32 %v2571, %v2573
        %v2575 = vrot.slane %v2561, %v2574
        %v2576 = vcombine.high %v2568, %v2568
        %v2577 = vcombine.high %v2575, %v2575
        %v2578 = vcombine.high %v2498, %v2498
        %v2580 = vunpack.c.l.s4 1983009808
        %v2581 = vunpack.c.0.s8 %v2580
        %v2582 = vlaneseq
        %v2583 = vshrl.u32 %v2582, 7
        %v2584 = vsub.s32 %v2581, %v2583
        %v2585 = vrot.slane %v2498, %v2584
        %v2587 = vunpack.c.l.s4 1983009808
        %v2588 = vunpack.c.0.s8 %v2587
        %v2589 = vlaneseq
        %v2590 = vshrl.u32 %v2589, 7
        %v2591 = vsub.s32 %v2588, %v2590
        %v2592 = vrot.slane %v2578, %v2591
        %v2593 = vcombine.high %v2585, %v2585
        %v2594 = vcombine.high %v2592, %v2592
        %v2595 = vcombine.high %v2499, %v2499
        %v2597 = vunpack.c.l.s4 1983009808
        %v2598 = vunpack.c.0.s8 %v2597
        %v2599 = vlaneseq
        %v2600 = vshrl.u32 %v2599, 7
        %v2601 = vsub.s32 %v2598, %v2600
        %v2602 = vrot.slane %v2499, %v2601
        %v2604 = vunpack.c.l.s4 1983009808
        %v2605 = vunpack.c.0.s8 %v2604
        %v2606 = vlaneseq
        %v2607 = vshrl.u32 %v2606, 7
        %v2608 = vsub.s32 %v2605, %v2607
        %v2609 = vrot.slane %v2595, %v2608
        %v2610 = vcombine.high %v2602, %v2602
        %v2611 = vcombine.high %v2609, %v2609
        %v2612 = vcombine.high %v2500, %v2500
        %v2614 = vunpack.c.l.s4 1983009808
        %v2615 = vunpack.c.0.s8 %v2614
        %v2616 = vlaneseq
        %v2617 = vshrl.u32 %v2616, 7
        %v2618 = vsub.s32 %v2615, %v2617
        %v2619 = vrot.slane %v2500, %v2618
        %v2621 = vunpack.c.l.s4 1983009808
        %v2622 = vunpack.c.0.s8 %v2621
        %v2623 = vlaneseq
        %v2624 = vshrl.u32 %v2623, 7
        %v2625 = vsub.s32 %v2622, %v2624
        %v2626 = vrot.slane %v2612, %v2625
        %v2627 = vcombine.high %v2619, %v2619
        %v2628 = vcombine.high %v2626, %v2626
        %v2629 = vcombine.high %v2501, %v2501
        %v2631 = vunpack.c.l.s4 1983009808
        %v2632 = vunpack.c.0.s8 %v2631
        %v2633 = vlaneseq
        %v2634 = vshrl.u32 %v2633, 7
        %v2635 = vsub.s32 %v2632, %v2634
        %v2636 = vrot.slane %v2501, %v2635
        %v2638 = vunpack.c.l.s4 1983009808
        %v2639 = vunpack.c.0.s8 %v2638
        %v2640 = vlaneseq
        %v2641 = vshrl.u32 %v2640, 7
        %v2642 = vsub.s32 %v2639, %v2641
        %v2643 = vrot.slane %v2629, %v2642
        %v2644 = vcombine.high %v2636, %v2636
        %v2645 = vcombine.high %v2643, %v2643
        %v2646 = vcombine.high %v2502, %v2502
        %v2648 = vunpack.c.l.s4 1983009808
        %v2649 = vunpack.c.0.s8 %v2648
        %v2650 = vlaneseq
        %v2651 = vshrl.u32 %v2650, 7
        %v2652 = vsub.s32 %v2649, %v2651
        %v2653 = vrot.slane %v2502, %v2652
        %v2655 = vunpack.c.l.s4 1983009808
        %v2656 = vunpack.c.0.s8 %v2655
        %v2657 = vlaneseq
        %v2658 = vshrl.u32 %v2657, 7
        %v2659 = vsub.s32 %v2656, %v2658
        %v2660 = vrot.slane %v2646, %v2659
        %v2661 = vcombine.high %v2653, %v2653
        %v2662 = vcombine.high %v2660, %v2660
        %v2663 = vcombine.high %v2503, %v2503
        %v2665 = vunpack.c.l.s4 1983009808
        %v2666 = vunpack.c.0.s8 %v2665
        %v2667 = vlaneseq
        %v2668 = vshrl.u32 %v2667, 7
        %v2669 = vsub.s32 %v2666, %v2668
        %v2670 = vrot.slane %v2503, %v2669
        %v2672 = vunpack.c.l.s4 1983009808
        %v2673 = vunpack.c.0.s8 %v2672
        %v2674 = vlaneseq
        %v2675 = vshrl.u32 %v2674, 7
        %v2676 = vsub.s32 %v2673, %v2675
        %v2677 = vrot.slane %v2663, %v2676
        %v2678 = vcombine.high %v2670, %v2670
        %v2679 = vcombine.high %v2677, %v2677
        %v2680 = vcombine.high %v2504, %v2504
        %v2682 = vunpack.c.l.s4 1983009808
        %v2683 = vunpack.c.0.s8 %v2682
        %v2684 = vlaneseq
        %v2685 = vshrl.u32 %v2684, 7
        %v2686 = vsub.s32 %v2683, %v2685
        %v2687 = vrot.slane %v2504, %v2686
        %v2689 = vunpack.c.l.s4 1983009808
        %v2690 = vunpack.c.0.s8 %v2689
        %v2691 = vlaneseq
        %v2692 = vshrl.u32 %v2691, 7
        %v2693 = vsub.s32 %v2690, %v2692
        %v2694 = vrot.slane %v2680, %v2693
        %v2695 = vcombine.high %v2687, %v2687
        %v2696 = vcombine.high %v2694, %v2694
        %v2697 = vcombine.high %v2505, %v2505
        %v2699 = vunpack.c.l.s4 1983009808
        %v2700 = vunpack.c.0.s8 %v2699
        %v2701 = vlaneseq
        %v2702 = vshrl.u32 %v2701, 7
        %v2703 = vsub.s32 %v2700, %v2702
        %v2704 = vrot.slane %v2505, %v2703
        %v2706 = vunpack.c.l.s4 1983009808
        %v2707 = vunpack.c.0.s8 %v2706
        %v2708 = vlaneseq
        %v2709 = vshrl.u32 %v2708, 7
        %v2710 = vsub.s32 %v2707, %v2709
        %v2711 = vrot.slane %v2697, %v2710
        %v2712 = vcombine.high %v2704, %v2704
        %v2713 = vcombine.high %v2711, %v2711
        %v2714 = vcombine.high %v2506, %v2506
        %v2716 = vunpack.c.l.s4 1983009808
        %v2717 = vunpack.c.0.s8 %v2716
        %v2718 = vlaneseq
        %v2719 = vshrl.u32 %v2718, 7
        %v2720 = vsub.s32 %v2717, %v2719
        %v2721 = vrot.slane %v2506, %v2720
        %v2723 = vunpack.c.l.s4 1983009808
        %v2724 = vunpack.c.0.s8 %v2723
        %v2725 = vlaneseq
        %v2726 = vshrl.u32 %v2725, 7
        %v2727 = vsub.s32 %v2724, %v2726
        %v2728 = vrot.slane %v2714, %v2727
        %v2729 = vcombine.high %v2721, %v2721
        %v2730 = vcombine.high %v2728, %v2728
        %v2731 = vcombine.high %v2507, %v2507
        %v2733 = vunpack.c.l.s4 1983009808
        %v2734 = vunpack.c.0.s8 %v2733
        %v2735 = vlaneseq
        %v2736 = vshrl.u32 %v2735, 7
        %v2737 = vsub.s32 %v2734, %v2736
        %v2738 = vrot.slane %v2507, %v2737
        %v2740 = vunpack.c.l.s4 1983009808
        %v2741 = vunpack.c.0.s8 %v2740
        %v2742 = vlaneseq
        %v2743 = vshrl.u32 %v2742, 7
        %v2744 = vsub.s32 %v2741, %v2743
        %v2745 = vrot.slane %v2731, %v2744
        %v2746 = vcombine.high %v2738, %v2738
        %v2747 = vcombine.high %v2745, %v2745
        %v2748 = vcombine.high %v2508, %v2508
        %v2750 = vunpack.c.l.s4 1983009808
        %v2751 = vunpack.c.0.s8 %v2750
        %v2752 = vlaneseq
        %v2753 = vshrl.u32 %v2752, 7
        %v2754 = vsub.s32 %v2751, %v2753
        %v2755 = vrot.slane %v2508, %v2754
        %v2757 = vunpack.c.l.s4 1983009808
        %v2758 = vunpack.c.0.s8 %v2757
        %v2759 = vlaneseq
        %v2760 = vshrl.u32 %v2759, 7
        %v2761 = vsub.s32 %v2758, %v2760
        %v2762 = vrot.slane %v2748, %v2761
        %v2763 = vcombine.high %v2755, %v2755
        %v2764 = vcombine.high %v2762, %v2762
        %v2765 = vcombine.high %v2509, %v2509
        %v2767 = vunpack.c.l.s4 1983009808
        %v2768 = vunpack.c.0.s8 %v2767
        %v2769 = vlaneseq
        %v2770 = vshrl.u32 %v2769, 7
        %v2771 = vsub.s32 %v2768, %v2770
        %v2772 = vrot.slane %v2509, %v2771
        %v2774 = vunpack.c.l.s4 1983009808
        %v2775 = vunpack.c.0.s8 %v2774
        %v2776 = vlaneseq
        %v2777 = vshrl.u32 %v2776, 7
        %v2778 = vsub.s32 %v2775, %v2777
        %v2779 = vrot.slane %v2765, %v2778
        %v2780 = vcombine.high %v2772, %v2772
        %v2781 = vcombine.high %v2779, %v2779
        %v2782 = vcombine.high %v2510, %v2510
        %v2784 = vunpack.c.l.s4 1983009808
        %v2785 = vunpack.c.0.s8 %v2784
        %v2786 = vlaneseq
        %v2787 = vshrl.u32 %v2786, 7
        %v2788 = vsub.s32 %v2785, %v2787
        %v2789 = vrot.slane %v2510, %v2788
        %v2791 = vunpack.c.l.s4 1983009808
        %v2792 = vunpack.c.0.s8 %v2791
        %v2793 = vlaneseq
        %v2794 = vshrl.u32 %v2793, 7
        %v2795 = vsub.s32 %v2792, %v2794
        %v2796 = vrot.slane %v2782, %v2795
        %v2797 = vcombine.high %v2789, %v2789
        %v2798 = vcombine.high %v2796, %v2796
        %v2799 = vcombine.high %v2511, %v2511
        %v2801 = vunpack.c.l.s4 1983009808
        %v2802 = vunpack.c.0.s8 %v2801
        %v2803 = vlaneseq
        %v2804 = vshrl.u32 %v2803, 7
        %v2805 = vsub.s32 %v2802, %v2804
        %v2806 = vrot.slane %v2511, %v2805
        %v2808 = vunpack.c.l.s4 1983009808
        %v2809 = vunpack.c.0.s8 %v2808
        %v2810 = vlaneseq
        %v2811 = vshrl.u32 %v2810, 7
        %v2812 = vsub.s32 %v2809, %v2811
        %v2813 = vrot.slane %v2799, %v2812
        %v2814 = vcombine.high %v2806, %v2806
        %v2815 = vcombine.high %v2813, %v2813
        %v2816 = vcombine.high %v2512, %v2512
        %v2818 = vunpack.c.l.s4 1983009808
        %v2819 = vunpack.c.0.s8 %v2818
        %v2820 = vlaneseq
        %v2821 = vshrl.u32 %v2820, 7
        %v2822 = vsub.s32 %v2819, %v2821
        %v2823 = vrot.slane %v2512, %v2822
        %v2825 = vunpack.c.l.s4 1983009808
        %v2826 = vunpack.c.0.s8 %v2825
        %v2827 = vlaneseq
        %v2828 = vshrl.u32 %v2827, 7
        %v2829 = vsub.s32 %v2826, %v2828
        %v2830 = vrot.slane %v2816, %v2829
        %v2831 = vcombine.high %v2823, %v2823
        %v2832 = vcombine.high %v2830, %v2830
        %v2833 = vcombine.high %v2513, %v2513
        %v2835 = vunpack.c.l.s4 1983009808
        %v2836 = vunpack.c.0.s8 %v2835
        %v2837 = vlaneseq
        %v2838 = vshrl.u32 %v2837, 7
        %v2839 = vsub.s32 %v2836, %v2838
        %v2840 = vrot.slane %v2513, %v2839
        %v2842 = vunpack.c.l.s4 1983009808
        %v2843 = vunpack.c.0.s8 %v2842
        %v2844 = vlaneseq
        %v2845 = vshrl.u32 %v2844, 7
        %v2846 = vsub.s32 %v2843, %v2845
        %v2847 = vrot.slane %v2833, %v2846
        %v2848 = vcombine.high %v2840, %v2840
        %v2849 = vcombine.high %v2847, %v2847
        %v2850 = vcombine.high %v2514, %v2514
        %v2852 = vunpack.c.l.s4 1983009808
        %v2853 = vunpack.c.0.s8 %v2852
        %v2854 = vlaneseq
        %v2855 = vshrl.u32 %v2854, 7
        %v2856 = vsub.s32 %v2853, %v2855
        %v2857 = vrot.slane %v2514, %v2856
        %v2859 = vunpack.c.l.s4 1983009808
        %v2860 = vunpack.c.0.s8 %v2859
        %v2861 = vlaneseq
        %v2862 = vshrl.u32 %v2861, 7
        %v2863 = vsub.s32 %v2860, %v2862
        %v2864 = vrot.slane %v2850, %v2863
        %v2865 = vcombine.high %v2857, %v2857
        %v2866 = vcombine.high %v2864, %v2864
        %v2867 = vcombine.high %v2515, %v2515
        %v2869 = vunpack.c.l.s4 1983009808
        %v2870 = vunpack.c.0.s8 %v2869
        %v2871 = vlaneseq
        %v2872 = vshrl.u32 %v2871, 7
        %v2873 = vsub.s32 %v2870, %v2872
        %v2874 = vrot.slane %v2515, %v2873
        %v2876 = vunpack.c.l.s4 1983009808
        %v2877 = vunpack.c.0.s8 %v2876
        %v2878 = vlaneseq
        %v2879 = vshrl.u32 %v2878, 7
        %v2880 = vsub.s32 %v2877, %v2879
        %v2881 = vrot.slane %v2867, %v2880
        %v2882 = vcombine.high %v2874, %v2874
        %v2883 = vcombine.high %v2881, %v2881
        %v2884 = vcombine.high %v2516, %v2516
        %v2886 = vunpack.c.l.s4 1983009808
        %v2887 = vunpack.c.0.s8 %v2886
        %v2888 = vlaneseq
        %v2889 = vshrl.u32 %v2888, 7
        %v2890 = vsub.s32 %v2887, %v2889
        %v2891 = vrot.slane %v2516, %v2890
        %v2893 = vunpack.c.l.s4 1983009808
        %v2894 = vunpack.c.0.s8 %v2893
        %v2895 = vlaneseq
        %v2896 = vshrl.u32 %v2895, 7
        %v2897 = vsub.s32 %v2894, %v2896
        %v2898 = vrot.slane %v2884, %v2897
        %v2899 = vcombine.high %v2891, %v2891
        %v2900 = vcombine.high %v2898, %v2898
        %v2901 = vcombine.high %v2517, %v2517
        %v2903 = vunpack.c.l.s4 1983009808
        %v2904 = vunpack.c.0.s8 %v2903
        %v2905 = vlaneseq
        %v2906 = vshrl.u32 %v2905, 7
        %v2907 = vsub.s32 %v2904, %v2906
        %v2908 = vrot.slane %v2517, %v2907
        %v2910 = vunpack.c.l.s4 1983009808
        %v2911 = vunpack.c.0.s8 %v2910
        %v2912 = vlaneseq
        %v2913 = vshrl.u32 %v2912, 7
        %v2914 = vsub.s32 %v2911, %v2913
        %v2915 = vrot.slane %v2901, %v2914
        %v2916 = vcombine.high %v2908, %v2908
        %v2917 = vcombine.high %v2915, %v2915
        %v2918 = vcombine.high %v2518, %v2518
        %v2920 = vunpack.c.l.s4 1983009808
        %v2921 = vunpack.c.0.s8 %v2920
        %v2922 = vlaneseq
        %v2923 = vshrl.u32 %v2922, 7
        %v2924 = vsub.s32 %v2921, %v2923
        %v2925 = vrot.slane %v2518, %v2924
        %v2927 = vunpack.c.l.s4 1983009808
        %v2928 = vunpack.c.0.s8 %v2927
        %v2929 = vlaneseq
        %v2930 = vshrl.u32 %v2929, 7
        %v2931 = vsub.s32 %v2928, %v2930
        %v2932 = vrot.slane %v2918, %v2931
        %v2933 = vcombine.high %v2925, %v2925
        %v2934 = vcombine.high %v2932, %v2932
        %v2935 = vcombine.high %v2519, %v2519
        %v2937 = vunpack.c.l.s4 1983009808
        %v2938 = vunpack.c.0.s8 %v2937
        %v2939 = vlaneseq
        %v2940 = vshrl.u32 %v2939, 7
        %v2941 = vsub.s32 %v2938, %v2940
        %v2942 = vrot.slane %v2519, %v2941
        %v2944 = vunpack.c.l.s4 1983009808
        %v2945 = vunpack.c.0.s8 %v2944
        %v2946 = vlaneseq
        %v2947 = vshrl.u32 %v2946, 7
        %v2948 = vsub.s32 %v2945, %v2947
        %v2949 = vrot.slane %v2935, %v2948
        %v2950 = vcombine.high %v2942, %v2942
        %v2951 = vcombine.high %v2949, %v2949
        %v2952 = vcombine.high %v2520, %v2520
        %v2954 = vunpack.c.l.s4 1983009808
        %v2955 = vunpack.c.0.s8 %v2954
        %v2956 = vlaneseq
        %v2957 = vshrl.u32 %v2956, 7
        %v2958 = vsub.s32 %v2955, %v2957
        %v2959 = vrot.slane %v2520, %v2958
        %v2961 = vunpack.c.l.s4 1983009808
        %v2962 = vunpack.c.0.s8 %v2961
        %v2963 = vlaneseq
        %v2964 = vshrl.u32 %v2963, 7
        %v2965 = vsub.s32 %v2962, %v2964
        %v2966 = vrot.slane %v2952, %v2965
        %v2967 = vcombine.high %v2959, %v2959
        %v2968 = vcombine.high %v2966, %v2966
        %v2969 = vcombine.high %v2521, %v2521
        %v2971 = vunpack.c.l.s4 1983009808
        %v2972 = vunpack.c.0.s8 %v2971
        %v2973 = vlaneseq
        %v2974 = vshrl.u32 %v2973, 7
        %v2975 = vsub.s32 %v2972, %v2974
        %v2976 = vrot.slane %v2521, %v2975
        %v2978 = vunpack.c.l.s4 1983009808
        %v2979 = vunpack.c.0.s8 %v2978
        %v2980 = vlaneseq
        %v2981 = vshrl.u32 %v2980, 7
        %v2982 = vsub.s32 %v2979, %v2981
        %v2983 = vrot.slane %v2969, %v2982
        %v2984 = vcombine.high %v2976, %v2976
        %v2985 = vcombine.high %v2983, %v2983
        %v2986 = vcombine.high %v2522, %v2522
        %v2988 = vunpack.c.l.s4 1983009808
        %v2989 = vunpack.c.0.s8 %v2988
        %v2990 = vlaneseq
        %v2991 = vshrl.u32 %v2990, 7
        %v2992 = vsub.s32 %v2989, %v2991
        %v2993 = vrot.slane %v2522, %v2992
        %v2995 = vunpack.c.l.s4 1983009808
        %v2996 = vunpack.c.0.s8 %v2995
        %v2997 = vlaneseq
        %v2998 = vshrl.u32 %v2997, 7
        %v2999 = vsub.s32 %v2996, %v2998
        %v3000 = vrot.slane %v2986, %v2999
        %v3001 = vcombine.high %v2993, %v2993
        %v3002 = vcombine.high %v3000, %v3000
        %v3003 = vcombine.high %v2523, %v2523
        %v3005 = vunpack.c.l.s4 1983009808
        %v3006 = vunpack.c.0.s8 %v3005
        %v3007 = vlaneseq
        %v3008 = vshrl.u32 %v3007, 7
        %v3009 = vsub.s32 %v3006, %v3008
        %v3010 = vrot.slane %v2523, %v3009
        %v3012 = vunpack.c.l.s4 1983009808
        %v3013 = vunpack.c.0.s8 %v3012
        %v3014 = vlaneseq
        %v3015 = vshrl.u32 %v3014, 7
        %v3016 = vsub.s32 %v3013, %v3015
        %v3017 = vrot.slane %v3003, %v3016
        %v3018 = vcombine.high %v3010, %v3010
        %v3019 = vcombine.high %v3017, %v3017
        %v3020 = vcombine.high %v2524, %v2524
        %v3022 = vunpack.c.l.s4 1983009808
        %v3023 = vunpack.c.0.s8 %v3022
        %v3024 = vlaneseq
        %v3025 = vshrl.u32 %v3024, 7
        %v3026 = vsub.s32 %v3023, %v3025
        %v3027 = vrot.slane %v2524, %v3026
        %v3029 = vunpack.c.l.s4 1983009808
        %v3030 = vunpack.c.0.s8 %v3029
        %v3031 = vlaneseq
        %v3032 = vshrl.u32 %v3031, 7
        %v3033 = vsub.s32 %v3030, %v3032
        %v3034 = vrot.slane %v3020, %v3033
        %v3035 = vcombine.high %v3027, %v3027
        %v3036 = vcombine.high %v3034, %v3034
        %v3037 = vcombine.high %v2525, %v2525
        %v3039 = vunpack.c.l.s4 1983009808
        %v3040 = vunpack.c.0.s8 %v3039
        %v3041 = vlaneseq
        %v3042 = vshrl.u32 %v3041, 7
        %v3043 = vsub.s32 %v3040, %v3042
        %v3044 = vrot.slane %v2525, %v3043
        %v3046 = vunpack.c.l.s4 1983009808
        %v3047 = vunpack.c.0.s8 %v3046
        %v3048 = vlaneseq
        %v3049 = vshrl.u32 %v3048, 7
        %v3050 = vsub.s32 %v3047, %v3049
        %v3051 = vrot.slane %v3037, %v3050
        %v3052 = vcombine.high %v3044, %v3044
        %v3053 = vcombine.high %v3051, %v3051
        %v3054 = vcombine.high %v2526, %v2526
        %v3056 = vunpack.c.l.s4 1983009808
        %v3057 = vunpack.c.0.s8 %v3056
        %v3058 = vlaneseq
        %v3059 = vshrl.u32 %v3058, 7
        %v3060 = vsub.s32 %v3057, %v3059
        %v3061 = vrot.slane %v2526, %v3060
        %v3063 = vunpack.c.l.s4 1983009808
        %v3064 = vunpack.c.0.s8 %v3063
        %v3065 = vlaneseq
        %v3066 = vshrl.u32 %v3065, 7
        %v3067 = vsub.s32 %v3064, %v3066
        %v3068 = vrot.slane %v3054, %v3067
        %v3069 = vcombine.high %v3061, %v3061
        %v3070 = vcombine.high %v3068, %v3068
        %v3071 = vcombine.high %v2527, %v2527
        %v3073 = vunpack.c.l.s4 1983009808
        %v3074 = vunpack.c.0.s8 %v3073
        %v3075 = vlaneseq
        %v3076 = vshrl.u32 %v3075, 7
        %v3077 = vsub.s32 %v3074, %v3076
        %v3078 = vrot.slane %v2527, %v3077
        %v3080 = vunpack.c.l.s4 1983009808
        %v3081 = vunpack.c.0.s8 %v3080
        %v3082 = vlaneseq
        %v3083 = vshrl.u32 %v3082, 7
        %v3084 = vsub.s32 %v3081, %v3083
        %v3085 = vrot.slane %v3071, %v3084
        %v3086 = vcombine.high %v3078, %v3078
        %v3087 = vcombine.high %v3085, %v3085
        %v3088 = vcombine.high %v2528, %v2528
        %v3090 = vunpack.c.l.s4 1983009808
        %v3091 = vunpack.c.0.s8 %v3090
        %v3092 = vlaneseq
        %v3093 = vshrl.u32 %v3092, 7
        %v3094 = vsub.s32 %v3091, %v3093
        %v3095 = vrot.slane %v2528, %v3094
        %v3097 = vunpack.c.l.s4 1983009808
        %v3098 = vunpack.c.0.s8 %v3097
        %v3099 = vlaneseq
        %v3100 = vshrl.u32 %v3099, 7
        %v3101 = vsub.s32 %v3098, %v3100
        %v3102 = vrot.slane %v3088, %v3101
        %v3103 = vcombine.high %v3095, %v3095
        %v3104 = vcombine.high %v3102, %v3102
        %vm3233 = vcmask 254976
        %v3234 = vsel %vm3233, %v2568, -inf
        %v3235 = vrot.slane %v3234, 4
        %v3236 = vmax.f32 %v3234, %v3235
        %v3237 = vrot.slane %v3236, 2
        %v3238 = vmax.f32 %v3236, %v3237
        %v3239 = vrot.slane %v3238, 1
        %v3240 = vmax.f32 %v3238, %v3239
        %v3241 = vsel %vm3233, %v2576, -inf
        %v3242 = vrot.slane %v3241, 4
        %v3243 = vmax.f32 %v3241, %v3242
        %v3244 = vrot.slane %v3243, 2
        %v3245 = vmax.f32 %v3243, %v3244
        %v3246 = vrot.slane %v3245, 1
        %v3247 = vmax.f32 %v3245, %v3246
        %v3248 = vsel %vm3233, %v2575, -inf
        %v3249 = vrot.slane %v3248, 4
        %v3250 = vmax.f32 %v3248, %v3249
        %v3251 = vrot.slane %v3250, 2
        %v3252 = vmax.f32 %v3250, %v3251
        %v3253 = vrot.slane %v3252, 1
        %v3254 = vmax.f32 %v3252, %v3253
        %v3255 = vsel %vm3233, %v2577, -inf
        %v3256 = vrot.slane %v3255, 4
        %v3257 = vmax.f32 %v3255, %v3256
        %v3258 = vrot.slane %v3257, 2
        %v3259 = vmax.f32 %v3257, %v3258
        %v3260 = vrot.slane %v3259, 1
        %v3261 = vmax.f32 %v3259, %v3260
        %v3262 = vsel %vm3233, %v2585, -inf
        %v3263 = vrot.slane %v3262, 4
        %v3264 = vmax.f32 %v3262, %v3263
        %v3265 = vrot.slane %v3264, 2
        %v3266 = vmax.f32 %v3264, %v3265
        %v3267 = vrot.slane %v3266, 1
        %v3268 = vmax.f32 %v3266, %v3267
        %v3269 = vsel %vm3233, %v2593, -inf
        %v3270 = vrot.slane %v3269, 4
        %v3271 = vmax.f32 %v3269, %v3270
        %v3272 = vrot.slane %v3271, 2
        %v3273 = vmax.f32 %v3271, %v3272
        %v3274 = vrot.slane %v3273, 1
        %v3275 = vmax.f32 %v3273, %v3274
        %v3276 = vsel %vm3233, %v2592, -inf
        %v3277 = vrot.slane %v3276, 4
        %v3278 = vmax.f32 %v3276, %v3277
        %v3279 = vrot.slane %v3278, 2
        %v3280 = vmax.f32 %v3278, %v3279
        %v3281 = vrot.slane %v3280, 1
        %v3282 = vmax.f32 %v3280, %v3281
        %v3283 = vsel %vm3233, %v2594, -inf
        %v3284 = vrot.slane %v3283, 4
        %v3285 = vmax.f32 %v3283, %v3284
        %v3286 = vrot.slane %v3285, 2
        %v3287 = vmax.f32 %v3285, %v3286
        %v3288 = vrot.slane %v3287, 1
        %v3289 = vmax.f32 %v3287, %v3288
        %v3290 = vsel %vm3233, %v2602, -inf
        %v3291 = vrot.slane %v3290, 4
        %v3292 = vmax.f32 %v3290, %v3291
        %v3293 = vrot.slane %v3292, 2
        %v3294 = vmax.f32 %v3292, %v3293
        %v3295 = vrot.slane %v3294, 1
        %v3296 = vmax.f32 %v3294, %v3295
        %v3297 = vsel %vm3233, %v2610, -inf
        %v3298 = vrot.slane %v3297, 4
        %v3299 = vmax.f32 %v3297, %v3298
        %v3300 = vrot.slane %v3299, 2
        %v3301 = vmax.f32 %v3299, %v3300
        %v3302 = vrot.slane %v3301, 1
        %v3303 = vmax.f32 %v3301, %v3302
        %v3304 = vsel %vm3233, %v2609, -inf
        %v3305 = vrot.slane %v3304, 4
        %v3306 = vmax.f32 %v3304, %v3305
        %v3307 = vrot.slane %v3306, 2
        %v3308 = vmax.f32 %v3306, %v3307
        %v3309 = vrot.slane %v3308, 1
        %v3310 = vmax.f32 %v3308, %v3309
        %v3311 = vsel %vm3233, %v2611, -inf
        %v3312 = vrot.slane %v3311, 4
        %v3313 = vmax.f32 %v3311, %v3312
        %v3314 = vrot.slane %v3313, 2
        %v3315 = vmax.f32 %v3313, %v3314
        %v3316 = vrot.slane %v3315, 1
        %v3317 = vmax.f32 %v3315, %v3316
        %v3318 = vsel %vm3233, %v2619, -inf
        %v3319 = vrot.slane %v3318, 4
        %v3320 = vmax.f32 %v3318, %v3319
        %v3321 = vrot.slane %v3320, 2
        %v3322 = vmax.f32 %v3320, %v3321
        %v3323 = vrot.slane %v3322, 1
        %v3324 = vmax.f32 %v3322, %v3323
        %v3325 = vsel %vm3233, %v2627, -inf
        %v3326 = vrot.slane %v3325, 4
        %v3327 = vmax.f32 %v3325, %v3326
        %v3328 = vrot.slane %v3327, 2
        %v3329 = vmax.f32 %v3327, %v3328
        %v3330 = vrot.slane %v3329, 1
        %v3331 = vmax.f32 %v3329, %v3330
        %v3332 = vsel %vm3233, %v2626, -inf
        %v3333 = vrot.slane %v3332, 4
        %v3334 = vmax.f32 %v3332, %v3333
        %v3335 = vrot.slane %v3334, 2
        %v3336 = vmax.f32 %v3334, %v3335
        %v3337 = vrot.slane %v3336, 1
        %v3338 = vmax.f32 %v3336, %v3337
        %v3339 = vsel %vm3233, %v2628, -inf
        %v3340 = vrot.slane %v3339, 4
        %v3341 = vmax.f32 %v3339, %v3340
        %v3342 = vrot.slane %v3341, 2
        %v3343 = vmax.f32 %v3341, %v3342
        %v3344 = vrot.slane %v3343, 1
        %v3345 = vmax.f32 %v3343, %v3344
        %v3346 = vsel %vm3233, %v2636, -inf
        %v3347 = vrot.slane %v3346, 4
        %v3348 = vmax.f32 %v3346, %v3347
        %v3349 = vrot.slane %v3348, 2
        %v3350 = vmax.f32 %v3348, %v3349
        %v3351 = vrot.slane %v3350, 1
        %v3352 = vmax.f32 %v3350, %v3351
        %v3353 = vsel %vm3233, %v2644, -inf
        %v3354 = vrot.slane %v3353, 4
        %v3355 = vmax.f32 %v3353, %v3354
        %v3356 = vrot.slane %v3355, 2
        %v3357 = vmax.f32 %v3355, %v3356
        %v3358 = vrot.slane %v3357, 1
        %v3359 = vmax.f32 %v3357, %v3358
        %v3360 = vsel %vm3233, %v2643, -inf
        %v3361 = vrot.slane %v3360, 4
        %v3362 = vmax.f32 %v3360, %v3361
        %v3363 = vrot.slane %v3362, 2
        %v3364 = vmax.f32 %v3362, %v3363
        %v3365 = vrot.slane %v3364, 1
        %v3366 = vmax.f32 %v3364, %v3365
        %v3367 = vsel %vm3233, %v2645, -inf
        %v3368 = vrot.slane %v3367, 4
        %v3369 = vmax.f32 %v3367, %v3368
        %v3370 = vrot.slane %v3369, 2
        %v3371 = vmax.f32 %v3369, %v3370
        %v3372 = vrot.slane %v3371, 1
        %v3373 = vmax.f32 %v3371, %v3372
        %v3374 = vsel %vm3233, %v2653, -inf
        %v3375 = vrot.slane %v3374, 4
        %v3376 = vmax.f32 %v3374, %v3375
        %v3377 = vrot.slane %v3376, 2
        %v3378 = vmax.f32 %v3376, %v3377
        %v3379 = vrot.slane %v3378, 1
        %v3380 = vmax.f32 %v3378, %v3379
        %v3381 = vsel %vm3233, %v2661, -inf
        %v3382 = vrot.slane %v3381, 4
        %v3383 = vmax.f32 %v3381, %v3382
        %v3384 = vrot.slane %v3383, 2
        %v3385 = vmax.f32 %v3383, %v3384
        %v3386 = vrot.slane %v3385, 1
        %v3387 = vmax.f32 %v3385, %v3386
        %v3388 = vsel %vm3233, %v2660, -inf
        %v3389 = vrot.slane %v3388, 4
        %v3390 = vmax.f32 %v3388, %v3389
        %v3391 = vrot.slane %v3390, 2
        %v3392 = vmax.f32 %v3390, %v3391
        %v3393 = vrot.slane %v3392, 1
        %v3394 = vmax.f32 %v3392, %v3393
        %v3395 = vsel %vm3233, %v2662, -inf
        %v3396 = vrot.slane %v3395, 4
        %v3397 = vmax.f32 %v3395, %v3396
        %v3398 = vrot.slane %v3397, 2
        %v3399 = vmax.f32 %v3397, %v3398
        %v3400 = vrot.slane %v3399, 1
        %v3401 = vmax.f32 %v3399, %v3400
        %v3402 = vsel %vm3233, %v2670, -inf
        %v3403 = vrot.slane %v3402, 4
        %v3404 = vmax.f32 %v3402, %v3403
        %v3405 = vrot.slane %v3404, 2
        %v3406 = vmax.f32 %v3404, %v3405
        %v3407 = vrot.slane %v3406, 1
        %v3408 = vmax.f32 %v3406, %v3407
        %v3409 = vsel %vm3233, %v2678, -inf
        %v3410 = vrot.slane %v3409, 4
        %v3411 = vmax.f32 %v3409, %v3410
        %v3412 = vrot.slane %v3411, 2
        %v3413 = vmax.f32 %v3411, %v3412
        %v3414 = vrot.slane %v3413, 1
        %v3415 = vmax.f32 %v3413, %v3414
        %v3416 = vsel %vm3233, %v2677, -inf
        %v3417 = vrot.slane %v3416, 4
        %v3418 = vmax.f32 %v3416, %v3417
        %v3419 = vrot.slane %v3418, 2
        %v3420 = vmax.f32 %v3418, %v3419
        %v3421 = vrot.slane %v3420, 1
        %v3422 = vmax.f32 %v3420, %v3421
        %v3423 = vsel %vm3233, %v2679, -inf
        %v3424 = vrot.slane %v3423, 4
        %v3425 = vmax.f32 %v3423, %v3424
        %v3426 = vrot.slane %v3425, 2
        %v3427 = vmax.f32 %v3425, %v3426
        %v3428 = vrot.slane %v3427, 1
        %v3429 = vmax.f32 %v3427, %v3428
        %v3430 = vsel %vm3233, %v2687, -inf
        %v3431 = vrot.slane %v3430, 4
        %v3432 = vmax.f32 %v3430, %v3431
        %v3433 = vrot.slane %v3432, 2
        %v3434 = vmax.f32 %v3432, %v3433
        %v3435 = vrot.slane %v3434, 1
        %v3436 = vmax.f32 %v3434, %v3435
        %v3437 = vsel %vm3233, %v2695, -inf
        %v3438 = vrot.slane %v3437, 4
        %v3439 = vmax.f32 %v3437, %v3438
        %v3440 = vrot.slane %v3439, 2
        %v3441 = vmax.f32 %v3439, %v3440
        %v3442 = vrot.slane %v3441, 1
        %v3443 = vmax.f32 %v3441, %v3442
        %v3444 = vsel %vm3233, %v2694, -inf
        %v3445 = vrot.slane %v3444, 4
        %v3446 = vmax.f32 %v3444, %v3445
        %v3447 = vrot.slane %v3446, 2
        %v3448 = vmax.f32 %v3446, %v3447
        %v3449 = vrot.slane %v3448, 1
        %v3450 = vmax.f32 %v3448, %v3449
        %v3451 = vsel %vm3233, %v2696, -inf
        %v3452 = vrot.slane %v3451, 4
        %v3453 = vmax.f32 %v3451, %v3452
        %v3454 = vrot.slane %v3453, 2
        %v3455 = vmax.f32 %v3453, %v3454
        %v3456 = vrot.slane %v3455, 1
        %v3457 = vmax.f32 %v3455, %v3456
        %v3458 = vsel %vm3233, %v2704, -inf
        %v3459 = vrot.slane %v3458, 4
        %v3460 = vmax.f32 %v3458, %v3459
        %v3461 = vrot.slane %v3460, 2
        %v3462 = vmax.f32 %v3460, %v3461
        %v3463 = vrot.slane %v3462, 1
        %v3464 = vmax.f32 %v3462, %v3463
        %v3465 = vsel %vm3233, %v2712, -inf
        %v3466 = vrot.slane %v3465, 4
        %v3467 = vmax.f32 %v3465, %v3466
        %v3468 = vrot.slane %v3467, 2
        %v3469 = vmax.f32 %v3467, %v3468
        %v3470 = vrot.slane %v3469, 1
        %v3471 = vmax.f32 %v3469, %v3470
        %v3472 = vsel %vm3233, %v2711, -inf
        %v3473 = vrot.slane %v3472, 4
        %v3474 = vmax.f32 %v3472, %v3473
        %v3475 = vrot.slane %v3474, 2
        %v3476 = vmax.f32 %v3474, %v3475
        %v3477 = vrot.slane %v3476, 1
        %v3478 = vmax.f32 %v3476, %v3477
        %v3479 = vsel %vm3233, %v2713, -inf
        %v3480 = vrot.slane %v3479, 4
        %v3481 = vmax.f32 %v3479, %v3480
        %v3482 = vrot.slane %v3481, 2
        %v3483 = vmax.f32 %v3481, %v3482
        %v3484 = vrot.slane %v3483, 1
        %v3485 = vmax.f32 %v3483, %v3484
        %v3486 = vsel %vm3233, %v2721, -inf
        %v3487 = vrot.slane %v3486, 4
        %v3488 = vmax.f32 %v3486, %v3487
        %v3489 = vrot.slane %v3488, 2
        %v3490 = vmax.f32 %v3488, %v3489
        %v3491 = vrot.slane %v3490, 1
        %v3492 = vmax.f32 %v3490, %v3491
        %v3493 = vsel %vm3233, %v2729, -inf
        %v3494 = vrot.slane %v3493, 4
        %v3495 = vmax.f32 %v3493, %v3494
        %v3496 = vrot.slane %v3495, 2
        %v3497 = vmax.f32 %v3495, %v3496
        %v3498 = vrot.slane %v3497, 1
        %v3499 = vmax.f32 %v3497, %v3498
        %v3500 = vsel %vm3233, %v2728, -inf
        %v3501 = vrot.slane %v3500, 4
        %v3502 = vmax.f32 %v3500, %v3501
        %v3503 = vrot.slane %v3502, 2
        %v3504 = vmax.f32 %v3502, %v3503
        %v3505 = vrot.slane %v3504, 1
        %v3506 = vmax.f32 %v3504, %v3505
        %v3507 = vsel %vm3233, %v2730, -inf
        %v3508 = vrot.slane %v3507, 4
        %v3509 = vmax.f32 %v3507, %v3508
        %v3510 = vrot.slane %v3509, 2
        %v3511 = vmax.f32 %v3509, %v3510
        %v3512 = vrot.slane %v3511, 1
        %v3513 = vmax.f32 %v3511, %v3512
        %v3514 = vsel %vm3233, %v2738, -inf
        %v3515 = vrot.slane %v3514, 4
        %v3516 = vmax.f32 %v3514, %v3515
        %v3517 = vrot.slane %v3516, 2
        %v3518 = vmax.f32 %v3516, %v3517
        %v3519 = vrot.slane %v3518, 1
        %v3520 = vmax.f32 %v3518, %v3519
        %v3521 = vsel %vm3233, %v2746, -inf
        %v3522 = vrot.slane %v3521, 4
        %v3523 = vmax.f32 %v3521, %v3522
        %v3524 = vrot.slane %v3523, 2
        %v3525 = vmax.f32 %v3523, %v3524
        %v3526 = vrot.slane %v3525, 1
        %v3527 = vmax.f32 %v3525, %v3526
        %v3528 = vsel %vm3233, %v2745, -inf
        %v3529 = vrot.slane %v3528, 4
        %v3530 = vmax.f32 %v3528, %v3529
        %v3531 = vrot.slane %v3530, 2
        %v3532 = vmax.f32 %v3530, %v3531
        %v3533 = vrot.slane %v3532, 1
        %v3534 = vmax.f32 %v3532, %v3533
        %v3535 = vsel %vm3233, %v2747, -inf
        %v3536 = vrot.slane %v3535, 4
        %v3537 = vmax.f32 %v3535, %v3536
        %v3538 = vrot.slane %v3537, 2
        %v3539 = vmax.f32 %v3537, %v3538
        %v3540 = vrot.slane %v3539, 1
        %v3541 = vmax.f32 %v3539, %v3540
        %v3542 = vsel %vm3233, %v2755, -inf
        %v3543 = vrot.slane %v3542, 4
        %v3544 = vmax.f32 %v3542, %v3543
        %v3545 = vrot.slane %v3544, 2
        %v3546 = vmax.f32 %v3544, %v3545
        %v3547 = vrot.slane %v3546, 1
        %v3548 = vmax.f32 %v3546, %v3547
        %v3549 = vsel %vm3233, %v2763, -inf
        %v3550 = vrot.slane %v3549, 4
        %v3551 = vmax.f32 %v3549, %v3550
        %v3552 = vrot.slane %v3551, 2
        %v3553 = vmax.f32 %v3551, %v3552
        %v3554 = vrot.slane %v3553, 1
        %v3555 = vmax.f32 %v3553, %v3554
        %v3556 = vsel %vm3233, %v2762, -inf
        %v3557 = vrot.slane %v3556, 4
        %v3558 = vmax.f32 %v3556, %v3557
        %v3559 = vrot.slane %v3558, 2
        %v3560 = vmax.f32 %v3558, %v3559
        %v3561 = vrot.slane %v3560, 1
        %v3562 = vmax.f32 %v3560, %v3561
        %v3563 = vsel %vm3233, %v2764, -inf
        %v3564 = vrot.slane %v3563, 4
        %v3565 = vmax.f32 %v3563, %v3564
        %v3566 = vrot.slane %v3565, 2
        %v3567 = vmax.f32 %v3565, %v3566
        %v3568 = vrot.slane %v3567, 1
        %v3569 = vmax.f32 %v3567, %v3568
        %v3570 = vsel %vm3233, %v2772, -inf
        %v3571 = vrot.slane %v3570, 4
        %v3572 = vmax.f32 %v3570, %v3571
        %v3573 = vrot.slane %v3572, 2
        %v3574 = vmax.f32 %v3572, %v3573
        %v3575 = vrot.slane %v3574, 1
        %v3576 = vmax.f32 %v3574, %v3575
        %v3577 = vsel %vm3233, %v2780, -inf
        %v3578 = vrot.slane %v3577, 4
        %v3579 = vmax.f32 %v3577, %v3578
        %v3580 = vrot.slane %v3579, 2
        %v3581 = vmax.f32 %v3579, %v3580
        %v3582 = vrot.slane %v3581, 1
        %v3583 = vmax.f32 %v3581, %v3582
        %v3584 = vsel %vm3233, %v2779, -inf
        %v3585 = vrot.slane %v3584, 4
        %v3586 = vmax.f32 %v3584, %v3585
        %v3587 = vrot.slane %v3586, 2
        %v3588 = vmax.f32 %v3586, %v3587
        %v3589 = vrot.slane %v3588, 1
        %v3590 = vmax.f32 %v3588, %v3589
        %v3591 = vsel %vm3233, %v2781, -inf
        %v3592 = vrot.slane %v3591, 4
        %v3593 = vmax.f32 %v3591, %v3592
        %v3594 = vrot.slane %v3593, 2
        %v3595 = vmax.f32 %v3593, %v3594
        %v3596 = vrot.slane %v3595, 1
        %v3597 = vmax.f32 %v3595, %v3596
        %v3598 = vsel %vm3233, %v2789, -inf
        %v3599 = vrot.slane %v3598, 4
        %v3600 = vmax.f32 %v3598, %v3599
        %v3601 = vrot.slane %v3600, 2
        %v3602 = vmax.f32 %v3600, %v3601
        %v3603 = vrot.slane %v3602, 1
        %v3604 = vmax.f32 %v3602, %v3603
        %v3605 = vsel %vm3233, %v2797, -inf
        %v3606 = vrot.slane %v3605, 4
        %v3607 = vmax.f32 %v3605, %v3606
        %v3608 = vrot.slane %v3607, 2
        %v3609 = vmax.f32 %v3607, %v3608
        %v3610 = vrot.slane %v3609, 1
        %v3611 = vmax.f32 %v3609, %v3610
        %v3612 = vsel %vm3233, %v2796, -inf
        %v3613 = vrot.slane %v3612, 4
        %v3614 = vmax.f32 %v3612, %v3613
        %v3615 = vrot.slane %v3614, 2
        %v3616 = vmax.f32 %v3614, %v3615
        %v3617 = vrot.slane %v3616, 1
        %v3618 = vmax.f32 %v3616, %v3617
        %v3619 = vsel %vm3233, %v2798, -inf
        %v3620 = vrot.slane %v3619, 4
        %v3621 = vmax.f32 %v3619, %v3620
        %v3622 = vrot.slane %v3621, 2
        %v3623 = vmax.f32 %v3621, %v3622
        %v3624 = vrot.slane %v3623, 1
        %v3625 = vmax.f32 %v3623, %v3624
        %v3626 = vsel %vm3233, %v2806, -inf
        %v3627 = vrot.slane %v3626, 4
        %v3628 = vmax.f32 %v3626, %v3627
        %v3629 = vrot.slane %v3628, 2
        %v3630 = vmax.f32 %v3628, %v3629
        %v3631 = vrot.slane %v3630, 1
        %v3632 = vmax.f32 %v3630, %v3631
        %v3633 = vsel %vm3233, %v2814, -inf
        %v3634 = vrot.slane %v3633, 4
        %v3635 = vmax.f32 %v3633, %v3634
        %v3636 = vrot.slane %v3635, 2
        %v3637 = vmax.f32 %v3635, %v3636
        %v3638 = vrot.slane %v3637, 1
        %v3639 = vmax.f32 %v3637, %v3638
        %v3640 = vsel %vm3233, %v2813, -inf
        %v3641 = vrot.slane %v3640, 4
        %v3642 = vmax.f32 %v3640, %v3641
        %v3643 = vrot.slane %v3642, 2
        %v3644 = vmax.f32 %v3642, %v3643
        %v3645 = vrot.slane %v3644, 1
        %v3646 = vmax.f32 %v3644, %v3645
        %v3647 = vsel %vm3233, %v2815, -inf
        %v3648 = vrot.slane %v3647, 4
        %v3649 = vmax.f32 %v3647, %v3648
        %v3650 = vrot.slane %v3649, 2
        %v3651 = vmax.f32 %v3649, %v3650
        %v3652 = vrot.slane %v3651, 1
        %v3653 = vmax.f32 %v3651, %v3652
        %v3654 = vsel %vm3233, %v2823, -inf
        %v3655 = vrot.slane %v3654, 4
        %v3656 = vmax.f32 %v3654, %v3655
        %v3657 = vrot.slane %v3656, 2
        %v3658 = vmax.f32 %v3656, %v3657
        %v3659 = vrot.slane %v3658, 1
        %v3660 = vmax.f32 %v3658, %v3659
        %v3661 = vsel %vm3233, %v2831, -inf
        %v3662 = vrot.slane %v3661, 4
        %v3663 = vmax.f32 %v3661, %v3662
        %v3664 = vrot.slane %v3663, 2
        %v3665 = vmax.f32 %v3663, %v3664
        %v3666 = vrot.slane %v3665, 1
        %v3667 = vmax.f32 %v3665, %v3666
        %v3668 = vsel %vm3233, %v2830, -inf
        %v3669 = vrot.slane %v3668, 4
        %v3670 = vmax.f32 %v3668, %v3669
        %v3671 = vrot.slane %v3670, 2
        %v3672 = vmax.f32 %v3670, %v3671
        %v3673 = vrot.slane %v3672, 1
        %v3674 = vmax.f32 %v3672, %v3673
        %v3675 = vsel %vm3233, %v2832, -inf
        %v3676 = vrot.slane %v3675, 4
        %v3677 = vmax.f32 %v3675, %v3676
        %v3678 = vrot.slane %v3677, 2
        %v3679 = vmax.f32 %v3677, %v3678
        %v3680 = vrot.slane %v3679, 1
        %v3681 = vmax.f32 %v3679, %v3680
        %v3682 = vsel %vm3233, %v2840, -inf
        %v3683 = vrot.slane %v3682, 4
        %v3684 = vmax.f32 %v3682, %v3683
        %v3685 = vrot.slane %v3684, 2
        %v3686 = vmax.f32 %v3684, %v3685
        %v3687 = vrot.slane %v3686, 1
        %v3688 = vmax.f32 %v3686, %v3687
        %v3689 = vsel %vm3233, %v2848, -inf
        %v3690 = vrot.slane %v3689, 4
        %v3691 = vmax.f32 %v3689, %v3690
        %v3692 = vrot.slane %v3691, 2
        %v3693 = vmax.f32 %v3691, %v3692
        %v3694 = vrot.slane %v3693, 1
        %v3695 = vmax.f32 %v3693, %v3694
        %v3696 = vsel %vm3233, %v2847, -inf
        %v3697 = vrot.slane %v3696, 4
        %v3698 = vmax.f32 %v3696, %v3697
        %v3699 = vrot.slane %v3698, 2
        %v3700 = vmax.f32 %v3698, %v3699
        %v3701 = vrot.slane %v3700, 1
        %v3702 = vmax.f32 %v3700, %v3701
        %v3703 = vsel %vm3233, %v2849, -inf
        %v3704 = vrot.slane %v3703, 4
        %v3705 = vmax.f32 %v3703, %v3704
        %v3706 = vrot.slane %v3705, 2
        %v3707 = vmax.f32 %v3705, %v3706
        %v3708 = vrot.slane %v3707, 1
        %v3709 = vmax.f32 %v3707, %v3708
        %v3710 = vsel %vm3233, %v2857, -inf
        %v3711 = vrot.slane %v3710, 4
        %v3712 = vmax.f32 %v3710, %v3711
        %v3713 = vrot.slane %v3712, 2
        %v3714 = vmax.f32 %v3712, %v3713
        %v3715 = vrot.slane %v3714, 1
        %v3716 = vmax.f32 %v3714, %v3715
        %v3717 = vsel %vm3233, %v2865, -inf
        %v3718 = vrot.slane %v3717, 4
        %v3719 = vmax.f32 %v3717, %v3718
        %v3720 = vrot.slane %v3719, 2
        %v3721 = vmax.f32 %v3719, %v3720
        %v3722 = vrot.slane %v3721, 1
        %v3723 = vmax.f32 %v3721, %v3722
        %v3724 = vsel %vm3233, %v2864, -inf
        %v3725 = vrot.slane %v3724, 4
        %v3726 = vmax.f32 %v3724, %v3725
        %v3727 = vrot.slane %v3726, 2
        %v3728 = vmax.f32 %v3726, %v3727
        %v3729 = vrot.slane %v3728, 1
        %v3730 = vmax.f32 %v3728, %v3729
        %v3731 = vsel %vm3233, %v2866, -inf
        %v3732 = vrot.slane %v3731, 4
        %v3733 = vmax.f32 %v3731, %v3732
        %v3734 = vrot.slane %v3733, 2
        %v3735 = vmax.f32 %v3733, %v3734
        %v3736 = vrot.slane %v3735, 1
        %v3737 = vmax.f32 %v3735, %v3736
        %v3738 = vsel %vm3233, %v2874, -inf
        %v3739 = vrot.slane %v3738, 4
        %v3740 = vmax.f32 %v3738, %v3739
        %v3741 = vrot.slane %v3740, 2
        %v3742 = vmax.f32 %v3740, %v3741
        %v3743 = vrot.slane %v3742, 1
        %v3744 = vmax.f32 %v3742, %v3743
        %v3745 = vsel %vm3233, %v2882, -inf
        %v3746 = vrot.slane %v3745, 4
        %v3747 = vmax.f32 %v3745, %v3746
        %v3748 = vrot.slane %v3747, 2
        %v3749 = vmax.f32 %v3747, %v3748
        %v3750 = vrot.slane %v3749, 1
        %v3751 = vmax.f32 %v3749, %v3750
        %v3752 = vsel %vm3233, %v2881, -inf
        %v3753 = vrot.slane %v3752, 4
        %v3754 = vmax.f32 %v3752, %v3753
        %v3755 = vrot.slane %v3754, 2
        %v3756 = vmax.f32 %v3754, %v3755
        %v3757 = vrot.slane %v3756, 1
        %v3758 = vmax.f32 %v3756, %v3757
        %v3759 = vsel %vm3233, %v2883, -inf
        %v3760 = vrot.slane %v3759, 4
        %v3761 = vmax.f32 %v3759, %v3760
        %v3762 = vrot.slane %v3761, 2
        %v3763 = vmax.f32 %v3761, %v3762
        %v3764 = vrot.slane %v3763, 1
        %v3765 = vmax.f32 %v3763, %v3764
        %v3766 = vsel %vm3233, %v2891, -inf
        %v3767 = vrot.slane %v3766, 4
        %v3768 = vmax.f32 %v3766, %v3767
        %v3769 = vrot.slane %v3768, 2
        %v3770 = vmax.f32 %v3768, %v3769
        %v3771 = vrot.slane %v3770, 1
        %v3772 = vmax.f32 %v3770, %v3771
        %v3773 = vsel %vm3233, %v2899, -inf
        %v3774 = vrot.slane %v3773, 4
        %v3775 = vmax.f32 %v3773, %v3774
        %v3776 = vrot.slane %v3775, 2
        %v3777 = vmax.f32 %v3775, %v3776
        %v3778 = vrot.slane %v3777, 1
        %v3779 = vmax.f32 %v3777, %v3778
        %v3780 = vsel %vm3233, %v2898, -inf
        %v3781 = vrot.slane %v3780, 4
        %v3782 = vmax.f32 %v3780, %v3781
        %v3783 = vrot.slane %v3782, 2
        %v3784 = vmax.f32 %v3782, %v3783
        %v3785 = vrot.slane %v3784, 1
        %v3786 = vmax.f32 %v3784, %v3785
        %v3787 = vsel %vm3233, %v2900, -inf
        %v3788 = vrot.slane %v3787, 4
        %v3789 = vmax.f32 %v3787, %v3788
        %v3790 = vrot.slane %v3789, 2
        %v3791 = vmax.f32 %v3789, %v3790
        %v3792 = vrot.slane %v3791, 1
        %v3793 = vmax.f32 %v3791, %v3792
        %v3794 = vsel %vm3233, %v2908, -inf
        %v3795 = vrot.slane %v3794, 4
        %v3796 = vmax.f32 %v3794, %v3795
        %v3797 = vrot.slane %v3796, 2
        %v3798 = vmax.f32 %v3796, %v3797
        %v3799 = vrot.slane %v3798, 1
        %v3800 = vmax.f32 %v3798, %v3799
        %v3801 = vsel %vm3233, %v2916, -inf
        %v3802 = vrot.slane %v3801, 4
        %v3803 = vmax.f32 %v3801, %v3802
        %v3804 = vrot.slane %v3803, 2
        %v3805 = vmax.f32 %v3803, %v3804
        %v3806 = vrot.slane %v3805, 1
        %v3807 = vmax.f32 %v3805, %v3806
        %v3808 = vsel %vm3233, %v2915, -inf
        %v3809 = vrot.slane %v3808, 4
        %v3810 = vmax.f32 %v3808, %v3809
        %v3811 = vrot.slane %v3810, 2
        %v3812 = vmax.f32 %v3810, %v3811
        %v3813 = vrot.slane %v3812, 1
        %v3814 = vmax.f32 %v3812, %v3813
        %v3815 = vsel %vm3233, %v2917, -inf
        %v3816 = vrot.slane %v3815, 4
        %v3817 = vmax.f32 %v3815, %v3816
        %v3818 = vrot.slane %v3817, 2
        %v3819 = vmax.f32 %v3817, %v3818
        %v3820 = vrot.slane %v3819, 1
        %v3821 = vmax.f32 %v3819, %v3820
        %v3822 = vsel %vm3233, %v2925, -inf
        %v3823 = vrot.slane %v3822, 4
        %v3824 = vmax.f32 %v3822, %v3823
        %v3825 = vrot.slane %v3824, 2
        %v3826 = vmax.f32 %v3824, %v3825
        %v3827 = vrot.slane %v3826, 1
        %v3828 = vmax.f32 %v3826, %v3827
        %v3829 = vsel %vm3233, %v2933, -inf
        %v3830 = vrot.slane %v3829, 4
        %v3831 = vmax.f32 %v3829, %v3830
        %v3832 = vrot.slane %v3831, 2
        %v3833 = vmax.f32 %v3831, %v3832
        %v3834 = vrot.slane %v3833, 1
        %v3835 = vmax.f32 %v3833, %v3834
        %v3836 = vsel %vm3233, %v2932, -inf
        %v3837 = vrot.slane %v3836, 4
        %v3838 = vmax.f32 %v3836, %v3837
        %v3839 = vrot.slane %v3838, 2
        %v3840 = vmax.f32 %v3838, %v3839
        %v3841 = vrot.slane %v3840, 1
        %v3842 = vmax.f32 %v3840, %v3841
        %v3843 = vsel %vm3233, %v2934, -inf
        %v3844 = vrot.slane %v3843, 4
        %v3845 = vmax.f32 %v3843, %v3844
        %v3846 = vrot.slane %v3845, 2
        %v3847 = vmax.f32 %v3845, %v3846
        %v3848 = vrot.slane %v3847, 1
        %v3849 = vmax.f32 %v3847, %v3848
        %v3850 = vsel %vm3233, %v2942, -inf
        %v3851 = vrot.slane %v3850, 4
        %v3852 = vmax.f32 %v3850, %v3851
        %v3853 = vrot.slane %v3852, 2
        %v3854 = vmax.f32 %v3852, %v3853
        %v3855 = vrot.slane %v3854, 1
        %v3856 = vmax.f32 %v3854, %v3855
        %v3857 = vsel %vm3233, %v2950, -inf
        %v3858 = vrot.slane %v3857, 4
        %v3859 = vmax.f32 %v3857, %v3858
        %v3860 = vrot.slane %v3859, 2
        %v3861 = vmax.f32 %v3859, %v3860
        %v3862 = vrot.slane %v3861, 1
        %v3863 = vmax.f32 %v3861, %v3862
        %v3864 = vsel %vm3233, %v2949, -inf
        %v3865 = vrot.slane %v3864, 4
        %v3866 = vmax.f32 %v3864, %v3865
        %v3867 = vrot.slane %v3866, 2
        %v3868 = vmax.f32 %v3866, %v3867
        %v3869 = vrot.slane %v3868, 1
        %v3870 = vmax.f32 %v3868, %v3869
        %v3871 = vsel %vm3233, %v2951, -inf
        %v3872 = vrot.slane %v3871, 4
        %v3873 = vmax.f32 %v3871, %v3872
        %v3874 = vrot.slane %v3873, 2
        %v3875 = vmax.f32 %v3873, %v3874
        %v3876 = vrot.slane %v3875, 1
        %v3877 = vmax.f32 %v3875, %v3876
        %v3878 = vsel %vm3233, %v2959, -inf
        %v3879 = vrot.slane %v3878, 4
        %v3880 = vmax.f32 %v3878, %v3879
        %v3881 = vrot.slane %v3880, 2
        %v3882 = vmax.f32 %v3880, %v3881
        %v3883 = vrot.slane %v3882, 1
        %v3884 = vmax.f32 %v3882, %v3883
        %v3885 = vsel %vm3233, %v2967, -inf
        %v3886 = vrot.slane %v3885, 4
        %v3887 = vmax.f32 %v3885, %v3886
        %v3888 = vrot.slane %v3887, 2
        %v3889 = vmax.f32 %v3887, %v3888
        %v3890 = vrot.slane %v3889, 1
        %v3891 = vmax.f32 %v3889, %v3890
        %v3892 = vsel %vm3233, %v2966, -inf
        %v3893 = vrot.slane %v3892, 4
        %v3894 = vmax.f32 %v3892, %v3893
        %v3895 = vrot.slane %v3894, 2
        %v3896 = vmax.f32 %v3894, %v3895
        %v3897 = vrot.slane %v3896, 1
        %v3898 = vmax.f32 %v3896, %v3897
        %v3899 = vsel %vm3233, %v2968, -inf
        %v3900 = vrot.slane %v3899, 4
        %v3901 = vmax.f32 %v3899, %v3900
        %v3902 = vrot.slane %v3901, 2
        %v3903 = vmax.f32 %v3901, %v3902
        %v3904 = vrot.slane %v3903, 1
        %v3905 = vmax.f32 %v3903, %v3904
        %v3906 = vsel %vm3233, %v2976, -inf
        %v3907 = vrot.slane %v3906, 4
        %v3908 = vmax.f32 %v3906, %v3907
        %v3909 = vrot.slane %v3908, 2
        %v3910 = vmax.f32 %v3908, %v3909
        %v3911 = vrot.slane %v3910, 1
        %v3912 = vmax.f32 %v3910, %v3911
        %v3913 = vsel %vm3233, %v2984, -inf
        %v3914 = vrot.slane %v3913, 4
        %v3915 = vmax.f32 %v3913, %v3914
        %v3916 = vrot.slane %v3915, 2
        %v3917 = vmax.f32 %v3915, %v3916
        %v3918 = vrot.slane %v3917, 1
        %v3919 = vmax.f32 %v3917, %v3918
        %v3920 = vsel %vm3233, %v2983, -inf
        %v3921 = vrot.slane %v3920, 4
        %v3922 = vmax.f32 %v3920, %v3921
        %v3923 = vrot.slane %v3922, 2
        %v3924 = vmax.f32 %v3922, %v3923
        %v3925 = vrot.slane %v3924, 1
        %v3926 = vmax.f32 %v3924, %v3925
        %v3927 = vsel %vm3233, %v2985, -inf
        %v3928 = vrot.slane %v3927, 4
        %v3929 = vmax.f32 %v3927, %v3928
        %v3930 = vrot.slane %v3929, 2
        %v3931 = vmax.f32 %v3929, %v3930
        %v3932 = vrot.slane %v3931, 1
        %v3933 = vmax.f32 %v3931, %v3932
        %v3934 = vsel %vm3233, %v2993, -inf
        %v3935 = vrot.slane %v3934, 4
        %v3936 = vmax.f32 %v3934, %v3935
        %v3937 = vrot.slane %v3936, 2
        %v3938 = vmax.f32 %v3936, %v3937
        %v3939 = vrot.slane %v3938, 1
        %v3940 = vmax.f32 %v3938, %v3939
        %v3941 = vsel %vm3233, %v3001, -inf
        %v3942 = vrot.slane %v3941, 4
        %v3943 = vmax.f32 %v3941, %v3942
        %v3944 = vrot.slane %v3943, 2
        %v3945 = vmax.f32 %v3943, %v3944
        %v3946 = vrot.slane %v3945, 1
        %v3947 = vmax.f32 %v3945, %v3946
        %v3948 = vsel %vm3233, %v3000, -inf
        %v3949 = vrot.slane %v3948, 4
        %v3950 = vmax.f32 %v3948, %v3949
        %v3951 = vrot.slane %v3950, 2
        %v3952 = vmax.f32 %v3950, %v3951
        %v3953 = vrot.slane %v3952, 1
        %v3954 = vmax.f32 %v3952, %v3953
        %v3955 = vsel %vm3233, %v3002, -inf
        %v3956 = vrot.slane %v3955, 4
        %v3957 = vmax.f32 %v3955, %v3956
        %v3958 = vrot.slane %v3957, 2
        %v3959 = vmax.f32 %v3957, %v3958
        %v3960 = vrot.slane %v3959, 1
        %v3961 = vmax.f32 %v3959, %v3960
        %v3962 = vsel %vm3233, %v3010, -inf
        %v3963 = vrot.slane %v3962, 4
        %v3964 = vmax.f32 %v3962, %v3963
        %v3965 = vrot.slane %v3964, 2
        %v3966 = vmax.f32 %v3964, %v3965
        %v3967 = vrot.slane %v3966, 1
        %v3968 = vmax.f32 %v3966, %v3967
        %v3969 = vsel %vm3233, %v3018, -inf
        %v3970 = vrot.slane %v3969, 4
        %v3971 = vmax.f32 %v3969, %v3970
        %v3972 = vrot.slane %v3971, 2
        %v3973 = vmax.f32 %v3971, %v3972
        %v3974 = vrot.slane %v3973, 1
        %v3975 = vmax.f32 %v3973, %v3974
        %v3976 = vsel %vm3233, %v3017, -inf
        %v3977 = vrot.slane %v3976, 4
        %v3978 = vmax.f32 %v3976, %v3977
        %v3979 = vrot.slane %v3978, 2
        %v3980 = vmax.f32 %v3978, %v3979
        %v3981 = vrot.slane %v3980, 1
        %v3982 = vmax.f32 %v3980, %v3981
        %v3983 = vsel %vm3233, %v3019, -inf
        %v3984 = vrot.slane %v3983, 4
        %v3985 = vmax.f32 %v3983, %v3984
        %v3986 = vrot.slane %v3985, 2
        %v3987 = vmax.f32 %v3985, %v3986
        %v3988 = vrot.slane %v3987, 1
        %v3989 = vmax.f32 %v3987, %v3988
        %v3990 = vsel %vm3233, %v3027, -inf
        %v3991 = vrot.slane %v3990, 4
        %v3992 = vmax.f32 %v3990, %v3991
        %v3993 = vrot.slane %v3992, 2
        %v3994 = vmax.f32 %v3992, %v3993
        %v3995 = vrot.slane %v3994, 1
        %v3996 = vmax.f32 %v3994, %v3995
        %v3997 = vsel %vm3233, %v3035, -inf
        %v3998 = vrot.slane %v3997, 4
        %v3999 = vmax.f32 %v3997, %v3998
        %v4000 = vrot.slane %v3999, 2
        %v4001 = vmax.f32 %v3999, %v4000
        %v4002 = vrot.slane %v4001, 1
        %v4003 = vmax.f32 %v4001, %v4002
        %v4004 = vsel %vm3233, %v3034, -inf
        %v4005 = vrot.slane %v4004, 4
        %v4006 = vmax.f32 %v4004, %v4005
        %v4007 = vrot.slane %v4006, 2
        %v4008 = vmax.f32 %v4006, %v4007
        %v4009 = vrot.slane %v4008, 1
        %v4010 = vmax.f32 %v4008, %v4009
        %v4011 = vsel %vm3233, %v3036, -inf
        %v4012 = vrot.slane %v4011, 4
        %v4013 = vmax.f32 %v4011, %v4012
        %v4014 = vrot.slane %v4013, 2
        %v4015 = vmax.f32 %v4013, %v4014
        %v4016 = vrot.slane %v4015, 1
        %v4017 = vmax.f32 %v4015, %v4016
        %v4018 = vsel %vm3233, %v3044, -inf
        %v4019 = vrot.slane %v4018, 4
        %v4020 = vmax.f32 %v4018, %v4019
        %v4021 = vrot.slane %v4020, 2
        %v4022 = vmax.f32 %v4020, %v4021
        %v4023 = vrot.slane %v4022, 1
        %v4024 = vmax.f32 %v4022, %v4023
        %v4025 = vsel %vm3233, %v3052, -inf
        %v4026 = vrot.slane %v4025, 4
        %v4027 = vmax.f32 %v4025, %v4026
        %v4028 = vrot.slane %v4027, 2
        %v4029 = vmax.f32 %v4027, %v4028
        %v4030 = vrot.slane %v4029, 1
        %v4031 = vmax.f32 %v4029, %v4030
        %v4032 = vsel %vm3233, %v3051, -inf
        %v4033 = vrot.slane %v4032, 4
        %v4034 = vmax.f32 %v4032, %v4033
        %v4035 = vrot.slane %v4034, 2
        %v4036 = vmax.f32 %v4034, %v4035
        %v4037 = vrot.slane %v4036, 1
        %v4038 = vmax.f32 %v4036, %v4037
        %v4039 = vsel %vm3233, %v3053, -inf
        %v4040 = vrot.slane %v4039, 4
        %v4041 = vmax.f32 %v4039, %v4040
        %v4042 = vrot.slane %v4041, 2
        %v4043 = vmax.f32 %v4041, %v4042
        %v4044 = vrot.slane %v4043, 1
        %v4045 = vmax.f32 %v4043, %v4044
        %v4046 = vsel %vm3233, %v3061, -inf
        %v4047 = vrot.slane %v4046, 4
        %v4048 = vmax.f32 %v4046, %v4047
        %v4049 = vrot.slane %v4048, 2
        %v4050 = vmax.f32 %v4048, %v4049
        %v4051 = vrot.slane %v4050, 1
        %v4052 = vmax.f32 %v4050, %v4051
        %v4053 = vsel %vm3233, %v3069, -inf
        %v4054 = vrot.slane %v4053, 4
        %v4055 = vmax.f32 %v4053, %v4054
        %v4056 = vrot.slane %v4055, 2
        %v4057 = vmax.f32 %v4055, %v4056
        %v4058 = vrot.slane %v4057, 1
        %v4059 = vmax.f32 %v4057, %v4058
        %v4060 = vsel %vm3233, %v3068, -inf
        %v4061 = vrot.slane %v4060, 4
        %v4062 = vmax.f32 %v4060, %v4061
        %v4063 = vrot.slane %v4062, 2
        %v4064 = vmax.f32 %v4062, %v4063
        %v4065 = vrot.slane %v4064, 1
        %v4066 = vmax.f32 %v4064, %v4065
        %v4067 = vsel %vm3233, %v3070, -inf
        %v4068 = vrot.slane %v4067, 4
        %v4069 = vmax.f32 %v4067, %v4068
        %v4070 = vrot.slane %v4069, 2
        %v4071 = vmax.f32 %v4069, %v4070
        %v4072 = vrot.slane %v4071, 1
        %v4073 = vmax.f32 %v4071, %v4072
        %v4074 = vsel %vm3233, %v3078, -inf
        %v4075 = vrot.slane %v4074, 4
        %v4076 = vmax.f32 %v4074, %v4075
        %v4077 = vrot.slane %v4076, 2
        %v4078 = vmax.f32 %v4076, %v4077
        %v4079 = vrot.slane %v4078, 1
        %v4080 = vmax.f32 %v4078, %v4079
        %v4081 = vsel %vm3233, %v3086, -inf
        %v4082 = vrot.slane %v4081, 4
        %v4083 = vmax.f32 %v4081, %v4082
        %v4084 = vrot.slane %v4083, 2
        %v4085 = vmax.f32 %v4083, %v4084
        %v4086 = vrot.slane %v4085, 1
        %v4087 = vmax.f32 %v4085, %v4086
        %v4088 = vsel %vm3233, %v3085, -inf
        %v4089 = vrot.slane %v4088, 4
        %v4090 = vmax.f32 %v4088, %v4089
        %v4091 = vrot.slane %v4090, 2
        %v4092 = vmax.f32 %v4090, %v4091
        %v4093 = vrot.slane %v4092, 1
        %v4094 = vmax.f32 %v4092, %v4093
        %v4095 = vsel %vm3233, %v3087, -inf
        %v4096 = vrot.slane %v4095, 4
        %v4097 = vmax.f32 %v4095, %v4096
        %v4098 = vrot.slane %v4097, 2
        %v4099 = vmax.f32 %v4097, %v4098
        %v4100 = vrot.slane %v4099, 1
        %v4101 = vmax.f32 %v4099, %v4100
        %v4102 = vsel %vm3233, %v3095, -inf
        %v4103 = vrot.slane %v4102, 4
        %v4104 = vmax.f32 %v4102, %v4103
        %v4105 = vrot.slane %v4104, 2
        %v4106 = vmax.f32 %v4104, %v4105
        %v4107 = vrot.slane %v4106, 1
        %v4108 = vmax.f32 %v4106, %v4107
        %v4109 = vsel %vm3233, %v3103, -inf
        %v4110 = vrot.slane %v4109, 4
        %v4111 = vmax.f32 %v4109, %v4110
        %v4112 = vrot.slane %v4111, 2
        %v4113 = vmax.f32 %v4111, %v4112
        %v4114 = vrot.slane %v4113, 1
        %v4115 = vmax.f32 %v4113, %v4114
        %v4116 = vsel %vm3233, %v3102, -inf
        %v4117 = vrot.slane %v4116, 4
        %v4118 = vmax.f32 %v4116, %v4117
        %v4119 = vrot.slane %v4118, 2
        %v4120 = vmax.f32 %v4118, %v4119
        %v4121 = vrot.slane %v4120, 1
        %v4122 = vmax.f32 %v4120, %v4121
        %v4123 = vsel %vm3233, %v3104, -inf
        %v4124 = vrot.slane %v4123, 4
        %v4125 = vmax.f32 %v4123, %v4124
        %v4126 = vrot.slane %v4125, 2
        %v4127 = vmax.f32 %v4125, %v4126
        %v4128 = vrot.slane %v4127, 1
        %v4129 = vmax.f32 %v4127, %v4128
        %vm4130 = vcmask 261120
        %v4131 = vsel %vm4130, %v3240, -inf
        %v4132 = vsel %vm4130, %v3296, -inf
        %v4133 = vmax.f32 %v4131, %v4132
        %v4134 = vsel %vm4130, %v3247, -inf
        %v4135 = vsel %vm4130, %v3303, -inf
        %v4136 = vmax.f32 %v4134, %v4135
        %v4137 = vsel %vm4130, %v3254, -inf
        %v4138 = vsel %vm4130, %v3310, -inf
        %v4139 = vmax.f32 %v4137, %v4138
        %v4140 = vsel %vm4130, %v3261, -inf
        %v4141 = vsel %vm4130, %v3317, -inf
        %v4142 = vmax.f32 %v4140, %v4141
        %v4143 = vsel %vm4130, %v3268, -inf
        %v4144 = vsel %vm4130, %v3324, -inf
        %v4145 = vmax.f32 %v4143, %v4144
        %v4146 = vsel %vm4130, %v3275, -inf
        %v4147 = vsel %vm4130, %v3331, -inf
        %v4148 = vmax.f32 %v4146, %v4147
        %v4149 = vsel %vm4130, %v3282, -inf
        %v4150 = vsel %vm4130, %v3338, -inf
        %v4151 = vmax.f32 %v4149, %v4150
        %v4152 = vsel %vm4130, %v3289, -inf
        %v4153 = vsel %vm4130, %v3345, -inf
        %v4154 = vmax.f32 %v4152, %v4153
        %v4155 = vsel %vm4130, %v3352, -inf
        %v4156 = vsel %vm4130, %v3408, -inf
        %v4157 = vmax.f32 %v4155, %v4156
        %v4158 = vsel %vm4130, %v3359, -inf
        %v4159 = vsel %vm4130, %v3415, -inf
        %v4160 = vmax.f32 %v4158, %v4159
        %v4161 = vsel %vm4130, %v3366, -inf
        %v4162 = vsel %vm4130, %v3422, -inf
        %v4163 = vmax.f32 %v4161, %v4162
        %v4164 = vsel %vm4130, %v3373, -inf
        %v4165 = vsel %vm4130, %v3429, -inf
        %v4166 = vmax.f32 %v4164, %v4165
        %v4167 = vsel %vm4130, %v3380, -inf
        %v4168 = vsel %vm4130, %v3436, -inf
        %v4169 = vmax.f32 %v4167, %v4168
        %v4170 = vsel %vm4130, %v3387, -inf
        %v4171 = vsel %vm4130, %v3443, -inf
        %v4172 = vmax.f32 %v4170, %v4171
        %v4173 = vsel %vm4130, %v3394, -inf
        %v4174 = vsel %vm4130, %v3450, -inf
        %v4175 = vmax.f32 %v4173, %v4174
        %v4176 = vsel %vm4130, %v3401, -inf
        %v4177 = vsel %vm4130, %v3457, -inf
        %v4178 = vmax.f32 %v4176, %v4177
        %v4179 = vsel %vm4130, %v3464, -inf
        %v4180 = vsel %vm4130, %v3520, -inf
        %v4181 = vmax.f32 %v4179, %v4180
        %v4182 = vsel %vm4130, %v3471, -inf
        %v4183 = vsel %vm4130, %v3527, -inf
        %v4184 = vmax.f32 %v4182, %v4183
        %v4185 = vsel %vm4130, %v3478, -inf
        %v4186 = vsel %vm4130, %v3534, -inf
        %v4187 = vmax.f32 %v4185, %v4186
        %v4188 = vsel %vm4130, %v3485, -inf
        %v4189 = vsel %vm4130, %v3541, -inf
        %v4190 = vmax.f32 %v4188, %v4189
        %v4191 = vsel %vm4130, %v3492, -inf
        %v4192 = vsel %vm4130, %v3548, -inf
        %v4193 = vmax.f32 %v4191, %v4192
        %v4194 = vsel %vm4130, %v3499, -inf
        %v4195 = vsel %vm4130, %v3555, -inf
        %v4196 = vmax.f32 %v4194, %v4195
        %v4197 = vsel %vm4130, %v3506, -inf
        %v4198 = vsel %vm4130, %v3562, -inf
        %v4199 = vmax.f32 %v4197, %v4198
        %v4200 = vsel %vm4130, %v3513, -inf
        %v4201 = vsel %vm4130, %v3569, -inf
        %v4202 = vmax.f32 %v4200, %v4201
        %v4203 = vsel %vm4130, %v3576, -inf
        %v4204 = vsel %vm4130, %v3632, -inf
        %v4205 = vmax.f32 %v4203, %v4204
        %v4206 = vsel %vm4130, %v3583, -inf
        %v4207 = vsel %vm4130, %v3639, -inf
        %v4208 = vmax.f32 %v4206, %v4207
        %v4209 = vsel %vm4130, %v3590, -inf
        %v4210 = vsel %vm4130, %v3646, -inf
        %v4211 = vmax.f32 %v4209, %v4210
        %v4212 = vsel %vm4130, %v3597, -inf
        %v4213 = vsel %vm4130, %v3653, -inf
        %v4214 = vmax.f32 %v4212, %v4213
        %v4215 = vsel %vm4130, %v3604, -inf
        %v4216 = vsel %vm4130, %v3660, -inf
        %v4217 = vmax.f32 %v4215, %v4216
        %v4218 = vsel %vm4130, %v3611, -inf
        %v4219 = vsel %vm4130, %v3667, -inf
        %v4220 = vmax.f32 %v4218, %v4219
        %v4221 = vsel %vm4130, %v3618, -inf
        %v4222 = vsel %vm4130, %v3674, -inf
        %v4223 = vmax.f32 %v4221, %v4222
        %v4224 = vsel %vm4130, %v3625, -inf
        %v4225 = vsel %vm4130, %v3681, -inf
        %v4226 = vmax.f32 %v4224, %v4225
        %v4227 = vsel %vm4130, %v3688, -inf
        %v4228 = vsel %vm4130, %v3744, -inf
        %v4229 = vmax.f32 %v4227, %v4228
        %v4230 = vsel %vm4130, %v3695, -inf
        %v4231 = vsel %vm4130, %v3751, -inf
        %v4232 = vmax.f32 %v4230, %v4231
        %v4233 = vsel %vm4130, %v3702, -inf
        %v4234 = vsel %vm4130, %v3758, -inf
        %v4235 = vmax.f32 %v4233, %v4234
        %v4236 = vsel %vm4130, %v3709, -inf
        %v4237 = vsel %vm4130, %v3765, -inf
        %v4238 = vmax.f32 %v4236, %v4237
        %v4239 = vsel %vm4130, %v3716, -inf
        %v4240 = vsel %vm4130, %v3772, -inf
        %v4241 = vmax.f32 %v4239, %v4240
        %v4242 = vsel %vm4130, %v3723, -inf
        %v4243 = vsel %vm4130, %v3779, -inf
        %v4244 = vmax.f32 %v4242, %v4243
        %v4245 = vsel %vm4130, %v3730, -inf
        %v4246 = vsel %vm4130, %v3786, -inf
        %v4247 = vmax.f32 %v4245, %v4246
        %v4248 = vsel %vm4130, %v3737, -inf
        %v4249 = vsel %vm4130, %v3793, -inf
        %v4250 = vmax.f32 %v4248, %v4249
        %v4251 = vsel %vm4130, %v3800, -inf
        %v4252 = vsel %vm4130, %v3856, -inf
        %v4253 = vmax.f32 %v4251, %v4252
        %v4254 = vsel %vm4130, %v3807, -inf
        %v4255 = vsel %vm4130, %v3863, -inf
        %v4256 = vmax.f32 %v4254, %v4255
        %v4257 = vsel %vm4130, %v3814, -inf
        %v4258 = vsel %vm4130, %v3870, -inf
        %v4259 = vmax.f32 %v4257, %v4258
        %v4260 = vsel %vm4130, %v3821, -inf
        %v4261 = vsel %vm4130, %v3877, -inf
        %v4262 = vmax.f32 %v4260, %v4261
        %v4263 = vsel %vm4130, %v3828, -inf
        %v4264 = vsel %vm4130, %v3884, -inf
        %v4265 = vmax.f32 %v4263, %v4264
        %v4266 = vsel %vm4130, %v3835, -inf
        %v4267 = vsel %vm4130, %v3891, -inf
        %v4268 = vmax.f32 %v4266, %v4267
        %v4269 = vsel %vm4130, %v3842, -inf
        %v4270 = vsel %vm4130, %v3898, -inf
        %v4271 = vmax.f32 %v4269, %v4270
        %v4272 = vsel %vm4130, %v3849, -inf
        %v4273 = vsel %vm4130, %v3905, -inf
        %v4274 = vmax.f32 %v4272, %v4273
        %v4275 = vsel %vm4130, %v3912, -inf
        %v4276 = vsel %vm4130, %v3968, -inf
        %v4277 = vmax.f32 %v4275, %v4276
        %v4278 = vsel %vm4130, %v3919, -inf
        %v4279 = vsel %vm4130, %v3975, -inf
        %v4280 = vmax.f32 %v4278, %v4279
        %v4281 = vsel %vm4130, %v3926, -inf
        %v4282 = vsel %vm4130, %v3982, -inf
        %v4283 = vmax.f32 %v4281, %v4282
        %v4284 = vsel %vm4130, %v3933, -inf
        %v4285 = vsel %vm4130, %v3989, -inf
        %v4286 = vmax.f32 %v4284, %v4285
        %v4287 = vsel %vm4130, %v3940, -inf
        %v4288 = vsel %vm4130, %v3996, -inf
        %v4289 = vmax.f32 %v4287, %v4288
        %v4290 = vsel %vm4130, %v3947, -inf
        %v4291 = vsel %vm4130, %v4003, -inf
        %v4292 = vmax.f32 %v4290, %v4291
        %v4293 = vsel %vm4130, %v3954, -inf
        %v4294 = vsel %vm4130, %v4010, -inf
        %v4295 = vmax.f32 %v4293, %v4294
        %v4296 = vsel %vm4130, %v3961, -inf
        %v4297 = vsel %vm4130, %v4017, -inf
        %v4298 = vmax.f32 %v4296, %v4297
        %v4299 = vsel %vm4130, %v4024, -inf
        %v4300 = vsel %vm4130, %v4080, -inf
        %v4301 = vmax.f32 %v4299, %v4300
        %v4302 = vsel %vm4130, %v4031, -inf
        %v4303 = vsel %vm4130, %v4087, -inf
        %v4304 = vmax.f32 %v4302, %v4303
        %v4305 = vsel %vm4130, %v4038, -inf
        %v4306 = vsel %vm4130, %v4094, -inf
        %v4307 = vmax.f32 %v4305, %v4306
        %v4308 = vsel %vm4130, %v4045, -inf
        %v4309 = vsel %vm4130, %v4101, -inf
        %v4310 = vmax.f32 %v4308, %v4309
        %v4311 = vsel %vm4130, %v4052, -inf
        %v4312 = vsel %vm4130, %v4108, -inf
        %v4313 = vmax.f32 %v4311, %v4312
        %v4314 = vsel %vm4130, %v4059, -inf
        %v4315 = vsel %vm4130, %v4115, -inf
        %v4316 = vmax.f32 %v4314, %v4315
        %v4317 = vsel %vm4130, %v4066, -inf
        %v4318 = vsel %vm4130, %v4122, -inf
        %v4319 = vmax.f32 %v4317, %v4318
        %v4320 = vsel %vm4130, %v4073, -inf
        %v4321 = vsel %vm4130, %v4129, -inf
        %v4322 = vmax.f32 %v4320, %v4321
        %v4323 = vpack.c.bf16 %v4133, %v4133
        %v4324 = vpack.c.bf16 %v4136, %v4136
        %v4325 = vpack.c.bf16 %v4139, %v4139
        %v4326 = vpack.c.bf16 %v4142, %v4142
        %v4327 = vpack.c.bf16 %v4145, %v4145
        %v4328 = vpack.c.bf16 %v4148, %v4148
        %v4329 = vpack.c.bf16 %v4151, %v4151
        %v4330 = vpack.c.bf16 %v4154, %v4154
        %v4331 = vpack.c.bf16 %v4157, %v4157
        %v4332 = vpack.c.bf16 %v4160, %v4160
        %v4333 = vpack.c.bf16 %v4163, %v4163
        %v4334 = vpack.c.bf16 %v4166, %v4166
        %v4335 = vpack.c.bf16 %v4169, %v4169
        %v4336 = vpack.c.bf16 %v4172, %v4172
        %v4337 = vpack.c.bf16 %v4175, %v4175
        %v4338 = vpack.c.bf16 %v4178, %v4178
        %v4339 = vpack.c.bf16 %v4181, %v4181
        %v4340 = vpack.c.bf16 %v4184, %v4184
        %v4341 = vpack.c.bf16 %v4187, %v4187
        %v4342 = vpack.c.bf16 %v4190, %v4190
        %v4343 = vpack.c.bf16 %v4193, %v4193
        %v4344 = vpack.c.bf16 %v4196, %v4196
        %v4345 = vpack.c.bf16 %v4199, %v4199
        %v4346 = vpack.c.bf16 %v4202, %v4202
        %v4347 = vpack.c.bf16 %v4205, %v4205
        %v4348 = vpack.c.bf16 %v4208, %v4208
        %v4349 = vpack.c.bf16 %v4211, %v4211
        %v4350 = vpack.c.bf16 %v4214, %v4214
        %v4351 = vpack.c.bf16 %v4217, %v4217
        %v4352 = vpack.c.bf16 %v4220, %v4220
        %v4353 = vpack.c.bf16 %v4223, %v4223
        %v4354 = vpack.c.bf16 %v4226, %v4226
        %v4355 = vpack.c.bf16 %v4229, %v4229
        %v4356 = vpack.c.bf16 %v4232, %v4232
        %v4357 = vpack.c.bf16 %v4235, %v4235
        %v4358 = vpack.c.bf16 %v4238, %v4238
        %v4359 = vpack.c.bf16 %v4241, %v4241
        %v4360 = vpack.c.bf16 %v4244, %v4244
        %v4361 = vpack.c.bf16 %v4247, %v4247
        %v4362 = vpack.c.bf16 %v4250, %v4250
        %v4363 = vpack.c.bf16 %v4253, %v4253
        %v4364 = vpack.c.bf16 %v4256, %v4256
        %v4365 = vpack.c.bf16 %v4259, %v4259
        %v4366 = vpack.c.bf16 %v4262, %v4262
        %v4367 = vpack.c.bf16 %v4265, %v4265
        %v4368 = vpack.c.bf16 %v4268, %v4268
        %v4369 = vpack.c.bf16 %v4271, %v4271
        %v4370 = vpack.c.bf16 %v4274, %v4274
        %v4371 = vpack.c.bf16 %v4277, %v4277
        %v4372 = vpack.c.bf16 %v4280, %v4280
        %v4373 = vpack.c.bf16 %v4283, %v4283
        %v4374 = vpack.c.bf16 %v4286, %v4286
        %v4375 = vpack.c.bf16 %v4289, %v4289
        %v4376 = vpack.c.bf16 %v4292, %v4292
        %v4377 = vpack.c.bf16 %v4295, %v4295
        %v4378 = vpack.c.bf16 %v4298, %v4298
        %v4379 = vpack.c.bf16 %v4301, %v4301
        %v4380 = vpack.c.bf16 %v4304, %v4304
        %v4381 = vpack.c.bf16 %v4307, %v4307
        %v4382 = vpack.c.bf16 %v4310, %v4310
        %v4383 = vpack.c.bf16 %v4313, %v4313
        %v4384 = vpack.c.bf16 %v4316, %v4316
        %v4385 = vpack.c.bf16 %v4319, %v4319
        %v4386 = vpack.c.bf16 %v4322, %v4322
        %v4451 = vunpack.c.l.b16 %v4323
        %v4452 = vunpack.c.l.b16 %v4324
        %v4453 = vunpack.c.l.b16 %v4325
        %v4454 = vunpack.c.l.b16 %v4326
        %v4455 = vunpack.c.l.b16 %v4327
        %v4456 = vunpack.c.l.b16 %v4328
        %v4457 = vunpack.c.l.b16 %v4329
        %v4458 = vunpack.c.l.b16 %v4330
        %v4459 = vunpack.c.l.b16 %v4331
        %v4460 = vunpack.c.l.b16 %v4332
        %v4461 = vunpack.c.l.b16 %v4333
        %v4462 = vunpack.c.l.b16 %v4334
        %v4463 = vunpack.c.l.b16 %v4335
        %v4464 = vunpack.c.l.b16 %v4336
        %v4465 = vunpack.c.l.b16 %v4337
        %v4466 = vunpack.c.l.b16 %v4338
        %v4467 = vunpack.c.l.b16 %v4339
        %v4468 = vunpack.c.l.b16 %v4340
        %v4469 = vunpack.c.l.b16 %v4341
        %v4470 = vunpack.c.l.b16 %v4342
        %v4471 = vunpack.c.l.b16 %v4343
        %v4472 = vunpack.c.l.b16 %v4344
        %v4473 = vunpack.c.l.b16 %v4345
        %v4474 = vunpack.c.l.b16 %v4346
        %v4475 = vunpack.c.l.b16 %v4347
        %v4476 = vunpack.c.l.b16 %v4348
        %v4477 = vunpack.c.l.b16 %v4349
        %v4478 = vunpack.c.l.b16 %v4350
        %v4479 = vunpack.c.l.b16 %v4351
        %v4480 = vunpack.c.l.b16 %v4352
        %v4481 = vunpack.c.l.b16 %v4353
        %v4482 = vunpack.c.l.b16 %v4354
        %v4483 = vunpack.c.l.b16 %v4355
        %v4484 = vunpack.c.l.b16 %v4356
        %v4485 = vunpack.c.l.b16 %v4357
        %v4486 = vunpack.c.l.b16 %v4358
        %v4487 = vunpack.c.l.b16 %v4359
        %v4488 = vunpack.c.l.b16 %v4360
        %v4489 = vunpack.c.l.b16 %v4361
        %v4490 = vunpack.c.l.b16 %v4362
        %v4491 = vunpack.c.l.b16 %v4363
        %v4492 = vunpack.c.l.b16 %v4364
        %v4493 = vunpack.c.l.b16 %v4365
        %v4494 = vunpack.c.l.b16 %v4366
        %v4495 = vunpack.c.l.b16 %v4367
        %v4496 = vunpack.c.l.b16 %v4368
        %v4497 = vunpack.c.l.b16 %v4369
        %v4498 = vunpack.c.l.b16 %v4370
        %v4499 = vunpack.c.l.b16 %v4371
        %v4500 = vunpack.c.l.b16 %v4372
        %v4501 = vunpack.c.l.b16 %v4373
        %v4502 = vunpack.c.l.b16 %v4374
        %v4503 = vunpack.c.l.b16 %v4375
        %v4504 = vunpack.c.l.b16 %v4376
        %v4505 = vunpack.c.l.b16 %v4377
        %v4506 = vunpack.c.l.b16 %v4378
        %v4507 = vunpack.c.l.b16 %v4379
        %v4508 = vunpack.c.l.b16 %v4380
        %v4509 = vunpack.c.l.b16 %v4381
        %v4510 = vunpack.c.l.b16 %v4382
        %v4511 = vunpack.c.l.b16 %v4383
        %v4512 = vunpack.c.l.b16 %v4384
        %v4513 = vunpack.c.l.b16 %v4385
        %v4514 = vunpack.c.l.b16 %v4386
        %v4515 = vpack.c.b16 %v4451, %v4451
        %v4516 = vpack.c.b16 %v4452, %v4452
        %v4517 = vpack.c.b16 %v4453, %v4453
        %v4518 = vpack.c.b16 %v4454, %v4454
        %v4519 = vpack.c.b16 %v4455, %v4455
        %v4520 = vpack.c.b16 %v4456, %v4456
        %v4521 = vpack.c.b16 %v4457, %v4457
        %v4522 = vpack.c.b16 %v4458, %v4458
        %v4523 = vpack.c.b16 %v4459, %v4459
        %v4524 = vpack.c.b16 %v4460, %v4460
        %v4525 = vpack.c.b16 %v4461, %v4461
        %v4526 = vpack.c.b16 %v4462, %v4462
        %v4527 = vpack.c.b16 %v4463, %v4463
        %v4528 = vpack.c.b16 %v4464, %v4464
        %v4529 = vpack.c.b16 %v4465, %v4465
        %v4530 = vpack.c.b16 %v4466, %v4466
        %v4531 = vpack.c.b16 %v4467, %v4467
        %v4532 = vpack.c.b16 %v4468, %v4468
        %v4533 = vpack.c.b16 %v4469, %v4469
        %v4534 = vpack.c.b16 %v4470, %v4470
        %v4535 = vpack.c.b16 %v4471, %v4471
        %v4536 = vpack.c.b16 %v4472, %v4472
        %v4537 = vpack.c.b16 %v4473, %v4473
        %v4538 = vpack.c.b16 %v4474, %v4474
        %v4539 = vpack.c.b16 %v4475, %v4475
        %v4540 = vpack.c.b16 %v4476, %v4476
        %v4541 = vpack.c.b16 %v4477, %v4477
        %v4542 = vpack.c.b16 %v4478, %v4478
        %v4543 = vpack.c.b16 %v4479, %v4479
        %v4544 = vpack.c.b16 %v4480, %v4480
        %v4545 = vpack.c.b16 %v4481, %v4481
        %v4546 = vpack.c.b16 %v4482, %v4482
        %v4547 = vpack.c.b16 %v4483, %v4483
        %v4548 = vpack.c.b16 %v4484, %v4484
        %v4549 = vpack.c.b16 %v4485, %v4485
        %v4550 = vpack.c.b16 %v4486, %v4486
        %v4551 = vpack.c.b16 %v4487, %v4487
        %v4552 = vpack.c.b16 %v4488, %v4488
        %v4553 = vpack.c.b16 %v4489, %v4489
        %v4554 = vpack.c.b16 %v4490, %v4490
        %v4555 = vpack.c.b16 %v4491, %v4491
        %v4556 = vpack.c.b16 %v4492, %v4492
        %v4557 = vpack.c.b16 %v4493, %v4493
        %v4558 = vpack.c.b16 %v4494, %v4494
        %v4559 = vpack.c.b16 %v4495, %v4495
        %v4560 = vpack.c.b16 %v4496, %v4496
        %v4561 = vpack.c.b16 %v4497, %v4497
        %v4562 = vpack.c.b16 %v4498, %v4498
        %v4563 = vpack.c.b16 %v4499, %v4499
        %v4564 = vpack.c.b16 %v4500, %v4500
        %v4565 = vpack.c.b16 %v4501, %v4501
        %v4566 = vpack.c.b16 %v4502, %v4502
        %v4567 = vpack.c.b16 %v4503, %v4503
        %v4568 = vpack.c.b16 %v4504, %v4504
        %v4569 = vpack.c.b16 %v4505, %v4505
        %v4570 = vpack.c.b16 %v4506, %v4506
        %v4571 = vpack.c.b16 %v4507, %v4507
        %v4572 = vpack.c.b16 %v4508, %v4508
        %v4573 = vpack.c.b16 %v4509, %v4509
        %v4574 = vpack.c.b16 %v4510, %v4510
        %v4575 = vpack.c.b16 %v4511, %v4511
        %v4576 = vpack.c.b16 %v4512, %v4512
        %v4577 = vpack.c.b16 %v4513, %v4513
        %v4578 = vpack.c.b16 %v4514, %v4514
        %v4579 = vunpack.c.l.b16 %v4515
        %v4580 = vunpack.c.l.b16 %v4516
        %v4581 = vunpack.c.l.b16 %v4517
        %v4582 = vunpack.c.l.b16 %v4518
        %v4583 = vunpack.c.l.b16 %v4519
        %v4584 = vunpack.c.l.b16 %v4520
        %v4585 = vunpack.c.l.b16 %v4521
        %v4586 = vunpack.c.l.b16 %v4522
        %v4587 = vunpack.c.l.b16 %v4523
        %v4588 = vunpack.c.l.b16 %v4524
        %v4589 = vunpack.c.l.b16 %v4525
        %v4590 = vunpack.c.l.b16 %v4526
        %v4591 = vunpack.c.l.b16 %v4527
        %v4592 = vunpack.c.l.b16 %v4528
        %v4593 = vunpack.c.l.b16 %v4529
        %v4594 = vunpack.c.l.b16 %v4530
        %v4595 = vunpack.c.l.b16 %v4531
        %v4596 = vunpack.c.l.b16 %v4532
        %v4597 = vunpack.c.l.b16 %v4533
        %v4598 = vunpack.c.l.b16 %v4534
        %v4599 = vunpack.c.l.b16 %v4535
        %v4600 = vunpack.c.l.b16 %v4536
        %v4601 = vunpack.c.l.b16 %v4537
        %v4602 = vunpack.c.l.b16 %v4538
        %v4603 = vunpack.c.l.b16 %v4539
        %v4604 = vunpack.c.l.b16 %v4540
        %v4605 = vunpack.c.l.b16 %v4541
        %v4606 = vunpack.c.l.b16 %v4542
        %v4607 = vunpack.c.l.b16 %v4543
        %v4608 = vunpack.c.l.b16 %v4544
        %v4609 = vunpack.c.l.b16 %v4545
        %v4610 = vunpack.c.l.b16 %v4546
        %v4611 = vunpack.c.l.b16 %v4547
        %v4612 = vunpack.c.l.b16 %v4548
        %v4613 = vunpack.c.l.b16 %v4549
        %v4614 = vunpack.c.l.b16 %v4550
        %v4615 = vunpack.c.l.b16 %v4551
        %v4616 = vunpack.c.l.b16 %v4552
        %v4617 = vunpack.c.l.b16 %v4553
        %v4618 = vunpack.c.l.b16 %v4554
        %v4619 = vunpack.c.l.b16 %v4555
        %v4620 = vunpack.c.l.b16 %v4556
        %v4621 = vunpack.c.l.b16 %v4557
        %v4622 = vunpack.c.l.b16 %v4558
        %v4623 = vunpack.c.l.b16 %v4559
        %v4624 = vunpack.c.l.b16 %v4560
        %v4625 = vunpack.c.l.b16 %v4561
        %v4626 = vunpack.c.l.b16 %v4562
        %v4627 = vunpack.c.l.b16 %v4563
        %v4628 = vunpack.c.l.b16 %v4564
        %v4629 = vunpack.c.l.b16 %v4565
        %v4630 = vunpack.c.l.b16 %v4566
        %v4631 = vunpack.c.l.b16 %v4567
        %v4632 = vunpack.c.l.b16 %v4568
        %v4633 = vunpack.c.l.b16 %v4569
        %v4634 = vunpack.c.l.b16 %v4570
        %v4635 = vunpack.c.l.b16 %v4571
        %v4636 = vunpack.c.l.b16 %v4572
        %v4637 = vunpack.c.l.b16 %v4573
        %v4638 = vunpack.c.l.b16 %v4574
        %v4639 = vunpack.c.l.b16 %v4575
        %v4640 = vunpack.c.l.b16 %v4576
        %v4641 = vunpack.c.l.b16 %v4577
        %v4642 = vunpack.c.l.b16 %v4578
        %vm4643 = vcmask 1041409
        %v4644 = vsel %vm4643, %v4580, %v4579
        %vm4645 = vcmask 1042434
        %v4646 = vsel %vm4645, %v4581, %v4644
        %vm4647 = vcmask 1043459
        %v4648 = vsel %vm4647, %v4582, %v4646
        %vm4649 = vcmask 1044484
        %v4650 = vsel %vm4649, %v4583, %v4648
        %vm4651 = vcmask 1045509
        %v4652 = vsel %vm4651, %v4584, %v4650
        %vm4653 = vcmask 1046534
        %v4654 = vsel %vm4653, %v4585, %v4652
        %vm4655 = vcmask 1047559
        %v4656 = vsel %vm4655, %v4586, %v4654
        %v4657 = vsel %vm4643, %v4588, %v4587
        %v4658 = vsel %vm4645, %v4589, %v4657
        %v4659 = vsel %vm4647, %v4590, %v4658
        %v4660 = vsel %vm4649, %v4591, %v4659
        %v4661 = vsel %vm4651, %v4592, %v4660
        %v4662 = vsel %vm4653, %v4593, %v4661
        %v4663 = vsel %vm4655, %v4594, %v4662
        %v4664 = vsel %vm4643, %v4596, %v4595
        %v4665 = vsel %vm4645, %v4597, %v4664
        %v4666 = vsel %vm4647, %v4598, %v4665
        %v4667 = vsel %vm4649, %v4599, %v4666
        %v4668 = vsel %vm4651, %v4600, %v4667
        %v4669 = vsel %vm4653, %v4601, %v4668
        %v4670 = vsel %vm4655, %v4602, %v4669
        %v4671 = vsel %vm4643, %v4604, %v4603
        %v4672 = vsel %vm4645, %v4605, %v4671
        %v4673 = vsel %vm4647, %v4606, %v4672
        %v4674 = vsel %vm4649, %v4607, %v4673
        %v4675 = vsel %vm4651, %v4608, %v4674
        %v4676 = vsel %vm4653, %v4609, %v4675
        %v4677 = vsel %vm4655, %v4610, %v4676
        %v4678 = vsel %vm4643, %v4612, %v4611
        %v4679 = vsel %vm4645, %v4613, %v4678
        %v4680 = vsel %vm4647, %v4614, %v4679
        %v4681 = vsel %vm4649, %v4615, %v4680
        %v4682 = vsel %vm4651, %v4616, %v4681
        %v4683 = vsel %vm4653, %v4617, %v4682
        %v4684 = vsel %vm4655, %v4618, %v4683
        %v4685 = vsel %vm4643, %v4620, %v4619
        %v4686 = vsel %vm4645, %v4621, %v4685
        %v4687 = vsel %vm4647, %v4622, %v4686
        %v4688 = vsel %vm4649, %v4623, %v4687
        %v4689 = vsel %vm4651, %v4624, %v4688
        %v4690 = vsel %vm4653, %v4625, %v4689
        %v4691 = vsel %vm4655, %v4626, %v4690
        %v4692 = vsel %vm4643, %v4628, %v4627
        %v4693 = vsel %vm4645, %v4629, %v4692
        %v4694 = vsel %vm4647, %v4630, %v4693
        %v4695 = vsel %vm4649, %v4631, %v4694
        %v4696 = vsel %vm4651, %v4632, %v4695
        %v4697 = vsel %vm4653, %v4633, %v4696
        %v4698 = vsel %vm4655, %v4634, %v4697
        %v4699 = vsel %vm4643, %v4636, %v4635
        %v4700 = vsel %vm4645, %v4637, %v4699
        %v4701 = vsel %vm4647, %v4638, %v4700
        %v4702 = vsel %vm4649, %v4639, %v4701
        %v4703 = vsel %vm4651, %v4640, %v4702
        %v4704 = vsel %vm4653, %v4641, %v4703
        %v4705 = vsel %vm4655, %v4642, %v4704
        %v4706 = vpack.c.b16 %v4656, %v4656
        %v4707 = vpack.c.b16 %v4663, %v4663
        %v4708 = vpack.c.b16 %v4670, %v4670
        %v4709 = vpack.c.b16 %v4677, %v4677
        %v4710 = vpack.c.b16 %v4684, %v4684
        %v4711 = vpack.c.b16 %v4691, %v4691
        %v4712 = vpack.c.b16 %v4698, %v4698
        %v4713 = vpack.c.b16 %v4705, %v4705
        %4714 = vrot.lane.b32.xlu0 %v4706, 32
        %v4715 = vpop.permute.xlu0 %4714
        %4716 = vrot.lane.b32.xlu0 %v4707, 32
        %v4717 = vpop.permute.xlu0 %4716
        %4718 = vrot.lane.b32.xlu0 %v4708, 32
        %v4719 = vpop.permute.xlu0 %4718
        %4720 = vrot.lane.b32.xlu0 %v4709, 32
        %v4721 = vpop.permute.xlu0 %4720
        %4722 = vrot.lane.b32.xlu0 %v4710, 32
        %v4723 = vpop.permute.xlu0 %4722
        %4724 = vrot.lane.b32.xlu0 %v4711, 32
        %v4725 = vpop.permute.xlu0 %4724
        %4726 = vrot.lane.b32.xlu0 %v4712, 32
        %v4727 = vpop.permute.xlu0 %4726
        %4728 = vrot.lane.b32.xlu0 %v4713, 32
        %v4729 = vpop.permute.xlu0 %4728
        %s4738 = scalar_lea.vmem [#allocation3], 4
        %vm4739 = vcmask 519424
        %4740 = vst.msk [vmem:[%s4738] sm:$0xf] %vm4739, %v4715
        %4741 = vst.msk [vmem:[%s4738 + $0x4] sm:$0xf] %vm4739, %v4717
        %4742 = vst.msk [vmem:[%s4738 + $0x8] sm:$0xf] %vm4739, %v4719
        %4743 = vst.msk [vmem:[%s4738 + $0xc] sm:$0xf] %vm4739, %v4721
        %4744 = vst.msk [vmem:[%s4738 + $0x10] sm:$0xf] %vm4739, %v4723
        %4745 = vst.msk [vmem:[%s4738 + $0x14] sm:$0xf] %vm4739, %v4725
        %4746 = vst.msk [vmem:[%s4738 + $0x18] sm:$0xf] %vm4739, %v4727
        %4747 = vst.msk [vmem:[%s4738 + $0x1c] sm:$0xf] %vm4739, %v4729
        %v4748 = vsel %vm4645, %v4580, %v4579
        %v4749 = vsel %vm4647, %v4581, %v4748
        %v4750 = vsel %vm4649, %v4582, %v4749
        %v4751 = vsel %vm4651, %v4583, %v4750
        %v4752 = vsel %vm4653, %v4584, %v4751
        %v4753 = vsel %vm4655, %v4585, %v4752
        %v4754 = vsel %vm4645, %v4588, %v4587
        %v4755 = vsel %vm4647, %v4589, %v4754
        %v4756 = vsel %vm4649, %v4590, %v4755
        %v4757 = vsel %vm4651, %v4591, %v4756
        %v4758 = vsel %vm4653, %v4592, %v4757
        %v4759 = vsel %vm4655, %v4593, %v4758
        %v4760 = vsel %vm4645, %v4596, %v4595
        %v4761 = vsel %vm4647, %v4597, %v4760
        %v4762 = vsel %vm4649, %v4598, %v4761
        %v4763 = vsel %vm4651, %v4599, %v4762
        %v4764 = vsel %vm4653, %v4600, %v4763
        %v4765 = vsel %vm4655, %v4601, %v4764
        %v4766 = vsel %vm4645, %v4604, %v4603
        %v4767 = vsel %vm4647, %v4605, %v4766
        %v4768 = vsel %vm4649, %v4606, %v4767
        %v4769 = vsel %vm4651, %v4607, %v4768
        %v4770 = vsel %vm4653, %v4608, %v4769
        %v4771 = vsel %vm4655, %v4609, %v4770
        %v4772 = vsel %vm4645, %v4612, %v4611
        %v4773 = vsel %vm4647, %v4613, %v4772
        %v4774 = vsel %vm4649, %v4614, %v4773
        %v4775 = vsel %vm4651, %v4615, %v4774
        %v4776 = vsel %vm4653, %v4616, %v4775
        %v4777 = vsel %vm4655, %v4617, %v4776
        %v4778 = vsel %vm4645, %v4620, %v4619
        %v4779 = vsel %vm4647, %v4621, %v4778
        %v4780 = vsel %vm4649, %v4622, %v4779
        %v4781 = vsel %vm4651, %v4623, %v4780
        %v4782 = vsel %vm4653, %v4624, %v4781
        %v4783 = vsel %vm4655, %v4625, %v4782
        %v4784 = vsel %vm4645, %v4628, %v4627
        %v4785 = vsel %vm4647, %v4629, %v4784
        %v4786 = vsel %vm4649, %v4630, %v4785
        %v4787 = vsel %vm4651, %v4631, %v4786
        %v4788 = vsel %vm4653, %v4632, %v4787
        %v4789 = vsel %vm4655, %v4633, %v4788
        %v4790 = vsel %vm4645, %v4636, %v4635
        %v4791 = vsel %vm4647, %v4637, %v4790
        %v4792 = vsel %vm4649, %v4638, %v4791
        %v4793 = vsel %vm4651, %v4639, %v4792
        %v4794 = vsel %vm4653, %v4640, %v4793
        %v4795 = vsel %vm4655, %v4641, %v4794
        %v4796 = vpack.c.b16 %v4753, %v4753
        %v4797 = vpack.c.b16 %v4759, %v4759
        %v4798 = vpack.c.b16 %v4765, %v4765
        %v4799 = vpack.c.b16 %v4771, %v4771
        %v4800 = vpack.c.b16 %v4777, %v4777
        %v4801 = vpack.c.b16 %v4783, %v4783
        %v4802 = vpack.c.b16 %v4789, %v4789
        %v4803 = vpack.c.b16 %v4795, %v4795
        %vm4812 = vcmask 257024
        %vm4813 = vmand %vm4812, %vm1051
        %v4814 = vld [vmem:[%s4738] sm:$0xf]
        %v4815 = vsel %vm4813, %v4796, %v4814
        %4816 = vst [vmem:[%s4738] sm:$0xf] %v4815
        %v4817 = vld [vmem:[%s4738 + $0x4] sm:$0xf]
        %v4818 = vsel %vm4813, %v4797, %v4817
        %4819 = vst [vmem:[%s4738 + $0x4] sm:$0xf] %v4818
        %v4820 = vld [vmem:[%s4738 + $0x8] sm:$0xf]
        %v4821 = vsel %vm4813, %v4798, %v4820
        %4822 = vst [vmem:[%s4738 + $0x8] sm:$0xf] %v4821
        %v4823 = vld [vmem:[%s4738 + $0xc] sm:$0xf]
        %v4824 = vsel %vm4813, %v4799, %v4823
        %4825 = vst [vmem:[%s4738 + $0xc] sm:$0xf] %v4824
        %v4826 = vld [vmem:[%s4738 + $0x10] sm:$0xf]
        %v4827 = vsel %vm4813, %v4800, %v4826
        %4828 = vst [vmem:[%s4738 + $0x10] sm:$0xf] %v4827
        %v4829 = vld [vmem:[%s4738 + $0x14] sm:$0xf]
        %v4830 = vsel %vm4813, %v4801, %v4829
        %4831 = vst [vmem:[%s4738 + $0x14] sm:$0xf] %v4830
        %v4832 = vld [vmem:[%s4738 + $0x18] sm:$0xf]
        %v4833 = vsel %vm4813, %v4802, %v4832
        %4834 = vst [vmem:[%s4738 + $0x18] sm:$0xf] %v4833
        %v4835 = vld [vmem:[%s4738 + $0x1c] sm:$0xf]
        %v4836 = vsel %vm4813, %v4803, %v4835
        %4837 = vst [vmem:[%s4738 + $0x1c] sm:$0xf] %v4836
        %v4838 = vsel %vm4643, %v4581, %v4580
        %v4839 = vsel %vm4645, %v4582, %v4838
        %v4840 = vsel %vm4647, %v4583, %v4839
        %v4841 = vsel %vm4649, %v4584, %v4840
        %v4842 = vsel %vm4651, %v4585, %v4841
        %v4843 = vsel %vm4653, %v4586, %v4842
        %v4844 = vsel %vm4643, %v4589, %v4588
        %v4845 = vsel %vm4645, %v4590, %v4844
        %v4846 = vsel %vm4647, %v4591, %v4845
        %v4847 = vsel %vm4649, %v4592, %v4846
        %v4848 = vsel %vm4651, %v4593, %v4847
        %v4849 = vsel %vm4653, %v4594, %v4848
        %v4850 = vsel %vm4643, %v4597, %v4596
        %v4851 = vsel %vm4645, %v4598, %v4850
        %v4852 = vsel %vm4647, %v4599, %v4851
        %v4853 = vsel %vm4649, %v4600, %v4852
        %v4854 = vsel %vm4651, %v4601, %v4853
        %v4855 = vsel %vm4653, %v4602, %v4854
        %v4856 = vsel %vm4643, %v4605, %v4604
        %v4857 = vsel %vm4645, %v4606, %v4856
        %v4858 = vsel %vm4647, %v4607, %v4857
        %v4859 = vsel %vm4649, %v4608, %v4858
        %v4860 = vsel %vm4651, %v4609, %v4859
        %v4861 = vsel %vm4653, %v4610, %v4860
        %v4862 = vsel %vm4643, %v4613, %v4612
        %v4863 = vsel %vm4645, %v4614, %v4862
        %v4864 = vsel %vm4647, %v4615, %v4863
        %v4865 = vsel %vm4649, %v4616, %v4864
        %v4866 = vsel %vm4651, %v4617, %v4865
        %v4867 = vsel %vm4653, %v4618, %v4866
        %v4868 = vsel %vm4643, %v4621, %v4620
        %v4869 = vsel %vm4645, %v4622, %v4868
        %v4870 = vsel %vm4647, %v4623, %v4869
        %v4871 = vsel %vm4649, %v4624, %v4870
        %v4872 = vsel %vm4651, %v4625, %v4871
        %v4873 = vsel %vm4653, %v4626, %v4872
        %v4874 = vsel %vm4643, %v4629, %v4628
        %v4875 = vsel %vm4645, %v4630, %v4874
        %v4876 = vsel %vm4647, %v4631, %v4875
        %v4877 = vsel %vm4649, %v4632, %v4876
        %v4878 = vsel %vm4651, %v4633, %v4877
        %v4879 = vsel %vm4653, %v4634, %v4878
        %v4880 = vsel %vm4643, %v4637, %v4636
        %v4881 = vsel %vm4645, %v4638, %v4880
        %v4882 = vsel %vm4647, %v4639, %v4881
        %v4883 = vsel %vm4649, %v4640, %v4882
        %v4884 = vsel %vm4651, %v4641, %v4883
        %v4885 = vsel %vm4653, %v4642, %v4884
        %v4886 = vpack.c.b16 %v4843, %v4843
        %v4887 = vpack.c.b16 %v4849, %v4849
        %v4888 = vpack.c.b16 %v4855, %v4855
        %v4889 = vpack.c.b16 %v4861, %v4861
        %v4890 = vpack.c.b16 %v4867, %v4867
        %v4891 = vpack.c.b16 %v4873, %v4873
        %v4892 = vpack.c.b16 %v4879, %v4879
        %v4893 = vpack.c.b16 %v4885, %v4885
        %4894 = vrot.lane.b32.xlu0 %v4886, 64
        %v4895 = vpop.permute.xlu0 %4894
        %4896 = vrot.lane.b32.xlu0 %v4887, 64
        %v4897 = vpop.permute.xlu0 %4896
        %4898 = vrot.lane.b32.xlu0 %v4888, 64
        %v4899 = vpop.permute.xlu0 %4898
        %4900 = vrot.lane.b32.xlu0 %v4889, 64
        %v4901 = vpop.permute.xlu0 %4900
        %4902 = vrot.lane.b32.xlu0 %v4890, 64
        %v4903 = vpop.permute.xlu0 %4902
        %4904 = vrot.lane.b32.xlu0 %v4891, 64
        %v4905 = vpop.permute.xlu0 %4904
        %4906 = vrot.lane.b32.xlu0 %v4892, 64
        %v4907 = vpop.permute.xlu0 %4906
        %4908 = vrot.lane.b32.xlu0 %v4893, 64
        %v4909 = vpop.permute.xlu0 %4908
        %vm4918 = vcmask 781824
        %vm4919 = vmand %vm4918, %vm1118
        %v4920 = vld [vmem:[%s4738] sm:$0xf]
        %v4921 = vsel %vm4919, %v4895, %v4920
        %4922 = vst [vmem:[%s4738] sm:$0xf] %v4921
        %v4923 = vld [vmem:[%s4738 + $0x4] sm:$0xf]
        %v4924 = vsel %vm4919, %v4897, %v4923
        %4925 = vst [vmem:[%s4738 + $0x4] sm:$0xf] %v4924
        %v4926 = vld [vmem:[%s4738 + $0x8] sm:$0xf]
        %v4927 = vsel %vm4919, %v4899, %v4926
        %4928 = vst [vmem:[%s4738 + $0x8] sm:$0xf] %v4927
        %v4929 = vld [vmem:[%s4738 + $0xc] sm:$0xf]
        %v4930 = vsel %vm4919, %v4901, %v4929
        %4931 = vst [vmem:[%s4738 + $0xc] sm:$0xf] %v4930
        %v4932 = vld [vmem:[%s4738 + $0x10] sm:$0xf]
        %v4933 = vsel %vm4919, %v4903, %v4932
        %4934 = vst [vmem:[%s4738 + $0x10] sm:$0xf] %v4933
        %v4935 = vld [vmem:[%s4738 + $0x14] sm:$0xf]
        %v4936 = vsel %vm4919, %v4905, %v4935
        %4937 = vst [vmem:[%s4738 + $0x14] sm:$0xf] %v4936
        %v4938 = vld [vmem:[%s4738 + $0x18] sm:$0xf]
        %v4939 = vsel %vm4919, %v4907, %v4938
        %4940 = vst [vmem:[%s4738 + $0x18] sm:$0xf] %v4939
        %v4941 = vld [vmem:[%s4738 + $0x1c] sm:$0xf]
        %v4942 = vsel %vm4919, %v4909, %v4941
        %4943 = vst [vmem:[%s4738 + $0x1c] sm:$0xf] %v4942
        %v4944 = vld [vmem:[#allocation3] sm:$0xf]
        %v4945 = vld [vmem:[#allocation3 + $0x4] sm:$0xf]
        %v4946 = vld [vmem:[#allocation3 + $0x8] sm:$0xf]
        %v4947 = vld [vmem:[#allocation3 + $0xc] sm:$0xf]
        %v4948 = vld [vmem:[#allocation3 + $0x10] sm:$0xf]
        %v4949 = vld [vmem:[#allocation3 + $0x14] sm:$0xf]
        %v4950 = vld [vmem:[#allocation3 + $0x18] sm:$0xf]
        %v4951 = vld [vmem:[#allocation3 + $0x1c] sm:$0xf]
        %v4952 = vld [vmem:[%s3] sm:$0xf]
        %v4953 = vld [vmem:[%s3 + $0x4] sm:$0xf]
        %v4954 = vld [vmem:[%s3 + $0x8] sm:$0xf]
        %v4955 = vld [vmem:[%s3 + $0xc] sm:$0xf]
        %v4956 = vld [vmem:[%s3 + $0x10] sm:$0xf]
        %v4957 = vld [vmem:[%s3 + $0x14] sm:$0xf]
        %v4958 = vld [vmem:[%s3 + $0x18] sm:$0xf]
        %v4959 = vld [vmem:[%s3 + $0x1c] sm:$0xf]
        %v4960 = vld [vmem:[%s3 + $0x20] sm:$0xf]
        %v4961 = vld [vmem:[%s3 + $0x24] sm:$0xf]
        %v4962 = vld [vmem:[%s3 + $0x28] sm:$0xf]
        %v4963 = vld [vmem:[%s3 + $0x2c] sm:$0xf]
        %v4964 = vld [vmem:[%s4738] sm:$0xf]
        %v4965 = vld [vmem:[%s4738 + $0x4] sm:$0xf]
        %v4966 = vld [vmem:[%s4738 + $0x8] sm:$0xf]
        %v4967 = vld [vmem:[%s4738 + $0xc] sm:$0xf]
        %v4968 = vld [vmem:[%s4738 + $0x10] sm:$0xf]
        %v4969 = vld [vmem:[%s4738 + $0x14] sm:$0xf]
        %v4970 = vld [vmem:[%s4738 + $0x18] sm:$0xf]
        %v4971 = vld [vmem:[%s4738 + $0x1c] sm:$0xf]
        %s4972 = scalar_lea.vmem %s3, 48
        %v4973 = vld [vmem:[%s4972] sm:$0xf]
        %v4974 = vld [vmem:[%s4972 + $0x4] sm:$0xf]
        %v4975 = vld [vmem:[%s4972 + $0x8] sm:$0xf]
        %v4976 = vld [vmem:[%s4972 + $0xc] sm:$0xf]
        %v4977 = vld [vmem:[%s4972 + $0x10] sm:$0xf]
        %v4978 = vld [vmem:[%s4972 + $0x14] sm:$0xf]
        %v4979 = vld [vmem:[%s4972 + $0x18] sm:$0xf]
        %v4980 = vld [vmem:[%s4972 + $0x1c] sm:$0xf]
        %v4981 = vld [vmem:[%s4972 + $0x20] sm:$0xf]
        %v4982 = vld [vmem:[%s4972 + $0x24] sm:$0xf]
        %v4983 = vld [vmem:[%s4972 + $0x28] sm:$0xf]
        %v4984 = vld [vmem:[%s4972 + $0x2c] sm:$0xf]
        %v4993 = vunpack.c.l.b16 %v4964
        %v4994 = vunpack.c.l.b16 %v4965
        %v4995 = vunpack.c.l.b16 %v4966
        %v4996 = vunpack.c.l.b16 %v4967
        %v4997 = vunpack.c.l.b16 %v4968
        %v4998 = vunpack.c.l.b16 %v4969
        %v4999 = vunpack.c.l.b16 %v4970
        %v5000 = vunpack.c.l.b16 %v4971
        %v5001 = vpack.c.b16 %v4994, %v4993
        %v5002 = vpack.c.b16 %v4996, %v4995
        %v5003 = vpack.c.b16 %v4998, %v4997
        %v5004 = vpack.c.b16 %v5000, %v4999
        %v5017 = vunpack.c.l.b16 %v4973
        %v5018 = vunpack.c.l.b16 %v4974
        %v5019 = vunpack.c.l.b16 %v4975
        %v5020 = vunpack.c.l.b16 %v4976
        %v5021 = vunpack.c.l.b16 %v4977
        %v5022 = vunpack.c.l.b16 %v4978
        %v5023 = vunpack.c.l.b16 %v4979
        %v5024 = vunpack.c.l.b16 %v4980
        %v5025 = vunpack.c.l.b16 %v4981
        %v5026 = vunpack.c.l.b16 %v4982
        %v5027 = vunpack.c.l.b16 %v4983
        %v5028 = vunpack.c.l.b16 %v4984
        %v5029 = vpack.c.b16 %v5018, %v5017
        %v5030 = vpack.c.b16 %v5020, %v5019
        %v5031 = vpack.c.b16 %v5022, %v5021
        %v5032 = vpack.c.b16 %v5024, %v5023
        %v5033 = vpack.c.b16 %v5026, %v5025
        %v5034 = vpack.c.b16 %v5028, %v5027
        %vm5041 = vcmask 785408
        %v5043 = vsel %vm5041, %v5001, 0
        %v5046 = vsel %vm5041, %v5002, 0
        %v5049 = vsel %vm5041, %v5003, 0
        %v5052 = vsel %vm5041, %v5004, 0
        %5054 = vmatprep.subr.bf16.mxu0 0
        %5055 = vmatpush1.bf16.msra.mxu0 0
        %5056 = vmatprep.subr.bf16.mxu0 0
        %5057 = vmatpush1.bf16.msra.mxu0 0
        %5058 = vmatprep.subr.bf16.mxu0 0
        %5059 = vmatpush1.bf16.msra.mxu0 %v5034
        %5060 = vmatprep.subr.bf16.mxu0 0
        %5061 = vmatpush1.bf16.msra.mxu0 %v5033
        %5062 = vmatprep.subr.bf16.mxu0 0
        %5063 = vmatpush1.bf16.msra.mxu0 %v5032
        %5064 = vmatprep.subr.bf16.mxu0 0
        %5065 = vmatpush1.bf16.msra.mxu0 %v5031
        %5066 = vmatprep.subr.bf16.mxu0 0
        %5067 = vmatpush1.bf16.msra.mxu0 %v5030
        %5068 = vmatprep.subr.bf16.mxu0 0
        %5069 = vmatpush1.bf16.msra.mxu0 %v5029
        %5070 = vmatprep.subr.bf16.mxu0 0
        %5071 = vmatpush2.bf16.msra.mxu0 0
        %5072 = vmatprep.subr.bf16.mxu0 0
        %5073 = vmatpush2.bf16.msra.mxu0 0
        %5074 = vmatprep.subr.bf16.mxu0 0
        %5075 = vmatpush2.bf16.msra.mxu0 0
        %5076 = vmatprep.subr.bf16.mxu0 0
        %5077 = vmatpush2.bf16.msra.mxu0 0
        %5078 = vmatprep.subr.bf16.mxu0 0
        %5079 = vmatpush2.bf16.msra.mxu0 0
        %5080 = vmatprep.subr.bf16.mxu0 0
        %5081 = vmatpush2.bf16.msra.mxu0 0
        %5082 = vmatprep.subr.bf16.mxu0 0
        %5083 = vmatpush2.bf16.msra.mxu0 0
        %5084 = vmatprep.subr.bf16.mxu0 0
        %5085 = vmatpush2.bf16.msra.mxu0 0
        %5086 = vmatprep.mubr.bf16.mxu0 0
        %5087 = vmatmul.mubr.bf16.gmra.mxu0 %v5043
        %v5088 = vpop.f32.mrf.mxu0
        %v5089 = vadd.f32 0.0, %v5088
        %v5090 = vpop.f32.mrf.mxu0
        %v5091 = vpop.f32.mrf.mxu0
        %v5092 = vadd.f32 0.0, %v5091
        %v5093 = vpop.f32.mrf.mxu0
        %5094 = vmatprep.mubr.bf16.mxu0 0
        %5095 = vmatmul.mubr.bf16.gmra.mxu0 %v5046
        %v5096 = vpop.f32.mrf.mxu0
        %v5097 = vadd.f32 0.0, %v5096
        %v5098 = vpop.f32.mrf.mxu0
        %v5099 = vpop.f32.mrf.mxu0
        %v5100 = vadd.f32 0.0, %v5099
        %v5101 = vpop.f32.mrf.mxu0
        %5102 = vmatprep.mubr.bf16.mxu0 0
        %5103 = vmatmul.mubr.bf16.gmra.mxu0 %v5049
        %v5104 = vpop.f32.mrf.mxu0
        %v5105 = vadd.f32 0.0, %v5104
        %v5106 = vpop.f32.mrf.mxu0
        %v5107 = vpop.f32.mrf.mxu0
        %v5108 = vadd.f32 0.0, %v5107
        %v5109 = vpop.f32.mrf.mxu0
        %5110 = vmatprep.mubr.bf16.mxu0 0
        %5111 = vmatmul.mubr.bf16.gmra.mxu0 %v5052
        %v5112 = vpop.f32.mrf.mxu0
        %v5113 = vadd.f32 0.0, %v5112
        %v5114 = vpop.f32.mrf.mxu0
        %v5115 = vpop.f32.mrf.mxu0
        %v5116 = vadd.f32 0.0, %v5115
        %v5117 = vpop.f32.mrf.mxu0
        %5118 = vdwg.mxu0
        %v5127 = vunpack.c.l.b16 %v4944
        %v5128 = vunpack.c.l.b16 %v4945
        %v5129 = vunpack.c.l.b16 %v4946
        %v5130 = vunpack.c.l.b16 %v4947
        %v5131 = vunpack.c.l.b16 %v4948
        %v5132 = vunpack.c.l.b16 %v4949
        %v5133 = vunpack.c.l.b16 %v4950
        %v5134 = vunpack.c.l.b16 %v4951
        %v5135 = vpack.c.b16 %v5128, %v5127
        %v5136 = vpack.c.b16 %v5130, %v5129
        %v5137 = vpack.c.b16 %v5132, %v5131
        %v5138 = vpack.c.b16 %v5134, %v5133
        %v5151 = vunpack.c.l.b16 %v4952
        %v5152 = vunpack.c.l.b16 %v4953
        %v5153 = vunpack.c.l.b16 %v4954
        %v5154 = vunpack.c.l.b16 %v4955
        %v5155 = vunpack.c.l.b16 %v4956
        %v5156 = vunpack.c.l.b16 %v4957
        %v5157 = vunpack.c.l.b16 %v4958
        %v5158 = vunpack.c.l.b16 %v4959
        %v5159 = vunpack.c.l.b16 %v4960
        %v5160 = vunpack.c.l.b16 %v4961
        %v5161 = vunpack.c.l.b16 %v4962
        %v5162 = vunpack.c.l.b16 %v4963
        %v5163 = vpack.c.b16 %v5152, %v5151
        %v5164 = vpack.c.b16 %v5154, %v5153
        %v5165 = vpack.c.b16 %v5156, %v5155
        %v5166 = vpack.c.b16 %v5158, %v5157
        %v5167 = vpack.c.b16 %v5160, %v5159
        %v5168 = vpack.c.b16 %v5162, %v5161
        %v5176 = vsel %vm5041, %v5135, 0
        %v5179 = vsel %vm5041, %v5136, 0
        %v5182 = vsel %vm5041, %v5137, 0
        %v5185 = vsel %vm5041, %v5138, 0
        %5187 = vmatprep.subr.bf16.mxu0 0
        %5188 = vmatpush1.bf16.msra.mxu0 0
        %5189 = vmatprep.subr.bf16.mxu0 0
        %5190 = vmatpush1.bf16.msra.mxu0 0
        %5191 = vmatprep.subr.bf16.mxu0 0
        %5192 = vmatpush1.bf16.msra.mxu0 %v5168
        %5193 = vmatprep.subr.bf16.mxu0 0
        %5194 = vmatpush1.bf16.msra.mxu0 %v5167
        %5195 = vmatprep.subr.bf16.mxu0 0
        %5196 = vmatpush1.bf16.msra.mxu0 %v5166
        %5197 = vmatprep.subr.bf16.mxu0 0
        %5198 = vmatpush1.bf16.msra.mxu0 %v5165
        %5199 = vmatprep.subr.bf16.mxu0 0
        %5200 = vmatpush1.bf16.msra.mxu0 %v5164
        %5201 = vmatprep.subr.bf16.mxu0 0
        %5202 = vmatpush1.bf16.msra.mxu0 %v5163
        %5203 = vmatprep.subr.bf16.mxu0 0
        %5204 = vmatpush2.bf16.msra.mxu0 0
        %5205 = vmatprep.subr.bf16.mxu0 0
        %5206 = vmatpush2.bf16.msra.mxu0 0
        %5207 = vmatprep.subr.bf16.mxu0 0
        %5208 = vmatpush2.bf16.msra.mxu0 0
        %5209 = vmatprep.subr.bf16.mxu0 0
        %5210 = vmatpush2.bf16.msra.mxu0 0
        %5211 = vmatprep.subr.bf16.mxu0 0
        %5212 = vmatpush2.bf16.msra.mxu0 0
        %5213 = vmatprep.subr.bf16.mxu0 0
        %5214 = vmatpush2.bf16.msra.mxu0 0
        %5215 = vmatprep.subr.bf16.mxu0 0
        %5216 = vmatpush2.bf16.msra.mxu0 0
        %5217 = vmatprep.subr.bf16.mxu0 0
        %5218 = vmatpush2.bf16.msra.mxu0 0
        %5219 = vmatprep.mubr.bf16.mxu0 0
        %5220 = vmatmul.mubr.bf16.gmra.mxu0 %v5176
        %v5221 = vpop.f32.mrf.mxu0
        %v5222 = vadd.f32 %v5089, %v5221
        %v5223 = vpop.f32.mrf.mxu0
        %v5224 = vpop.f32.mrf.mxu0
        %v5225 = vadd.f32 %v5092, %v5224
        %v5226 = vpop.f32.mrf.mxu0
        %5227 = vmatprep.mubr.bf16.mxu0 0
        %5228 = vmatmul.mubr.bf16.gmra.mxu0 %v5179
        %v5229 = vpop.f32.mrf.mxu0
        %v5230 = vadd.f32 %v5097, %v5229
        %v5231 = vpop.f32.mrf.mxu0
        %v5232 = vpop.f32.mrf.mxu0
        %v5233 = vadd.f32 %v5100, %v5232
        %v5234 = vpop.f32.mrf.mxu0
        %5235 = vmatprep.mubr.bf16.mxu0 0
        %5236 = vmatmul.mubr.bf16.gmra.mxu0 %v5182
        %v5237 = vpop.f32.mrf.mxu0
        %v5238 = vadd.f32 %v5105, %v5237
        %v5239 = vpop.f32.mrf.mxu0
        %v5240 = vpop.f32.mrf.mxu0
        %v5241 = vadd.f32 %v5108, %v5240
        %v5242 = vpop.f32.mrf.mxu0
        %5243 = vmatprep.mubr.bf16.mxu0 0
        %5244 = vmatmul.mubr.bf16.gmra.mxu0 %v5185
        %v5245 = vpop.f32.mrf.mxu0
        %v5246 = vadd.f32 %v5113, %v5245
        %v5247 = vpop.f32.mrf.mxu0
        %v5248 = vpop.f32.mrf.mxu0
        %v5249 = vadd.f32 %v5116, %v5248
        %v5250 = vpop.f32.mrf.mxu0
        %5251 = vdwg.mxu0
        %s5252 = scalar_lea.vmem [#allocation3], 8
        %v5253 = vld [vmem:[%s5252] sm:$0xf]
        %v5254 = vld [vmem:[%s5252 + $0x4] sm:$0xf]
        %v5255 = vld [vmem:[%s5252 + $0x8] sm:$0xf]
        %v5256 = vld [vmem:[%s5252 + $0xc] sm:$0xf]
        %v5257 = vld [vmem:[%s5252 + $0x10] sm:$0xf]
        %v5258 = vld [vmem:[%s5252 + $0x14] sm:$0xf]
        %v5259 = vld [vmem:[%s5252 + $0x18] sm:$0xf]
        %v5260 = vld [vmem:[%s5252 + $0x1c] sm:$0xf]
        %s5261 = scalar_lea.vmem %s3, 96
        %v5262 = vld [vmem:[%s5261] sm:$0xf]
        %v5263 = vld [vmem:[%s5261 + $0x4] sm:$0xf]
        %v5264 = vld [vmem:[%s5261 + $0x8] sm:$0xf]
        %v5265 = vld [vmem:[%s5261 + $0xc] sm:$0xf]
        %v5266 = vld [vmem:[%s5261 + $0x10] sm:$0xf]
        %v5267 = vld [vmem:[%s5261 + $0x14] sm:$0xf]
        %v5268 = vld [vmem:[%s5261 + $0x18] sm:$0xf]
        %v5269 = vld [vmem:[%s5261 + $0x1c] sm:$0xf]
        %v5270 = vld [vmem:[%s5261 + $0x20] sm:$0xf]
        %v5271 = vld [vmem:[%s5261 + $0x24] sm:$0xf]
        %v5272 = vld [vmem:[%s5261 + $0x28] sm:$0xf]
        %v5273 = vld [vmem:[%s5261 + $0x2c] sm:$0xf]
        %v5282 = vunpack.c.l.b16 %v5253
        %v5283 = vunpack.c.l.b16 %v5254
        %v5284 = vunpack.c.l.b16 %v5255
        %v5285 = vunpack.c.l.b16 %v5256
        %v5286 = vunpack.c.l.b16 %v5257
        %v5287 = vunpack.c.l.b16 %v5258
        %v5288 = vunpack.c.l.b16 %v5259
        %v5289 = vunpack.c.l.b16 %v5260
        %v5290 = vpack.c.b16 %v5283, %v5282
        %v5291 = vpack.c.b16 %v5285, %v5284
        %v5292 = vpack.c.b16 %v5287, %v5286
        %v5293 = vpack.c.b16 %v5289, %v5288
        %v5306 = vunpack.c.l.b16 %v5262
        %v5307 = vunpack.c.l.b16 %v5263
        %v5308 = vunpack.c.l.b16 %v5264
        %v5309 = vunpack.c.l.b16 %v5265
        %v5310 = vunpack.c.l.b16 %v5266
        %v5311 = vunpack.c.l.b16 %v5267
        %v5312 = vunpack.c.l.b16 %v5268
        %v5313 = vunpack.c.l.b16 %v5269
        %v5314 = vunpack.c.l.b16 %v5270
        %v5315 = vunpack.c.l.b16 %v5271
        %v5316 = vunpack.c.l.b16 %v5272
        %v5317 = vunpack.c.l.b16 %v5273
        %v5318 = vpack.c.b16 %v5307, %v5306
        %v5319 = vpack.c.b16 %v5309, %v5308
        %v5320 = vpack.c.b16 %v5311, %v5310
        %v5321 = vpack.c.b16 %v5313, %v5312
        %v5322 = vpack.c.b16 %v5315, %v5314
        %v5323 = vpack.c.b16 %v5317, %v5316
        %v5331 = vsel %vm5041, %v5290, 0
        %v5334 = vsel %vm5041, %v5291, 0
        %v5337 = vsel %vm5041, %v5292, 0
        %v5340 = vsel %vm5041, %v5293, 0
        %5342 = vmatprep.subr.bf16.mxu0 0
        %5343 = vmatpush1.bf16.msra.mxu0 0
        %5344 = vmatprep.subr.bf16.mxu0 0
        %5345 = vmatpush1.bf16.msra.mxu0 0
        %5346 = vmatprep.subr.bf16.mxu0 0
        %5347 = vmatpush1.bf16.msra.mxu0 %v5323
        %5348 = vmatprep.subr.bf16.mxu0 0
        %5349 = vmatpush1.bf16.msra.mxu0 %v5322
        %5350 = vmatprep.subr.bf16.mxu0 0
        %5351 = vmatpush1.bf16.msra.mxu0 %v5321
        %5352 = vmatprep.subr.bf16.mxu0 0
        %5353 = vmatpush1.bf16.msra.mxu0 %v5320
        %5354 = vmatprep.subr.bf16.mxu0 0
        %5355 = vmatpush1.bf16.msra.mxu0 %v5319
        %5356 = vmatprep.subr.bf16.mxu0 0
        %5357 = vmatpush1.bf16.msra.mxu0 %v5318
        %5358 = vmatprep.subr.bf16.mxu0 0
        %5359 = vmatpush2.bf16.msra.mxu0 0
        %5360 = vmatprep.subr.bf16.mxu0 0
        %5361 = vmatpush2.bf16.msra.mxu0 0
        %5362 = vmatprep.subr.bf16.mxu0 0
        %5363 = vmatpush2.bf16.msra.mxu0 0
        %5364 = vmatprep.subr.bf16.mxu0 0
        %5365 = vmatpush2.bf16.msra.mxu0 0
        %5366 = vmatprep.subr.bf16.mxu0 0
        %5367 = vmatpush2.bf16.msra.mxu0 0
        %5368 = vmatprep.subr.bf16.mxu0 0
        %5369 = vmatpush2.bf16.msra.mxu0 0
        %5370 = vmatprep.subr.bf16.mxu0 0
        %5371 = vmatpush2.bf16.msra.mxu0 0
        %5372 = vmatprep.subr.bf16.mxu0 0
        %5373 = vmatpush2.bf16.msra.mxu0 0
        %5374 = vmatprep.mubr.bf16.mxu0 0
        %5375 = vmatmul.mubr.bf16.gmra.mxu0 %v5331
        %v5376 = vpop.f32.mrf.mxu0
        %v5377 = vadd.f32 0.0, %v5376
        %v5378 = vpop.f32.mrf.mxu0
        %v5379 = vpop.f32.mrf.mxu0
        %v5380 = vadd.f32 0.0, %v5379
        %v5381 = vpop.f32.mrf.mxu0
        %5382 = vmatprep.mubr.bf16.mxu0 0
        %5383 = vmatmul.mubr.bf16.gmra.mxu0 %v5334
        %v5384 = vpop.f32.mrf.mxu0
        %v5385 = vadd.f32 0.0, %v5384
        %v5386 = vpop.f32.mrf.mxu0
        %v5387 = vpop.f32.mrf.mxu0
        %v5388 = vadd.f32 0.0, %v5387
        %v5389 = vpop.f32.mrf.mxu0
        %5390 = vmatprep.mubr.bf16.mxu0 0
        %5391 = vmatmul.mubr.bf16.gmra.mxu0 %v5337
        %v5392 = vpop.f32.mrf.mxu0
        %v5393 = vadd.f32 0.0, %v5392
        %v5394 = vpop.f32.mrf.mxu0
        %v5395 = vpop.f32.mrf.mxu0
        %v5396 = vadd.f32 0.0, %v5395
        %v5397 = vpop.f32.mrf.mxu0
        %5398 = vmatprep.mubr.bf16.mxu0 0
        %5399 = vmatmul.mubr.bf16.gmra.mxu0 %v5340
        %v5400 = vpop.f32.mrf.mxu0
        %v5401 = vadd.f32 0.0, %v5400
        %v5402 = vpop.f32.mrf.mxu0
        %v5403 = vpop.f32.mrf.mxu0
        %v5404 = vadd.f32 0.0, %v5403
        %v5405 = vpop.f32.mrf.mxu0
        %5406 = vdwg.mxu0
        %v5407 = vadd.f32 %v5222, %v5377
        %v5408 = vadd.f32 %v5225, %v5380
        %v5409 = vadd.f32 %v5230, %v5385
        %v5410 = vadd.f32 %v5233, %v5388
        %v5411 = vadd.f32 %v5238, %v5393
        %v5412 = vadd.f32 %v5241, %v5396
        %v5413 = vadd.f32 %v5246, %v5401
        %v5414 = vadd.f32 %v5249, %v5404
        %v5415 = vld [vmem:[%s4] sm:$0x1]
        %v5417 = vlaneseq
        %v5418 = vshrl.u32 %v5417, 7
        %v5419 = vsub.s32 0, %v5418
        %v5420 = vrot.slane %v5415, %v5419
        %v5422 = vadd.f32 %v5407, %v5420
        %v5423 = vadd.f32 %v5408, %v5420
        %v5424 = vadd.f32 %v5409, %v5420
        %v5425 = vadd.f32 %v5410, %v5420
        %v5426 = vadd.f32 %v5411, %v5420
        %v5427 = vadd.f32 %v5412, %v5420
        %v5428 = vadd.f32 %v5413, %v5420
        %v5429 = vadd.f32 %v5414, %v5420
        %v5430 = vmax.f32 %v5422, 0.0
        %v5431 = vmax.f32 %v5423, 0.0
        %v5432 = vmax.f32 %v5424, 0.0
        %v5433 = vmax.f32 %v5425, 0.0
        %v5434 = vmax.f32 %v5426, 0.0
        %v5435 = vmax.f32 %v5427, 0.0
        %v5436 = vmax.f32 %v5428, 0.0
        %v5437 = vmax.f32 %v5429, 0.0
        %v5446 = vcombine.high %v5430, %v5430
        %v5448 = vunpack.c.l.s4 1983009808
        %v5449 = vunpack.c.0.s8 %v5448
        %v5450 = vlaneseq
        %v5451 = vshrl.u32 %v5450, 7
        %v5452 = vsub.s32 %v5449, %v5451
        %v5453 = vrot.slane %v5430, %v5452
        %v5455 = vunpack.c.l.s4 1983009808
        %v5456 = vunpack.c.0.s8 %v5455
        %v5457 = vlaneseq
        %v5458 = vshrl.u32 %v5457, 7
        %v5459 = vsub.s32 %v5456, %v5458
        %v5460 = vrot.slane %v5446, %v5459
        %v5461 = vcombine.high %v5453, %v5453
        %v5462 = vcombine.high %v5460, %v5460
        %v5463 = vcombine.high %v5431, %v5431
        %v5465 = vunpack.c.l.s4 1983009808
        %v5466 = vunpack.c.0.s8 %v5465
        %v5467 = vlaneseq
        %v5468 = vshrl.u32 %v5467, 7
        %v5469 = vsub.s32 %v5466, %v5468
        %v5470 = vrot.slane %v5431, %v5469
        %v5472 = vunpack.c.l.s4 1983009808
        %v5473 = vunpack.c.0.s8 %v5472
        %v5474 = vlaneseq
        %v5475 = vshrl.u32 %v5474, 7
        %v5476 = vsub.s32 %v5473, %v5475
        %v5477 = vrot.slane %v5463, %v5476
        %v5478 = vcombine.high %v5470, %v5470
        %v5479 = vcombine.high %v5477, %v5477
        %v5480 = vcombine.high %v5432, %v5432
        %v5482 = vunpack.c.l.s4 1983009808
        %v5483 = vunpack.c.0.s8 %v5482
        %v5484 = vlaneseq
        %v5485 = vshrl.u32 %v5484, 7
        %v5486 = vsub.s32 %v5483, %v5485
        %v5487 = vrot.slane %v5432, %v5486
        %v5489 = vunpack.c.l.s4 1983009808
        %v5490 = vunpack.c.0.s8 %v5489
        %v5491 = vlaneseq
        %v5492 = vshrl.u32 %v5491, 7
        %v5493 = vsub.s32 %v5490, %v5492
        %v5494 = vrot.slane %v5480, %v5493
        %v5495 = vcombine.high %v5487, %v5487
        %v5496 = vcombine.high %v5494, %v5494
        %v5497 = vcombine.high %v5433, %v5433
        %v5499 = vunpack.c.l.s4 1983009808
        %v5500 = vunpack.c.0.s8 %v5499
        %v5501 = vlaneseq
        %v5502 = vshrl.u32 %v5501, 7
        %v5503 = vsub.s32 %v5500, %v5502
        %v5504 = vrot.slane %v5433, %v5503
        %v5506 = vunpack.c.l.s4 1983009808
        %v5507 = vunpack.c.0.s8 %v5506
        %v5508 = vlaneseq
        %v5509 = vshrl.u32 %v5508, 7
        %v5510 = vsub.s32 %v5507, %v5509
        %v5511 = vrot.slane %v5497, %v5510
        %v5512 = vcombine.high %v5504, %v5504
        %v5513 = vcombine.high %v5511, %v5511
        %v5514 = vcombine.high %v5434, %v5434
        %v5516 = vunpack.c.l.s4 1983009808
        %v5517 = vunpack.c.0.s8 %v5516
        %v5518 = vlaneseq
        %v5519 = vshrl.u32 %v5518, 7
        %v5520 = vsub.s32 %v5517, %v5519
        %v5521 = vrot.slane %v5434, %v5520
        %v5523 = vunpack.c.l.s4 1983009808
        %v5524 = vunpack.c.0.s8 %v5523
        %v5525 = vlaneseq
        %v5526 = vshrl.u32 %v5525, 7
        %v5527 = vsub.s32 %v5524, %v5526
        %v5528 = vrot.slane %v5514, %v5527
        %v5529 = vcombine.high %v5521, %v5521
        %v5530 = vcombine.high %v5528, %v5528
        %v5531 = vcombine.high %v5435, %v5435
        %v5533 = vunpack.c.l.s4 1983009808
        %v5534 = vunpack.c.0.s8 %v5533
        %v5535 = vlaneseq
        %v5536 = vshrl.u32 %v5535, 7
        %v5537 = vsub.s32 %v5534, %v5536
        %v5538 = vrot.slane %v5435, %v5537
        %v5540 = vunpack.c.l.s4 1983009808
        %v5541 = vunpack.c.0.s8 %v5540
        %v5542 = vlaneseq
        %v5543 = vshrl.u32 %v5542, 7
        %v5544 = vsub.s32 %v5541, %v5543
        %v5545 = vrot.slane %v5531, %v5544
        %v5546 = vcombine.high %v5538, %v5538
        %v5547 = vcombine.high %v5545, %v5545
        %v5548 = vcombine.high %v5436, %v5436
        %v5550 = vunpack.c.l.s4 1983009808
        %v5551 = vunpack.c.0.s8 %v5550
        %v5552 = vlaneseq
        %v5553 = vshrl.u32 %v5552, 7
        %v5554 = vsub.s32 %v5551, %v5553
        %v5555 = vrot.slane %v5436, %v5554
        %v5557 = vunpack.c.l.s4 1983009808
        %v5558 = vunpack.c.0.s8 %v5557
        %v5559 = vlaneseq
        %v5560 = vshrl.u32 %v5559, 7
        %v5561 = vsub.s32 %v5558, %v5560
        %v5562 = vrot.slane %v5548, %v5561
        %v5563 = vcombine.high %v5555, %v5555
        %v5564 = vcombine.high %v5562, %v5562
        %v5565 = vcombine.high %v5437, %v5437
        %v5567 = vunpack.c.l.s4 1983009808
        %v5568 = vunpack.c.0.s8 %v5567
        %v5569 = vlaneseq
        %v5570 = vshrl.u32 %v5569, 7
        %v5571 = vsub.s32 %v5568, %v5570
        %v5572 = vrot.slane %v5437, %v5571
        %v5574 = vunpack.c.l.s4 1983009808
        %v5575 = vunpack.c.0.s8 %v5574
        %v5576 = vlaneseq
        %v5577 = vshrl.u32 %v5576, 7
        %v5578 = vsub.s32 %v5575, %v5577
        %v5579 = vrot.slane %v5565, %v5578
        %v5580 = vcombine.high %v5572, %v5572
        %v5581 = vcombine.high %v5579, %v5579
        %vm5614 = vcmask 517120
        %v5615 = vsel %vm5614, %v5453, -inf
        %v5616 = vrot.slane %v5615, 4
        %v5617 = vmax.f32 %v5615, %v5616
        %v5618 = vrot.slane %v5617, 2
        %v5619 = vmax.f32 %v5617, %v5618
        %v5620 = vrot.slane %v5619, 1
        %v5621 = vmax.f32 %v5619, %v5620
        %v5622 = vsel %vm5614, %v5461, -inf
        %v5623 = vrot.slane %v5622, 4
        %v5624 = vmax.f32 %v5622, %v5623
        %v5625 = vrot.slane %v5624, 2
        %v5626 = vmax.f32 %v5624, %v5625
        %v5627 = vrot.slane %v5626, 1
        %v5628 = vmax.f32 %v5626, %v5627
        %v5629 = vsel %vm5614, %v5460, -inf
        %v5630 = vrot.slane %v5629, 4
        %v5631 = vmax.f32 %v5629, %v5630
        %v5632 = vrot.slane %v5631, 2
        %v5633 = vmax.f32 %v5631, %v5632
        %v5634 = vrot.slane %v5633, 1
        %v5635 = vmax.f32 %v5633, %v5634
        %v5636 = vsel %vm5614, %v5462, -inf
        %v5637 = vrot.slane %v5636, 4
        %v5638 = vmax.f32 %v5636, %v5637
        %v5639 = vrot.slane %v5638, 2
        %v5640 = vmax.f32 %v5638, %v5639
        %v5641 = vrot.slane %v5640, 1
        %v5642 = vmax.f32 %v5640, %v5641
        %v5643 = vsel %vm5614, %v5470, -inf
        %v5644 = vrot.slane %v5643, 4
        %v5645 = vmax.f32 %v5643, %v5644
        %v5646 = vrot.slane %v5645, 2
        %v5647 = vmax.f32 %v5645, %v5646
        %v5648 = vrot.slane %v5647, 1
        %v5649 = vmax.f32 %v5647, %v5648
        %v5650 = vsel %vm5614, %v5478, -inf
        %v5651 = vrot.slane %v5650, 4
        %v5652 = vmax.f32 %v5650, %v5651
        %v5653 = vrot.slane %v5652, 2
        %v5654 = vmax.f32 %v5652, %v5653
        %v5655 = vrot.slane %v5654, 1
        %v5656 = vmax.f32 %v5654, %v5655
        %v5657 = vsel %vm5614, %v5477, -inf
        %v5658 = vrot.slane %v5657, 4
        %v5659 = vmax.f32 %v5657, %v5658
        %v5660 = vrot.slane %v5659, 2
        %v5661 = vmax.f32 %v5659, %v5660
        %v5662 = vrot.slane %v5661, 1
        %v5663 = vmax.f32 %v5661, %v5662
        %v5664 = vsel %vm5614, %v5479, -inf
        %v5665 = vrot.slane %v5664, 4
        %v5666 = vmax.f32 %v5664, %v5665
        %v5667 = vrot.slane %v5666, 2
        %v5668 = vmax.f32 %v5666, %v5667
        %v5669 = vrot.slane %v5668, 1
        %v5670 = vmax.f32 %v5668, %v5669
        %v5671 = vsel %vm5614, %v5487, -inf
        %v5672 = vrot.slane %v5671, 4
        %v5673 = vmax.f32 %v5671, %v5672
        %v5674 = vrot.slane %v5673, 2
        %v5675 = vmax.f32 %v5673, %v5674
        %v5676 = vrot.slane %v5675, 1
        %v5677 = vmax.f32 %v5675, %v5676
        %v5678 = vsel %vm5614, %v5495, -inf
        %v5679 = vrot.slane %v5678, 4
        %v5680 = vmax.f32 %v5678, %v5679
        %v5681 = vrot.slane %v5680, 2
        %v5682 = vmax.f32 %v5680, %v5681
        %v5683 = vrot.slane %v5682, 1
        %v5684 = vmax.f32 %v5682, %v5683
        %v5685 = vsel %vm5614, %v5494, -inf
        %v5686 = vrot.slane %v5685, 4
        %v5687 = vmax.f32 %v5685, %v5686
        %v5688 = vrot.slane %v5687, 2
        %v5689 = vmax.f32 %v5687, %v5688
        %v5690 = vrot.slane %v5689, 1
        %v5691 = vmax.f32 %v5689, %v5690
        %v5692 = vsel %vm5614, %v5496, -inf
        %v5693 = vrot.slane %v5692, 4
        %v5694 = vmax.f32 %v5692, %v5693
        %v5695 = vrot.slane %v5694, 2
        %v5696 = vmax.f32 %v5694, %v5695
        %v5697 = vrot.slane %v5696, 1
        %v5698 = vmax.f32 %v5696, %v5697
        %v5699 = vsel %vm5614, %v5504, -inf
        %v5700 = vrot.slane %v5699, 4
        %v5701 = vmax.f32 %v5699, %v5700
        %v5702 = vrot.slane %v5701, 2
        %v5703 = vmax.f32 %v5701, %v5702
        %v5704 = vrot.slane %v5703, 1
        %v5705 = vmax.f32 %v5703, %v5704
        %v5706 = vsel %vm5614, %v5512, -inf
        %v5707 = vrot.slane %v5706, 4
        %v5708 = vmax.f32 %v5706, %v5707
        %v5709 = vrot.slane %v5708, 2
        %v5710 = vmax.f32 %v5708, %v5709
        %v5711 = vrot.slane %v5710, 1
        %v5712 = vmax.f32 %v5710, %v5711
        %v5713 = vsel %vm5614, %v5511, -inf
        %v5714 = vrot.slane %v5713, 4
        %v5715 = vmax.f32 %v5713, %v5714
        %v5716 = vrot.slane %v5715, 2
        %v5717 = vmax.f32 %v5715, %v5716
        %v5718 = vrot.slane %v5717, 1
        %v5719 = vmax.f32 %v5717, %v5718
        %v5720 = vsel %vm5614, %v5513, -inf
        %v5721 = vrot.slane %v5720, 4
        %v5722 = vmax.f32 %v5720, %v5721
        %v5723 = vrot.slane %v5722, 2
        %v5724 = vmax.f32 %v5722, %v5723
        %v5725 = vrot.slane %v5724, 1
        %v5726 = vmax.f32 %v5724, %v5725
        %v5727 = vsel %vm5614, %v5521, -inf
        %v5728 = vrot.slane %v5727, 4
        %v5729 = vmax.f32 %v5727, %v5728
        %v5730 = vrot.slane %v5729, 2
        %v5731 = vmax.f32 %v5729, %v5730
        %v5732 = vrot.slane %v5731, 1
        %v5733 = vmax.f32 %v5731, %v5732
        %v5734 = vsel %vm5614, %v5529, -inf
        %v5735 = vrot.slane %v5734, 4
        %v5736 = vmax.f32 %v5734, %v5735
        %v5737 = vrot.slane %v5736, 2
        %v5738 = vmax.f32 %v5736, %v5737
        %v5739 = vrot.slane %v5738, 1
        %v5740 = vmax.f32 %v5738, %v5739
        %v5741 = vsel %vm5614, %v5528, -inf
        %v5742 = vrot.slane %v5741, 4
        %v5743 = vmax.f32 %v5741, %v5742
        %v5744 = vrot.slane %v5743, 2
        %v5745 = vmax.f32 %v5743, %v5744
        %v5746 = vrot.slane %v5745, 1
        %v5747 = vmax.f32 %v5745, %v5746
        %v5748 = vsel %vm5614, %v5530, -inf
        %v5749 = vrot.slane %v5748, 4
        %v5750 = vmax.f32 %v5748, %v5749
        %v5751 = vrot.slane %v5750, 2
        %v5752 = vmax.f32 %v5750, %v5751
        %v5753 = vrot.slane %v5752, 1
        %v5754 = vmax.f32 %v5752, %v5753
        %v5755 = vsel %vm5614, %v5538, -inf
        %v5756 = vrot.slane %v5755, 4
        %v5757 = vmax.f32 %v5755, %v5756
        %v5758 = vrot.slane %v5757, 2
        %v5759 = vmax.f32 %v5757, %v5758
        %v5760 = vrot.slane %v5759, 1
        %v5761 = vmax.f32 %v5759, %v5760
        %v5762 = vsel %vm5614, %v5546, -inf
        %v5763 = vrot.slane %v5762, 4
        %v5764 = vmax.f32 %v5762, %v5763
        %v5765 = vrot.slane %v5764, 2
        %v5766 = vmax.f32 %v5764, %v5765
        %v5767 = vrot.slane %v5766, 1
        %v5768 = vmax.f32 %v5766, %v5767
        %v5769 = vsel %vm5614, %v5545, -inf
        %v5770 = vrot.slane %v5769, 4
        %v5771 = vmax.f32 %v5769, %v5770
        %v5772 = vrot.slane %v5771, 2
        %v5773 = vmax.f32 %v5771, %v5772
        %v5774 = vrot.slane %v5773, 1
        %v5775 = vmax.f32 %v5773, %v5774
        %v5776 = vsel %vm5614, %v5547, -inf
        %v5777 = vrot.slane %v5776, 4
        %v5778 = vmax.f32 %v5776, %v5777
        %v5779 = vrot.slane %v5778, 2
        %v5780 = vmax.f32 %v5778, %v5779
        %v5781 = vrot.slane %v5780, 1
        %v5782 = vmax.f32 %v5780, %v5781
        %v5783 = vsel %vm5614, %v5555, -inf
        %v5784 = vrot.slane %v5783, 4
        %v5785 = vmax.f32 %v5783, %v5784
        %v5786 = vrot.slane %v5785, 2
        %v5787 = vmax.f32 %v5785, %v5786
        %v5788 = vrot.slane %v5787, 1
        %v5789 = vmax.f32 %v5787, %v5788
        %v5790 = vsel %vm5614, %v5563, -inf
        %v5791 = vrot.slane %v5790, 4
        %v5792 = vmax.f32 %v5790, %v5791
        %v5793 = vrot.slane %v5792, 2
        %v5794 = vmax.f32 %v5792, %v5793
        %v5795 = vrot.slane %v5794, 1
        %v5796 = vmax.f32 %v5794, %v5795
        %v5797 = vsel %vm5614, %v5562, -inf
        %v5798 = vrot.slane %v5797, 4
        %v5799 = vmax.f32 %v5797, %v5798
        %v5800 = vrot.slane %v5799, 2
        %v5801 = vmax.f32 %v5799, %v5800
        %v5802 = vrot.slane %v5801, 1
        %v5803 = vmax.f32 %v5801, %v5802
        %v5804 = vsel %vm5614, %v5564, -inf
        %v5805 = vrot.slane %v5804, 4
        %v5806 = vmax.f32 %v5804, %v5805
        %v5807 = vrot.slane %v5806, 2
        %v5808 = vmax.f32 %v5806, %v5807
        %v5809 = vrot.slane %v5808, 1
        %v5810 = vmax.f32 %v5808, %v5809
        %v5811 = vsel %vm5614, %v5572, -inf
        %v5812 = vrot.slane %v5811, 4
        %v5813 = vmax.f32 %v5811, %v5812
        %v5814 = vrot.slane %v5813, 2
        %v5815 = vmax.f32 %v5813, %v5814
        %v5816 = vrot.slane %v5815, 1
        %v5817 = vmax.f32 %v5815, %v5816
        %v5818 = vsel %vm5614, %v5580, -inf
        %v5819 = vrot.slane %v5818, 4
        %v5820 = vmax.f32 %v5818, %v5819
        %v5821 = vrot.slane %v5820, 2
        %v5822 = vmax.f32 %v5820, %v5821
        %v5823 = vrot.slane %v5822, 1
        %v5824 = vmax.f32 %v5822, %v5823
        %v5825 = vsel %vm5614, %v5579, -inf
        %v5826 = vrot.slane %v5825, 4
        %v5827 = vmax.f32 %v5825, %v5826
        %v5828 = vrot.slane %v5827, 2
        %v5829 = vmax.f32 %v5827, %v5828
        %v5830 = vrot.slane %v5829, 1
        %v5831 = vmax.f32 %v5829, %v5830
        %v5832 = vsel %vm5614, %v5581, -inf
        %v5833 = vrot.slane %v5832, 4
        %v5834 = vmax.f32 %v5832, %v5833
        %v5835 = vrot.slane %v5834, 2
        %v5836 = vmax.f32 %v5834, %v5835
        %v5837 = vrot.slane %v5836, 1
        %v5838 = vmax.f32 %v5836, %v5837
        %vm5839 = vcmask 523264
        %v5840 = vsel %vm5839, %v5621, -inf
        %v5841 = vsel %vm5839, %v5649, -inf
        %v5842 = vmax.f32 %v5840, %v5841
        %v5843 = vsel %vm5839, %v5628, -inf
        %v5844 = vsel %vm5839, %v5656, -inf
        %v5845 = vmax.f32 %v5843, %v5844
        %v5846 = vsel %vm5839, %v5635, -inf
        %v5847 = vsel %vm5839, %v5663, -inf
        %v5848 = vmax.f32 %v5846, %v5847
        %v5849 = vsel %vm5839, %v5642, -inf
        %v5850 = vsel %vm5839, %v5670, -inf
        %v5851 = vmax.f32 %v5849, %v5850
        %v5852 = vsel %vm5839, %v5677, -inf
        %v5853 = vsel %vm5839, %v5705, -inf
        %v5854 = vmax.f32 %v5852, %v5853
        %v5855 = vsel %vm5839, %v5684, -inf
        %v5856 = vsel %vm5839, %v5712, -inf
        %v5857 = vmax.f32 %v5855, %v5856
        %v5858 = vsel %vm5839, %v5691, -inf
        %v5859 = vsel %vm5839, %v5719, -inf
        %v5860 = vmax.f32 %v5858, %v5859
        %v5861 = vsel %vm5839, %v5698, -inf
        %v5862 = vsel %vm5839, %v5726, -inf
        %v5863 = vmax.f32 %v5861, %v5862
        %v5864 = vsel %vm5839, %v5733, -inf
        %v5865 = vsel %vm5839, %v5761, -inf
        %v5866 = vmax.f32 %v5864, %v5865
        %v5867 = vsel %vm5839, %v5740, -inf
        %v5868 = vsel %vm5839, %v5768, -inf
        %v5869 = vmax.f32 %v5867, %v5868
        %v5870 = vsel %vm5839, %v5747, -inf
        %v5871 = vsel %vm5839, %v5775, -inf
        %v5872 = vmax.f32 %v5870, %v5871
        %v5873 = vsel %vm5839, %v5754, -inf
        %v5874 = vsel %vm5839, %v5782, -inf
        %v5875 = vmax.f32 %v5873, %v5874
        %v5876 = vsel %vm5839, %v5789, -inf
        %v5877 = vsel %vm5839, %v5817, -inf
        %v5878 = vmax.f32 %v5876, %v5877
        %v5879 = vsel %vm5839, %v5796, -inf
        %v5880 = vsel %vm5839, %v5824, -inf
        %v5881 = vmax.f32 %v5879, %v5880
        %v5882 = vsel %vm5839, %v5803, -inf
        %v5883 = vsel %vm5839, %v5831, -inf
        %v5884 = vmax.f32 %v5882, %v5883
        %v5885 = vsel %vm5839, %v5810, -inf
        %v5886 = vsel %vm5839, %v5838, -inf
        %v5887 = vmax.f32 %v5885, %v5886
        %v5888 = vpack.c.bf16 %v5842, %v5842
        %v5889 = vpack.c.bf16 %v5845, %v5845
        %v5890 = vpack.c.bf16 %v5848, %v5848
        %v5891 = vpack.c.bf16 %v5851, %v5851
        %v5892 = vpack.c.bf16 %v5854, %v5854
        %v5893 = vpack.c.bf16 %v5857, %v5857
        %v5894 = vpack.c.bf16 %v5860, %v5860
        %v5895 = vpack.c.bf16 %v5863, %v5863
        %v5896 = vpack.c.bf16 %v5866, %v5866
        %v5897 = vpack.c.bf16 %v5869, %v5869
        %v5898 = vpack.c.bf16 %v5872, %v5872
        %v5899 = vpack.c.bf16 %v5875, %v5875
        %v5900 = vpack.c.bf16 %v5878, %v5878
        %v5901 = vpack.c.bf16 %v5881, %v5881
        %v5902 = vpack.c.bf16 %v5884, %v5884
        %v5903 = vpack.c.bf16 %v5887, %v5887
        %v5921 = vunpack.c.l.s4 1983009808
        %v5922 = vunpack.c.0.s8 %v5921
        %v5923 = vlaneseq
        %v5924 = vshrl.u32 %v5923, 7
        %v5925 = vsub.s32 %v5922, %v5924
        %v5926 = vrot.slane %v5888, %v5925
        %v5928 = vunpack.c.l.s4 1983009808
        %v5929 = vunpack.c.0.s8 %v5928
        %v5930 = vlaneseq
        %v5931 = vshrl.u32 %v5930, 7
        %v5932 = vsub.s32 %v5929, %v5931
        %v5933 = vrot.slane %v5889, %v5932
        %v5935 = vunpack.c.l.s4 1983009808
        %v5936 = vunpack.c.0.s8 %v5935
        %v5937 = vlaneseq
        %v5938 = vshrl.u32 %v5937, 7
        %v5939 = vsub.s32 %v5936, %v5938
        %v5940 = vrot.slane %v5890, %v5939
        %v5942 = vunpack.c.l.s4 1983009808
        %v5943 = vunpack.c.0.s8 %v5942
        %v5944 = vlaneseq
        %v5945 = vshrl.u32 %v5944, 7
        %v5946 = vsub.s32 %v5943, %v5945
        %v5947 = vrot.slane %v5891, %v5946
        %v5949 = vunpack.c.l.s4 1983009808
        %v5950 = vunpack.c.0.s8 %v5949
        %v5951 = vlaneseq
        %v5952 = vshrl.u32 %v5951, 7
        %v5953 = vsub.s32 %v5950, %v5952
        %v5954 = vrot.slane %v5892, %v5953
        %v5956 = vunpack.c.l.s4 1983009808
        %v5957 = vunpack.c.0.s8 %v5956
        %v5958 = vlaneseq
        %v5959 = vshrl.u32 %v5958, 7
        %v5960 = vsub.s32 %v5957, %v5959
        %v5961 = vrot.slane %v5893, %v5960
        %v5963 = vunpack.c.l.s4 1983009808
        %v5964 = vunpack.c.0.s8 %v5963
        %v5965 = vlaneseq
        %v5966 = vshrl.u32 %v5965, 7
        %v5967 = vsub.s32 %v5964, %v5966
        %v5968 = vrot.slane %v5894, %v5967
        %v5970 = vunpack.c.l.s4 1983009808
        %v5971 = vunpack.c.0.s8 %v5970
        %v5972 = vlaneseq
        %v5973 = vshrl.u32 %v5972, 7
        %v5974 = vsub.s32 %v5971, %v5973
        %v5975 = vrot.slane %v5895, %v5974
        %v5977 = vunpack.c.l.s4 1983009808
        %v5978 = vunpack.c.0.s8 %v5977
        %v5979 = vlaneseq
        %v5980 = vshrl.u32 %v5979, 7
        %v5981 = vsub.s32 %v5978, %v5980
        %v5982 = vrot.slane %v5896, %v5981
        %v5984 = vunpack.c.l.s4 1983009808
        %v5985 = vunpack.c.0.s8 %v5984
        %v5986 = vlaneseq
        %v5987 = vshrl.u32 %v5986, 7
        %v5988 = vsub.s32 %v5985, %v5987
        %v5989 = vrot.slane %v5897, %v5988
        %v5991 = vunpack.c.l.s4 1983009808
        %v5992 = vunpack.c.0.s8 %v5991
        %v5993 = vlaneseq
        %v5994 = vshrl.u32 %v5993, 7
        %v5995 = vsub.s32 %v5992, %v5994
        %v5996 = vrot.slane %v5898, %v5995
        %v5998 = vunpack.c.l.s4 1983009808
        %v5999 = vunpack.c.0.s8 %v5998
        %v6000 = vlaneseq
        %v6001 = vshrl.u32 %v6000, 7
        %v6002 = vsub.s32 %v5999, %v6001
        %v6003 = vrot.slane %v5899, %v6002
        %v6005 = vunpack.c.l.s4 1983009808
        %v6006 = vunpack.c.0.s8 %v6005
        %v6007 = vlaneseq
        %v6008 = vshrl.u32 %v6007, 7
        %v6009 = vsub.s32 %v6006, %v6008
        %v6010 = vrot.slane %v5900, %v6009
        %v6012 = vunpack.c.l.s4 1983009808
        %v6013 = vunpack.c.0.s8 %v6012
        %v6014 = vlaneseq
        %v6015 = vshrl.u32 %v6014, 7
        %v6016 = vsub.s32 %v6013, %v6015
        %v6017 = vrot.slane %v5901, %v6016
        %v6019 = vunpack.c.l.s4 1983009808
        %v6020 = vunpack.c.0.s8 %v6019
        %v6021 = vlaneseq
        %v6022 = vshrl.u32 %v6021, 7
        %v6023 = vsub.s32 %v6020, %v6022
        %v6024 = vrot.slane %v5902, %v6023
        %v6026 = vunpack.c.l.s4 1983009808
        %v6027 = vunpack.c.0.s8 %v6026
        %v6028 = vlaneseq
        %v6029 = vshrl.u32 %v6028, 7
        %v6030 = vsub.s32 %v6027, %v6029
        %v6031 = vrot.slane %v5903, %v6030
        %v6033 = vunpack.c.l.s4 1983009808
        %v6034 = vunpack.c.0.s8 %v6033
        %v6035 = vlaneseq
        %v6036 = vshrl.u32 %v6035, 7
        %v6037 = vsub.s32 %v6034, %v6036
        %v6038 = vrot.slane %v5926, %v6037
        %v6040 = vunpack.c.l.s4 1983009808
        %v6041 = vunpack.c.0.s8 %v6040
        %v6042 = vlaneseq
        %v6043 = vshrl.u32 %v6042, 7
        %v6044 = vsub.s32 %v6041, %v6043
        %v6045 = vrot.slane %v5933, %v6044
        %v6047 = vunpack.c.l.s4 1983009808
        %v6048 = vunpack.c.0.s8 %v6047
        %v6049 = vlaneseq
        %v6050 = vshrl.u32 %v6049, 7
        %v6051 = vsub.s32 %v6048, %v6050
        %v6052 = vrot.slane %v5940, %v6051
        %v6054 = vunpack.c.l.s4 1983009808
        %v6055 = vunpack.c.0.s8 %v6054
        %v6056 = vlaneseq
        %v6057 = vshrl.u32 %v6056, 7
        %v6058 = vsub.s32 %v6055, %v6057
        %v6059 = vrot.slane %v5947, %v6058
        %v6061 = vunpack.c.l.s4 1983009808
        %v6062 = vunpack.c.0.s8 %v6061
        %v6063 = vlaneseq
        %v6064 = vshrl.u32 %v6063, 7
        %v6065 = vsub.s32 %v6062, %v6064
        %v6066 = vrot.slane %v5954, %v6065
        %v6068 = vunpack.c.l.s4 1983009808
        %v6069 = vunpack.c.0.s8 %v6068
        %v6070 = vlaneseq
        %v6071 = vshrl.u32 %v6070, 7
        %v6072 = vsub.s32 %v6069, %v6071
        %v6073 = vrot.slane %v5961, %v6072
        %v6075 = vunpack.c.l.s4 1983009808
        %v6076 = vunpack.c.0.s8 %v6075
        %v6077 = vlaneseq
        %v6078 = vshrl.u32 %v6077, 7
        %v6079 = vsub.s32 %v6076, %v6078
        %v6080 = vrot.slane %v5968, %v6079
        %v6082 = vunpack.c.l.s4 1983009808
        %v6083 = vunpack.c.0.s8 %v6082
        %v6084 = vlaneseq
        %v6085 = vshrl.u32 %v6084, 7
        %v6086 = vsub.s32 %v6083, %v6085
        %v6087 = vrot.slane %v5975, %v6086
        %v6089 = vunpack.c.l.s4 1983009808
        %v6090 = vunpack.c.0.s8 %v6089
        %v6091 = vlaneseq
        %v6092 = vshrl.u32 %v6091, 7
        %v6093 = vsub.s32 %v6090, %v6092
        %v6094 = vrot.slane %v5982, %v6093
        %v6096 = vunpack.c.l.s4 1983009808
        %v6097 = vunpack.c.0.s8 %v6096
        %v6098 = vlaneseq
        %v6099 = vshrl.u32 %v6098, 7
        %v6100 = vsub.s32 %v6097, %v6099
        %v6101 = vrot.slane %v5989, %v6100
        %v6103 = vunpack.c.l.s4 1983009808
        %v6104 = vunpack.c.0.s8 %v6103
        %v6105 = vlaneseq
        %v6106 = vshrl.u32 %v6105, 7
        %v6107 = vsub.s32 %v6104, %v6106
        %v6108 = vrot.slane %v5996, %v6107
        %v6110 = vunpack.c.l.s4 1983009808
        %v6111 = vunpack.c.0.s8 %v6110
        %v6112 = vlaneseq
        %v6113 = vshrl.u32 %v6112, 7
        %v6114 = vsub.s32 %v6111, %v6113
        %v6115 = vrot.slane %v6003, %v6114
        %v6117 = vunpack.c.l.s4 1983009808
        %v6118 = vunpack.c.0.s8 %v6117
        %v6119 = vlaneseq
        %v6120 = vshrl.u32 %v6119, 7
        %v6121 = vsub.s32 %v6118, %v6120
        %v6122 = vrot.slane %v6010, %v6121
        %v6124 = vunpack.c.l.s4 1983009808
        %v6125 = vunpack.c.0.s8 %v6124
        %v6126 = vlaneseq
        %v6127 = vshrl.u32 %v6126, 7
        %v6128 = vsub.s32 %v6125, %v6127
        %v6129 = vrot.slane %v6017, %v6128
        %v6131 = vunpack.c.l.s4 1983009808
        %v6132 = vunpack.c.0.s8 %v6131
        %v6133 = vlaneseq
        %v6134 = vshrl.u32 %v6133, 7
        %v6135 = vsub.s32 %v6132, %v6134
        %v6136 = vrot.slane %v6024, %v6135
        %v6138 = vunpack.c.l.s4 1983009808
        %v6139 = vunpack.c.0.s8 %v6138
        %v6140 = vlaneseq
        %v6141 = vshrl.u32 %v6140, 7
        %v6142 = vsub.s32 %v6139, %v6141
        %v6143 = vrot.slane %v6031, %v6142
        %v6144 = vunpack.c.l.b16 %v6038
        %v6145 = vunpack.c.l.b16 %v6045
        %v6146 = vunpack.c.l.b16 %v6052
        %v6147 = vunpack.c.l.b16 %v6059
        %v6148 = vunpack.c.l.b16 %v6066
        %v6149 = vunpack.c.l.b16 %v6073
        %v6150 = vunpack.c.l.b16 %v6080
        %v6151 = vunpack.c.l.b16 %v6087
        %v6152 = vunpack.c.l.b16 %v6094
        %v6153 = vunpack.c.l.b16 %v6101
        %v6154 = vunpack.c.l.b16 %v6108
        %v6155 = vunpack.c.l.b16 %v6115
        %v6156 = vunpack.c.l.b16 %v6122
        %v6157 = vunpack.c.l.b16 %v6129
        %v6158 = vunpack.c.l.b16 %v6136
        %v6159 = vunpack.c.l.b16 %v6143
        %v6160 = vrot.slane %v6145, 7
        %v6161 = vsel %vm4643, %v6160, %v6144
        %v6162 = vrot.slane %v6146, 6
        %v6163 = vsel %vm4645, %v6162, %v6161
        %v6164 = vrot.slane %v6147, 5
        %v6165 = vsel %vm4647, %v6164, %v6163
        %v6166 = vrot.slane %v6149, 7
        %v6167 = vsel %vm4643, %v6166, %v6148
        %v6168 = vrot.slane %v6150, 6
        %v6169 = vsel %vm4645, %v6168, %v6167
        %v6170 = vrot.slane %v6151, 5
        %v6171 = vsel %vm4647, %v6170, %v6169
        %v6172 = vrot.slane %v6153, 7
        %v6173 = vsel %vm4643, %v6172, %v6152
        %v6174 = vrot.slane %v6154, 6
        %v6175 = vsel %vm4645, %v6174, %v6173
        %v6176 = vrot.slane %v6155, 5
        %v6177 = vsel %vm4647, %v6176, %v6175
        %v6178 = vrot.slane %v6157, 7
        %v6179 = vsel %vm4643, %v6178, %v6156
        %v6180 = vrot.slane %v6158, 6
        %v6181 = vsel %vm4645, %v6180, %v6179
        %v6182 = vrot.slane %v6159, 5
        %v6183 = vsel %vm4647, %v6182, %v6181
        %v6184 = vpack.c.b16 %v6165, %v6165
        %v6185 = vpack.c.b16 %v6171, %v6171
        %v6186 = vpack.c.b16 %v6177, %v6177
        %v6187 = vpack.c.b16 %v6183, %v6183
        %v6189 = vunpack.c.l.s4 1983009808
        %v6190 = vunpack.c.0.s8 %v6189
        %v6191 = vlaneseq
        %v6192 = vshrl.u32 %v6191, 7
        %v6193 = vsub.s32 %v6190, %v6192
        %v6194 = vrot.slane %v6184, %v6193
        %v6196 = vunpack.c.l.s4 1983009808
        %v6197 = vunpack.c.0.s8 %v6196
        %v6198 = vlaneseq
        %v6199 = vshrl.u32 %v6198, 7
        %v6200 = vsub.s32 %v6197, %v6199
        %v6201 = vrot.slane %v6185, %v6200
        %v6203 = vunpack.c.l.s4 1983009808
        %v6204 = vunpack.c.0.s8 %v6203
        %v6205 = vlaneseq
        %v6206 = vshrl.u32 %v6205, 7
        %v6207 = vsub.s32 %v6204, %v6206
        %v6208 = vrot.slane %v6186, %v6207
        %v6210 = vunpack.c.l.s4 1983009808
        %v6211 = vunpack.c.0.s8 %v6210
        %v6212 = vlaneseq
        %v6213 = vshrl.u32 %v6212, 7
        %v6214 = vsub.s32 %v6211, %v6213
        %v6215 = vrot.slane %v6187, %v6214
        %6216 = vrot.lane.b32.xlu0 %v6194, 64
        %v6217 = vpop.permute.xlu0 %6216
        %6218 = vrot.lane.b32.xlu0 %v6201, 64
        %v6219 = vpop.permute.xlu0 %6218
        %6220 = vrot.lane.b32.xlu0 %v6208, 64
        %v6221 = vpop.permute.xlu0 %6220
        %6222 = vrot.lane.b32.xlu0 %v6215, 64
        %v6223 = vpop.permute.xlu0 %6222
        %s6228 = scalar_lea.vmem [#allocation4], 4
        %vm6229 = vcmask 1041920
        %6230 = vst.msk [vmem:[%s6228] sm:$0x3] %vm6229, %v6217
        %6231 = vst.msk [vmem:[%s6228 + $0x4] sm:$0x3] %vm6229, %v6219
        %6232 = vst.msk [vmem:[%s6228 + $0x8] sm:$0x3] %vm6229, %v6221
        %6233 = vst.msk [vmem:[%s6228 + $0xc] sm:$0x3] %vm6229, %v6223
        %v6234 = vrot.slane %v6144, 7
        %v6235 = vrot.slane %v6145, 6
        %v6236 = vsel %vm4645, %v6235, %v6234
        %v6237 = vrot.slane %v6146, 5
        %v6238 = vsel %vm4647, %v6237, %v6236
        %v6239 = vrot.slane %v6148, 7
        %v6240 = vrot.slane %v6149, 6
        %v6241 = vsel %vm4645, %v6240, %v6239
        %v6242 = vrot.slane %v6150, 5
        %v6243 = vsel %vm4647, %v6242, %v6241
        %v6244 = vrot.slane %v6152, 7
        %v6245 = vrot.slane %v6153, 6
        %v6246 = vsel %vm4645, %v6245, %v6244
        %v6247 = vrot.slane %v6154, 5
        %v6248 = vsel %vm4647, %v6247, %v6246
        %v6249 = vrot.slane %v6156, 7
        %v6250 = vrot.slane %v6157, 6
        %v6251 = vsel %vm4645, %v6250, %v6249
        %v6252 = vrot.slane %v6158, 5
        %v6253 = vsel %vm4647, %v6252, %v6251
        %v6254 = vpack.c.b16 %v6238, %v6238
        %v6255 = vpack.c.b16 %v6243, %v6243
        %v6256 = vpack.c.b16 %v6248, %v6248
        %v6257 = vpack.c.b16 %v6253, %v6253
        %v6259 = vunpack.c.l.s4 1983009808
        %v6260 = vunpack.c.0.s8 %v6259
        %v6261 = vlaneseq
        %v6262 = vshrl.u32 %v6261, 7
        %v6263 = vsub.s32 %v6260, %v6262
        %v6264 = vrot.slane %v6254, %v6263
        %v6266 = vunpack.c.l.s4 1983009808
        %v6267 = vunpack.c.0.s8 %v6266
        %v6268 = vlaneseq
        %v6269 = vshrl.u32 %v6268, 7
        %v6270 = vsub.s32 %v6267, %v6269
        %v6271 = vrot.slane %v6255, %v6270
        %v6273 = vunpack.c.l.s4 1983009808
        %v6274 = vunpack.c.0.s8 %v6273
        %v6275 = vlaneseq
        %v6276 = vshrl.u32 %v6275, 7
        %v6277 = vsub.s32 %v6274, %v6276
        %v6278 = vrot.slane %v6256, %v6277
        %v6280 = vunpack.c.l.s4 1983009808
        %v6281 = vunpack.c.0.s8 %v6280
        %v6282 = vlaneseq
        %v6283 = vshrl.u32 %v6282, 7
        %v6284 = vsub.s32 %v6281, %v6283
        %v6285 = vrot.slane %v6257, %v6284
        %vm6290 = vcmask 517120
        %vm6291 = vmand %vm6290, %vm1051
        %v6292 = vld [vmem:[%s6228] sm:$0x3]
        %v6293 = vsel %vm6291, %v6264, %v6292
        %6294 = vst [vmem:[%s6228] sm:$0x3] %v6293
        %v6295 = vld [vmem:[%s6228 + $0x4] sm:$0x3]
        %v6296 = vsel %vm6291, %v6271, %v6295
        %6297 = vst [vmem:[%s6228 + $0x4] sm:$0x3] %v6296
        %v6298 = vld [vmem:[%s6228 + $0x8] sm:$0x3]
        %v6299 = vsel %vm6291, %v6278, %v6298
        %6300 = vst [vmem:[%s6228 + $0x8] sm:$0x3] %v6299
        %v6301 = vld [vmem:[%s6228 + $0xc] sm:$0x3]
        %v6302 = vsel %vm6291, %v6285, %v6301
        %6303 = vst [vmem:[%s6228 + $0xc] sm:$0x3] %v6302
        %v6304 = vrot.slane %v6146, 7
        %v6305 = vsel %vm4643, %v6304, %v6145
        %v6306 = vrot.slane %v6147, 6
        %v6307 = vsel %vm4645, %v6306, %v6305
        %v6308 = vrot.slane %v6150, 7
        %v6309 = vsel %vm4643, %v6308, %v6149
        %v6310 = vrot.slane %v6151, 6
        %v6311 = vsel %vm4645, %v6310, %v6309
        %v6312 = vrot.slane %v6154, 7
        %v6313 = vsel %vm4643, %v6312, %v6153
        %v6314 = vrot.slane %v6155, 6
        %v6315 = vsel %vm4645, %v6314, %v6313
        %v6316 = vrot.slane %v6158, 7
        %v6317 = vsel %vm4643, %v6316, %v6157
        %v6318 = vrot.slane %v6159, 6
        %v6319 = vsel %vm4645, %v6318, %v6317
        %v6320 = vpack.c.b16 %v6307, %v6307
        %v6321 = vpack.c.b16 %v6311, %v6311
        %v6322 = vpack.c.b16 %v6315, %v6315
        %v6323 = vpack.c.b16 %v6319, %v6319
        %v6325 = vunpack.c.l.s4 1983009808
        %v6326 = vunpack.c.0.s8 %v6325
        %v6327 = vlaneseq
        %v6328 = vshrl.u32 %v6327, 7
        %v6329 = vsub.s32 %v6326, %v6328
        %v6330 = vrot.slane %v6320, %v6329
        %v6332 = vunpack.c.l.s4 1983009808
        %v6333 = vunpack.c.0.s8 %v6332
        %v6334 = vlaneseq
        %v6335 = vshrl.u32 %v6334, 7
        %v6336 = vsub.s32 %v6333, %v6335
        %v6337 = vrot.slane %v6321, %v6336
        %v6339 = vunpack.c.l.s4 1983009808
        %v6340 = vunpack.c.0.s8 %v6339
        %v6341 = vlaneseq
        %v6342 = vshrl.u32 %v6341, 7
        %v6343 = vsub.s32 %v6340, %v6342
        %v6344 = vrot.slane %v6322, %v6343
        %v6346 = vunpack.c.l.s4 1983009808
        %v6347 = vunpack.c.0.s8 %v6346
        %v6348 = vlaneseq
        %v6349 = vshrl.u32 %v6348, 7
        %v6350 = vsub.s32 %v6347, %v6349
        %v6351 = vrot.slane %v6323, %v6350
        %vm6356 = vsmask.f32 1280
        %vm6357 = vmand %vm6290, %vm6356
        %v6358 = vld [vmem:[%s6228 + $0x2] sm:$0x3]
        %v6359 = vsel %vm6357, %v6330, %v6358
        %6360 = vst [vmem:[%s6228 + $0x2] sm:$0x3] %v6359
        %v6361 = vld [vmem:[%s6228 + $0x6] sm:$0x3]
        %v6362 = vsel %vm6357, %v6337, %v6361
        %6363 = vst [vmem:[%s6228 + $0x6] sm:$0x3] %v6362
        %v6364 = vld [vmem:[%s6228 + $0xa] sm:$0x3]
        %v6365 = vsel %vm6357, %v6344, %v6364
        %6366 = vst [vmem:[%s6228 + $0xa] sm:$0x3] %v6365
        %v6367 = vld [vmem:[%s6228 + $0xe] sm:$0x3]
        %v6368 = vsel %vm6357, %v6351, %v6367
        %6369 = vst [vmem:[%s6228 + $0xe] sm:$0x3] %v6368
        %v6370 = vld [vmem:[#allocation4] sm:$0xf]
        %v6371 = vld [vmem:[#allocation4 + $0x4] sm:$0xf]
        %v6372 = vld [vmem:[#allocation4 + $0x8] sm:$0xf]
        %v6373 = vld [vmem:[#allocation4 + $0xc] sm:$0xf]
        %v6374 = vld [vmem:[%s5] sm:$0xf]
        %v6375 = vld [vmem:[%s5 + $0x4] sm:$0xf]
        %v6376 = vld [vmem:[%s5 + $0x8] sm:$0xf]
        %v6377 = vld [vmem:[%s5 + $0xc] sm:$0xf]
        %v6378 = vld [vmem:[%s5 + $0x10] sm:$0xf]
        %v6379 = vld [vmem:[%s5 + $0x14] sm:$0xf]
        %v6380 = vld [vmem:[%s5 + $0x18] sm:$0xf]
        %v6381 = vld [vmem:[%s5 + $0x1c] sm:$0xf]
        %v6382 = vld [vmem:[%s5 + $0x20] sm:$0xf]
        %v6383 = vld [vmem:[%s5 + $0x24] sm:$0xf]
        %v6384 = vld [vmem:[%s5 + $0x28] sm:$0xf]
        %v6385 = vld [vmem:[%s5 + $0x2c] sm:$0xf]
        %v6386 = vld [vmem:[%s5 + $0x30] sm:$0xf]
        %v6387 = vld [vmem:[%s5 + $0x34] sm:$0xf]
        %v6388 = vld [vmem:[%s5 + $0x38] sm:$0xf]
        %v6389 = vld [vmem:[%s5 + $0x3c] sm:$0xf]
        %v6390 = vld [vmem:[%s5 + $0x40] sm:$0xf]
        %v6391 = vld [vmem:[%s5 + $0x44] sm:$0xf]
        %v6392 = vld [vmem:[%s5 + $0x48] sm:$0xf]
        %v6393 = vld [vmem:[%s5 + $0x4c] sm:$0xf]
        %v6394 = vld [vmem:[%s5 + $0x50] sm:$0xf]
        %v6395 = vld [vmem:[%s5 + $0x54] sm:$0xf]
        %v6396 = vld [vmem:[%s5 + $0x58] sm:$0xf]
        %v6397 = vld [vmem:[%s5 + $0x5c] sm:$0xf]
        %v6398 = vld [vmem:[%s6228] sm:$0xf]
        %v6399 = vld [vmem:[%s6228 + $0x4] sm:$0xf]
        %v6400 = vld [vmem:[%s6228 + $0x8] sm:$0xf]
        %v6401 = vld [vmem:[%s6228 + $0xc] sm:$0xf]
        %s6402 = scalar_lea.vmem %s5, 96
        %v6403 = vld [vmem:[%s6402] sm:$0xf]
        %v6404 = vld [vmem:[%s6402 + $0x4] sm:$0xf]
        %v6405 = vld [vmem:[%s6402 + $0x8] sm:$0xf]
        %v6406 = vld [vmem:[%s6402 + $0xc] sm:$0xf]
        %v6407 = vld [vmem:[%s6402 + $0x10] sm:$0xf]
        %v6408 = vld [vmem:[%s6402 + $0x14] sm:$0xf]
        %v6409 = vld [vmem:[%s6402 + $0x18] sm:$0xf]
        %v6410 = vld [vmem:[%s6402 + $0x1c] sm:$0xf]
        %v6411 = vld [vmem:[%s6402 + $0x20] sm:$0xf]
        %v6412 = vld [vmem:[%s6402 + $0x24] sm:$0xf]
        %v6413 = vld [vmem:[%s6402 + $0x28] sm:$0xf]
        %v6414 = vld [vmem:[%s6402 + $0x2c] sm:$0xf]
        %v6415 = vld [vmem:[%s6402 + $0x30] sm:$0xf]
        %v6416 = vld [vmem:[%s6402 + $0x34] sm:$0xf]
        %v6417 = vld [vmem:[%s6402 + $0x38] sm:$0xf]
        %v6418 = vld [vmem:[%s6402 + $0x3c] sm:$0xf]
        %v6419 = vld [vmem:[%s6402 + $0x40] sm:$0xf]
        %v6420 = vld [vmem:[%s6402 + $0x44] sm:$0xf]
        %v6421 = vld [vmem:[%s6402 + $0x48] sm:$0xf]
        %v6422 = vld [vmem:[%s6402 + $0x4c] sm:$0xf]
        %v6423 = vld [vmem:[%s6402 + $0x50] sm:$0xf]
        %v6424 = vld [vmem:[%s6402 + $0x54] sm:$0xf]
        %v6425 = vld [vmem:[%s6402 + $0x58] sm:$0xf]
        %v6426 = vld [vmem:[%s6402 + $0x5c] sm:$0xf]
        %v6431 = vcombine.low %v6398, %v6399
        %v6432 = vcombine.low %v6400, %v6401
        %v6434 = vunpack.c.l.s4 1983009808
        %v6435 = vunpack.c.0.s8 %v6434
        %v6436 = vlaneseq
        %v6437 = vshrl.u32 %v6436, 7
        %v6438 = vsub.s32 %v6435, %v6437
        %v6439 = vrot.slane %v6431, %v6438
        %v6441 = vunpack.c.l.s4 1983009808
        %v6442 = vunpack.c.0.s8 %v6441
        %v6443 = vlaneseq
        %v6444 = vshrl.u32 %v6443, 7
        %v6445 = vsub.s32 %v6442, %v6444
        %v6446 = vrot.slane %v6432, %v6445
        %v6447 = vcombine.low %v6439, %v6446
        %v6448 = vcombine.high %v6439, %v6446
        %v6474 = vunpack.c.l.b16 %v6403
        %v6475 = vunpack.c.l.b16 %v6404
        %v6476 = vunpack.c.l.b16 %v6405
        %v6477 = vunpack.c.l.b16 %v6406
        %v6478 = vunpack.c.l.b16 %v6407
        %v6479 = vunpack.c.l.b16 %v6408
        %v6480 = vunpack.c.l.b16 %v6409
        %v6481 = vunpack.c.l.b16 %v6410
        %v6482 = vunpack.c.l.b16 %v6411
        %v6483 = vunpack.c.l.b16 %v6412
        %v6484 = vunpack.c.l.b16 %v6413
        %v6485 = vunpack.c.l.b16 %v6414
        %v6486 = vunpack.c.l.b16 %v6415
        %v6487 = vunpack.c.l.b16 %v6416
        %v6488 = vunpack.c.l.b16 %v6417
        %v6489 = vunpack.c.l.b16 %v6418
        %v6490 = vunpack.c.l.b16 %v6419
        %v6491 = vunpack.c.l.b16 %v6420
        %v6492 = vunpack.c.l.b16 %v6421
        %v6493 = vunpack.c.l.b16 %v6422
        %v6494 = vunpack.c.l.b16 %v6423
        %v6495 = vunpack.c.l.b16 %v6424
        %v6496 = vunpack.c.l.b16 %v6425
        %v6497 = vunpack.c.l.b16 %v6426
        %v6498 = vpack.c.b16 %v6475, %v6474
        %v6499 = vpack.c.b16 %v6477, %v6476
        %v6500 = vpack.c.b16 %v6479, %v6478
        %v6501 = vpack.c.b16 %v6481, %v6480
        %v6502 = vpack.c.b16 %v6483, %v6482
        %v6503 = vpack.c.b16 %v6485, %v6484
        %v6504 = vpack.c.b16 %v6487, %v6486
        %v6505 = vpack.c.b16 %v6489, %v6488
        %v6506 = vpack.c.b16 %v6491, %v6490
        %v6507 = vpack.c.b16 %v6493, %v6492
        %v6508 = vpack.c.b16 %v6495, %v6494
        %v6509 = vpack.c.b16 %v6497, %v6496
        %v6523 = vsel %vm5839, %v6448, 0
        %6525 = vmatprep.subr.bf16.mxu0 0
        %6526 = vmatpush1.bf16.msra.mxu0 %v6505
        %6527 = vmatprep.subr.bf16.mxu0 0
        %6528 = vmatpush1.bf16.msra.mxu0 %v6504
        %6529 = vmatprep.subr.bf16.mxu0 0
        %6530 = vmatpush1.bf16.msra.mxu0 %v6503
        %6531 = vmatprep.subr.bf16.mxu0 0
        %6532 = vmatpush1.bf16.msra.mxu0 %v6502
        %6533 = vmatprep.subr.bf16.mxu0 0
        %6534 = vmatpush1.bf16.msra.mxu0 %v6501
        %6535 = vmatprep.subr.bf16.mxu0 0
        %6536 = vmatpush1.bf16.msra.mxu0 %v6500
        %6537 = vmatprep.subr.bf16.mxu0 0
        %6538 = vmatpush1.bf16.msra.mxu0 %v6499
        %6539 = vmatprep.subr.bf16.mxu0 0
        %6540 = vmatpush1.bf16.msra.mxu0 %v6498
        %6541 = vmatprep.subr.bf16.mxu0 0
        %6542 = vmatpush2.bf16.msra.mxu0 0
        %6543 = vmatprep.subr.bf16.mxu0 0
        %6544 = vmatpush2.bf16.msra.mxu0 0
        %6545 = vmatprep.subr.bf16.mxu0 0
        %6546 = vmatpush2.bf16.msra.mxu0 0
        %6547 = vmatprep.subr.bf16.mxu0 0
        %6548 = vmatpush2.bf16.msra.mxu0 0
        %6549 = vmatprep.subr.bf16.mxu0 0
        %6550 = vmatpush2.bf16.msra.mxu0 %v6509
        %6551 = vmatprep.subr.bf16.mxu0 0
        %6552 = vmatpush2.bf16.msra.mxu0 %v6508
        %6553 = vmatprep.subr.bf16.mxu0 0
        %6554 = vmatpush2.bf16.msra.mxu0 %v6507
        %6555 = vmatprep.subr.bf16.mxu0 0
        %6556 = vmatpush2.bf16.msra.mxu0 %v6506
        %6557 = vmatprep.mubr.bf16.mxu0 %v6523
        %6558 = vmatmul.mubr.bf16.gmra.mxu0 %v6447
        %v6559 = vpop.f32.mrf.mxu0
        %v6560 = vadd.f32 0.0, %v6559
        %v6561 = vpop.f32.mrf.mxu0
        %v6562 = vpop.f32.mrf.mxu0
        %v6563 = vadd.f32 0.0, %v6562
        %v6564 = vpop.f32.mrf.mxu0
        %6565 = vdwg.mxu0
        %v6570 = vcombine.low %v6370, %v6371
        %v6571 = vcombine.low %v6372, %v6373
        %v6573 = vunpack.c.l.s4 1983009808
        %v6574 = vunpack.c.0.s8 %v6573
        %v6575 = vlaneseq
        %v6576 = vshrl.u32 %v6575, 7
        %v6577 = vsub.s32 %v6574, %v6576
        %v6578 = vrot.slane %v6570, %v6577
        %v6580 = vunpack.c.l.s4 1983009808
        %v6581 = vunpack.c.0.s8 %v6580
        %v6582 = vlaneseq
        %v6583 = vshrl.u32 %v6582, 7
        %v6584 = vsub.s32 %v6581, %v6583
        %v6585 = vrot.slane %v6571, %v6584
        %v6586 = vcombine.low %v6578, %v6585
        %v6587 = vcombine.high %v6578, %v6585
        %v6613 = vunpack.c.l.b16 %v6374
        %v6614 = vunpack.c.l.b16 %v6375
        %v6615 = vunpack.c.l.b16 %v6376
        %v6616 = vunpack.c.l.b16 %v6377
        %v6617 = vunpack.c.l.b16 %v6378
        %v6618 = vunpack.c.l.b16 %v6379
        %v6619 = vunpack.c.l.b16 %v6380
        %v6620 = vunpack.c.l.b16 %v6381
        %v6621 = vunpack.c.l.b16 %v6382
        %v6622 = vunpack.c.l.b16 %v6383
        %v6623 = vunpack.c.l.b16 %v6384
        %v6624 = vunpack.c.l.b16 %v6385
        %v6625 = vunpack.c.l.b16 %v6386
        %v6626 = vunpack.c.l.b16 %v6387
        %v6627 = vunpack.c.l.b16 %v6388
        %v6628 = vunpack.c.l.b16 %v6389
        %v6629 = vunpack.c.l.b16 %v6390
        %v6630 = vunpack.c.l.b16 %v6391
        %v6631 = vunpack.c.l.b16 %v6392
        %v6632 = vunpack.c.l.b16 %v6393
        %v6633 = vunpack.c.l.b16 %v6394
        %v6634 = vunpack.c.l.b16 %v6395
        %v6635 = vunpack.c.l.b16 %v6396
        %v6636 = vunpack.c.l.b16 %v6397
        %v6637 = vpack.c.b16 %v6614, %v6613
        %v6638 = vpack.c.b16 %v6616, %v6615
        %v6639 = vpack.c.b16 %v6618, %v6617
        %v6640 = vpack.c.b16 %v6620, %v6619
        %v6641 = vpack.c.b16 %v6622, %v6621
        %v6642 = vpack.c.b16 %v6624, %v6623
        %v6643 = vpack.c.b16 %v6626, %v6625
        %v6644 = vpack.c.b16 %v6628, %v6627
        %v6645 = vpack.c.b16 %v6630, %v6629
        %v6646 = vpack.c.b16 %v6632, %v6631
        %v6647 = vpack.c.b16 %v6634, %v6633
        %v6648 = vpack.c.b16 %v6636, %v6635
        %v6662 = vsel %vm5839, %v6587, 0
        %6664 = vmatprep.subr.bf16.mxu0 0
        %6665 = vmatpush1.bf16.msra.mxu0 %v6644
        %6666 = vmatprep.subr.bf16.mxu0 0
        %6667 = vmatpush1.bf16.msra.mxu0 %v6643
        %6668 = vmatprep.subr.bf16.mxu0 0
        %6669 = vmatpush1.bf16.msra.mxu0 %v6642
        %6670 = vmatprep.subr.bf16.mxu0 0
        %6671 = vmatpush1.bf16.msra.mxu0 %v6641
        %6672 = vmatprep.subr.bf16.mxu0 0
        %6673 = vmatpush1.bf16.msra.mxu0 %v6640
        %6674 = vmatprep.subr.bf16.mxu0 0
        %6675 = vmatpush1.bf16.msra.mxu0 %v6639
        %6676 = vmatprep.subr.bf16.mxu0 0
        %6677 = vmatpush1.bf16.msra.mxu0 %v6638
        %6678 = vmatprep.subr.bf16.mxu0 0
        %6679 = vmatpush1.bf16.msra.mxu0 %v6637
        %6680 = vmatprep.subr.bf16.mxu0 0
        %6681 = vmatpush2.bf16.msra.mxu0 0
        %6682 = vmatprep.subr.bf16.mxu0 0
        %6683 = vmatpush2.bf16.msra.mxu0 0
        %6684 = vmatprep.subr.bf16.mxu0 0
        %6685 = vmatpush2.bf16.msra.mxu0 0
        %6686 = vmatprep.subr.bf16.mxu0 0
        %6687 = vmatpush2.bf16.msra.mxu0 0
        %6688 = vmatprep.subr.bf16.mxu0 0
        %6689 = vmatpush2.bf16.msra.mxu0 %v6648
        %6690 = vmatprep.subr.bf16.mxu0 0
        %6691 = vmatpush2.bf16.msra.mxu0 %v6647
        %6692 = vmatprep.subr.bf16.mxu0 0
        %6693 = vmatpush2.bf16.msra.mxu0 %v6646
        %6694 = vmatprep.subr.bf16.mxu0 0
        %6695 = vmatpush2.bf16.msra.mxu0 %v6645
        %6696 = vmatprep.mubr.bf16.mxu0 %v6662
        %6697 = vmatmul.mubr.bf16.gmra.mxu0 %v6586
        %v6698 = vpop.f32.mrf.mxu0
        %v6699 = vadd.f32 %v6560, %v6698
        %v6700 = vpop.f32.mrf.mxu0
        %v6701 = vpop.f32.mrf.mxu0
        %v6702 = vadd.f32 %v6563, %v6701
        %v6703 = vpop.f32.mrf.mxu0
        %6704 = vdwg.mxu0
        %s6705 = scalar_lea.vmem [#allocation4], 8
        %v6706 = vld [vmem:[%s6705] sm:$0xf]
        %v6707 = vld [vmem:[%s6705 + $0x4] sm:$0xf]
        %v6708 = vld [vmem:[%s6705 + $0x8] sm:$0xf]
        %v6709 = vld [vmem:[%s6705 + $0xc] sm:$0xf]
        %s6710 = scalar_lea.vmem %s5, 192
        %v6711 = vld [vmem:[%s6710] sm:$0xf]
        %v6712 = vld [vmem:[%s6710 + $0x4] sm:$0xf]
        %v6713 = vld [vmem:[%s6710 + $0x8] sm:$0xf]
        %v6714 = vld [vmem:[%s6710 + $0xc] sm:$0xf]
        %v6715 = vld [vmem:[%s6710 + $0x10] sm:$0xf]
        %v6716 = vld [vmem:[%s6710 + $0x14] sm:$0xf]
        %v6717 = vld [vmem:[%s6710 + $0x18] sm:$0xf]
        %v6718 = vld [vmem:[%s6710 + $0x1c] sm:$0xf]
        %v6719 = vld [vmem:[%s6710 + $0x20] sm:$0xf]
        %v6720 = vld [vmem:[%s6710 + $0x24] sm:$0xf]
        %v6721 = vld [vmem:[%s6710 + $0x28] sm:$0xf]
        %v6722 = vld [vmem:[%s6710 + $0x2c] sm:$0xf]
        %v6723 = vld [vmem:[%s6710 + $0x30] sm:$0xf]
        %v6724 = vld [vmem:[%s6710 + $0x34] sm:$0xf]
        %v6725 = vld [vmem:[%s6710 + $0x38] sm:$0xf]
        %v6726 = vld [vmem:[%s6710 + $0x3c] sm:$0xf]
        %v6727 = vld [vmem:[%s6710 + $0x40] sm:$0xf]
        %v6728 = vld [vmem:[%s6710 + $0x44] sm:$0xf]
        %v6729 = vld [vmem:[%s6710 + $0x48] sm:$0xf]
        %v6730 = vld [vmem:[%s6710 + $0x4c] sm:$0xf]
        %v6731 = vld [vmem:[%s6710 + $0x50] sm:$0xf]
        %v6732 = vld [vmem:[%s6710 + $0x54] sm:$0xf]
        %v6733 = vld [vmem:[%s6710 + $0x58] sm:$0xf]
        %v6734 = vld [vmem:[%s6710 + $0x5c] sm:$0xf]
        %v6739 = vcombine.low %v6706, %v6707
        %v6740 = vcombine.low %v6708, %v6709
        %v6742 = vunpack.c.l.s4 1983009808
        %v6743 = vunpack.c.0.s8 %v6742
        %v6744 = vlaneseq
        %v6745 = vshrl.u32 %v6744, 7
        %v6746 = vsub.s32 %v6743, %v6745
        %v6747 = vrot.slane %v6739, %v6746
        %v6749 = vunpack.c.l.s4 1983009808
        %v6750 = vunpack.c.0.s8 %v6749
        %v6751 = vlaneseq
        %v6752 = vshrl.u32 %v6751, 7
        %v6753 = vsub.s32 %v6750, %v6752
        %v6754 = vrot.slane %v6740, %v6753
        %v6755 = vcombine.low %v6747, %v6754
        %v6756 = vcombine.high %v6747, %v6754
        %v6782 = vunpack.c.l.b16 %v6711
        %v6783 = vunpack.c.l.b16 %v6712
        %v6784 = vunpack.c.l.b16 %v6713
        %v6785 = vunpack.c.l.b16 %v6714
        %v6786 = vunpack.c.l.b16 %v6715
        %v6787 = vunpack.c.l.b16 %v6716
        %v6788 = vunpack.c.l.b16 %v6717
        %v6789 = vunpack.c.l.b16 %v6718
        %v6790 = vunpack.c.l.b16 %v6719
        %v6791 = vunpack.c.l.b16 %v6720
        %v6792 = vunpack.c.l.b16 %v6721
        %v6793 = vunpack.c.l.b16 %v6722
        %v6794 = vunpack.c.l.b16 %v6723
        %v6795 = vunpack.c.l.b16 %v6724
        %v6796 = vunpack.c.l.b16 %v6725
        %v6797 = vunpack.c.l.b16 %v6726
        %v6798 = vunpack.c.l.b16 %v6727
        %v6799 = vunpack.c.l.b16 %v6728
        %v6800 = vunpack.c.l.b16 %v6729
        %v6801 = vunpack.c.l.b16 %v6730
        %v6802 = vunpack.c.l.b16 %v6731
        %v6803 = vunpack.c.l.b16 %v6732
        %v6804 = vunpack.c.l.b16 %v6733
        %v6805 = vunpack.c.l.b16 %v6734
        %v6806 = vpack.c.b16 %v6783, %v6782
        %v6807 = vpack.c.b16 %v6785, %v6784
        %v6808 = vpack.c.b16 %v6787, %v6786
        %v6809 = vpack.c.b16 %v6789, %v6788
        %v6810 = vpack.c.b16 %v6791, %v6790
        %v6811 = vpack.c.b16 %v6793, %v6792
        %v6812 = vpack.c.b16 %v6795, %v6794
        %v6813 = vpack.c.b16 %v6797, %v6796
        %v6814 = vpack.c.b16 %v6799, %v6798
        %v6815 = vpack.c.b16 %v6801, %v6800
        %v6816 = vpack.c.b16 %v6803, %v6802
        %v6817 = vpack.c.b16 %v6805, %v6804
        %v6831 = vsel %vm5839, %v6756, 0
        %6833 = vmatprep.subr.bf16.mxu0 0
        %6834 = vmatpush1.bf16.msra.mxu0 %v6813
        %6835 = vmatprep.subr.bf16.mxu0 0
        %6836 = vmatpush1.bf16.msra.mxu0 %v6812
        %6837 = vmatprep.subr.bf16.mxu0 0
        %6838 = vmatpush1.bf16.msra.mxu0 %v6811
        %6839 = vmatprep.subr.bf16.mxu0 0
        %6840 = vmatpush1.bf16.msra.mxu0 %v6810
        %6841 = vmatprep.subr.bf16.mxu0 0
        %6842 = vmatpush1.bf16.msra.mxu0 %v6809
        %6843 = vmatprep.subr.bf16.mxu0 0
        %6844 = vmatpush1.bf16.msra.mxu0 %v6808
        %6845 = vmatprep.subr.bf16.mxu0 0
        %6846 = vmatpush1.bf16.msra.mxu0 %v6807
        %6847 = vmatprep.subr.bf16.mxu0 0
        %6848 = vmatpush1.bf16.msra.mxu0 %v6806
        %6849 = vmatprep.subr.bf16.mxu0 0
        %6850 = vmatpush2.bf16.msra.mxu0 0
        %6851 = vmatprep.subr.bf16.mxu0 0
        %6852 = vmatpush2.bf16.msra.mxu0 0
        %6853 = vmatprep.subr.bf16.mxu0 0
        %6854 = vmatpush2.bf16.msra.mxu0 0
        %6855 = vmatprep.subr.bf16.mxu0 0
        %6856 = vmatpush2.bf16.msra.mxu0 0
        %6857 = vmatprep.subr.bf16.mxu0 0
        %6858 = vmatpush2.bf16.msra.mxu0 %v6817
        %6859 = vmatprep.subr.bf16.mxu0 0
        %6860 = vmatpush2.bf16.msra.mxu0 %v6816
        %6861 = vmatprep.subr.bf16.mxu0 0
        %6862 = vmatpush2.bf16.msra.mxu0 %v6815
        %6863 = vmatprep.subr.bf16.mxu0 0
        %6864 = vmatpush2.bf16.msra.mxu0 %v6814
        %6865 = vmatprep.mubr.bf16.mxu0 %v6831
        %6866 = vmatmul.mubr.bf16.gmra.mxu0 %v6755
        %v6867 = vpop.f32.mrf.mxu0
        %v6868 = vadd.f32 0.0, %v6867
        %v6869 = vpop.f32.mrf.mxu0
        %v6870 = vpop.f32.mrf.mxu0
        %v6871 = vadd.f32 0.0, %v6870
        %v6872 = vpop.f32.mrf.mxu0
        %6873 = vdwg.mxu0
        %v6874 = vadd.f32 %v6699, %v6868
        %v6875 = vadd.f32 %v6702, %v6871
        %v6876 = vld [vmem:[%s6] sm:$0x1]
        %v6878 = vlaneseq
        %v6879 = vshrl.u32 %v6878, 7
        %v6880 = vsub.s32 0, %v6879
        %v6881 = vrot.slane %v6876, %v6880
        %v6883 = vadd.f32 %v6874, %v6881
        %v6884 = vadd.f32 %v6875, %v6881
        %v6885 = vmax.f32 %v6883, 0.0
        %v6886 = vmax.f32 %v6884, 0.0
        %v6889 = vcombine.high %v6885, %v6885
        %v6891 = vunpack.c.l.s4 1983009808
        %v6892 = vunpack.c.0.s8 %v6891
        %v6893 = vlaneseq
        %v6894 = vshrl.u32 %v6893, 7
        %v6895 = vsub.s32 %v6892, %v6894
        %v6896 = vrot.slane %v6885, %v6895
        %v6898 = vunpack.c.l.s4 1983009808
        %v6899 = vunpack.c.0.s8 %v6898
        %v6900 = vlaneseq
        %v6901 = vshrl.u32 %v6900, 7
        %v6902 = vsub.s32 %v6899, %v6901
        %v6903 = vrot.slane %v6889, %v6902
        %v6904 = vcombine.high %v6896, %v6896
        %v6905 = vcombine.high %v6903, %v6903
        %v6906 = vcombine.high %v6886, %v6886
        %v6908 = vunpack.c.l.s4 1983009808
        %v6909 = vunpack.c.0.s8 %v6908
        %v6910 = vlaneseq
        %v6911 = vshrl.u32 %v6910, 7
        %v6912 = vsub.s32 %v6909, %v6911
        %v6913 = vrot.slane %v6886, %v6912
        %v6915 = vunpack.c.l.s4 1983009808
        %v6916 = vunpack.c.0.s8 %v6915
        %v6917 = vlaneseq
        %v6918 = vshrl.u32 %v6917, 7
        %v6919 = vsub.s32 %v6916, %v6918
        %v6920 = vrot.slane %v6906, %v6919
        %v6921 = vcombine.high %v6913, %v6913
        %v6922 = vcombine.high %v6920, %v6920
        %v6931 = vsel %vm519, %v6896, -inf
        %v6932 = vrot.slane %v6931, 4
        %v6933 = vmax.f32 %v6931, %v6932
        %v6934 = vrot.slane %v6933, 2
        %v6935 = vmax.f32 %v6933, %v6934
        %v6936 = vrot.slane %v6935, 1
        %v6937 = vmax.f32 %v6935, %v6936
        %v6938 = vsel %vm519, %v6904, -inf
        %v6939 = vrot.slane %v6938, 4
        %v6940 = vmax.f32 %v6938, %v6939
        %v6941 = vrot.slane %v6940, 2
        %v6942 = vmax.f32 %v6940, %v6941
        %v6943 = vrot.slane %v6942, 1
        %v6944 = vmax.f32 %v6942, %v6943
        %v6945 = vsel %vm519, %v6903, -inf
        %v6946 = vrot.slane %v6945, 4
        %v6947 = vmax.f32 %v6945, %v6946
        %v6948 = vrot.slane %v6947, 2
        %v6949 = vmax.f32 %v6947, %v6948
        %v6950 = vrot.slane %v6949, 1
        %v6951 = vmax.f32 %v6949, %v6950
        %v6952 = vsel %vm519, %v6905, -inf
        %v6953 = vrot.slane %v6952, 4
        %v6954 = vmax.f32 %v6952, %v6953
        %v6955 = vrot.slane %v6954, 2
        %v6956 = vmax.f32 %v6954, %v6955
        %v6957 = vrot.slane %v6956, 1
        %v6958 = vmax.f32 %v6956, %v6957
        %v6959 = vsel %vm519, %v6913, -inf
        %v6960 = vrot.slane %v6959, 4
        %v6961 = vmax.f32 %v6959, %v6960
        %v6962 = vrot.slane %v6961, 2
        %v6963 = vmax.f32 %v6961, %v6962
        %v6964 = vrot.slane %v6963, 1
        %v6965 = vmax.f32 %v6963, %v6964
        %v6966 = vsel %vm519, %v6921, -inf
        %v6967 = vrot.slane %v6966, 4
        %v6968 = vmax.f32 %v6966, %v6967
        %v6969 = vrot.slane %v6968, 2
        %v6970 = vmax.f32 %v6968, %v6969
        %v6971 = vrot.slane %v6970, 1
        %v6972 = vmax.f32 %v6970, %v6971
        %v6973 = vsel %vm519, %v6920, -inf
        %v6974 = vrot.slane %v6973, 4
        %v6975 = vmax.f32 %v6973, %v6974
        %v6976 = vrot.slane %v6975, 2
        %v6977 = vmax.f32 %v6975, %v6976
        %v6978 = vrot.slane %v6977, 1
        %v6979 = vmax.f32 %v6977, %v6978
        %v6980 = vsel %vm519, %v6922, -inf
        %v6981 = vrot.slane %v6980, 4
        %v6982 = vmax.f32 %v6980, %v6981
        %v6983 = vrot.slane %v6982, 2
        %v6984 = vmax.f32 %v6982, %v6983
        %v6985 = vrot.slane %v6984, 1
        %v6986 = vmax.f32 %v6984, %v6985
        %v6987 = vmax.f32 %v6937, %v6951
        %v6988 = vmax.f32 %v6944, %v6958
        %v6989 = vmax.f32 %v6965, %v6979
        %v6990 = vmax.f32 %v6972, %v6986
        %v6991 = vpack.c.bf16 %v6987, %v6987
        %v6992 = vpack.c.bf16 %v6988, %v6988
        %v6993 = vpack.c.bf16 %v6989, %v6989
        %v6994 = vpack.c.bf16 %v6990, %v6990
        %v6995 = vld [vmem:[%s7] sm:$0xf]
        %v6996 = vld [vmem:[%s7 + $0x4] sm:$0xf]
        %v6997 = vld [vmem:[%s7 + $0x8] sm:$0xf]
        %v6998 = vld [vmem:[%s7 + $0xc] sm:$0xf]
        %v6999 = vld [vmem:[%s7 + $0x10] sm:$0xf]
        %v7000 = vld [vmem:[%s7 + $0x14] sm:$0xf]
        %v7001 = vld [vmem:[%s7 + $0x18] sm:$0xf]
        %v7002 = vld [vmem:[%s7 + $0x1c] sm:$0xf]
        %v7003 = vld [vmem:[%s7 + $0x20] sm:$0xf]
        %v7004 = vld [vmem:[%s7 + $0x24] sm:$0xf]
        %v7005 = vld [vmem:[%s7 + $0x28] sm:$0xf]
        %v7006 = vld [vmem:[%s7 + $0x2c] sm:$0xf]
        %v7007 = vld [vmem:[%s7 + $0x30] sm:$0xf]
        %v7008 = vld [vmem:[%s7 + $0x34] sm:$0xf]
        %v7009 = vld [vmem:[%s7 + $0x38] sm:$0xf]
        %v7010 = vld [vmem:[%s7 + $0x3c] sm:$0xf]
        %s7011 = scalar_lea.vmem %s7, 64
        %v7012 = vld [vmem:[%s7011] sm:$0xf]
        %v7013 = vld [vmem:[%s7011 + $0x4] sm:$0xf]
        %v7014 = vld [vmem:[%s7011 + $0x8] sm:$0xf]
        %v7015 = vld [vmem:[%s7011 + $0xc] sm:$0xf]
        %v7016 = vld [vmem:[%s7011 + $0x10] sm:$0xf]
        %v7017 = vld [vmem:[%s7011 + $0x14] sm:$0xf]
        %v7018 = vld [vmem:[%s7011 + $0x18] sm:$0xf]
        %v7019 = vld [vmem:[%s7011 + $0x1c] sm:$0xf]
        %v7020 = vld [vmem:[%s7011 + $0x20] sm:$0xf]
        %v7021 = vld [vmem:[%s7011 + $0x24] sm:$0xf]
        %v7022 = vld [vmem:[%s7011 + $0x28] sm:$0xf]
        %v7023 = vld [vmem:[%s7011 + $0x2c] sm:$0xf]
        %v7024 = vld [vmem:[%s7011 + $0x30] sm:$0xf]
        %v7025 = vld [vmem:[%s7011 + $0x34] sm:$0xf]
        %v7026 = vld [vmem:[%s7011 + $0x38] sm:$0xf]
        %v7027 = vld [vmem:[%s7011 + $0x3c] sm:$0xf]
        %v7044 = vunpack.c.l.b16 %v7012
        %v7045 = vunpack.c.l.b16 %v7013
        %v7046 = vunpack.c.l.b16 %v7014
        %v7047 = vunpack.c.l.b16 %v7015
        %v7048 = vunpack.c.l.b16 %v7016
        %v7049 = vunpack.c.l.b16 %v7017
        %v7050 = vunpack.c.l.b16 %v7018
        %v7051 = vunpack.c.l.b16 %v7019
        %v7052 = vunpack.c.l.b16 %v7020
        %v7053 = vunpack.c.l.b16 %v7021
        %v7054 = vunpack.c.l.b16 %v7022
        %v7055 = vunpack.c.l.b16 %v7023
        %v7056 = vunpack.c.l.b16 %v7024
        %v7057 = vunpack.c.l.b16 %v7025
        %v7058 = vunpack.c.l.b16 %v7026
        %v7059 = vunpack.c.l.b16 %v7027
        %v7060 = vpack.c.b16 %v7045, %v7044
        %v7061 = vpack.c.b16 %v7047, %v7046
        %v7062 = vpack.c.b16 %v7049, %v7048
        %v7063 = vpack.c.b16 %v7051, %v7050
        %v7064 = vpack.c.b16 %v7053, %v7052
        %v7065 = vpack.c.b16 %v7055, %v7054
        %v7066 = vpack.c.b16 %v7057, %v7056
        %v7067 = vpack.c.b16 %v7059, %v7058
        %7076 = vmatprep.subr.bf16.mxu0 0
        %7077 = vmatpush1.bf16.msra.mxu0 %v7067
        %7078 = vmatprep.subr.bf16.mxu0 0
        %7079 = vmatpush1.bf16.msra.mxu0 %v7066
        %7080 = vmatprep.subr.bf16.mxu0 0
        %7081 = vmatpush1.bf16.msra.mxu0 %v7065
        %7082 = vmatprep.subr.bf16.mxu0 0
        %7083 = vmatpush1.bf16.msra.mxu0 %v7064
        %7084 = vmatprep.subr.bf16.mxu0 0
        %7085 = vmatpush1.bf16.msra.mxu0 %v7063
        %7086 = vmatprep.subr.bf16.mxu0 0
        %7087 = vmatpush1.bf16.msra.mxu0 %v7062
        %7088 = vmatprep.subr.bf16.mxu0 0
        %7089 = vmatpush1.bf16.msra.mxu0 %v7061
        %7090 = vmatprep.subr.bf16.mxu0 0
        %7091 = vmatpush1.bf16.msra.mxu0 %v7060
        %7092 = vmatprep.subr.bf16.mxu0 0
        %7093 = vmatpush2.bf16.msra.mxu0 0
        %7094 = vmatprep.subr.bf16.mxu0 0
        %7095 = vmatpush2.bf16.msra.mxu0 0
        %7096 = vmatprep.subr.bf16.mxu0 0
        %7097 = vmatpush2.bf16.msra.mxu0 0
        %7098 = vmatprep.subr.bf16.mxu0 0
        %7099 = vmatpush2.bf16.msra.mxu0 0
        %7100 = vmatprep.subr.bf16.mxu0 0
        %7101 = vmatpush2.bf16.msra.mxu0 0
        %7102 = vmatprep.subr.bf16.mxu0 0
        %7103 = vmatpush2.bf16.msra.mxu0 0
        %7104 = vmatprep.subr.bf16.mxu0 0
        %7105 = vmatpush2.bf16.msra.mxu0 0
        %7106 = vmatprep.subr.bf16.mxu0 0
        %7107 = vmatpush2.bf16.msra.mxu0 0
        %7108 = vmatprep.mubr.bf16.mxu0 0
        %7109 = vmatmul.mubr.bf16.gmra.mxu0 %v6992
        %v7110 = vpop.f32.mrf.mxu0
        %v7111 = vadd.f32 0.0, %v7110
        %v7112 = vpop.f32.mrf.mxu0
        %v7113 = vpop.f32.mrf.mxu0
        %v7114 = vpop.f32.mrf.mxu0
        %7115 = vdwg.mxu0
        %v7132 = vunpack.c.l.b16 %v6995
        %v7133 = vunpack.c.l.b16 %v6996
        %v7134 = vunpack.c.l.b16 %v6997
        %v7135 = vunpack.c.l.b16 %v6998
        %v7136 = vunpack.c.l.b16 %v6999
        %v7137 = vunpack.c.l.b16 %v7000
        %v7138 = vunpack.c.l.b16 %v7001
        %v7139 = vunpack.c.l.b16 %v7002
        %v7140 = vunpack.c.l.b16 %v7003
        %v7141 = vunpack.c.l.b16 %v7004
        %v7142 = vunpack.c.l.b16 %v7005
        %v7143 = vunpack.c.l.b16 %v7006
        %v7144 = vunpack.c.l.b16 %v7007
        %v7145 = vunpack.c.l.b16 %v7008
        %v7146 = vunpack.c.l.b16 %v7009
        %v7147 = vunpack.c.l.b16 %v7010
        %v7148 = vpack.c.b16 %v7133, %v7132
        %v7149 = vpack.c.b16 %v7135, %v7134
        %v7150 = vpack.c.b16 %v7137, %v7136
        %v7151 = vpack.c.b16 %v7139, %v7138
        %v7152 = vpack.c.b16 %v7141, %v7140
        %v7153 = vpack.c.b16 %v7143, %v7142
        %v7154 = vpack.c.b16 %v7145, %v7144
        %v7155 = vpack.c.b16 %v7147, %v7146
        %7164 = vmatprep.subr.bf16.mxu0 0
        %7165 = vmatpush1.bf16.msra.mxu0 %v7155
        %7166 = vmatprep.subr.bf16.mxu0 0
        %7167 = vmatpush1.bf16.msra.mxu0 %v7154
        %7168 = vmatprep.subr.bf16.mxu0 0
        %7169 = vmatpush1.bf16.msra.mxu0 %v7153
        %7170 = vmatprep.subr.bf16.mxu0 0
        %7171 = vmatpush1.bf16.msra.mxu0 %v7152
        %7172 = vmatprep.subr.bf16.mxu0 0
        %7173 = vmatpush1.bf16.msra.mxu0 %v7151
        %7174 = vmatprep.subr.bf16.mxu0 0
        %7175 = vmatpush1.bf16.msra.mxu0 %v7150
        %7176 = vmatprep.subr.bf16.mxu0 0
        %7177 = vmatpush1.bf16.msra.mxu0 %v7149
        %7178 = vmatprep.subr.bf16.mxu0 0
        %7179 = vmatpush1.bf16.msra.mxu0 %v7148
        %7180 = vmatprep.subr.bf16.mxu0 0
        %7181 = vmatpush2.bf16.msra.mxu0 0
        %7182 = vmatprep.subr.bf16.mxu0 0
        %7183 = vmatpush2.bf16.msra.mxu0 0
        %7184 = vmatprep.subr.bf16.mxu0 0
        %7185 = vmatpush2.bf16.msra.mxu0 0
        %7186 = vmatprep.subr.bf16.mxu0 0
        %7187 = vmatpush2.bf16.msra.mxu0 0
        %7188 = vmatprep.subr.bf16.mxu0 0
        %7189 = vmatpush2.bf16.msra.mxu0 0
        %7190 = vmatprep.subr.bf16.mxu0 0
        %7191 = vmatpush2.bf16.msra.mxu0 0
        %7192 = vmatprep.subr.bf16.mxu0 0
        %7193 = vmatpush2.bf16.msra.mxu0 0
        %7194 = vmatprep.subr.bf16.mxu0 0
        %7195 = vmatpush2.bf16.msra.mxu0 0
        %7196 = vmatprep.mubr.bf16.mxu0 0
        %7197 = vmatmul.mubr.bf16.gmra.mxu0 %v6991
        %v7198 = vpop.f32.mrf.mxu0
        %v7199 = vadd.f32 %v7111, %v7198
        %v7200 = vpop.f32.mrf.mxu0
        %v7201 = vpop.f32.mrf.mxu0
        %v7202 = vpop.f32.mrf.mxu0
        %7203 = vdwg.mxu0
        %s7204 = scalar_lea.vmem %s7, 128
        %v7205 = vld [vmem:[%s7204] sm:$0xf]
        %v7206 = vld [vmem:[%s7204 + $0x4] sm:$0xf]
        %v7207 = vld [vmem:[%s7204 + $0x8] sm:$0xf]
        %v7208 = vld [vmem:[%s7204 + $0xc] sm:$0xf]
        %v7209 = vld [vmem:[%s7204 + $0x10] sm:$0xf]
        %v7210 = vld [vmem:[%s7204 + $0x14] sm:$0xf]
        %v7211 = vld [vmem:[%s7204 + $0x18] sm:$0xf]
        %v7212 = vld [vmem:[%s7204 + $0x1c] sm:$0xf]
        %v7213 = vld [vmem:[%s7204 + $0x20] sm:$0xf]
        %v7214 = vld [vmem:[%s7204 + $0x24] sm:$0xf]
        %v7215 = vld [vmem:[%s7204 + $0x28] sm:$0xf]
        %v7216 = vld [vmem:[%s7204 + $0x2c] sm:$0xf]
        %v7217 = vld [vmem:[%s7204 + $0x30] sm:$0xf]
        %v7218 = vld [vmem:[%s7204 + $0x34] sm:$0xf]
        %v7219 = vld [vmem:[%s7204 + $0x38] sm:$0xf]
        %v7220 = vld [vmem:[%s7204 + $0x3c] sm:$0xf]
        %v7237 = vunpack.c.l.b16 %v7205
        %v7238 = vunpack.c.l.b16 %v7206
        %v7239 = vunpack.c.l.b16 %v7207
        %v7240 = vunpack.c.l.b16 %v7208
        %v7241 = vunpack.c.l.b16 %v7209
        %v7242 = vunpack.c.l.b16 %v7210
        %v7243 = vunpack.c.l.b16 %v7211
        %v7244 = vunpack.c.l.b16 %v7212
        %v7245 = vunpack.c.l.b16 %v7213
        %v7246 = vunpack.c.l.b16 %v7214
        %v7247 = vunpack.c.l.b16 %v7215
        %v7248 = vunpack.c.l.b16 %v7216
        %v7249 = vunpack.c.l.b16 %v7217
        %v7250 = vunpack.c.l.b16 %v7218
        %v7251 = vunpack.c.l.b16 %v7219
        %v7252 = vunpack.c.l.b16 %v7220
        %v7253 = vpack.c.b16 %v7238, %v7237
        %v7254 = vpack.c.b16 %v7240, %v7239
        %v7255 = vpack.c.b16 %v7242, %v7241
        %v7256 = vpack.c.b16 %v7244, %v7243
        %v7257 = vpack.c.b16 %v7246, %v7245
        %v7258 = vpack.c.b16 %v7248, %v7247
        %v7259 = vpack.c.b16 %v7250, %v7249
        %v7260 = vpack.c.b16 %v7252, %v7251
        %7269 = vmatprep.subr.bf16.mxu0 0
        %7270 = vmatpush1.bf16.msra.mxu0 %v7260
        %7271 = vmatprep.subr.bf16.mxu0 0
        %7272 = vmatpush1.bf16.msra.mxu0 %v7259
        %7273 = vmatprep.subr.bf16.mxu0 0
        %7274 = vmatpush1.bf16.msra.mxu0 %v7258
        %7275 = vmatprep.subr.bf16.mxu0 0
        %7276 = vmatpush1.bf16.msra.mxu0 %v7257
        %7277 = vmatprep.subr.bf16.mxu0 0
        %7278 = vmatpush1.bf16.msra.mxu0 %v7256
        %7279 = vmatprep.subr.bf16.mxu0 0
        %7280 = vmatpush1.bf16.msra.mxu0 %v7255
        %7281 = vmatprep.subr.bf16.mxu0 0
        %7282 = vmatpush1.bf16.msra.mxu0 %v7254
        %7283 = vmatprep.subr.bf16.mxu0 0
        %7284 = vmatpush1.bf16.msra.mxu0 %v7253
        %7285 = vmatprep.subr.bf16.mxu0 0
        %7286 = vmatpush2.bf16.msra.mxu0 0
        %7287 = vmatprep.subr.bf16.mxu0 0
        %7288 = vmatpush2.bf16.msra.mxu0 0
        %7289 = vmatprep.subr.bf16.mxu0 0
        %7290 = vmatpush2.bf16.msra.mxu0 0
        %7291 = vmatprep.subr.bf16.mxu0 0
        %7292 = vmatpush2.bf16.msra.mxu0 0
        %7293 = vmatprep.subr.bf16.mxu0 0
        %7294 = vmatpush2.bf16.msra.mxu0 0
        %7295 = vmatprep.subr.bf16.mxu0 0
        %7296 = vmatpush2.bf16.msra.mxu0 0
        %7297 = vmatprep.subr.bf16.mxu0 0
        %7298 = vmatpush2.bf16.msra.mxu0 0
        %7299 = vmatprep.subr.bf16.mxu0 0
        %7300 = vmatpush2.bf16.msra.mxu0 0
        %7301 = vmatprep.mubr.bf16.mxu0 0
        %7302 = vmatmul.mubr.bf16.gmra.mxu0 %v6993
        %v7303 = vpop.f32.mrf.mxu0
        %v7304 = vadd.f32 0.0, %v7303
        %v7305 = vpop.f32.mrf.mxu0
        %v7306 = vpop.f32.mrf.mxu0
        %v7307 = vpop.f32.mrf.mxu0
        %7308 = vdwg.mxu0
        %v7309 = vadd.f32 %v7199, %v7304
        %s7310 = scalar_lea.vmem %s7, 192
        %v7311 = vld [vmem:[%s7310] sm:$0xf]
        %v7312 = vld [vmem:[%s7310 + $0x4] sm:$0xf]
        %v7313 = vld [vmem:[%s7310 + $0x8] sm:$0xf]
        %v7314 = vld [vmem:[%s7310 + $0xc] sm:$0xf]
        %v7315 = vld [vmem:[%s7310 + $0x10] sm:$0xf]
        %v7316 = vld [vmem:[%s7310 + $0x14] sm:$0xf]
        %v7317 = vld [vmem:[%s7310 + $0x18] sm:$0xf]
        %v7318 = vld [vmem:[%s7310 + $0x1c] sm:$0xf]
        %v7319 = vld [vmem:[%s7310 + $0x20] sm:$0xf]
        %v7320 = vld [vmem:[%s7310 + $0x24] sm:$0xf]
        %v7321 = vld [vmem:[%s7310 + $0x28] sm:$0xf]
        %v7322 = vld [vmem:[%s7310 + $0x2c] sm:$0xf]
        %v7323 = vld [vmem:[%s7310 + $0x30] sm:$0xf]
        %v7324 = vld [vmem:[%s7310 + $0x34] sm:$0xf]
        %v7325 = vld [vmem:[%s7310 + $0x38] sm:$0xf]
        %v7326 = vld [vmem:[%s7310 + $0x3c] sm:$0xf]
        %v7343 = vunpack.c.l.b16 %v7311
        %v7344 = vunpack.c.l.b16 %v7312
        %v7345 = vunpack.c.l.b16 %v7313
        %v7346 = vunpack.c.l.b16 %v7314
        %v7347 = vunpack.c.l.b16 %v7315
        %v7348 = vunpack.c.l.b16 %v7316
        %v7349 = vunpack.c.l.b16 %v7317
        %v7350 = vunpack.c.l.b16 %v7318
        %v7351 = vunpack.c.l.b16 %v7319
        %v7352 = vunpack.c.l.b16 %v7320
        %v7353 = vunpack.c.l.b16 %v7321
        %v7354 = vunpack.c.l.b16 %v7322
        %v7355 = vunpack.c.l.b16 %v7323
        %v7356 = vunpack.c.l.b16 %v7324
        %v7357 = vunpack.c.l.b16 %v7325
        %v7358 = vunpack.c.l.b16 %v7326
        %v7359 = vpack.c.b16 %v7344, %v7343
        %v7360 = vpack.c.b16 %v7346, %v7345
        %v7361 = vpack.c.b16 %v7348, %v7347
        %v7362 = vpack.c.b16 %v7350, %v7349
        %v7363 = vpack.c.b16 %v7352, %v7351
        %v7364 = vpack.c.b16 %v7354, %v7353
        %v7365 = vpack.c.b16 %v7356, %v7355
        %v7366 = vpack.c.b16 %v7358, %v7357
        %7375 = vmatprep.subr.bf16.mxu0 0
        %7376 = vmatpush1.bf16.msra.mxu0 %v7366
        %7377 = vmatprep.subr.bf16.mxu0 0
        %7378 = vmatpush1.bf16.msra.mxu0 %v7365
        %7379 = vmatprep.subr.bf16.mxu0 0
        %7380 = vmatpush1.bf16.msra.mxu0 %v7364
        %7381 = vmatprep.subr.bf16.mxu0 0
        %7382 = vmatpush1.bf16.msra.mxu0 %v7363
        %7383 = vmatprep.subr.bf16.mxu0 0
        %7384 = vmatpush1.bf16.msra.mxu0 %v7362
        %7385 = vmatprep.subr.bf16.mxu0 0
        %7386 = vmatpush1.bf16.msra.mxu0 %v7361
        %7387 = vmatprep.subr.bf16.mxu0 0
        %7388 = vmatpush1.bf16.msra.mxu0 %v7360
        %7389 = vmatprep.subr.bf16.mxu0 0
        %7390 = vmatpush1.bf16.msra.mxu0 %v7359
        %7391 = vmatprep.subr.bf16.mxu0 0
        %7392 = vmatpush2.bf16.msra.mxu0 0
        %7393 = vmatprep.subr.bf16.mxu0 0
        %7394 = vmatpush2.bf16.msra.mxu0 0
        %7395 = vmatprep.subr.bf16.mxu0 0
        %7396 = vmatpush2.bf16.msra.mxu0 0
        %7397 = vmatprep.subr.bf16.mxu0 0
        %7398 = vmatpush2.bf16.msra.mxu0 0
        %7399 = vmatprep.subr.bf16.mxu0 0
        %7400 = vmatpush2.bf16.msra.mxu0 0
        %7401 = vmatprep.subr.bf16.mxu0 0
        %7402 = vmatpush2.bf16.msra.mxu0 0
        %7403 = vmatprep.subr.bf16.mxu0 0
        %7404 = vmatpush2.bf16.msra.mxu0 0
        %7405 = vmatprep.subr.bf16.mxu0 0
        %7406 = vmatpush2.bf16.msra.mxu0 0
        %7407 = vmatprep.mubr.bf16.mxu0 0
        %7408 = vmatmul.mubr.bf16.gmra.mxu0 %v6994
        %v7409 = vpop.f32.mrf.mxu0
        %v7410 = vadd.f32 0.0, %v7409
        %v7411 = vpop.f32.mrf.mxu0
        %v7412 = vpop.f32.mrf.mxu0
        %v7413 = vpop.f32.mrf.mxu0
        %7414 = vdwg.mxu0
        %v7415 = vadd.f32 %v7309, %v7410
        %v7416 = vld [vmem:[%s8] sm:$0x1]
        %v7417 = vadd.f32 %v7415, %v7416
        %vm7418 = vcmask 253952
        %7419 = vst.msk [vmem:[%s324] sm:$0x1] %vm7418, %v7417
        %s7420 = sand.u32 %s225, 1
        %s7421 = scalar_lea.sflag [#allocation6], %s7420
        %s7422 = sand.u32 %s225, 1
        %s7423 = scalar_lea.vmem [#allocation5], %s7422
        // Predicated region
        $region57: #{tpu_custom_call.1} parent=55 // pred_check
          %p7424 = pneg %p235
        $region58: #{tpu_custom_call.1} parent=55 // pred_check_branch
          %7426 = sbr.rel (%p7424) target = $region60
        $region59: #{tpu_custom_call.1} parent=55 // pred_region
          %s7428 = ssub.s32 16, 16
          %7429 = vsyncadd %s7421, %s7428
          %s7430 = smul.addr %s23, 16
          %s7431 = scalar_lea.hbm %s9, %s7430
          %s7433 = sshll.u32 %s7423, 4
          %s7434 = int_to_ptr.vmem [resolvable:$true] %s7433
          %7436 = dma.vmem_to_hbm [thread:$0]  %s7434, 16, %s7431, %s7421
        $region60: #{tpu_custom_call.1} parent=55 // pred_fallthru
          _
      $region56: #{tpu_custom_call.1} parent=5 // pred_fallthru
        _
      %p7437 = scmp.le.s32.totalorder 2, %s18
      // Predicated region
      $region61: #{tpu_custom_call.1} parent=5 // pred_check
        %p7438 = pneg %p7437
      $region62: #{tpu_custom_call.1} parent=5 // pred_check_branch
        %7440 = sbr.rel (%p7438) target = $region64
      $region63: #{tpu_custom_call.1} parent=5 // pred_region
        %s7441 = ssub.s32 %s18, 2
        // Predicated region
        $region65: #{tpu_custom_call.1} parent=63 // pred_check
          %p7442 = pneg %p241
        $region66: #{tpu_custom_call.1} parent=63 // pred_check_branch
          %7444 = sbr.rel (%p7442) target = $region68
        $region67: #{tpu_custom_call.1} parent=63 // pred_region
          %s7445 = sand.u32 %s226, 1
          %s7446 = scalar_lea.sflag [#allocation6], %s7445
          %s7447 = sand.u32 %s226, 1
          %s7448 = scalar_lea.vmem [#allocation5], %s7447
          %7449 = dma.done %s7446, 16
        $region68: #{tpu_custom_call.1} parent=63 // pred_fallthru
          _
      $region64: #{tpu_custom_call.1} parent=5 // pred_fallthru
        _
    $region6: #{tpu_custom_call.1} parent=1 // loop_footer
      %s22 = sadd.s32 1, %s18
    $region7: #{tpu_custom_call.1} parent=1 // loop_footer_branch
      %17 = sbr.rel target = $region3
    $region8: #{tpu_custom_call.1} parent=1 // loop_exit
      _
    %7450 = vsyncpa [#allocation6], 1
    %s7451 = scalar_lea.sflag [#allocation6], 1
    %7452 = vsyncpa %s7451, 1

</llo_original>
